<compile_context>
chip_gen: v7x
topology: tpu7x:2x2x1
jax: 0.10.0
libtpu: 0.0.40
codegen_flags: <defaults>
</compile_context>

<pallas_src>
import functools

import jax
import jax.numpy as jnp
from jax import lax
from jax.experimental import pallas as pl
from jax.experimental.pallas import tpu as pltpu


# ---------------------------------------------------------------------------
# Fused whole-network kernel (one batch element per grid step)
# ---------------------------------------------------------------------------
def _fused_kernel(x_ref, in_w_ref, res_w_ref, out_w_ref, o_ref, buf_ref, im_ref,
                  *, H, W, dc, num_res):
    """Whole LightLearningNet forward for one batch element; activations stay in VMEM.

    x_ref    : (H+2, BW, 128)        f32   halo'd input, data at [1:H+1, dc:dc+W, :C]
    in_w_ref : (9*128, 128)          bf16  folded input dw*pw weights (im2col layout)
    res_w_ref: (R, 9*128, 128)       bf16  stacked folded residual weights
    out_w_ref: (9*128, 128)          bf16  final 3x3 conv weights (out-ch zero-padded)
    o_ref    : (H, W, 128)           f32   output (channel-padded -> lane-dense store)
    buf_ref  : (H+2, BW, 128)        f32   VMEM activation buffer (with zero halo ring)
    im_ref   : (H*W, 9*128)          bf16  im2col scratch (rebuilt for every layer)
    """
    CH = o_ref.shape[-1]
    BW = buf_ref.shape[1]
    HW = H * W

    def im2col(src):
        # Read each (ky,kx) tap directly from the ref (nothing held across taps),
        # cast to bf16 and drop it into its 128-lane-aligned im2col column block.
        for ky in range(3):
            for kx in range(3):
                kk = 3 * ky + kx
                tap = src[ky:ky + H, dc - 1 + kx: dc - 1 + kx + W, :]
                im_ref[:, kk * CH:(kk + 1) * CH] = (
                    tap.reshape(HW, CH).astype(jnp.bfloat16))

    def conv_mxu(w):
        # One K=9*CH matmul per layer: accumulation happens inside the MXU.
        return jnp.dot(im_ref[...], w, preferred_element_type=jnp.float32)

    # ---- zero only the halo ring (interior is fully written by layer 0). ----
    # Unconditional every grid step: correct under megacore grid sharding.
    buf_ref[0:1, :, :] = jnp.zeros((1, BW, CH), jnp.float32)
    buf_ref[H + 1:H + 2, :, :] = jnp.zeros((1, BW, CH), jnp.float32)
    buf_ref[1:H + 1, 0:dc, :] = jnp.zeros((H, dc, CH), jnp.float32)
    buf_ref[1:H + 1, dc + W:, :] = jnp.zeros((H, BW - dc - W, CH), jnp.float32)

    # ---- input DSConv (depthwise folded into pointwise) + ReLU ----
    im2col(x_ref)
    y = conv_mxu(in_w_ref[...])
    buf_ref[1:H + 1, dc:dc + W, :] = jnp.maximum(y, 0.0).reshape(H, W, CH)

    # ---- residual DSConv + ReLU stack (fori_loop, VMEM-resident, in-place) ----
    def body(i, carry):
        im2col(buf_ref)                       # taps are captured before the store
        y = conv_mxu(res_w_ref[i])
        buf_ref[1:H + 1, dc:dc + W, :] = jnp.maximum(y, 0.0).reshape(H, W, CH)
        return carry

    lax.fori_loop(0, num_res, body, 0)

    # ---- final full 3x3 conv (128 -> channel-padded 128) + residual add ----
    im2col(buf_ref)
    y = conv_mxu(out_w_ref[...])
    residual = x_ref[1:H + 1, dc:dc + W, :].reshape(HW, CH)   # padded channels are zero
    o_ref[...] = (y + residual).reshape(H, W, CH).astype(o_ref.dtype)


# ---------------------------------------------------------------------------
# Wrapper: NCHW in / NCHW out, like the PyTorch module
# ---------------------------------------------------------------------------
def light_learning_net(x_nchw, params):
    N, C, H, W = x_nchw.shape
    CH = params["in_pw"].shape[1]                # 128 hidden channels = one lane width
    num_res = len(params["res"])
    assert C <= CH

    # Data columns start at an 8-aligned offset; one zero column on each side of
    # the data acts as the conv halo. BW is a multiple of 8 and >= dc + W + 1.
    dc = 8
    BW = dc + ((W + 1 + 7) // 8) * 8

    x = jnp.transpose(x_nchw, (0, 2, 3, 1)).astype(jnp.float32)        # -> NHWC
    xp = jnp.pad(x, ((0, 0), (1, 1), (dc, BW - dc - W), (0, CH - C)))  # one pad, total

    # ---- fold depthwise into pointwise: W[ky,kx,c,co] = dw[ky,kx,c] * pw[c,co] ----
    # Exact (ReLU only follows the pointwise); folded in f32, cast to bf16 for the MXU.
    in_w = jnp.einsum('hwc,co->hwco', params["in_dw"], params["in_pw"])
    in_w = jnp.pad(in_w, ((0, 0), (0, 0), (0, CH - C), (0, 0)))
    in_w = in_w.reshape(9 * CH, CH).astype(jnp.bfloat16)

    res_dw = jnp.stack([dw for dw, _ in params["res"]])                # (R,3,3,CH)
    res_pw = jnp.stack([pw for _, pw in params["res"]])                # (R,CH,CH)
    res_w = jnp.einsum('rhwc,rco->rhwco', res_dw, res_pw)
    res_w = res_w.reshape(num_res, 9 * CH, CH).astype(jnp.bfloat16)

    out_w = jnp.pad(params["out_w"], ((0, 0), (0, 0), (0, 0), (0, CH - C)))
    out_w = out_w.reshape(9 * CH, CH).astype(jnp.bfloat16)

    # Whole-image-in-VMEM assumption: fine at 16x16 (~9 MiB incl. double-buffered
    # weights); for much larger H,W switch to row-band tiling with a 1-row halo.
    vmem_est = ((H + 2) * BW * CH * 4            # activation buffer
                + H * W * 9 * CH * 2             # im2col scratch
                + 2 * (H + 2) * BW * CH * 4      # double-buffered input block
                + 2 * H * W * CH * 4             # double-buffered output block
                + 2 * (num_res + 2) * 9 * CH * CH * 2)  # double-buffered weights
    assert vmem_est < 28 * 1024 * 1024, f"VMEM footprint too large: {vmem_est}"

    kernel = functools.partial(_fused_kernel, H=H, W=W, dc=dc, num_res=num_res)
    out = pl.pallas_call(
        kernel,
        out_shape=jax.ShapeDtypeStruct((N, H, W, CH), jnp.float32),
        grid_spec=pltpu.PrefetchScalarGridSpec(
            num_scalar_prefetch=0,
            grid=(N,),
            in_specs=[
                pl.BlockSpec((None, H + 2, BW, CH), lambda n: (n, 0, 0, 0)),
                pl.BlockSpec((9 * CH, CH), lambda n: (0, 0)),
                pl.BlockSpec((num_res, 9 * CH, CH), lambda n: (0, 0, 0)),
                pl.BlockSpec((9 * CH, CH), lambda n: (0, 0)),
            ],
            out_specs=pl.BlockSpec((None, H, W, CH), lambda n: (n, 0, 0, 0)),
            scratch_shapes=[
                pltpu.VMEM((H + 2, BW, CH), jnp.float32),        # activation buffer
                pltpu.VMEM((H * W, 9 * CH), jnp.bfloat16),       # im2col scratch
            ],
        ),
        compiler_params=pltpu.CompilerParams(
            dimension_semantics=("parallel",),   # independent batch elems (2 TCs on v7x)
            vmem_limit_bytes=32 * 1024 * 1024,
        ),
    )(xp, in_w, res_w, out_w)

    out = out[..., :C]                           # drop lane-padding channels
    return jnp.transpose(out, (0, 3, 1, 2))      # NHWC -> NCHW


# ---------------------------------------------------------------------------
# Parameter init (deterministic): xavier_uniform with gain=sqrt(2) ('relu'),
# same fan computation as PyTorch nn.init for Conv2d weights. All convs bias-free
# (matches the module: every Conv2d has bias=False).
# ---------------------------------------------------------------------------
def _xavier_uniform(key, shape, fan_in, fan_out, gain):
    bound = gain * jnp.sqrt(6.0 / (fan_in + fan_out))
    return jax.random.uniform(key, shape, jnp.float32, -bound, bound)


def init_params(key, channels=14, hidden=128, num_res=10):
    gain = jnp.sqrt(2.0)
    params = {}
    keys = jax.random.split(key, 3 + 2 * num_res)

    # input depthwise (channels,1,3,3) -> stored (3,3,channels)
    params["in_dw"] = _xavier_uniform(keys[0], (3, 3, channels),
                                      fan_in=1 * 9, fan_out=channels * 9, gain=gain)
    # input pointwise (hidden, channels, 1, 1) -> stored (channels, hidden)
    params["in_pw"] = _xavier_uniform(keys[1], (channels, hidden),
                                      fan_in=channels, fan_out=hidden, gain=gain)
    res = []
    for i in range(num_res):
        dw = _xavier_uniform(keys[2 + 2 * i], (3, 3, hidden),
                             fan_in=1 * 9, fan_out=hidden * 9, gain=gain)
        pw = _xavier_uniform(keys[3 + 2 * i], (hidden, hidden),
                             fan_in=hidden, fan_out=hidden, gain=gain)
        res.append((dw, pw))
    params["res"] = res
    # output conv (channels, hidden, 3, 3) -> stored HWIO (3,3,hidden,channels)
    params["out_w"] = _xavier_uniform(keys[2 + 2 * num_res], (3, 3, hidden, channels),
                                      fan_in=hidden * 9, fan_out=channels * 9, gain=gain)
    return params


# ---------------------------------------------------------------------------
# Pure-JAX (lax.conv, f32 HIGHEST) reference for the numerical sanity check.
# ---------------------------------------------------------------------------
def _ref_forward(x_nchw, params):
    dn = ("NHWC", "HWIO", "NHWC")
    prec = lax.Precision.HIGHEST

    def dsconv(x, dw, pw, relu):
        cin = x.shape[-1]
        y = lax.conv_general_dilated(x, dw.reshape(3, 3, 1, cin), (1, 1), "SAME",
                                     dimension_numbers=dn, feature_group_count=cin,
                                     precision=prec)
        y = lax.conv_general_dilated(y, pw.reshape(1, 1, *pw.shape), (1, 1), "SAME",
                                     dimension_numbers=dn, precision=prec)
        return jnp.maximum(y, 0.0) if relu else y

    x = jnp.transpose(x_nchw, (0, 2, 3, 1))
    residual = x
    out = dsconv(x, params["in_dw"], params["in_pw"], True)
    for dw, pw in params["res"]:
        out = dsconv(out, dw, pw, True)
    out = lax.conv_general_dilated(out, params["out_w"], (1, 1), "SAME",
                                   dimension_numbers=dn, precision=prec)
    out = out + residual
    return jnp.transpose(out, (0, 3, 1, 2))


if __name__ == "__main__":
    key = jax.random.PRNGKey(0)
    k_param, k_param_small, k_x = jax.random.split(key, 3)

    N, C, H, W = 2, 14, 16, 16
    x = jax.random.normal(k_x, (N, C, H, W), jnp.float32)

    # Check 1: shallow variant (1 residual layer). With the module's
    # xavier(gain=sqrt(2)) init the hidden path decays rapidly with depth, so a
    # shallow variant gives a numerically meaningful check of the conv path
    # (im2col taps, halo handling, folded depthwise*pointwise, final conv,
    # residual add).
    params1 = init_params(k_param_small, channels=C, hidden=128, num_res=1)
    out1 = jax.block_until_ready(jax.jit(light_learning_net)(x, params1))
    ref1 = jax.block_until_ready(jax.jit(_ref_forward)(x, params1))
    err1 = float(jnp.max(jnp.abs(out1 - ref1)) / (jnp.max(jnp.abs(ref1)) + 1e-6))
    assert out1.shape == (N, C, H, W)
    assert err1 < 2e-2, f"shallow-model mismatch vs reference: rel_err={err1}"

    # Check 2: the real LightLearningNet configuration (10 residual layers).
    params = init_params(k_param, channels=C, hidden=128, num_res=10)
    out = jax.block_until_ready(jax.jit(light_learning_net)(x, params))
    ref = jax.block_until_ready(jax.jit(_ref_forward)(x, params))
    err = float(jnp.max(jnp.abs(out - ref)) / (jnp.max(jnp.abs(ref)) + 1e-6))
    assert out.shape == (N, C, H, W) and out.dtype == jnp.float32
    assert err < 5e-2, f"mismatch vs reference: rel_err={err}"

    print("KERNEL_OK")
</pallas_src>

<mosaic_0001>
module attributes {stable_mosaic.version = 11 : i64} {
  func.func @_fused_kernel(%arg0: i32, %arg1: memref<1x18x32x128xf32, #tpu.memory_space<vmem>>, %arg2: memref<1152x128xbf16, #tpu.memory_space<vmem>>, %arg3: memref<1x1152x128xbf16, #tpu.memory_space<vmem>>, %arg4: memref<1152x128xbf16, #tpu.memory_space<vmem>>, %arg5: memref<1x16x16x128xf32, #tpu.memory_space<vmem>>, %arg6: memref<18x32x128xf32, #tpu.memory_space<vmem>>, %arg7: memref<256x1152xbf16, #tpu.memory_space<vmem>>) attributes {dimension_semantics = [#tpu.dimension_semantics<parallel>], iteration_bounds = array<i64: 2>, scalar_prefetch = 0 : i64, scratch_operands = 2 : i64, tpu.core_type = #tpu.core_type<tc>, window_params = [{transform_indices = @transform_0, window_bounds = array<i64: 1, 18, 32, 128>}, {pipeline_mode = #tpu.pipeline_mode<synchronous>, transform_indices = @transform_1, window_bounds = array<i64: 1152, 128>}, {pipeline_mode = #tpu.pipeline_mode<synchronous>, transform_indices = @transform_2, window_bounds = array<i64: 1, 1152, 128>}, {pipeline_mode = #tpu.pipeline_mode<synchronous>, transform_indices = @transform_3, window_bounds = array<i64: 1152, 128>}, {transform_indices = @transform_4, window_bounds = array<i64: 1, 16, 16, 128>}]} {
    %cst = arith.constant 0.000000e+00 : f32
    %0 = vector.broadcast %cst : f32 to vector<1x32x128xf32>
    %c0 = arith.constant 0 : index
    %c0_0 = arith.constant 0 : index
    %c0_1 = arith.constant 0 : index
    %1 = vector.load %arg6[%c0, %c0_0, %c0_1] : memref<18x32x128xf32, #tpu.memory_space<vmem>>, vector<1x32x128xf32>
    tpu.vector_store %arg6[%c0, %c0_0, %c0_1], %0 {strides = array<i32>} : memref<18x32x128xf32, #tpu.memory_space<vmem>>, vector<1x32x128xf32>,
    %cst_2 = arith.constant 0.000000e+00 : f32
    %2 = vector.broadcast %cst_2 : f32 to vector<1x32x128xf32>
    %c17 = arith.constant 17 : index
    %c0_3 = arith.constant 0 : index
    %c0_4 = arith.constant 0 : index
    %3 = vector.load %arg6[%c17, %c0_3, %c0_4] : memref<18x32x128xf32, #tpu.memory_space<vmem>>, vector<1x32x128xf32>
    tpu.vector_store %arg6[%c17, %c0_3, %c0_4], %2 {strides = array<i32>} : memref<18x32x128xf32, #tpu.memory_space<vmem>>, vector<1x32x128xf32>,
    %cst_5 = arith.constant 0.000000e+00 : f32
    %4 = vector.broadcast %cst_5 : f32 to vector<16x8x128xf32>
    %c1 = arith.constant 1 : index
    %c0_6 = arith.constant 0 : index
    %c0_7 = arith.constant 0 : index
    %5 = vector.load %arg6[%c1, %c0_6, %c0_7] : memref<18x32x128xf32, #tpu.memory_space<vmem>>, vector<16x8x128xf32>
    tpu.vector_store %arg6[%c1, %c0_6, %c0_7], %4 {strides = array<i32>} : memref<18x32x128xf32, #tpu.memory_space<vmem>>, vector<16x8x128xf32>,
    %cst_8 = arith.constant 0.000000e+00 : f32
    %6 = vector.broadcast %cst_8 : f32 to vector<16x8x128xf32>
    %c1_9 = arith.constant 1 : index
    %c24 = arith.constant 24 : index
    %c0_10 = arith.constant 0 : index
    %7 = vector.load %arg6[%c1_9, %c24, %c0_10] : memref<18x32x128xf32, #tpu.memory_space<vmem>>, vector<16x8x128xf32>
    tpu.vector_store %arg6[%c1_9, %c24, %c0_10], %6 {strides = array<i32>} : memref<18x32x128xf32, #tpu.memory_space<vmem>>, vector<16x8x128xf32>,
    %c0_11 = arith.constant 0 : index
    %c0_12 = arith.constant 0 : index
    %c7 = arith.constant 7 : index
    %c0_13 = arith.constant 0 : index
    %8 = vector.load %arg1[%c0_11, %c0_12, %c7, %c0_13] : memref<1x18x32x128xf32, #tpu.memory_space<vmem>>, vector<1x16x16x128xf32>
    %9 = vector.shape_cast %8 : vector<1x16x16x128xf32> to vector<16x16x128xf32>
    %10 = vector.shape_cast %9 : vector<16x16x128xf32> to vector<256x128xf32>
    %11 = arith.truncf %10 : vector<256x128xf32> to vector<256x128xbf16>
    %c0_14 = arith.constant 0 : index
    %c0_15 = arith.constant 0 : index
    %12 = vector.load %arg7[%c0_14, %c0_15] : memref<256x1152xbf16, #tpu.memory_space<vmem>>, vector<256x128xbf16>
    tpu.vector_store %arg7[%c0_14, %c0_15], %11 {strides = array<i32>} : memref<256x1152xbf16, #tpu.memory_space<vmem>>, vector<256x128xbf16>,
    %c0_16 = arith.constant 0 : index
    %c0_17 = arith.constant 0 : index
    %c8 = arith.constant 8 : index
    %c0_18 = arith.constant 0 : index
    %13 = vector.load %arg1[%c0_16, %c0_17, %c8, %c0_18] : memref<1x18x32x128xf32, #tpu.memory_space<vmem>>, vector<1x16x16x128xf32>
    %14 = vector.shape_cast %13 : vector<1x16x16x128xf32> to vector<16x16x128xf32>
    %15 = vector.shape_cast %14 : vector<16x16x128xf32> to vector<256x128xf32>
    %16 = arith.truncf %15 : vector<256x128xf32> to vector<256x128xbf16>
    %c0_19 = arith.constant 0 : index
    %c128 = arith.constant 128 : index
    %17 = vector.load %arg7[%c0_19, %c128] : memref<256x1152xbf16, #tpu.memory_space<vmem>>, vector<256x128xbf16>
    tpu.vector_store %arg7[%c0_19, %c128], %16 {strides = array<i32>} : memref<256x1152xbf16, #tpu.memory_space<vmem>>, vector<256x128xbf16>,
    %c0_20 = arith.constant 0 : index
    %c0_21 = arith.constant 0 : index
    %c9 = arith.constant 9 : index
    %c0_22 = arith.constant 0 : index
    %18 = vector.load %arg1[%c0_20, %c0_21, %c9, %c0_22] : memref<1x18x32x128xf32, #tpu.memory_space<vmem>>, vector<1x16x16x128xf32>
    %19 = vector.shape_cast %18 : vector<1x16x16x128xf32> to vector<16x16x128xf32>
    %20 = vector.shape_cast %19 : vector<16x16x128xf32> to vector<256x128xf32>
    %21 = arith.truncf %20 : vector<256x128xf32> to vector<256x128xbf16>
    %c0_23 = arith.constant 0 : index
    %c256 = arith.constant 256 : index
    %22 = vector.load %arg7[%c0_23, %c256] : memref<256x1152xbf16, #tpu.memory_space<vmem>>, vector<256x128xbf16>
    tpu.vector_store %arg7[%c0_23, %c256], %21 {strides = array<i32>} : memref<256x1152xbf16, #tpu.memory_space<vmem>>, vector<256x128xbf16>,
    %c0_24 = arith.constant 0 : index
    %c1_25 = arith.constant 1 : index
    %c7_26 = arith.constant 7 : index
    %c0_27 = arith.constant 0 : index
    %23 = vector.load %arg1[%c0_24, %c1_25, %c7_26, %c0_27] : memref<1x18x32x128xf32, #tpu.memory_space<vmem>>, vector<1x16x16x128xf32>
    %24 = vector.shape_cast %23 : vector<1x16x16x128xf32> to vector<16x16x128xf32>
    %25 = vector.shape_cast %24 : vector<16x16x128xf32> to vector<256x128xf32>
    %26 = arith.truncf %25 : vector<256x128xf32> to vector<256x128xbf16>
    %c0_28 = arith.constant 0 : index
    %c384 = arith.constant 384 : index
    %27 = vector.load %arg7[%c0_28, %c384] : memref<256x1152xbf16, #tpu.memory_space<vmem>>, vector<256x128xbf16>
    tpu.vector_store %arg7[%c0_28, %c384], %26 {strides = array<i32>} : memref<256x1152xbf16, #tpu.memory_space<vmem>>, vector<256x128xbf16>,
    %c0_29 = arith.constant 0 : index
    %c1_30 = arith.constant 1 : index
    %c8_31 = arith.constant 8 : index
    %c0_32 = arith.constant 0 : index
    %28 = vector.load %arg1[%c0_29, %c1_30, %c8_31, %c0_32] : memref<1x18x32x128xf32, #tpu.memory_space<vmem>>, vector<1x16x16x128xf32>
    %29 = vector.shape_cast %28 : vector<1x16x16x128xf32> to vector<16x16x128xf32>
    %30 = vector.shape_cast %29 : vector<16x16x128xf32> to vector<256x128xf32>
    %31 = arith.truncf %30 : vector<256x128xf32> to vector<256x128xbf16>
    %c0_33 = arith.constant 0 : index
    %c512 = arith.constant 512 : index
    %32 = vector.load %arg7[%c0_33, %c512] : memref<256x1152xbf16, #tpu.memory_space<vmem>>, vector<256x128xbf16>
    tpu.vector_store %arg7[%c0_33, %c512], %31 {strides = array<i32>} : memref<256x1152xbf16, #tpu.memory_space<vmem>>, vector<256x128xbf16>,
    %c0_34 = arith.constant 0 : index
    %c1_35 = arith.constant 1 : index
    %c9_36 = arith.constant 9 : index
    %c0_37 = arith.constant 0 : index
    %33 = vector.load %arg1[%c0_34, %c1_35, %c9_36, %c0_37] : memref<1x18x32x128xf32, #tpu.memory_space<vmem>>, vector<1x16x16x128xf32>
    %34 = vector.shape_cast %33 : vector<1x16x16x128xf32> to vector<16x16x128xf32>
    %35 = vector.shape_cast %34 : vector<16x16x128xf32> to vector<256x128xf32>
    %36 = arith.truncf %35 : vector<256x128xf32> to vector<256x128xbf16>
    %c0_38 = arith.constant 0 : index
    %c640 = arith.constant 640 : index
    %37 = vector.load %arg7[%c0_38, %c640] : memref<256x1152xbf16, #tpu.memory_space<vmem>>, vector<256x128xbf16>
    tpu.vector_store %arg7[%c0_38, %c640], %36 {strides = array<i32>} : memref<256x1152xbf16, #tpu.memory_space<vmem>>, vector<256x128xbf16>,
    %c0_39 = arith.constant 0 : index
    %c2 = arith.constant 2 : index
    %c7_40 = arith.constant 7 : index
    %c0_41 = arith.constant 0 : index
    %38 = vector.load %arg1[%c0_39, %c2, %c7_40, %c0_41] : memref<1x18x32x128xf32, #tpu.memory_space<vmem>>, vector<1x16x16x128xf32>
    %39 = vector.shape_cast %38 : vector<1x16x16x128xf32> to vector<16x16x128xf32>
    %40 = vector.shape_cast %39 : vector<16x16x128xf32> to vector<256x128xf32>
    %41 = arith.truncf %40 : vector<256x128xf32> to vector<256x128xbf16>
    %c0_42 = arith.constant 0 : index
    %c768 = arith.constant 768 : index
    %42 = vector.load %arg7[%c0_42, %c768] : memref<256x1152xbf16, #tpu.memory_space<vmem>>, vector<256x128xbf16>
    tpu.vector_store %arg7[%c0_42, %c768], %41 {strides = array<i32>} : memref<256x1152xbf16, #tpu.memory_space<vmem>>, vector<256x128xbf16>,
    %c0_43 = arith.constant 0 : index
    %c2_44 = arith.constant 2 : index
    %c8_45 = arith.constant 8 : index
    %c0_46 = arith.constant 0 : index
    %43 = vector.load %arg1[%c0_43, %c2_44, %c8_45, %c0_46] : memref<1x18x32x128xf32, #tpu.memory_space<vmem>>, vector<1x16x16x128xf32>
    %44 = vector.shape_cast %43 : vector<1x16x16x128xf32> to vector<16x16x128xf32>
    %45 = vector.shape_cast %44 : vector<16x16x128xf32> to vector<256x128xf32>
    %46 = arith.truncf %45 : vector<256x128xf32> to vector<256x128xbf16>
    %c0_47 = arith.constant 0 : index
    %c896 = arith.constant 896 : index
    %47 = vector.load %arg7[%c0_47, %c896] : memref<256x1152xbf16, #tpu.memory_space<vmem>>, vector<256x128xbf16>
    tpu.vector_store %arg7[%c0_47, %c896], %46 {strides = array<i32>} : memref<256x1152xbf16, #tpu.memory_space<vmem>>, vector<256x128xbf16>,
    %c0_48 = arith.constant 0 : index
    %c2_49 = arith.constant 2 : index
    %c9_50 = arith.constant 9 : index
    %c0_51 = arith.constant 0 : index
    %48 = vector.load %arg1[%c0_48, %c2_49, %c9_50, %c0_51] : memref<1x18x32x128xf32, #tpu.memory_space<vmem>>, vector<1x16x16x128xf32>
    %49 = vector.shape_cast %48 : vector<1x16x16x128xf32> to vector<16x16x128xf32>
    %50 = vector.shape_cast %49 : vector<16x16x128xf32> to vector<256x128xf32>
    %51 = arith.truncf %50 : vector<256x128xf32> to vector<256x128xbf16>
    %c0_52 = arith.constant 0 : index
    %c1024 = arith.constant 1024 : index
    %52 = vector.load %arg7[%c0_52, %c1024] : memref<256x1152xbf16, #tpu.memory_space<vmem>>, vector<256x128xbf16>
    tpu.vector_store %arg7[%c0_52, %c1024], %51 {strides = array<i32>} : memref<256x1152xbf16, #tpu.memory_space<vmem>>, vector<256x128xbf16>,
    %c0_53 = arith.constant 0 : index
    %c0_54 = arith.constant 0 : index
    %53 = vector.load %arg2[%c0_53, %c0_54] : memref<1152x128xbf16, #tpu.memory_space<vmem>>, vector<1152x128xbf16>
    %c0_55 = arith.constant 0 : index
    %c0_56 = arith.constant 0 : index
    %54 = vector.load %arg7[%c0_55, %c0_56] : memref<256x1152xbf16, #tpu.memory_space<vmem>>, vector<256x1152xbf16>
    %cst_57 = arith.constant dense<0.000000e+00> : vector<256x128xf32>
    %55 = tpu.matmul %54, %53, %cst_57 {dimension_numbers = #tpu.dot_dimension_numbers<[1], [0], [0], [1], [0, 0, 1, 1], [], []>} : vector<256x1152xbf16>, vector<1152x128xbf16>, vector<256x128xf32> -> vector<256x128xf32>
    %cst_58 = arith.constant 0.000000e+00 : f32
    %56 = vector.broadcast %cst_58 : f32 to vector<256x128xf32>
    %57 = arith.maximumf %55, %56 : vector<256x128xf32>
    %58 = vector.shape_cast %57 : vector<256x128xf32> to vector<16x16x128xf32>
    %c1_59 = arith.constant 1 : index
    %c8_60 = arith.constant 8 : index
    %c0_61 = arith.constant 0 : index
    %59 = vector.load %arg6[%c1_59, %c8_60, %c0_61] : memref<18x32x128xf32, #tpu.memory_space<vmem>>, vector<16x16x128xf32>
    tpu.vector_store %arg6[%c1_59, %c8_60, %c0_61], %58 {strides = array<i32>} : memref<18x32x128xf32, #tpu.memory_space<vmem>>, vector<16x16x128xf32>,
    %c0_i32 = arith.constant 0 : i32
    %c0_62 = arith.constant 0 : index
    %c7_63 = arith.constant 7 : index
    %c0_64 = arith.constant 0 : index
    %60 = vector.load %arg6[%c0_62, %c7_63, %c0_64] : memref<18x32x128xf32, #tpu.memory_space<vmem>>, vector<16x16x128xf32>
    %61 = vector.shape_cast %60 : vector<16x16x128xf32> to vector<256x128xf32>
    %62 = arith.truncf %61 : vector<256x128xf32> to vector<256x128xbf16>
    %c0_65 = arith.constant 0 : index
    %c0_66 = arith.constant 0 : index
    %63 = vector.load %arg7[%c0_65, %c0_66] : memref<256x1152xbf16, #tpu.memory_space<vmem>>, vector<256x128xbf16>
    tpu.vector_store %arg7[%c0_65, %c0_66], %62 {strides = array<i32>} : memref<256x1152xbf16, #tpu.memory_space<vmem>>, vector<256x128xbf16>,
    %c0_67 = arith.constant 0 : index
    %c8_68 = arith.constant 8 : index
    %c0_69 = arith.constant 0 : index
    %64 = vector.load %arg6[%c0_67, %c8_68, %c0_69] : memref<18x32x128xf32, #tpu.memory_space<vmem>>, vector<16x16x128xf32>
    %65 = vector.shape_cast %64 : vector<16x16x128xf32> to vector<256x128xf32>
    %66 = arith.truncf %65 : vector<256x128xf32> to vector<256x128xbf16>
    %c0_70 = arith.constant 0 : index
    %c128_71 = arith.constant 128 : index
    %67 = vector.load %arg7[%c0_70, %c128_71] : memref<256x1152xbf16, #tpu.memory_space<vmem>>, vector<256x128xbf16>
    tpu.vector_store %arg7[%c0_70, %c128_71], %66 {strides = array<i32>} : memref<256x1152xbf16, #tpu.memory_space<vmem>>, vector<256x128xbf16>,
    %c0_72 = arith.constant 0 : index
    %c9_73 = arith.constant 9 : index
    %c0_74 = arith.constant 0 : index
    %68 = vector.load %arg6[%c0_72, %c9_73, %c0_74] : memref<18x32x128xf32, #tpu.memory_space<vmem>>, vector<16x16x128xf32>
    %69 = vector.shape_cast %68 : vector<16x16x128xf32> to vector<256x128xf32>
    %70 = arith.truncf %69 : vector<256x128xf32> to vector<256x128xbf16>
    %c0_75 = arith.constant 0 : index
    %c256_76 = arith.constant 256 : index
    %71 = vector.load %arg7[%c0_75, %c256_76] : memref<256x1152xbf16, #tpu.memory_space<vmem>>, vector<256x128xbf16>
    tpu.vector_store %arg7[%c0_75, %c256_76], %70 {strides = array<i32>} : memref<256x1152xbf16, #tpu.memory_space<vmem>>, vector<256x128xbf16>,
    %c1_77 = arith.constant 1 : index
    %c7_78 = arith.constant 7 : index
    %c0_79 = arith.constant 0 : index
    %72 = vector.load %arg6[%c1_77, %c7_78, %c0_79] : memref<18x32x128xf32, #tpu.memory_space<vmem>>, vector<16x16x128xf32>
    %73 = vector.shape_cast %72 : vector<16x16x128xf32> to vector<256x128xf32>
    %74 = arith.truncf %73 : vector<256x128xf32> to vector<256x128xbf16>
    %c0_80 = arith.constant 0 : index
    %c384_81 = arith.constant 384 : index
    %75 = vector.load %arg7[%c0_80, %c384_81] : memref<256x1152xbf16, #tpu.memory_space<vmem>>, vector<256x128xbf16>
    tpu.vector_store %arg7[%c0_80, %c384_81], %74 {strides = array<i32>} : memref<256x1152xbf16, #tpu.memory_space<vmem>>, vector<256x128xbf16>,
    %c1_82 = arith.constant 1 : index
    %c8_83 = arith.constant 8 : index
    %c0_84 = arith.constant 0 : index
    %76 = vector.load %arg6[%c1_82, %c8_83, %c0_84] : memref<18x32x128xf32, #tpu.memory_space<vmem>>, vector<16x16x128xf32>
    %77 = vector.shape_cast %76 : vector<16x16x128xf32> to vector<256x128xf32>
    %78 = arith.truncf %77 : vector<256x128xf32> to vector<256x128xbf16>
    %c0_85 = arith.constant 0 : index
    %c512_86 = arith.constant 512 : index
    %79 = vector.load %arg7[%c0_85, %c512_86] : memref<256x1152xbf16, #tpu.memory_space<vmem>>, vector<256x128xbf16>
    tpu.vector_store %arg7[%c0_85, %c512_86], %78 {strides = array<i32>} : memref<256x1152xbf16, #tpu.memory_space<vmem>>, vector<256x128xbf16>,
    %c1_87 = arith.constant 1 : index
    %c9_88 = arith.constant 9 : index
    %c0_89 = arith.constant 0 : index
    %80 = vector.load %arg6[%c1_87, %c9_88, %c0_89] : memref<18x32x128xf32, #tpu.memory_space<vmem>>, vector<16x16x128xf32>
    %81 = vector.shape_cast %80 : vector<16x16x128xf32> to vector<256x128xf32>
    %82 = arith.truncf %81 : vector<256x128xf32> to vector<256x128xbf16>
    %c0_90 = arith.constant 0 : index
    %c640_91 = arith.constant 640 : index
    %83 = vector.load %arg7[%c0_90, %c640_91] : memref<256x1152xbf16, #tpu.memory_space<vmem>>, vector<256x128xbf16>
    tpu.vector_store %arg7[%c0_90, %c640_91], %82 {strides = array<i32>} : memref<256x1152xbf16, #tpu.memory_space<vmem>>, vector<256x128xbf16>,
    %c2_92 = arith.constant 2 : index
    %c7_93 = arith.constant 7 : index
    %c0_94 = arith.constant 0 : index
    %84 = vector.load %arg6[%c2_92, %c7_93, %c0_94] : memref<18x32x128xf32, #tpu.memory_space<vmem>>, vector<16x16x128xf32>
    %85 = vector.shape_cast %84 : vector<16x16x128xf32> to vector<256x128xf32>
    %86 = arith.truncf %85 : vector<256x128xf32> to vector<256x128xbf16>
    %c0_95 = arith.constant 0 : index
    %c768_96 = arith.constant 768 : index
    %87 = vector.load %arg7[%c0_95, %c768_96] : memref<256x1152xbf16, #tpu.memory_space<vmem>>, vector<256x128xbf16>
    tpu.vector_store %arg7[%c0_95, %c768_96], %86 {strides = array<i32>} : memref<256x1152xbf16, #tpu.memory_space<vmem>>, vector<256x128xbf16>,
    %c2_97 = arith.constant 2 : index
    %c8_98 = arith.constant 8 : index
    %c0_99 = arith.constant 0 : index
    %88 = vector.load %arg6[%c2_97, %c8_98, %c0_99] : memref<18x32x128xf32, #tpu.memory_space<vmem>>, vector<16x16x128xf32>
    %89 = vector.shape_cast %88 : vector<16x16x128xf32> to vector<256x128xf32>
    %90 = arith.truncf %89 : vector<256x128xf32> to vector<256x128xbf16>
    %c0_100 = arith.constant 0 : index
    %c896_101 = arith.constant 896 : index
    %91 = vector.load %arg7[%c0_100, %c896_101] : memref<256x1152xbf16, #tpu.memory_space<vmem>>, vector<256x128xbf16>
    tpu.vector_store %arg7[%c0_100, %c896_101], %90 {strides = array<i32>} : memref<256x1152xbf16, #tpu.memory_space<vmem>>, vector<256x128xbf16>,
    %c2_102 = arith.constant 2 : index
    %c9_103 = arith.constant 9 : index
    %c0_104 = arith.constant 0 : index
    %92 = vector.load %arg6[%c2_102, %c9_103, %c0_104] : memref<18x32x128xf32, #tpu.memory_space<vmem>>, vector<16x16x128xf32>
    %93 = vector.shape_cast %92 : vector<16x16x128xf32> to vector<256x128xf32>
    %94 = arith.truncf %93 : vector<256x128xf32> to vector<256x128xbf16>
    %c0_105 = arith.constant 0 : index
    %c1024_106 = arith.constant 1024 : index
    %95 = vector.load %arg7[%c0_105, %c1024_106] : memref<256x1152xbf16, #tpu.memory_space<vmem>>, vector<256x128xbf16>
    tpu.vector_store %arg7[%c0_105, %c1024_106], %94 {strides = array<i32>} : memref<256x1152xbf16, #tpu.memory_space<vmem>>, vector<256x128xbf16>,
    %96 = arith.index_cast %c0_i32 : i32 to index
    %c0_107 = arith.constant 0 : index
    %c0_108 = arith.constant 0 : index
    %97 = vector.load %arg3[%96, %c0_107, %c0_108] : memref<1x1152x128xbf16, #tpu.memory_space<vmem>>, vector<1x1152x128xbf16>
    %98 = vector.shape_cast %97 : vector<1x1152x128xbf16> to vector<1152x128xbf16>
    %c0_109 = arith.constant 0 : index
    %c0_110 = arith.constant 0 : index
    %99 = vector.load %arg7[%c0_109, %c0_110] : memref<256x1152xbf16, #tpu.memory_space<vmem>>, vector<256x1152xbf16>
    %cst_111 = arith.constant dense<0.000000e+00> : vector<256x128xf32>
    %100 = tpu.matmul %99, %98, %cst_111 {dimension_numbers = #tpu.dot_dimension_numbers<[1], [0], [0], [1], [0, 0, 1, 1], [], []>} : vector<256x1152xbf16>, vector<1152x128xbf16>, vector<256x128xf32> -> vector<256x128xf32>
    %cst_112 = arith.constant 0.000000e+00 : f32
    %101 = vector.broadcast %cst_112 : f32 to vector<256x128xf32>
    %102 = arith.maximumf %100, %101 : vector<256x128xf32>
    %103 = vector.shape_cast %102 : vector<256x128xf32> to vector<16x16x128xf32>
    %c1_113 = arith.constant 1 : index
    %c8_114 = arith.constant 8 : index
    %c0_115 = arith.constant 0 : index
    %104 = vector.load %arg6[%c1_113, %c8_114, %c0_115] : memref<18x32x128xf32, #tpu.memory_space<vmem>>, vector<16x16x128xf32>
    tpu.vector_store %arg6[%c1_113, %c8_114, %c0_115], %103 {strides = array<i32>} : memref<18x32x128xf32, #tpu.memory_space<vmem>>, vector<16x16x128xf32>,
    %c1_i32 = arith.constant 1 : i32
    %c0_116 = arith.constant 0 : index
    %c7_117 = arith.constant 7 : index
    %c0_118 = arith.constant 0 : index
    %105 = vector.load %arg6[%c0_116, %c7_117, %c0_118] : memref<18x32x128xf32, #tpu.memory_space<vmem>>, vector<16x16x128xf32>
    %106 = vector.shape_cast %105 : vector<16x16x128xf32> to vector<256x128xf32>
    %107 = arith.truncf %106 : vector<256x128xf32> to vector<256x128xbf16>
    %c0_119 = arith.constant 0 : index
    %c0_120 = arith.constant 0 : index
    %108 = vector.load %arg7[%c0_119, %c0_120] : memref<256x1152xbf16, #tpu.memory_space<vmem>>, vector<256x128xbf16>
    tpu.vector_store %arg7[%c0_119, %c0_120], %107 {strides = array<i32>} : memref<256x1152xbf16, #tpu.memory_space<vmem>>, vector<256x128xbf16>,
    %c0_121 = arith.constant 0 : index
    %c8_122 = arith.constant 8 : index
    %c0_123 = arith.constant 0 : index
    %109 = vector.load %arg6[%c0_121, %c8_122, %c0_123] : memref<18x32x128xf32, #tpu.memory_space<vmem>>, vector<16x16x128xf32>
    %110 = vector.shape_cast %109 : vector<16x16x128xf32> to vector<256x128xf32>
    %111 = arith.truncf %110 : vector<256x128xf32> to vector<256x128xbf16>
    %c0_124 = arith.constant 0 : index
    %c128_125 = arith.constant 128 : index
    %112 = vector.load %arg7[%c0_124, %c128_125] : memref<256x1152xbf16, #tpu.memory_space<vmem>>, vector<256x128xbf16>
    tpu.vector_store %arg7[%c0_124, %c128_125], %111 {strides = array<i32>} : memref<256x1152xbf16, #tpu.memory_space<vmem>>, vector<256x128xbf16>,
    %c0_126 = arith.constant 0 : index
    %c9_127 = arith.constant 9 : index
    %c0_128 = arith.constant 0 : index
    %113 = vector.load %arg6[%c0_126, %c9_127, %c0_128] : memref<18x32x128xf32, #tpu.memory_space<vmem>>, vector<16x16x128xf32>
    %114 = vector.shape_cast %113 : vector<16x16x128xf32> to vector<256x128xf32>
    %115 = arith.truncf %114 : vector<256x128xf32> to vector<256x128xbf16>
    %c0_129 = arith.constant 0 : index
    %c256_130 = arith.constant 256 : index
    %116 = vector.load %arg7[%c0_129, %c256_130] : memref<256x1152xbf16, #tpu.memory_space<vmem>>, vector<256x128xbf16>
    tpu.vector_store %arg7[%c0_129, %c256_130], %115 {strides = array<i32>} : memref<256x1152xbf16, #tpu.memory_space<vmem>>, vector<256x128xbf16>,
    %c1_131 = arith.constant 1 : index
    %c7_132 = arith.constant 7 : index
    %c0_133 = arith.constant 0 : index
    %117 = vector.load %arg6[%c1_131, %c7_132, %c0_133] : memref<18x32x128xf32, #tpu.memory_space<vmem>>, vector<16x16x128xf32>
    %118 = vector.shape_cast %117 : vector<16x16x128xf32> to vector<256x128xf32>
    %119 = arith.truncf %118 : vector<256x128xf32> to vector<256x128xbf16>
    %c0_134 = arith.constant 0 : index
    %c384_135 = arith.constant 384 : index
    %120 = vector.load %arg7[%c0_134, %c384_135] : memref<256x1152xbf16, #tpu.memory_space<vmem>>, vector<256x128xbf16>
    tpu.vector_store %arg7[%c0_134, %c384_135], %119 {strides = array<i32>} : memref<256x1152xbf16, #tpu.memory_space<vmem>>, vector<256x128xbf16>,
    %c1_136 = arith.constant 1 : index
    %c8_137 = arith.constant 8 : index
    %c0_138 = arith.constant 0 : index
    %121 = vector.load %arg6[%c1_136, %c8_137, %c0_138] : memref<18x32x128xf32, #tpu.memory_space<vmem>>, vector<16x16x128xf32>
    %122 = vector.shape_cast %121 : vector<16x16x128xf32> to vector<256x128xf32>
    %123 = arith.truncf %122 : vector<256x128xf32> to vector<256x128xbf16>
    %c0_139 = arith.constant 0 : index
    %c512_140 = arith.constant 512 : index
    %124 = vector.load %arg7[%c0_139, %c512_140] : memref<256x1152xbf16, #tpu.memory_space<vmem>>, vector<256x128xbf16>
    tpu.vector_store %arg7[%c0_139, %c512_140], %123 {strides = array<i32>} : memref<256x1152xbf16, #tpu.memory_space<vmem>>, vector<256x128xbf16>,
    %c1_141 = arith.constant 1 : index
    %c9_142 = arith.constant 9 : index
    %c0_143 = arith.constant 0 : index
    %125 = vector.load %arg6[%c1_141, %c9_142, %c0_143] : memref<18x32x128xf32, #tpu.memory_space<vmem>>, vector<16x16x128xf32>
    %126 = vector.shape_cast %125 : vector<16x16x128xf32> to vector<256x128xf32>
    %127 = arith.truncf %126 : vector<256x128xf32> to vector<256x128xbf16>
    %c0_144 = arith.constant 0 : index
    %c640_145 = arith.constant 640 : index
    %128 = vector.load %arg7[%c0_144, %c640_145] : memref<256x1152xbf16, #tpu.memory_space<vmem>>, vector<256x128xbf16>
    tpu.vector_store %arg7[%c0_144, %c640_145], %127 {strides = array<i32>} : memref<256x1152xbf16, #tpu.memory_space<vmem>>, vector<256x128xbf16>,
    %c2_146 = arith.constant 2 : index
    %c7_147 = arith.constant 7 : index
    %c0_148 = arith.constant 0 : index
    %129 = vector.load %arg6[%c2_146, %c7_147, %c0_148] : memref<18x32x128xf32, #tpu.memory_space<vmem>>, vector<16x16x128xf32>
    %130 = vector.shape_cast %129 : vector<16x16x128xf32> to vector<256x128xf32>
    %131 = arith.truncf %130 : vector<256x128xf32> to vector<256x128xbf16>
    %c0_149 = arith.constant 0 : index
    %c768_150 = arith.constant 768 : index
    %132 = vector.load %arg7[%c0_149, %c768_150] : memref<256x1152xbf16, #tpu.memory_space<vmem>>, vector<256x128xbf16>
    tpu.vector_store %arg7[%c0_149, %c768_150], %131 {strides = array<i32>} : memref<256x1152xbf16, #tpu.memory_space<vmem>>, vector<256x128xbf16>,
    %c2_151 = arith.constant 2 : index
    %c8_152 = arith.constant 8 : index
    %c0_153 = arith.constant 0 : index
    %133 = vector.load %arg6[%c2_151, %c8_152, %c0_153] : memref<18x32x128xf32, #tpu.memory_space<vmem>>, vector<16x16x128xf32>
    %134 = vector.shape_cast %133 : vector<16x16x128xf32> to vector<256x128xf32>
    %135 = arith.truncf %134 : vector<256x128xf32> to vector<256x128xbf16>
    %c0_154 = arith.constant 0 : index
    %c896_155 = arith.constant 896 : index
    %136 = vector.load %arg7[%c0_154, %c896_155] : memref<256x1152xbf16, #tpu.memory_space<vmem>>, vector<256x128xbf16>
    tpu.vector_store %arg7[%c0_154, %c896_155], %135 {strides = array<i32>} : memref<256x1152xbf16, #tpu.memory_space<vmem>>, vector<256x128xbf16>,
    %c2_156 = arith.constant 2 : index
    %c9_157 = arith.constant 9 : index
    %c0_158 = arith.constant 0 : index
    %137 = vector.load %arg6[%c2_156, %c9_157, %c0_158] : memref<18x32x128xf32, #tpu.memory_space<vmem>>, vector<16x16x128xf32>
    %138 = vector.shape_cast %137 : vector<16x16x128xf32> to vector<256x128xf32>
    %139 = arith.truncf %138 : vector<256x128xf32> to vector<256x128xbf16>
    %c0_159 = arith.constant 0 : index
    %c1024_160 = arith.constant 1024 : index
    %140 = vector.load %arg7[%c0_159, %c1024_160] : memref<256x1152xbf16, #tpu.memory_space<vmem>>, vector<256x128xbf16>
    tpu.vector_store %arg7[%c0_159, %c1024_160], %139 {strides = array<i32>} : memref<256x1152xbf16, #tpu.memory_space<vmem>>, vector<256x128xbf16>,
    %c0_161 = arith.constant 0 : index
    %c0_162 = arith.constant 0 : index
    %141 = vector.load %arg4[%c0_161, %c0_162] : memref<1152x128xbf16, #tpu.memory_space<vmem>>, vector<1152x128xbf16>
    %c0_163 = arith.constant 0 : index
    %c0_164 = arith.constant 0 : index
    %142 = vector.load %arg7[%c0_163, %c0_164] : memref<256x1152xbf16, #tpu.memory_space<vmem>>, vector<256x1152xbf16>
    %cst_165 = arith.constant dense<0.000000e+00> : vector<256x128xf32>
    %143 = tpu.matmul %142, %141, %cst_165 {dimension_numbers = #tpu.dot_dimension_numbers<[1], [0], [0], [1], [0, 0, 1, 1], [], []>} : vector<256x1152xbf16>, vector<1152x128xbf16>, vector<256x128xf32> -> vector<256x128xf32>
    %c0_166 = arith.constant 0 : index
    %c1_167 = arith.constant 1 : index
    %c8_168 = arith.constant 8 : index
    %c0_169 = arith.constant 0 : index
    %144 = vector.load %arg1[%c0_166, %c1_167, %c8_168, %c0_169] : memref<1x18x32x128xf32, #tpu.memory_space<vmem>>, vector<1x16x16x128xf32>
    %145 = vector.shape_cast %144 : vector<1x16x16x128xf32> to vector<16x16x128xf32>
    %146 = vector.shape_cast %145 : vector<16x16x128xf32> to vector<256x128xf32>
    %147 = arith.addf %143, %146 : vector<256x128xf32>
    %148 = vector.shape_cast %147 : vector<256x128xf32> to vector<16x16x128xf32>
    %c0_170 = arith.constant 0 : index
    %c0_171 = arith.constant 0 : index
    %c0_172 = arith.constant 0 : index
    %c0_173 = arith.constant 0 : index
    %149 = vector.load %arg5[%c0_170, %c0_171, %c0_172, %c0_173] : memref<1x16x16x128xf32, #tpu.memory_space<vmem>>, vector<1x16x16x128xf32>
    %150 = vector.shape_cast %149 : vector<1x16x16x128xf32> to vector<16x16x128xf32>
    %151 = vector.shape_cast %148 : vector<16x16x128xf32> to vector<1x16x16x128xf32>
    tpu.vector_store %arg5[%c0_170, %c0_171, %c0_172, %c0_173], %151 {strides = array<i32>} : memref<1x16x16x128xf32, #tpu.memory_space<vmem>>, vector<1x16x16x128xf32>,
    return
  }
  func.func @transform_0(%arg0: i32) -> (i32, i32, i32, i32) {
    %c0_i32 = arith.constant 0 : i32
    %c0_i32_0 = arith.constant 0 : i32
    %c0_i32_1 = arith.constant 0 : i32
    %c0_i32_2 = arith.constant 0 : i32
    return %arg0, %c0_i32, %c0_i32_0, %c0_i32_1 : i32, i32, i32, i32
  }
  func.func @transform_1(%arg0: i32) -> (i32, i32) {
    %c0_i32 = arith.constant 0 : i32
    %c0_i32_0 = arith.constant 0 : i32
    %c0_i32_1 = arith.constant 0 : i32
    return %c0_i32, %c0_i32_0 : i32, i32
  }
  func.func @transform_2(%arg0: i32) -> (i32, i32, i32) {
    %c0_i32 = arith.constant 0 : i32
    %c0_i32_0 = arith.constant 0 : i32
    %c0_i32_1 = arith.constant 0 : i32
    %c0_i32_2 = arith.constant 0 : i32
    return %c0_i32, %c0_i32_0, %c0_i32_1 : i32, i32, i32
  }
  func.func @transform_3(%arg0: i32) -> (i32, i32) {
    %c0_i32 = arith.constant 0 : i32
    %c0_i32_0 = arith.constant 0 : i32
    %c0_i32_1 = arith.constant 0 : i32
    return %c0_i32, %c0_i32_0 : i32, i32
  }
  func.func @transform_4(%arg0: i32) -> (i32, i32, i32, i32) {
    %c0_i32 = arith.constant 0 : i32
    %c0_i32_0 = arith.constant 0 : i32
    %c0_i32_1 = arith.constant 0 : i32
    %c0_i32_2 = arith.constant 0 : i32
    return %arg0, %c0_i32, %c0_i32_0, %c0_i32_1 : i32, i32, i32, i32
  }
}

</mosaic_0001>

<llo_original>
// kernel: light_learning_net.1
$region0: #{light_learning_net.1}
  #allocation0 [shape = 'u32[]', space=smem, size = 0x4, offset = 0x4, fixed_abs, tag = 'smem constant byte address 0x4 - core index']
  #allocation1 [shape = 'u32[144,128]{1,0:T(1,128)}', space=vmem, size = 0x12000, scoped, tag = 'internal scratch']
  #allocation2 [shape = 'f32[18,32,128]{2,1,0:T(8,128)}', space=vmem, size = 0x48000, scoped, tag = 'scratch operand']
  #allocation3 [shape = 'bf16[256,1152]{1,0:T(16,128)(2,1)}', space=vmem, size = 0x90000, scoped, tag = 'scratch operand']
  %s0 = inlined_call_operand.vmem [shape: f32[2,18,32,128], index: 0, kind: input, shape index: {}]
  %s1 = inlined_call_operand.vmem [shape: bf16[1152,128], index: 1, kind: input, shape index: {}]
  %s2 = inlined_call_operand.vmem [shape: bf16[1,1152,128], index: 2, kind: input, shape index: {}]
  %s3 = inlined_call_operand.vmem [shape: bf16[1152,128], index: 3, kind: input, shape index: {}]
  %s4 = inlined_call_operand.vmem [shape: f32[2,16,16,128], index: 4, kind: output, shape index: {}]
  %s5 = sld [smem:[#allocation0]]
  $region49: #{light_learning_net.1} parent=0
    _
  %s7 = ssub.s32 1, %s5
  %s8 = scalar_select 0, %s7, %s5
  loop: start=0, step=1, limit=4
  $region2: #{light_learning_net.1} parent=0 // loop_pre_header
    _
  $region3: #{light_learning_net.1} parent=0 // loop_header
    %s10 = sphi 0, %s14
    %p11 = scmp.ge.s32.totalorder %s10, 4
    %s20 = sphi 0, %s22
    %s23 = sphi 0, %s20
    %s24 = sphi 0, %s23
    %s40 = sphi 0, %s24
    %s44 = sphi 0, %s44
    %s46 = sphi 0, %s44
    %s47 = sphi 0, %s46
    %s61 = sphi 0, %s47
    %s65 = sphi 0, %s65
    %s67 = sphi 0, %s65
    %s68 = sphi 0, %s67
    %s82 = sphi 0, %s68
    %s86 = sphi 0, %s86
    %s88 = sphi 0, %s86
    %s89 = sphi 0, %s88
    %s103 = sphi 0, %s89
    %s109 = sphi 0, %s111
    %s112 = sphi 0, %s109
    %s113 = sphi 0, %s112
    %s129 = sphi 0, %s113
  $region4: #{light_learning_net.1} parent=0 // loop_header_branch
    %13 = sbr.rel (%p11) target = $region8
  $region5: #{light_learning_net.1} parent=0 // loop_body
    %s15 = ssub.s32 %s10, 1
    %s16 = ssub.s32 %s10, 2
    %s17 = sadd.s32 %s10, 1
    %s18 = ssub.s32 %s10, %s17
    %p19 = scmp.eq.s32.totalorder %s18, 0
    %s21 = sadd.s32 %s20, 1
    %s22 = scalar_select %p19, %s20, %s21
    %p25 = pneg %p19
    %p26 = scmp.eq.s32.totalorder %s10, 1
    %p27 = por %p25, %p26
    %p28 = scmp.ne.s32.totalorder %s20, %s23
    %p29 = scmp.eq.s32.totalorder %s10, 0
    %p30 = por %p28, %p29
    %p31 = scmp.ne.s32.totalorder %s20, %s23
    %p32 = scmp.eq.s32.totalorder %s15, 1
    %p33 = por %p31, %p32
    %p34 = scmp.ne.s32.totalorder %s23, %s24
    %p35 = scmp.eq.s32.totalorder %s15, 0
    %p36 = por %p34, %p35
    %p37 = scmp.ne.s32.totalorder %s23, %s24
    %p38 = scmp.eq.s32.totalorder %s16, 1
    %p39 = por %p37, %p38
    %p41 = scmp.ne.s32.totalorder %s24, %s40
    %p42 = scmp.eq.s32.totalorder %s16, 0
    %p43 = por %p41, %p42
    %s45 = sadd.s32 %s44, 1
    %p48 = scmp.eq.s32.totalorder %s10, 1
    %p49 = scmp.ne.s32.totalorder %s44, %s46
    %p50 = scmp.eq.s32.totalorder %s10, 0
    %p51 = por %p49, %p50
    %p52 = scmp.ne.s32.totalorder %s44, %s46
    %p53 = scmp.eq.s32.totalorder %s15, 1
    %p54 = por %p52, %p53
    %p55 = scmp.ne.s32.totalorder %s46, %s47
    %p56 = scmp.eq.s32.totalorder %s15, 0
    %p57 = por %p55, %p56
    %p58 = scmp.ne.s32.totalorder %s46, %s47
    %p59 = scmp.eq.s32.totalorder %s16, 1
    %p60 = por %p58, %p59
    %p62 = scmp.ne.s32.totalorder %s47, %s61
    %p63 = scmp.eq.s32.totalorder %s16, 0
    %p64 = por %p62, %p63
    %s66 = sadd.s32 %s65, 1
    %p69 = scmp.eq.s32.totalorder %s10, 1
    %p70 = scmp.ne.s32.totalorder %s65, %s67
    %p71 = scmp.eq.s32.totalorder %s10, 0
    %p72 = por %p70, %p71
    %p73 = scmp.ne.s32.totalorder %s65, %s67
    %p74 = scmp.eq.s32.totalorder %s15, 1
    %p75 = por %p73, %p74
    %p76 = scmp.ne.s32.totalorder %s67, %s68
    %p77 = scmp.eq.s32.totalorder %s15, 0
    %p78 = por %p76, %p77
    %p79 = scmp.ne.s32.totalorder %s67, %s68
    %p80 = scmp.eq.s32.totalorder %s16, 1
    %p81 = por %p79, %p80
    %p83 = scmp.ne.s32.totalorder %s68, %s82
    %p84 = scmp.eq.s32.totalorder %s16, 0
    %p85 = por %p83, %p84
    %s87 = sadd.s32 %s86, 1
    %p90 = scmp.eq.s32.totalorder %s10, 1
    %p91 = scmp.ne.s32.totalorder %s86, %s88
    %p92 = scmp.eq.s32.totalorder %s10, 0
    %p93 = por %p91, %p92
    %p94 = scmp.ne.s32.totalorder %s86, %s88
    %p95 = scmp.eq.s32.totalorder %s15, 1
    %p96 = por %p94, %p95
    %p97 = scmp.ne.s32.totalorder %s88, %s89
    %p98 = scmp.eq.s32.totalorder %s15, 0
    %p99 = por %p97, %p98
    %p100 = scmp.ne.s32.totalorder %s88, %s89
    %p101 = scmp.eq.s32.totalorder %s16, 1
    %p102 = por %p100, %p101
    %p104 = scmp.ne.s32.totalorder %s89, %s103
    %p105 = scmp.eq.s32.totalorder %s16, 0
    %p106 = por %p104, %p105
    %s107 = ssub.s32 %s10, %s17
    %p108 = scmp.eq.s32.totalorder %s107, 0
    %s110 = sadd.s32 %s109, 1
    %s111 = scalar_select %p108, %s109, %s110
    %p114 = pneg %p108
    %p115 = scmp.eq.s32.totalorder %s10, 1
    %p116 = por %p114, %p115
    %p117 = scmp.ne.s32.totalorder %s109, %s112
    %p118 = scmp.eq.s32.totalorder %s10, 0
    %p119 = por %p117, %p118
    %p120 = scmp.ne.s32.totalorder %s109, %s112
    %p121 = scmp.eq.s32.totalorder %s15, 1
    %p122 = por %p120, %p121
    %p123 = scmp.ne.s32.totalorder %s112, %s113
    %p124 = scmp.eq.s32.totalorder %s15, 0
    %p125 = por %p123, %p124
    %p126 = scmp.ne.s32.totalorder %s112, %s113
    %p127 = scmp.eq.s32.totalorder %s16, 1
    %p128 = por %p126, %p127
    %p130 = scmp.ne.s32.totalorder %s113, %s129
    %p131 = scmp.eq.s32.totalorder %s16, 0
    %p132 = por %p130, %p131
    %p133 = scmp.le.s32.totalorder 1, %s10
    %p134 = scmp.lt.s32.totalorder %s10, 3
    %p135 = pnand %p133, %p134
    %p136 = pneg %p135
    // Predicated region
    $region9: #{light_learning_net.1} parent=5 // pred_check
      _
    $region10: #{light_learning_net.1} parent=5 // pred_check_branch
      %138 = sbr.rel (%p135) target = $region12
    $region11: #{light_learning_net.1} parent=5 // pred_region
      %s139 = ssub.s32 %s10, 1
      // Predicated region
      $region13: #{light_learning_net.1} parent=11 // pred_check
        %p140 = pneg %p57
      $region14: #{light_learning_net.1} parent=11 // pred_check_branch
        %142 = sbr.rel (%p140) target = $region16
      $region15: #{light_learning_net.1} parent=11 // pred_region
        _
      $region16: #{light_learning_net.1} parent=11 // pred_fallthru
        _
      // Predicated region
      $region17: #{light_learning_net.1} parent=11 // pred_check
        %p143 = pneg %p78
      $region18: #{light_learning_net.1} parent=11 // pred_check_branch
        %145 = sbr.rel (%p143) target = $region20
      $region19: #{light_learning_net.1} parent=11 // pred_region
        _
      $region20: #{light_learning_net.1} parent=11 // pred_fallthru
        _
      // Predicated region
      $region21: #{light_learning_net.1} parent=11 // pred_check
        %p146 = pneg %p99
      $region22: #{light_learning_net.1} parent=11 // pred_check_branch
        %148 = sbr.rel (%p146) target = $region24
      $region23: #{light_learning_net.1} parent=11 // pred_region
        _
      $region24: #{light_learning_net.1} parent=11 // pred_fallthru
        _
    $region12: #{light_learning_net.1} parent=5 // pred_fallthru
      _
    %p149 = scmp.lt.s32.totalorder %s10, 2
    // Predicated region
    $region25: #{light_learning_net.1} parent=5 // pred_check
      %p150 = pneg %p149
    $region26: #{light_learning_net.1} parent=5 // pred_check_branch
      %152 = sbr.rel (%p150) target = $region28
    $region27: #{light_learning_net.1} parent=5 // pred_region
      // Predicated region
      $region29: #{light_learning_net.1} parent=27 // pred_check
        %p153 = pneg %p30
      $region30: #{light_learning_net.1} parent=27 // pred_check_branch
        %155 = sbr.rel (%p153) target = $region32
      $region31: #{light_learning_net.1} parent=27 // pred_region
        %p156 = scmp.lt.s32.totalorder %s10, 1
        %s157 = scalar_select %p156, %s10, 1
        %s158 = smul.addr %s157, 72
        %s159 = smul.addr %s158, 8
        %s160 = scalar_lea.vmem %s0, %s159
      $region32: #{light_learning_net.1} parent=27 // pred_fallthru
        _
    $region28: #{light_learning_net.1} parent=5 // pred_fallthru
      _
    %p161 = scmp.le.s32.totalorder 1, %s10
    %p162 = scmp.lt.s32.totalorder %s10, 3
    %p163 = pnand %p161, %p162
    %p164 = pneg %p163
    // Predicated region
    $region33: #{light_learning_net.1} parent=5 // pred_check
      _
    $region34: #{light_learning_net.1} parent=5 // pred_check_branch
      %166 = sbr.rel (%p163) target = $region36
    $region35: #{light_learning_net.1} parent=5 // pred_region
      %s167 = ssub.s32 %s10, 1
      %p168 = scmp.lt.s32.totalorder %s15, 1
      %s169 = scalar_select %p168, %s15, 1
      %s170 = smul.addr %s169, 72
      %s171 = smul.addr %s170, 8
      %s172 = scalar_lea.vmem %s0, %s171
      %p173 = pneg %p36
      %p174 = pneg %p33
      %p175 = pneg %p57
      %p176 = pneg %p54
      %p177 = pneg %p78
      %p178 = pneg %p75
      %p179 = pneg %p99
      %p180 = pneg %p96
      %p181 = pneg %p125
      %p182 = pneg %p122
      %p183 = scmp.lt.s32.totalorder %s15, 1
      %s184 = scalar_select %p183, %s15, 1
      %s185 = smul.addr %s184, 32
      %s186 = smul.addr %s185, 8
      %s187 = scalar_lea.vmem %s4, %s186
      %p188 = scmp.lt.s32.totalorder %s15, 1
      %s189 = scalar_select %p188, %s15, 1
      %s190 = smul.addr %s189, 72
      %s191 = smul.addr %s190, 8
      %s192 = scalar_lea.vmem %s0, %s191
      %p193 = scmp.lt.s32.totalorder %s15, 1
      %s194 = scalar_select %p193, %s15, 1
      %s195 = smul.addr %s194, 32
      %s196 = smul.addr %s195, 8
      %s197 = scalar_lea.vmem %s4, %s196
      %199 = vst [vmem:[#allocation2] sm:$0xff] 0.0
      %200 = vst [vmem:[#allocation2 + $0x8] sm:$0xff] 0.0
      %201 = vst [vmem:[#allocation2 + $0x10] sm:$0xff] 0.0
      %202 = vst [vmem:[#allocation2 + $0x18] sm:$0xff] 0.0
      %s203 = scalar_lea.vmem [#allocation2], 544
      %204 = vst [vmem:[%s203] sm:$0xff] 0.0
      %205 = vst [vmem:[%s203 + $0x8] sm:$0xff] 0.0
      %206 = vst [vmem:[%s203 + $0x10] sm:$0xff] 0.0
      %207 = vst [vmem:[%s203 + $0x18] sm:$0xff] 0.0
      %s208 = scalar_lea.vmem [#allocation2], 32
      %209 = vst [vmem:[%s208] sm:$0xff] 0.0
      %210 = vst [vmem:[%s208 + $0x20] sm:$0xff] 0.0
      %211 = vst [vmem:[%s208 + $0x40] sm:$0xff] 0.0
      %212 = vst [vmem:[%s208 + $0x60] sm:$0xff] 0.0
      %213 = vst [vmem:[%s208 + $0x80] sm:$0xff] 0.0
      %214 = vst [vmem:[%s208 + $0xa0] sm:$0xff] 0.0
      %215 = vst [vmem:[%s208 + $0xc0] sm:$0xff] 0.0
      %216 = vst [vmem:[%s208 + $0xe0] sm:$0xff] 0.0
      %217 = vst [vmem:[%s208 + $0x100] sm:$0xff] 0.0
      %218 = vst [vmem:[%s208 + $0x120] sm:$0xff] 0.0
      %219 = vst [vmem:[%s208 + $0x140] sm:$0xff] 0.0
      %220 = vst [vmem:[%s208 + $0x160] sm:$0xff] 0.0
      %221 = vst [vmem:[%s208 + $0x180] sm:$0xff] 0.0
      %222 = vst [vmem:[%s208 + $0x1a0] sm:$0xff] 0.0
      %223 = vst [vmem:[%s208 + $0x1c0] sm:$0xff] 0.0
      %224 = vst [vmem:[%s208 + $0x1e0] sm:$0xff] 0.0
      %225 = vst [vmem:[%s208 + $0x18] sm:$0xff] 0.0
      %226 = vst [vmem:[%s208 + $0x38] sm:$0xff] 0.0
      %227 = vst [vmem:[%s208 + $0x58] sm:$0xff] 0.0
      %228 = vst [vmem:[%s208 + $0x78] sm:$0xff] 0.0
      %229 = vst [vmem:[%s208 + $0x98] sm:$0xff] 0.0
      %230 = vst [vmem:[%s208 + $0xb8] sm:$0xff] 0.0
      %231 = vst [vmem:[%s208 + $0xd8] sm:$0xff] 0.0
      %232 = vst [vmem:[%s208 + $0xf8] sm:$0xff] 0.0
      %233 = vst [vmem:[%s208 + $0x118] sm:$0xff] 0.0
      %234 = vst [vmem:[%s208 + $0x138] sm:$0xff] 0.0
      %235 = vst [vmem:[%s208 + $0x158] sm:$0xff] 0.0
      %236 = vst [vmem:[%s208 + $0x178] sm:$0xff] 0.0
      %237 = vst [vmem:[%s208 + $0x198] sm:$0xff] 0.0
      %238 = vst [vmem:[%s208 + $0x1b8] sm:$0xff] 0.0
      %239 = vst [vmem:[%s208 + $0x1d8] sm:$0xff] 0.0
      %240 = vst [vmem:[%s208 + $0x1f8] sm:$0xff] 0.0
      %v241 = vld [vmem:[%s192 + $0x7] sm:$0xff]
      %v242 = vld [vmem:[%s192 + $0xf] sm:$0xff]
      %v243 = vld [vmem:[%s192 + $0x27] sm:$0xff]
      %v244 = vld [vmem:[%s192 + $0x2f] sm:$0xff]
      %v245 = vld [vmem:[%s192 + $0x47] sm:$0xff]
      %v246 = vld [vmem:[%s192 + $0x4f] sm:$0xff]
      %v247 = vld [vmem:[%s192 + $0x67] sm:$0xff]
      %v248 = vld [vmem:[%s192 + $0x6f] sm:$0xff]
      %v249 = vld [vmem:[%s192 + $0x87] sm:$0xff]
      %v250 = vld [vmem:[%s192 + $0x8f] sm:$0xff]
      %v251 = vld [vmem:[%s192 + $0xa7] sm:$0xff]
      %v252 = vld [vmem:[%s192 + $0xaf] sm:$0xff]
      %v253 = vld [vmem:[%s192 + $0xc7] sm:$0xff]
      %v254 = vld [vmem:[%s192 + $0xcf] sm:$0xff]
      %v255 = vld [vmem:[%s192 + $0xe7] sm:$0xff]
      %v256 = vld [vmem:[%s192 + $0xef] sm:$0xff]
      %v257 = vld [vmem:[%s192 + $0x107] sm:$0xff]
      %v258 = vld [vmem:[%s192 + $0x10f] sm:$0xff]
      %v259 = vld [vmem:[%s192 + $0x127] sm:$0xff]
      %v260 = vld [vmem:[%s192 + $0x12f] sm:$0xff]
      %v261 = vld [vmem:[%s192 + $0x147] sm:$0xff]
      %v262 = vld [vmem:[%s192 + $0x14f] sm:$0xff]
      %v263 = vld [vmem:[%s192 + $0x167] sm:$0xff]
      %v264 = vld [vmem:[%s192 + $0x16f] sm:$0xff]
      %v265 = vld [vmem:[%s192 + $0x187] sm:$0xff]
      %v266 = vld [vmem:[%s192 + $0x18f] sm:$0xff]
      %v267 = vld [vmem:[%s192 + $0x1a7] sm:$0xff]
      %v268 = vld [vmem:[%s192 + $0x1af] sm:$0xff]
      %v269 = vld [vmem:[%s192 + $0x1c7] sm:$0xff]
      %v270 = vld [vmem:[%s192 + $0x1cf] sm:$0xff]
      %v271 = vld [vmem:[%s192 + $0x1e7] sm:$0xff]
      %v272 = vld [vmem:[%s192 + $0x1ef] sm:$0xff]
      %v273 = vpack.c.bf16 %v242, %v241
      %v274 = vpack.c.bf16 %v244, %v243
      %v275 = vpack.c.bf16 %v246, %v245
      %v276 = vpack.c.bf16 %v248, %v247
      %v277 = vpack.c.bf16 %v250, %v249
      %v278 = vpack.c.bf16 %v252, %v251
      %v279 = vpack.c.bf16 %v254, %v253
      %v280 = vpack.c.bf16 %v256, %v255
      %v281 = vpack.c.bf16 %v258, %v257
      %v282 = vpack.c.bf16 %v260, %v259
      %v283 = vpack.c.bf16 %v262, %v261
      %v284 = vpack.c.bf16 %v264, %v263
      %v285 = vpack.c.bf16 %v266, %v265
      %v286 = vpack.c.bf16 %v268, %v267
      %v287 = vpack.c.bf16 %v270, %v269
      %v288 = vpack.c.bf16 %v272, %v271
      %289 = vst [vmem:[#allocation3] sm:$0xff] %v273
      %290 = vst [vmem:[#allocation3 + $0x48] sm:$0xff] %v274
      %291 = vst [vmem:[#allocation3 + $0x90] sm:$0xff] %v275
      %292 = vst [vmem:[#allocation3 + $0xd8] sm:$0xff] %v276
      %293 = vst [vmem:[#allocation3 + $0x120] sm:$0xff] %v277
      %294 = vst [vmem:[#allocation3 + $0x168] sm:$0xff] %v278
      %295 = vst [vmem:[#allocation3 + $0x1b0] sm:$0xff] %v279
      %296 = vst [vmem:[#allocation3 + $0x1f8] sm:$0xff] %v280
      %297 = vst [vmem:[#allocation3 + $0x240] sm:$0xff] %v281
      %298 = vst [vmem:[#allocation3 + $0x288] sm:$0xff] %v282
      %299 = vst [vmem:[#allocation3 + $0x2d0] sm:$0xff] %v283
      %300 = vst [vmem:[#allocation3 + $0x318] sm:$0xff] %v284
      %301 = vst [vmem:[#allocation3 + $0x360] sm:$0xff] %v285
      %302 = vst [vmem:[#allocation3 + $0x3a8] sm:$0xff] %v286
      %303 = vst [vmem:[#allocation3 + $0x3f0] sm:$0xff] %v287
      %304 = vst [vmem:[#allocation3 + $0x438] sm:$0xff] %v288
      %v305 = vld [vmem:[%s192 + $0x8] sm:$0xff]
      %v306 = vld [vmem:[%s192 + $0x10] sm:$0xff]
      %v307 = vld [vmem:[%s192 + $0x28] sm:$0xff]
      %v308 = vld [vmem:[%s192 + $0x30] sm:$0xff]
      %v309 = vld [vmem:[%s192 + $0x48] sm:$0xff]
      %v310 = vld [vmem:[%s192 + $0x50] sm:$0xff]
      %v311 = vld [vmem:[%s192 + $0x68] sm:$0xff]
      %v312 = vld [vmem:[%s192 + $0x70] sm:$0xff]
      %v313 = vld [vmem:[%s192 + $0x88] sm:$0xff]
      %v314 = vld [vmem:[%s192 + $0x90] sm:$0xff]
      %v315 = vld [vmem:[%s192 + $0xa8] sm:$0xff]
      %v316 = vld [vmem:[%s192 + $0xb0] sm:$0xff]
      %v317 = vld [vmem:[%s192 + $0xc8] sm:$0xff]
      %v318 = vld [vmem:[%s192 + $0xd0] sm:$0xff]
      %v319 = vld [vmem:[%s192 + $0xe8] sm:$0xff]
      %v320 = vld [vmem:[%s192 + $0xf0] sm:$0xff]
      %v321 = vld [vmem:[%s192 + $0x108] sm:$0xff]
      %v322 = vld [vmem:[%s192 + $0x110] sm:$0xff]
      %v323 = vld [vmem:[%s192 + $0x128] sm:$0xff]
      %v324 = vld [vmem:[%s192 + $0x130] sm:$0xff]
      %v325 = vld [vmem:[%s192 + $0x148] sm:$0xff]
      %v326 = vld [vmem:[%s192 + $0x150] sm:$0xff]
      %v327 = vld [vmem:[%s192 + $0x168] sm:$0xff]
      %v328 = vld [vmem:[%s192 + $0x170] sm:$0xff]
      %v329 = vld [vmem:[%s192 + $0x188] sm:$0xff]
      %v330 = vld [vmem:[%s192 + $0x190] sm:$0xff]
      %v331 = vld [vmem:[%s192 + $0x1a8] sm:$0xff]
      %v332 = vld [vmem:[%s192 + $0x1b0] sm:$0xff]
      %v333 = vld [vmem:[%s192 + $0x1c8] sm:$0xff]
      %v334 = vld [vmem:[%s192 + $0x1d0] sm:$0xff]
      %v335 = vld [vmem:[%s192 + $0x1e8] sm:$0xff]
      %v336 = vld [vmem:[%s192 + $0x1f0] sm:$0xff]
      %v337 = vpack.c.bf16 %v306, %v305
      %v338 = vpack.c.bf16 %v308, %v307
      %v339 = vpack.c.bf16 %v310, %v309
      %v340 = vpack.c.bf16 %v312, %v311
      %v341 = vpack.c.bf16 %v314, %v313
      %v342 = vpack.c.bf16 %v316, %v315
      %v343 = vpack.c.bf16 %v318, %v317
      %v344 = vpack.c.bf16 %v320, %v319
      %v345 = vpack.c.bf16 %v322, %v321
      %v346 = vpack.c.bf16 %v324, %v323
      %v347 = vpack.c.bf16 %v326, %v325
      %v348 = vpack.c.bf16 %v328, %v327
      %v349 = vpack.c.bf16 %v330, %v329
      %v350 = vpack.c.bf16 %v332, %v331
      %v351 = vpack.c.bf16 %v334, %v333
      %v352 = vpack.c.bf16 %v336, %v335
      %353 = vst [vmem:[#allocation3 + $0x8] sm:$0xff] %v337
      %354 = vst [vmem:[#allocation3 + $0x50] sm:$0xff] %v338
      %355 = vst [vmem:[#allocation3 + $0x98] sm:$0xff] %v339
      %356 = vst [vmem:[#allocation3 + $0xe0] sm:$0xff] %v340
      %357 = vst [vmem:[#allocation3 + $0x128] sm:$0xff] %v341
      %358 = vst [vmem:[#allocation3 + $0x170] sm:$0xff] %v342
      %359 = vst [vmem:[#allocation3 + $0x1b8] sm:$0xff] %v343
      %360 = vst [vmem:[#allocation3 + $0x200] sm:$0xff] %v344
      %361 = vst [vmem:[#allocation3 + $0x248] sm:$0xff] %v345
      %362 = vst [vmem:[#allocation3 + $0x290] sm:$0xff] %v346
      %363 = vst [vmem:[#allocation3 + $0x2d8] sm:$0xff] %v347
      %364 = vst [vmem:[#allocation3 + $0x320] sm:$0xff] %v348
      %365 = vst [vmem:[#allocation3 + $0x368] sm:$0xff] %v349
      %366 = vst [vmem:[#allocation3 + $0x3b0] sm:$0xff] %v350
      %367 = vst [vmem:[#allocation3 + $0x3f8] sm:$0xff] %v351
      %368 = vst [vmem:[#allocation3 + $0x440] sm:$0xff] %v352
      %v369 = vld [vmem:[%s192 + $0x9] sm:$0xff]
      %v370 = vld [vmem:[%s192 + $0x11] sm:$0xff]
      %v371 = vld [vmem:[%s192 + $0x29] sm:$0xff]
      %v372 = vld [vmem:[%s192 + $0x31] sm:$0xff]
      %v373 = vld [vmem:[%s192 + $0x49] sm:$0xff]
      %v374 = vld [vmem:[%s192 + $0x51] sm:$0xff]
      %v375 = vld [vmem:[%s192 + $0x69] sm:$0xff]
      %v376 = vld [vmem:[%s192 + $0x71] sm:$0xff]
      %v377 = vld [vmem:[%s192 + $0x89] sm:$0xff]
      %v378 = vld [vmem:[%s192 + $0x91] sm:$0xff]
      %v379 = vld [vmem:[%s192 + $0xa9] sm:$0xff]
      %v380 = vld [vmem:[%s192 + $0xb1] sm:$0xff]
      %v381 = vld [vmem:[%s192 + $0xc9] sm:$0xff]
      %v382 = vld [vmem:[%s192 + $0xd1] sm:$0xff]
      %v383 = vld [vmem:[%s192 + $0xe9] sm:$0xff]
      %v384 = vld [vmem:[%s192 + $0xf1] sm:$0xff]
      %v385 = vld [vmem:[%s192 + $0x109] sm:$0xff]
      %v386 = vld [vmem:[%s192 + $0x111] sm:$0xff]
      %v387 = vld [vmem:[%s192 + $0x129] sm:$0xff]
      %v388 = vld [vmem:[%s192 + $0x131] sm:$0xff]
      %v389 = vld [vmem:[%s192 + $0x149] sm:$0xff]
      %v390 = vld [vmem:[%s192 + $0x151] sm:$0xff]
      %v391 = vld [vmem:[%s192 + $0x169] sm:$0xff]
      %v392 = vld [vmem:[%s192 + $0x171] sm:$0xff]
      %v393 = vld [vmem:[%s192 + $0x189] sm:$0xff]
      %v394 = vld [vmem:[%s192 + $0x191] sm:$0xff]
      %v395 = vld [vmem:[%s192 + $0x1a9] sm:$0xff]
      %v396 = vld [vmem:[%s192 + $0x1b1] sm:$0xff]
      %v397 = vld [vmem:[%s192 + $0x1c9] sm:$0xff]
      %v398 = vld [vmem:[%s192 + $0x1d1] sm:$0xff]
      %v399 = vld [vmem:[%s192 + $0x1e9] sm:$0xff]
      %v400 = vld [vmem:[%s192 + $0x1f1] sm:$0xff]
      %v401 = vpack.c.bf16 %v370, %v369
      %v402 = vpack.c.bf16 %v372, %v371
      %v403 = vpack.c.bf16 %v374, %v373
      %v404 = vpack.c.bf16 %v376, %v375
      %v405 = vpack.c.bf16 %v378, %v377
      %v406 = vpack.c.bf16 %v380, %v379
      %v407 = vpack.c.bf16 %v382, %v381
      %v408 = vpack.c.bf16 %v384, %v383
      %v409 = vpack.c.bf16 %v386, %v385
      %v410 = vpack.c.bf16 %v388, %v387
      %v411 = vpack.c.bf16 %v390, %v389
      %v412 = vpack.c.bf16 %v392, %v391
      %v413 = vpack.c.bf16 %v394, %v393
      %v414 = vpack.c.bf16 %v396, %v395
      %v415 = vpack.c.bf16 %v398, %v397
      %v416 = vpack.c.bf16 %v400, %v399
      %417 = vst [vmem:[#allocation3 + $0x10] sm:$0xff] %v401
      %418 = vst [vmem:[#allocation3 + $0x58] sm:$0xff] %v402
      %419 = vst [vmem:[#allocation3 + $0xa0] sm:$0xff] %v403
      %420 = vst [vmem:[#allocation3 + $0xe8] sm:$0xff] %v404
      %421 = vst [vmem:[#allocation3 + $0x130] sm:$0xff] %v405
      %422 = vst [vmem:[#allocation3 + $0x178] sm:$0xff] %v406
      %423 = vst [vmem:[#allocation3 + $0x1c0] sm:$0xff] %v407
      %424 = vst [vmem:[#allocation3 + $0x208] sm:$0xff] %v408
      %425 = vst [vmem:[#allocation3 + $0x250] sm:$0xff] %v409
      %426 = vst [vmem:[#allocation3 + $0x298] sm:$0xff] %v410
      %427 = vst [vmem:[#allocation3 + $0x2e0] sm:$0xff] %v411
      %428 = vst [vmem:[#allocation3 + $0x328] sm:$0xff] %v412
      %429 = vst [vmem:[#allocation3 + $0x370] sm:$0xff] %v413
      %430 = vst [vmem:[#allocation3 + $0x3b8] sm:$0xff] %v414
      %431 = vst [vmem:[#allocation3 + $0x400] sm:$0xff] %v415
      %432 = vst [vmem:[#allocation3 + $0x448] sm:$0xff] %v416
      %s433 = scalar_lea.vmem %s192, 32
      %v434 = vld [vmem:[%s433 + $0x7] sm:$0xff]
      %v435 = vld [vmem:[%s433 + $0xf] sm:$0xff]
      %v436 = vld [vmem:[%s433 + $0x27] sm:$0xff]
      %v437 = vld [vmem:[%s433 + $0x2f] sm:$0xff]
      %v438 = vld [vmem:[%s433 + $0x47] sm:$0xff]
      %v439 = vld [vmem:[%s433 + $0x4f] sm:$0xff]
      %v440 = vld [vmem:[%s433 + $0x67] sm:$0xff]
      %v441 = vld [vmem:[%s433 + $0x6f] sm:$0xff]
      %v442 = vld [vmem:[%s433 + $0x87] sm:$0xff]
      %v443 = vld [vmem:[%s433 + $0x8f] sm:$0xff]
      %v444 = vld [vmem:[%s433 + $0xa7] sm:$0xff]
      %v445 = vld [vmem:[%s433 + $0xaf] sm:$0xff]
      %v446 = vld [vmem:[%s433 + $0xc7] sm:$0xff]
      %v447 = vld [vmem:[%s433 + $0xcf] sm:$0xff]
      %v448 = vld [vmem:[%s433 + $0xe7] sm:$0xff]
      %v449 = vld [vmem:[%s433 + $0xef] sm:$0xff]
      %v450 = vld [vmem:[%s433 + $0x107] sm:$0xff]
      %v451 = vld [vmem:[%s433 + $0x10f] sm:$0xff]
      %v452 = vld [vmem:[%s433 + $0x127] sm:$0xff]
      %v453 = vld [vmem:[%s433 + $0x12f] sm:$0xff]
      %v454 = vld [vmem:[%s433 + $0x147] sm:$0xff]
      %v455 = vld [vmem:[%s433 + $0x14f] sm:$0xff]
      %v456 = vld [vmem:[%s433 + $0x167] sm:$0xff]
      %v457 = vld [vmem:[%s433 + $0x16f] sm:$0xff]
      %v458 = vld [vmem:[%s433 + $0x187] sm:$0xff]
      %v459 = vld [vmem:[%s433 + $0x18f] sm:$0xff]
      %v460 = vld [vmem:[%s433 + $0x1a7] sm:$0xff]
      %v461 = vld [vmem:[%s433 + $0x1af] sm:$0xff]
      %v462 = vld [vmem:[%s433 + $0x1c7] sm:$0xff]
      %v463 = vld [vmem:[%s433 + $0x1cf] sm:$0xff]
      %v464 = vld [vmem:[%s433 + $0x1e7] sm:$0xff]
      %v465 = vld [vmem:[%s433 + $0x1ef] sm:$0xff]
      %v466 = vpack.c.bf16 %v435, %v434
      %v467 = vpack.c.bf16 %v437, %v436
      %v468 = vpack.c.bf16 %v439, %v438
      %v469 = vpack.c.bf16 %v441, %v440
      %v470 = vpack.c.bf16 %v443, %v442
      %v471 = vpack.c.bf16 %v445, %v444
      %v472 = vpack.c.bf16 %v447, %v446
      %v473 = vpack.c.bf16 %v449, %v448
      %v474 = vpack.c.bf16 %v451, %v450
      %v475 = vpack.c.bf16 %v453, %v452
      %v476 = vpack.c.bf16 %v455, %v454
      %v477 = vpack.c.bf16 %v457, %v456
      %v478 = vpack.c.bf16 %v459, %v458
      %v479 = vpack.c.bf16 %v461, %v460
      %v480 = vpack.c.bf16 %v463, %v462
      %v481 = vpack.c.bf16 %v465, %v464
      %482 = vst [vmem:[#allocation3 + $0x18] sm:$0xff] %v466
      %483 = vst [vmem:[#allocation3 + $0x60] sm:$0xff] %v467
      %484 = vst [vmem:[#allocation3 + $0xa8] sm:$0xff] %v468
      %485 = vst [vmem:[#allocation3 + $0xf0] sm:$0xff] %v469
      %486 = vst [vmem:[#allocation3 + $0x138] sm:$0xff] %v470
      %487 = vst [vmem:[#allocation3 + $0x180] sm:$0xff] %v471
      %488 = vst [vmem:[#allocation3 + $0x1c8] sm:$0xff] %v472
      %489 = vst [vmem:[#allocation3 + $0x210] sm:$0xff] %v473
      %490 = vst [vmem:[#allocation3 + $0x258] sm:$0xff] %v474
      %491 = vst [vmem:[#allocation3 + $0x2a0] sm:$0xff] %v475
      %492 = vst [vmem:[#allocation3 + $0x2e8] sm:$0xff] %v476
      %493 = vst [vmem:[#allocation3 + $0x330] sm:$0xff] %v477
      %494 = vst [vmem:[#allocation3 + $0x378] sm:$0xff] %v478
      %495 = vst [vmem:[#allocation3 + $0x3c0] sm:$0xff] %v479
      %496 = vst [vmem:[#allocation3 + $0x408] sm:$0xff] %v480
      %497 = vst [vmem:[#allocation3 + $0x450] sm:$0xff] %v481
      %v498 = vld [vmem:[%s433 + $0x8] sm:$0xff]
      %v499 = vld [vmem:[%s433 + $0x10] sm:$0xff]
      %v500 = vld [vmem:[%s433 + $0x28] sm:$0xff]
      %v501 = vld [vmem:[%s433 + $0x30] sm:$0xff]
      %v502 = vld [vmem:[%s433 + $0x48] sm:$0xff]
      %v503 = vld [vmem:[%s433 + $0x50] sm:$0xff]
      %v504 = vld [vmem:[%s433 + $0x68] sm:$0xff]
      %v505 = vld [vmem:[%s433 + $0x70] sm:$0xff]
      %v506 = vld [vmem:[%s433 + $0x88] sm:$0xff]
      %v507 = vld [vmem:[%s433 + $0x90] sm:$0xff]
      %v508 = vld [vmem:[%s433 + $0xa8] sm:$0xff]
      %v509 = vld [vmem:[%s433 + $0xb0] sm:$0xff]
      %v510 = vld [vmem:[%s433 + $0xc8] sm:$0xff]
      %v511 = vld [vmem:[%s433 + $0xd0] sm:$0xff]
      %v512 = vld [vmem:[%s433 + $0xe8] sm:$0xff]
      %v513 = vld [vmem:[%s433 + $0xf0] sm:$0xff]
      %v514 = vld [vmem:[%s433 + $0x108] sm:$0xff]
      %v515 = vld [vmem:[%s433 + $0x110] sm:$0xff]
      %v516 = vld [vmem:[%s433 + $0x128] sm:$0xff]
      %v517 = vld [vmem:[%s433 + $0x130] sm:$0xff]
      %v518 = vld [vmem:[%s433 + $0x148] sm:$0xff]
      %v519 = vld [vmem:[%s433 + $0x150] sm:$0xff]
      %v520 = vld [vmem:[%s433 + $0x168] sm:$0xff]
      %v521 = vld [vmem:[%s433 + $0x170] sm:$0xff]
      %v522 = vld [vmem:[%s433 + $0x188] sm:$0xff]
      %v523 = vld [vmem:[%s433 + $0x190] sm:$0xff]
      %v524 = vld [vmem:[%s433 + $0x1a8] sm:$0xff]
      %v525 = vld [vmem:[%s433 + $0x1b0] sm:$0xff]
      %v526 = vld [vmem:[%s433 + $0x1c8] sm:$0xff]
      %v527 = vld [vmem:[%s433 + $0x1d0] sm:$0xff]
      %v528 = vld [vmem:[%s433 + $0x1e8] sm:$0xff]
      %v529 = vld [vmem:[%s433 + $0x1f0] sm:$0xff]
      %v530 = vpack.c.bf16 %v499, %v498
      %v531 = vpack.c.bf16 %v501, %v500
      %v532 = vpack.c.bf16 %v503, %v502
      %v533 = vpack.c.bf16 %v505, %v504
      %v534 = vpack.c.bf16 %v507, %v506
      %v535 = vpack.c.bf16 %v509, %v508
      %v536 = vpack.c.bf16 %v511, %v510
      %v537 = vpack.c.bf16 %v513, %v512
      %v538 = vpack.c.bf16 %v515, %v514
      %v539 = vpack.c.bf16 %v517, %v516
      %v540 = vpack.c.bf16 %v519, %v518
      %v541 = vpack.c.bf16 %v521, %v520
      %v542 = vpack.c.bf16 %v523, %v522
      %v543 = vpack.c.bf16 %v525, %v524
      %v544 = vpack.c.bf16 %v527, %v526
      %v545 = vpack.c.bf16 %v529, %v528
      %546 = vst [vmem:[#allocation3 + $0x20] sm:$0xff] %v530
      %547 = vst [vmem:[#allocation3 + $0x68] sm:$0xff] %v531
      %548 = vst [vmem:[#allocation3 + $0xb0] sm:$0xff] %v532
      %549 = vst [vmem:[#allocation3 + $0xf8] sm:$0xff] %v533
      %550 = vst [vmem:[#allocation3 + $0x140] sm:$0xff] %v534
      %551 = vst [vmem:[#allocation3 + $0x188] sm:$0xff] %v535
      %552 = vst [vmem:[#allocation3 + $0x1d0] sm:$0xff] %v536
      %553 = vst [vmem:[#allocation3 + $0x218] sm:$0xff] %v537
      %554 = vst [vmem:[#allocation3 + $0x260] sm:$0xff] %v538
      %555 = vst [vmem:[#allocation3 + $0x2a8] sm:$0xff] %v539
      %556 = vst [vmem:[#allocation3 + $0x2f0] sm:$0xff] %v540
      %557 = vst [vmem:[#allocation3 + $0x338] sm:$0xff] %v541
      %558 = vst [vmem:[#allocation3 + $0x380] sm:$0xff] %v542
      %559 = vst [vmem:[#allocation3 + $0x3c8] sm:$0xff] %v543
      %560 = vst [vmem:[#allocation3 + $0x410] sm:$0xff] %v544
      %561 = vst [vmem:[#allocation3 + $0x458] sm:$0xff] %v545
      %v562 = vld [vmem:[%s433 + $0x9] sm:$0xff]
      %v563 = vld [vmem:[%s433 + $0x11] sm:$0xff]
      %v564 = vld [vmem:[%s433 + $0x29] sm:$0xff]
      %v565 = vld [vmem:[%s433 + $0x31] sm:$0xff]
      %v566 = vld [vmem:[%s433 + $0x49] sm:$0xff]
      %v567 = vld [vmem:[%s433 + $0x51] sm:$0xff]
      %v568 = vld [vmem:[%s433 + $0x69] sm:$0xff]
      %v569 = vld [vmem:[%s433 + $0x71] sm:$0xff]
      %v570 = vld [vmem:[%s433 + $0x89] sm:$0xff]
      %v571 = vld [vmem:[%s433 + $0x91] sm:$0xff]
      %v572 = vld [vmem:[%s433 + $0xa9] sm:$0xff]
      %v573 = vld [vmem:[%s433 + $0xb1] sm:$0xff]
      %v574 = vld [vmem:[%s433 + $0xc9] sm:$0xff]
      %v575 = vld [vmem:[%s433 + $0xd1] sm:$0xff]
      %v576 = vld [vmem:[%s433 + $0xe9] sm:$0xff]
      %v577 = vld [vmem:[%s433 + $0xf1] sm:$0xff]
      %v578 = vld [vmem:[%s433 + $0x109] sm:$0xff]
      %v579 = vld [vmem:[%s433 + $0x111] sm:$0xff]
      %v580 = vld [vmem:[%s433 + $0x129] sm:$0xff]
      %v581 = vld [vmem:[%s433 + $0x131] sm:$0xff]
      %v582 = vld [vmem:[%s433 + $0x149] sm:$0xff]
      %v583 = vld [vmem:[%s433 + $0x151] sm:$0xff]
      %v584 = vld [vmem:[%s433 + $0x169] sm:$0xff]
      %v585 = vld [vmem:[%s433 + $0x171] sm:$0xff]
      %v586 = vld [vmem:[%s433 + $0x189] sm:$0xff]
      %v587 = vld [vmem:[%s433 + $0x191] sm:$0xff]
      %v588 = vld [vmem:[%s433 + $0x1a9] sm:$0xff]
      %v589 = vld [vmem:[%s433 + $0x1b1] sm:$0xff]
      %v590 = vld [vmem:[%s433 + $0x1c9] sm:$0xff]
      %v591 = vld [vmem:[%s433 + $0x1d1] sm:$0xff]
      %v592 = vld [vmem:[%s433 + $0x1e9] sm:$0xff]
      %v593 = vld [vmem:[%s433 + $0x1f1] sm:$0xff]
      %v594 = vpack.c.bf16 %v563, %v562
      %v595 = vpack.c.bf16 %v565, %v564
      %v596 = vpack.c.bf16 %v567, %v566
      %v597 = vpack.c.bf16 %v569, %v568
      %v598 = vpack.c.bf16 %v571, %v570
      %v599 = vpack.c.bf16 %v573, %v572
      %v600 = vpack.c.bf16 %v575, %v574
      %v601 = vpack.c.bf16 %v577, %v576
      %v602 = vpack.c.bf16 %v579, %v578
      %v603 = vpack.c.bf16 %v581, %v580
      %v604 = vpack.c.bf16 %v583, %v582
      %v605 = vpack.c.bf16 %v585, %v584
      %v606 = vpack.c.bf16 %v587, %v586
      %v607 = vpack.c.bf16 %v589, %v588
      %v608 = vpack.c.bf16 %v591, %v590
      %v609 = vpack.c.bf16 %v593, %v592
      %610 = vst [vmem:[#allocation3 + $0x28] sm:$0xff] %v594
      %611 = vst [vmem:[#allocation3 + $0x70] sm:$0xff] %v595
      %612 = vst [vmem:[#allocation3 + $0xb8] sm:$0xff] %v596
      %613 = vst [vmem:[#allocation3 + $0x100] sm:$0xff] %v597
      %614 = vst [vmem:[#allocation3 + $0x148] sm:$0xff] %v598
      %615 = vst [vmem:[#allocation3 + $0x190] sm:$0xff] %v599
      %616 = vst [vmem:[#allocation3 + $0x1d8] sm:$0xff] %v600
      %617 = vst [vmem:[#allocation3 + $0x220] sm:$0xff] %v601
      %618 = vst [vmem:[#allocation3 + $0x268] sm:$0xff] %v602
      %619 = vst [vmem:[#allocation3 + $0x2b0] sm:$0xff] %v603
      %620 = vst [vmem:[#allocation3 + $0x2f8] sm:$0xff] %v604
      %621 = vst [vmem:[#allocation3 + $0x340] sm:$0xff] %v605
      %622 = vst [vmem:[#allocation3 + $0x388] sm:$0xff] %v606
      %623 = vst [vmem:[#allocation3 + $0x3d0] sm:$0xff] %v607
      %624 = vst [vmem:[#allocation3 + $0x418] sm:$0xff] %v608
      %625 = vst [vmem:[#allocation3 + $0x460] sm:$0xff] %v609
      %s626 = scalar_lea.vmem %s192, 64
      %v627 = vld [vmem:[%s626 + $0x7] sm:$0xff]
      %v628 = vld [vmem:[%s626 + $0xf] sm:$0xff]
      %v629 = vld [vmem:[%s626 + $0x27] sm:$0xff]
      %v630 = vld [vmem:[%s626 + $0x2f] sm:$0xff]
      %v631 = vld [vmem:[%s626 + $0x47] sm:$0xff]
      %v632 = vld [vmem:[%s626 + $0x4f] sm:$0xff]
      %v633 = vld [vmem:[%s626 + $0x67] sm:$0xff]
      %v634 = vld [vmem:[%s626 + $0x6f] sm:$0xff]
      %v635 = vld [vmem:[%s626 + $0x87] sm:$0xff]
      %v636 = vld [vmem:[%s626 + $0x8f] sm:$0xff]
      %v637 = vld [vmem:[%s626 + $0xa7] sm:$0xff]
      %v638 = vld [vmem:[%s626 + $0xaf] sm:$0xff]
      %v639 = vld [vmem:[%s626 + $0xc7] sm:$0xff]
      %v640 = vld [vmem:[%s626 + $0xcf] sm:$0xff]
      %v641 = vld [vmem:[%s626 + $0xe7] sm:$0xff]
      %v642 = vld [vmem:[%s626 + $0xef] sm:$0xff]
      %v643 = vld [vmem:[%s626 + $0x107] sm:$0xff]
      %v644 = vld [vmem:[%s626 + $0x10f] sm:$0xff]
      %v645 = vld [vmem:[%s626 + $0x127] sm:$0xff]
      %v646 = vld [vmem:[%s626 + $0x12f] sm:$0xff]
      %v647 = vld [vmem:[%s626 + $0x147] sm:$0xff]
      %v648 = vld [vmem:[%s626 + $0x14f] sm:$0xff]
      %v649 = vld [vmem:[%s626 + $0x167] sm:$0xff]
      %v650 = vld [vmem:[%s626 + $0x16f] sm:$0xff]
      %v651 = vld [vmem:[%s626 + $0x187] sm:$0xff]
      %v652 = vld [vmem:[%s626 + $0x18f] sm:$0xff]
      %v653 = vld [vmem:[%s626 + $0x1a7] sm:$0xff]
      %v654 = vld [vmem:[%s626 + $0x1af] sm:$0xff]
      %v655 = vld [vmem:[%s626 + $0x1c7] sm:$0xff]
      %v656 = vld [vmem:[%s626 + $0x1cf] sm:$0xff]
      %v657 = vld [vmem:[%s626 + $0x1e7] sm:$0xff]
      %v658 = vld [vmem:[%s626 + $0x1ef] sm:$0xff]
      %v659 = vpack.c.bf16 %v628, %v627
      %v660 = vpack.c.bf16 %v630, %v629
      %v661 = vpack.c.bf16 %v632, %v631
      %v662 = vpack.c.bf16 %v634, %v633
      %v663 = vpack.c.bf16 %v636, %v635
      %v664 = vpack.c.bf16 %v638, %v637
      %v665 = vpack.c.bf16 %v640, %v639
      %v666 = vpack.c.bf16 %v642, %v641
      %v667 = vpack.c.bf16 %v644, %v643
      %v668 = vpack.c.bf16 %v646, %v645
      %v669 = vpack.c.bf16 %v648, %v647
      %v670 = vpack.c.bf16 %v650, %v649
      %v671 = vpack.c.bf16 %v652, %v651
      %v672 = vpack.c.bf16 %v654, %v653
      %v673 = vpack.c.bf16 %v656, %v655
      %v674 = vpack.c.bf16 %v658, %v657
      %675 = vst [vmem:[#allocation3 + $0x30] sm:$0xff] %v659
      %676 = vst [vmem:[#allocation3 + $0x78] sm:$0xff] %v660
      %677 = vst [vmem:[#allocation3 + $0xc0] sm:$0xff] %v661
      %678 = vst [vmem:[#allocation3 + $0x108] sm:$0xff] %v662
      %679 = vst [vmem:[#allocation3 + $0x150] sm:$0xff] %v663
      %680 = vst [vmem:[#allocation3 + $0x198] sm:$0xff] %v664
      %681 = vst [vmem:[#allocation3 + $0x1e0] sm:$0xff] %v665
      %682 = vst [vmem:[#allocation3 + $0x228] sm:$0xff] %v666
      %683 = vst [vmem:[#allocation3 + $0x270] sm:$0xff] %v667
      %684 = vst [vmem:[#allocation3 + $0x2b8] sm:$0xff] %v668
      %685 = vst [vmem:[#allocation3 + $0x300] sm:$0xff] %v669
      %686 = vst [vmem:[#allocation3 + $0x348] sm:$0xff] %v670
      %687 = vst [vmem:[#allocation3 + $0x390] sm:$0xff] %v671
      %688 = vst [vmem:[#allocation3 + $0x3d8] sm:$0xff] %v672
      %689 = vst [vmem:[#allocation3 + $0x420] sm:$0xff] %v673
      %690 = vst [vmem:[#allocation3 + $0x468] sm:$0xff] %v674
      %v691 = vld [vmem:[%s626 + $0x8] sm:$0xff]
      %v692 = vld [vmem:[%s626 + $0x10] sm:$0xff]
      %v693 = vld [vmem:[%s626 + $0x28] sm:$0xff]
      %v694 = vld [vmem:[%s626 + $0x30] sm:$0xff]
      %v695 = vld [vmem:[%s626 + $0x48] sm:$0xff]
      %v696 = vld [vmem:[%s626 + $0x50] sm:$0xff]
      %v697 = vld [vmem:[%s626 + $0x68] sm:$0xff]
      %v698 = vld [vmem:[%s626 + $0x70] sm:$0xff]
      %v699 = vld [vmem:[%s626 + $0x88] sm:$0xff]
      %v700 = vld [vmem:[%s626 + $0x90] sm:$0xff]
      %v701 = vld [vmem:[%s626 + $0xa8] sm:$0xff]
      %v702 = vld [vmem:[%s626 + $0xb0] sm:$0xff]
      %v703 = vld [vmem:[%s626 + $0xc8] sm:$0xff]
      %v704 = vld [vmem:[%s626 + $0xd0] sm:$0xff]
      %v705 = vld [vmem:[%s626 + $0xe8] sm:$0xff]
      %v706 = vld [vmem:[%s626 + $0xf0] sm:$0xff]
      %v707 = vld [vmem:[%s626 + $0x108] sm:$0xff]
      %v708 = vld [vmem:[%s626 + $0x110] sm:$0xff]
      %v709 = vld [vmem:[%s626 + $0x128] sm:$0xff]
      %v710 = vld [vmem:[%s626 + $0x130] sm:$0xff]
      %v711 = vld [vmem:[%s626 + $0x148] sm:$0xff]
      %v712 = vld [vmem:[%s626 + $0x150] sm:$0xff]
      %v713 = vld [vmem:[%s626 + $0x168] sm:$0xff]
      %v714 = vld [vmem:[%s626 + $0x170] sm:$0xff]
      %v715 = vld [vmem:[%s626 + $0x188] sm:$0xff]
      %v716 = vld [vmem:[%s626 + $0x190] sm:$0xff]
      %v717 = vld [vmem:[%s626 + $0x1a8] sm:$0xff]
      %v718 = vld [vmem:[%s626 + $0x1b0] sm:$0xff]
      %v719 = vld [vmem:[%s626 + $0x1c8] sm:$0xff]
      %v720 = vld [vmem:[%s626 + $0x1d0] sm:$0xff]
      %v721 = vld [vmem:[%s626 + $0x1e8] sm:$0xff]
      %v722 = vld [vmem:[%s626 + $0x1f0] sm:$0xff]
      %v723 = vpack.c.bf16 %v692, %v691
      %v724 = vpack.c.bf16 %v694, %v693
      %v725 = vpack.c.bf16 %v696, %v695
      %v726 = vpack.c.bf16 %v698, %v697
      %v727 = vpack.c.bf16 %v700, %v699
      %v728 = vpack.c.bf16 %v702, %v701
      %v729 = vpack.c.bf16 %v704, %v703
      %v730 = vpack.c.bf16 %v706, %v705
      %v731 = vpack.c.bf16 %v708, %v707
      %v732 = vpack.c.bf16 %v710, %v709
      %v733 = vpack.c.bf16 %v712, %v711
      %v734 = vpack.c.bf16 %v714, %v713
      %v735 = vpack.c.bf16 %v716, %v715
      %v736 = vpack.c.bf16 %v718, %v717
      %v737 = vpack.c.bf16 %v720, %v719
      %v738 = vpack.c.bf16 %v722, %v721
      %739 = vst [vmem:[#allocation3 + $0x38] sm:$0xff] %v723
      %740 = vst [vmem:[#allocation3 + $0x80] sm:$0xff] %v724
      %741 = vst [vmem:[#allocation3 + $0xc8] sm:$0xff] %v725
      %742 = vst [vmem:[#allocation3 + $0x110] sm:$0xff] %v726
      %743 = vst [vmem:[#allocation3 + $0x158] sm:$0xff] %v727
      %744 = vst [vmem:[#allocation3 + $0x1a0] sm:$0xff] %v728
      %745 = vst [vmem:[#allocation3 + $0x1e8] sm:$0xff] %v729
      %746 = vst [vmem:[#allocation3 + $0x230] sm:$0xff] %v730
      %747 = vst [vmem:[#allocation3 + $0x278] sm:$0xff] %v731
      %748 = vst [vmem:[#allocation3 + $0x2c0] sm:$0xff] %v732
      %749 = vst [vmem:[#allocation3 + $0x308] sm:$0xff] %v733
      %750 = vst [vmem:[#allocation3 + $0x350] sm:$0xff] %v734
      %751 = vst [vmem:[#allocation3 + $0x398] sm:$0xff] %v735
      %752 = vst [vmem:[#allocation3 + $0x3e0] sm:$0xff] %v736
      %753 = vst [vmem:[#allocation3 + $0x428] sm:$0xff] %v737
      %754 = vst [vmem:[#allocation3 + $0x470] sm:$0xff] %v738
      %v755 = vld [vmem:[%s626 + $0x9] sm:$0xff]
      %v756 = vld [vmem:[%s626 + $0x11] sm:$0xff]
      %v757 = vld [vmem:[%s626 + $0x29] sm:$0xff]
      %v758 = vld [vmem:[%s626 + $0x31] sm:$0xff]
      %v759 = vld [vmem:[%s626 + $0x49] sm:$0xff]
      %v760 = vld [vmem:[%s626 + $0x51] sm:$0xff]
      %v761 = vld [vmem:[%s626 + $0x69] sm:$0xff]
      %v762 = vld [vmem:[%s626 + $0x71] sm:$0xff]
      %v763 = vld [vmem:[%s626 + $0x89] sm:$0xff]
      %v764 = vld [vmem:[%s626 + $0x91] sm:$0xff]
      %v765 = vld [vmem:[%s626 + $0xa9] sm:$0xff]
      %v766 = vld [vmem:[%s626 + $0xb1] sm:$0xff]
      %v767 = vld [vmem:[%s626 + $0xc9] sm:$0xff]
      %v768 = vld [vmem:[%s626 + $0xd1] sm:$0xff]
      %v769 = vld [vmem:[%s626 + $0xe9] sm:$0xff]
      %v770 = vld [vmem:[%s626 + $0xf1] sm:$0xff]
      %v771 = vld [vmem:[%s626 + $0x109] sm:$0xff]
      %v772 = vld [vmem:[%s626 + $0x111] sm:$0xff]
      %v773 = vld [vmem:[%s626 + $0x129] sm:$0xff]
      %v774 = vld [vmem:[%s626 + $0x131] sm:$0xff]
      %v775 = vld [vmem:[%s626 + $0x149] sm:$0xff]
      %v776 = vld [vmem:[%s626 + $0x151] sm:$0xff]
      %v777 = vld [vmem:[%s626 + $0x169] sm:$0xff]
      %v778 = vld [vmem:[%s626 + $0x171] sm:$0xff]
      %v779 = vld [vmem:[%s626 + $0x189] sm:$0xff]
      %v780 = vld [vmem:[%s626 + $0x191] sm:$0xff]
      %v781 = vld [vmem:[%s626 + $0x1a9] sm:$0xff]
      %v782 = vld [vmem:[%s626 + $0x1b1] sm:$0xff]
      %v783 = vld [vmem:[%s626 + $0x1c9] sm:$0xff]
      %v784 = vld [vmem:[%s626 + $0x1d1] sm:$0xff]
      %v785 = vld [vmem:[%s626 + $0x1e9] sm:$0xff]
      %v786 = vld [vmem:[%s626 + $0x1f1] sm:$0xff]
      %v787 = vpack.c.bf16 %v756, %v755
      %v788 = vpack.c.bf16 %v758, %v757
      %v789 = vpack.c.bf16 %v760, %v759
      %v790 = vpack.c.bf16 %v762, %v761
      %v791 = vpack.c.bf16 %v764, %v763
      %v792 = vpack.c.bf16 %v766, %v765
      %v793 = vpack.c.bf16 %v768, %v767
      %v794 = vpack.c.bf16 %v770, %v769
      %v795 = vpack.c.bf16 %v772, %v771
      %v796 = vpack.c.bf16 %v774, %v773
      %v797 = vpack.c.bf16 %v776, %v775
      %v798 = vpack.c.bf16 %v778, %v777
      %v799 = vpack.c.bf16 %v780, %v779
      %v800 = vpack.c.bf16 %v782, %v781
      %v801 = vpack.c.bf16 %v784, %v783
      %v802 = vpack.c.bf16 %v786, %v785
      %803 = vst [vmem:[#allocation3 + $0x40] sm:$0xff] %v787
      %804 = vst [vmem:[#allocation3 + $0x88] sm:$0xff] %v788
      %805 = vst [vmem:[#allocation3 + $0xd0] sm:$0xff] %v789
      %806 = vst [vmem:[#allocation3 + $0x118] sm:$0xff] %v790
      %807 = vst [vmem:[#allocation3 + $0x160] sm:$0xff] %v791
      %808 = vst [vmem:[#allocation3 + $0x1a8] sm:$0xff] %v792
      %809 = vst [vmem:[#allocation3 + $0x1f0] sm:$0xff] %v793
      %810 = vst [vmem:[#allocation3 + $0x238] sm:$0xff] %v794
      %811 = vst [vmem:[#allocation3 + $0x280] sm:$0xff] %v795
      %812 = vst [vmem:[#allocation3 + $0x2c8] sm:$0xff] %v796
      %813 = vst [vmem:[#allocation3 + $0x310] sm:$0xff] %v797
      %814 = vst [vmem:[#allocation3 + $0x358] sm:$0xff] %v798
      %815 = vst [vmem:[#allocation3 + $0x3a0] sm:$0xff] %v799
      %816 = vst [vmem:[#allocation3 + $0x3e8] sm:$0xff] %v800
      %817 = vst [vmem:[#allocation3 + $0x430] sm:$0xff] %v801
      %818 = vst [vmem:[#allocation3 + $0x478] sm:$0xff] %v802
      %v819 = vld [vmem:[%s1] sm:$0xf]
      %v820 = vld [vmem:[%s1 + $0x4] sm:$0xf]
      %v821 = vld [vmem:[%s1 + $0x8] sm:$0xf]
      %v822 = vld [vmem:[%s1 + $0xc] sm:$0xf]
      %v823 = vld [vmem:[%s1 + $0x10] sm:$0xf]
      %v824 = vld [vmem:[%s1 + $0x14] sm:$0xf]
      %v825 = vld [vmem:[%s1 + $0x18] sm:$0xf]
      %v826 = vld [vmem:[%s1 + $0x1c] sm:$0xf]
      %v827 = vld [vmem:[%s1 + $0x20] sm:$0xf]
      %v828 = vld [vmem:[%s1 + $0x24] sm:$0xf]
      %v829 = vld [vmem:[%s1 + $0x28] sm:$0xf]
      %v830 = vld [vmem:[%s1 + $0x2c] sm:$0xf]
      %v831 = vld [vmem:[%s1 + $0x30] sm:$0xf]
      %v832 = vld [vmem:[%s1 + $0x34] sm:$0xf]
      %v833 = vld [vmem:[%s1 + $0x38] sm:$0xf]
      %v834 = vld [vmem:[%s1 + $0x3c] sm:$0xf]
      %v835 = vld [vmem:[%s1 + $0x40] sm:$0xf]
      %v836 = vld [vmem:[%s1 + $0x44] sm:$0xf]
      %v837 = vld [vmem:[%s1 + $0x48] sm:$0xf]
      %v838 = vld [vmem:[%s1 + $0x4c] sm:$0xf]
      %v839 = vld [vmem:[%s1 + $0x50] sm:$0xf]
      %v840 = vld [vmem:[%s1 + $0x54] sm:$0xf]
      %v841 = vld [vmem:[%s1 + $0x58] sm:$0xf]
      %v842 = vld [vmem:[%s1 + $0x5c] sm:$0xf]
      %v843 = vld [vmem:[%s1 + $0x60] sm:$0xf]
      %v844 = vld [vmem:[%s1 + $0x64] sm:$0xf]
      %v845 = vld [vmem:[%s1 + $0x68] sm:$0xf]
      %v846 = vld [vmem:[%s1 + $0x6c] sm:$0xf]
      %v847 = vld [vmem:[%s1 + $0x70] sm:$0xf]
      %v848 = vld [vmem:[%s1 + $0x74] sm:$0xf]
      %v849 = vld [vmem:[%s1 + $0x78] sm:$0xf]
      %v850 = vld [vmem:[%s1 + $0x7c] sm:$0xf]
      %v851 = vld [vmem:[%s1 + $0x80] sm:$0xf]
      %v852 = vld [vmem:[%s1 + $0x84] sm:$0xf]
      %v853 = vld [vmem:[%s1 + $0x88] sm:$0xf]
      %v854 = vld [vmem:[%s1 + $0x8c] sm:$0xf]
      %v855 = vld [vmem:[%s1 + $0x90] sm:$0xf]
      %v856 = vld [vmem:[%s1 + $0x94] sm:$0xf]
      %v857 = vld [vmem:[%s1 + $0x98] sm:$0xf]
      %v858 = vld [vmem:[%s1 + $0x9c] sm:$0xf]
      %v859 = vld [vmem:[%s1 + $0xa0] sm:$0xf]
      %v860 = vld [vmem:[%s1 + $0xa4] sm:$0xf]
      %v861 = vld [vmem:[%s1 + $0xa8] sm:$0xf]
      %v862 = vld [vmem:[%s1 + $0xac] sm:$0xf]
      %v863 = vld [vmem:[%s1 + $0xb0] sm:$0xf]
      %v864 = vld [vmem:[%s1 + $0xb4] sm:$0xf]
      %v865 = vld [vmem:[%s1 + $0xb8] sm:$0xf]
      %v866 = vld [vmem:[%s1 + $0xbc] sm:$0xf]
      %v867 = vld [vmem:[%s1 + $0xc0] sm:$0xf]
      %v868 = vld [vmem:[%s1 + $0xc4] sm:$0xf]
      %v869 = vld [vmem:[%s1 + $0xc8] sm:$0xf]
      %v870 = vld [vmem:[%s1 + $0xcc] sm:$0xf]
      %v871 = vld [vmem:[%s1 + $0xd0] sm:$0xf]
      %v872 = vld [vmem:[%s1 + $0xd4] sm:$0xf]
      %v873 = vld [vmem:[%s1 + $0xd8] sm:$0xf]
      %v874 = vld [vmem:[%s1 + $0xdc] sm:$0xf]
      %v875 = vld [vmem:[%s1 + $0xe0] sm:$0xf]
      %v876 = vld [vmem:[%s1 + $0xe4] sm:$0xf]
      %v877 = vld [vmem:[%s1 + $0xe8] sm:$0xf]
      %v878 = vld [vmem:[%s1 + $0xec] sm:$0xf]
      %v879 = vld [vmem:[%s1 + $0xf0] sm:$0xf]
      %v880 = vld [vmem:[%s1 + $0xf4] sm:$0xf]
      %v881 = vld [vmem:[%s1 + $0xf8] sm:$0xf]
      %v882 = vld [vmem:[%s1 + $0xfc] sm:$0xf]
      %v883 = vld [vmem:[%s1 + $0x100] sm:$0xf]
      %v884 = vld [vmem:[%s1 + $0x104] sm:$0xf]
      %v885 = vld [vmem:[%s1 + $0x108] sm:$0xf]
      %v886 = vld [vmem:[%s1 + $0x10c] sm:$0xf]
      %v887 = vld [vmem:[%s1 + $0x110] sm:$0xf]
      %v888 = vld [vmem:[%s1 + $0x114] sm:$0xf]
      %v889 = vld [vmem:[%s1 + $0x118] sm:$0xf]
      %v890 = vld [vmem:[%s1 + $0x11c] sm:$0xf]
      %v891 = vld [vmem:[%s1 + $0x120] sm:$0xf]
      %v892 = vld [vmem:[%s1 + $0x124] sm:$0xf]
      %v893 = vld [vmem:[%s1 + $0x128] sm:$0xf]
      %v894 = vld [vmem:[%s1 + $0x12c] sm:$0xf]
      %v895 = vld [vmem:[%s1 + $0x130] sm:$0xf]
      %v896 = vld [vmem:[%s1 + $0x134] sm:$0xf]
      %v897 = vld [vmem:[%s1 + $0x138] sm:$0xf]
      %v898 = vld [vmem:[%s1 + $0x13c] sm:$0xf]
      %v899 = vld [vmem:[%s1 + $0x140] sm:$0xf]
      %v900 = vld [vmem:[%s1 + $0x144] sm:$0xf]
      %v901 = vld [vmem:[%s1 + $0x148] sm:$0xf]
      %v902 = vld [vmem:[%s1 + $0x14c] sm:$0xf]
      %v903 = vld [vmem:[%s1 + $0x150] sm:$0xf]
      %v904 = vld [vmem:[%s1 + $0x154] sm:$0xf]
      %v905 = vld [vmem:[%s1 + $0x158] sm:$0xf]
      %v906 = vld [vmem:[%s1 + $0x15c] sm:$0xf]
      %v907 = vld [vmem:[%s1 + $0x160] sm:$0xf]
      %v908 = vld [vmem:[%s1 + $0x164] sm:$0xf]
      %v909 = vld [vmem:[%s1 + $0x168] sm:$0xf]
      %v910 = vld [vmem:[%s1 + $0x16c] sm:$0xf]
      %v911 = vld [vmem:[%s1 + $0x170] sm:$0xf]
      %v912 = vld [vmem:[%s1 + $0x174] sm:$0xf]
      %v913 = vld [vmem:[%s1 + $0x178] sm:$0xf]
      %v914 = vld [vmem:[%s1 + $0x17c] sm:$0xf]
      %v915 = vld [vmem:[%s1 + $0x180] sm:$0xf]
      %v916 = vld [vmem:[%s1 + $0x184] sm:$0xf]
      %v917 = vld [vmem:[%s1 + $0x188] sm:$0xf]
      %v918 = vld [vmem:[%s1 + $0x18c] sm:$0xf]
      %v919 = vld [vmem:[%s1 + $0x190] sm:$0xf]
      %v920 = vld [vmem:[%s1 + $0x194] sm:$0xf]
      %v921 = vld [vmem:[%s1 + $0x198] sm:$0xf]
      %v922 = vld [vmem:[%s1 + $0x19c] sm:$0xf]
      %v923 = vld [vmem:[%s1 + $0x1a0] sm:$0xf]
      %v924 = vld [vmem:[%s1 + $0x1a4] sm:$0xf]
      %v925 = vld [vmem:[%s1 + $0x1a8] sm:$0xf]
      %v926 = vld [vmem:[%s1 + $0x1ac] sm:$0xf]
      %v927 = vld [vmem:[%s1 + $0x1b0] sm:$0xf]
      %v928 = vld [vmem:[%s1 + $0x1b4] sm:$0xf]
      %v929 = vld [vmem:[%s1 + $0x1b8] sm:$0xf]
      %v930 = vld [vmem:[%s1 + $0x1bc] sm:$0xf]
      %v931 = vld [vmem:[%s1 + $0x1c0] sm:$0xf]
      %v932 = vld [vmem:[%s1 + $0x1c4] sm:$0xf]
      %v933 = vld [vmem:[%s1 + $0x1c8] sm:$0xf]
      %v934 = vld [vmem:[%s1 + $0x1cc] sm:$0xf]
      %v935 = vld [vmem:[%s1 + $0x1d0] sm:$0xf]
      %v936 = vld [vmem:[%s1 + $0x1d4] sm:$0xf]
      %v937 = vld [vmem:[%s1 + $0x1d8] sm:$0xf]
      %v938 = vld [vmem:[%s1 + $0x1dc] sm:$0xf]
      %v939 = vld [vmem:[%s1 + $0x1e0] sm:$0xf]
      %v940 = vld [vmem:[%s1 + $0x1e4] sm:$0xf]
      %v941 = vld [vmem:[%s1 + $0x1e8] sm:$0xf]
      %v942 = vld [vmem:[%s1 + $0x1ec] sm:$0xf]
      %v943 = vld [vmem:[%s1 + $0x1f0] sm:$0xf]
      %v944 = vld [vmem:[%s1 + $0x1f4] sm:$0xf]
      %v945 = vld [vmem:[%s1 + $0x1f8] sm:$0xf]
      %v946 = vld [vmem:[%s1 + $0x1fc] sm:$0xf]
      %v947 = vld [vmem:[%s1 + $0x200] sm:$0xf]
      %v948 = vld [vmem:[%s1 + $0x204] sm:$0xf]
      %v949 = vld [vmem:[%s1 + $0x208] sm:$0xf]
      %v950 = vld [vmem:[%s1 + $0x20c] sm:$0xf]
      %v951 = vld [vmem:[%s1 + $0x210] sm:$0xf]
      %v952 = vld [vmem:[%s1 + $0x214] sm:$0xf]
      %v953 = vld [vmem:[%s1 + $0x218] sm:$0xf]
      %v954 = vld [vmem:[%s1 + $0x21c] sm:$0xf]
      %v955 = vld [vmem:[%s1 + $0x220] sm:$0xf]
      %v956 = vld [vmem:[%s1 + $0x224] sm:$0xf]
      %v957 = vld [vmem:[%s1 + $0x228] sm:$0xf]
      %v958 = vld [vmem:[%s1 + $0x22c] sm:$0xf]
      %v959 = vld [vmem:[%s1 + $0x230] sm:$0xf]
      %v960 = vld [vmem:[%s1 + $0x234] sm:$0xf]
      %v961 = vld [vmem:[%s1 + $0x238] sm:$0xf]
      %v962 = vld [vmem:[%s1 + $0x23c] sm:$0xf]
      %v963 = vld [vmem:[#allocation3] sm:$0xff]
      %v964 = vld [vmem:[#allocation3 + $0x8] sm:$0xff]
      %v965 = vld [vmem:[#allocation3 + $0x10] sm:$0xff]
      %v966 = vld [vmem:[#allocation3 + $0x18] sm:$0xff]
      %v967 = vld [vmem:[#allocation3 + $0x20] sm:$0xff]
      %v968 = vld [vmem:[#allocation3 + $0x28] sm:$0xff]
      %v969 = vld [vmem:[#allocation3 + $0x30] sm:$0xff]
      %v970 = vld [vmem:[#allocation3 + $0x38] sm:$0xff]
      %v971 = vld [vmem:[#allocation3 + $0x40] sm:$0xff]
      %v972 = vld [vmem:[#allocation3 + $0x48] sm:$0xff]
      %v973 = vld [vmem:[#allocation3 + $0x50] sm:$0xff]
      %v974 = vld [vmem:[#allocation3 + $0x58] sm:$0xff]
      %v975 = vld [vmem:[#allocation3 + $0x60] sm:$0xff]
      %v976 = vld [vmem:[#allocation3 + $0x68] sm:$0xff]
      %v977 = vld [vmem:[#allocation3 + $0x70] sm:$0xff]
      %v978 = vld [vmem:[#allocation3 + $0x78] sm:$0xff]
      %v979 = vld [vmem:[#allocation3 + $0x80] sm:$0xff]
      %v980 = vld [vmem:[#allocation3 + $0x88] sm:$0xff]
      %v981 = vld [vmem:[#allocation3 + $0x90] sm:$0xff]
      %v982 = vld [vmem:[#allocation3 + $0x98] sm:$0xff]
      %v983 = vld [vmem:[#allocation3 + $0xa0] sm:$0xff]
      %v984 = vld [vmem:[#allocation3 + $0xa8] sm:$0xff]
      %v985 = vld [vmem:[#allocation3 + $0xb0] sm:$0xff]
      %v986 = vld [vmem:[#allocation3 + $0xb8] sm:$0xff]
      %v987 = vld [vmem:[#allocation3 + $0xc0] sm:$0xff]
      %v988 = vld [vmem:[#allocation3 + $0xc8] sm:$0xff]
      %v989 = vld [vmem:[#allocation3 + $0xd0] sm:$0xff]
      %v990 = vld [vmem:[#allocation3 + $0xd8] sm:$0xff]
      %v991 = vld [vmem:[#allocation3 + $0xe0] sm:$0xff]
      %v992 = vld [vmem:[#allocation3 + $0xe8] sm:$0xff]
      %v993 = vld [vmem:[#allocation3 + $0xf0] sm:$0xff]
      %v994 = vld [vmem:[#allocation3 + $0xf8] sm:$0xff]
      %v995 = vld [vmem:[#allocation3 + $0x100] sm:$0xff]
      %v996 = vld [vmem:[#allocation3 + $0x108] sm:$0xff]
      %v997 = vld [vmem:[#allocation3 + $0x110] sm:$0xff]
      %v998 = vld [vmem:[#allocation3 + $0x118] sm:$0xff]
      %v999 = vld [vmem:[#allocation3 + $0x120] sm:$0xff]
      %v1000 = vld [vmem:[#allocation3 + $0x128] sm:$0xff]
      %v1001 = vld [vmem:[#allocation3 + $0x130] sm:$0xff]
      %v1002 = vld [vmem:[#allocation3 + $0x138] sm:$0xff]
      %v1003 = vld [vmem:[#allocation3 + $0x140] sm:$0xff]
      %v1004 = vld [vmem:[#allocation3 + $0x148] sm:$0xff]
      %v1005 = vld [vmem:[#allocation3 + $0x150] sm:$0xff]
      %v1006 = vld [vmem:[#allocation3 + $0x158] sm:$0xff]
      %v1007 = vld [vmem:[#allocation3 + $0x160] sm:$0xff]
      %v1008 = vld [vmem:[#allocation3 + $0x168] sm:$0xff]
      %v1009 = vld [vmem:[#allocation3 + $0x170] sm:$0xff]
      %v1010 = vld [vmem:[#allocation3 + $0x178] sm:$0xff]
      %v1011 = vld [vmem:[#allocation3 + $0x180] sm:$0xff]
      %v1012 = vld [vmem:[#allocation3 + $0x188] sm:$0xff]
      %v1013 = vld [vmem:[#allocation3 + $0x190] sm:$0xff]
      %v1014 = vld [vmem:[#allocation3 + $0x198] sm:$0xff]
      %v1015 = vld [vmem:[#allocation3 + $0x1a0] sm:$0xff]
      %v1016 = vld [vmem:[#allocation3 + $0x1a8] sm:$0xff]
      %v1017 = vld [vmem:[#allocation3 + $0x1b0] sm:$0xff]
      %v1018 = vld [vmem:[#allocation3 + $0x1b8] sm:$0xff]
      %v1019 = vld [vmem:[#allocation3 + $0x1c0] sm:$0xff]
      %v1020 = vld [vmem:[#allocation3 + $0x1c8] sm:$0xff]
      %v1021 = vld [vmem:[#allocation3 + $0x1d0] sm:$0xff]
      %v1022 = vld [vmem:[#allocation3 + $0x1d8] sm:$0xff]
      %v1023 = vld [vmem:[#allocation3 + $0x1e0] sm:$0xff]
      %v1024 = vld [vmem:[#allocation3 + $0x1e8] sm:$0xff]
      %v1025 = vld [vmem:[#allocation3 + $0x1f0] sm:$0xff]
      %v1026 = vld [vmem:[#allocation3 + $0x1f8] sm:$0xff]
      %v1027 = vld [vmem:[#allocation3 + $0x200] sm:$0xff]
      %v1028 = vld [vmem:[#allocation3 + $0x208] sm:$0xff]
      %v1029 = vld [vmem:[#allocation3 + $0x210] sm:$0xff]
      %v1030 = vld [vmem:[#allocation3 + $0x218] sm:$0xff]
      %v1031 = vld [vmem:[#allocation3 + $0x220] sm:$0xff]
      %v1032 = vld [vmem:[#allocation3 + $0x228] sm:$0xff]
      %v1033 = vld [vmem:[#allocation3 + $0x230] sm:$0xff]
      %v1034 = vld [vmem:[#allocation3 + $0x238] sm:$0xff]
      %v1035 = vld [vmem:[#allocation3 + $0x240] sm:$0xff]
      %v1036 = vld [vmem:[#allocation3 + $0x248] sm:$0xff]
      %v1037 = vld [vmem:[#allocation3 + $0x250] sm:$0xff]
      %v1038 = vld [vmem:[#allocation3 + $0x258] sm:$0xff]
      %v1039 = vld [vmem:[#allocation3 + $0x260] sm:$0xff]
      %v1040 = vld [vmem:[#allocation3 + $0x268] sm:$0xff]
      %v1041 = vld [vmem:[#allocation3 + $0x270] sm:$0xff]
      %v1042 = vld [vmem:[#allocation3 + $0x278] sm:$0xff]
      %v1043 = vld [vmem:[#allocation3 + $0x280] sm:$0xff]
      %v1044 = vld [vmem:[#allocation3 + $0x288] sm:$0xff]
      %v1045 = vld [vmem:[#allocation3 + $0x290] sm:$0xff]
      %v1046 = vld [vmem:[#allocation3 + $0x298] sm:$0xff]
      %v1047 = vld [vmem:[#allocation3 + $0x2a0] sm:$0xff]
      %v1048 = vld [vmem:[#allocation3 + $0x2a8] sm:$0xff]
      %v1049 = vld [vmem:[#allocation3 + $0x2b0] sm:$0xff]
      %v1050 = vld [vmem:[#allocation3 + $0x2b8] sm:$0xff]
      %v1051 = vld [vmem:[#allocation3 + $0x2c0] sm:$0xff]
      %v1052 = vld [vmem:[#allocation3 + $0x2c8] sm:$0xff]
      %v1053 = vld [vmem:[#allocation3 + $0x2d0] sm:$0xff]
      %v1054 = vld [vmem:[#allocation3 + $0x2d8] sm:$0xff]
      %v1055 = vld [vmem:[#allocation3 + $0x2e0] sm:$0xff]
      %v1056 = vld [vmem:[#allocation3 + $0x2e8] sm:$0xff]
      %v1057 = vld [vmem:[#allocation3 + $0x2f0] sm:$0xff]
      %v1058 = vld [vmem:[#allocation3 + $0x2f8] sm:$0xff]
      %v1059 = vld [vmem:[#allocation3 + $0x300] sm:$0xff]
      %v1060 = vld [vmem:[#allocation3 + $0x308] sm:$0xff]
      %v1061 = vld [vmem:[#allocation3 + $0x310] sm:$0xff]
      %v1062 = vld [vmem:[#allocation3 + $0x318] sm:$0xff]
      %v1063 = vld [vmem:[#allocation3 + $0x320] sm:$0xff]
      %v1064 = vld [vmem:[#allocation3 + $0x328] sm:$0xff]
      %v1065 = vld [vmem:[#allocation3 + $0x330] sm:$0xff]
      %v1066 = vld [vmem:[#allocation3 + $0x338] sm:$0xff]
      %v1067 = vld [vmem:[#allocation3 + $0x340] sm:$0xff]
      %v1068 = vld [vmem:[#allocation3 + $0x348] sm:$0xff]
      %v1069 = vld [vmem:[#allocation3 + $0x350] sm:$0xff]
      %v1070 = vld [vmem:[#allocation3 + $0x358] sm:$0xff]
      %v1071 = vld [vmem:[#allocation3 + $0x360] sm:$0xff]
      %v1072 = vld [vmem:[#allocation3 + $0x368] sm:$0xff]
      %v1073 = vld [vmem:[#allocation3 + $0x370] sm:$0xff]
      %v1074 = vld [vmem:[#allocation3 + $0x378] sm:$0xff]
      %v1075 = vld [vmem:[#allocation3 + $0x380] sm:$0xff]
      %v1076 = vld [vmem:[#allocation3 + $0x388] sm:$0xff]
      %v1077 = vld [vmem:[#allocation3 + $0x390] sm:$0xff]
      %v1078 = vld [vmem:[#allocation3 + $0x398] sm:$0xff]
      %v1079 = vld [vmem:[#allocation3 + $0x3a0] sm:$0xff]
      %v1080 = vld [vmem:[#allocation3 + $0x3a8] sm:$0xff]
      %v1081 = vld [vmem:[#allocation3 + $0x3b0] sm:$0xff]
      %v1082 = vld [vmem:[#allocation3 + $0x3b8] sm:$0xff]
      %v1083 = vld [vmem:[#allocation3 + $0x3c0] sm:$0xff]
      %v1084 = vld [vmem:[#allocation3 + $0x3c8] sm:$0xff]
      %v1085 = vld [vmem:[#allocation3 + $0x3d0] sm:$0xff]
      %v1086 = vld [vmem:[#allocation3 + $0x3d8] sm:$0xff]
      %v1087 = vld [vmem:[#allocation3 + $0x3e0] sm:$0xff]
      %v1088 = vld [vmem:[#allocation3 + $0x3e8] sm:$0xff]
      %v1089 = vld [vmem:[#allocation3 + $0x3f0] sm:$0xff]
      %v1090 = vld [vmem:[#allocation3 + $0x3f8] sm:$0xff]
      %v1091 = vld [vmem:[#allocation3 + $0x400] sm:$0xff]
      %v1092 = vld [vmem:[#allocation3 + $0x408] sm:$0xff]
      %v1093 = vld [vmem:[#allocation3 + $0x410] sm:$0xff]
      %v1094 = vld [vmem:[#allocation3 + $0x418] sm:$0xff]
      %v1095 = vld [vmem:[#allocation3 + $0x420] sm:$0xff]
      %v1096 = vld [vmem:[#allocation3 + $0x428] sm:$0xff]
      %v1097 = vld [vmem:[#allocation3 + $0x430] sm:$0xff]
      %v1098 = vld [vmem:[#allocation3 + $0x438] sm:$0xff]
      %v1099 = vld [vmem:[#allocation3 + $0x440] sm:$0xff]
      %v1100 = vld [vmem:[#allocation3 + $0x448] sm:$0xff]
      %v1101 = vld [vmem:[#allocation3 + $0x450] sm:$0xff]
      %v1102 = vld [vmem:[#allocation3 + $0x458] sm:$0xff]
      %v1103 = vld [vmem:[#allocation3 + $0x460] sm:$0xff]
      %v1104 = vld [vmem:[#allocation3 + $0x468] sm:$0xff]
      %v1105 = vld [vmem:[#allocation3 + $0x470] sm:$0xff]
      %v1106 = vld [vmem:[#allocation3 + $0x478] sm:$0xff]
      %v1251 = vunpack.c.l.b16 %v819
      %v1252 = vunpack.c.l.b16 %v820
      %v1253 = vunpack.c.l.b16 %v821
      %v1254 = vunpack.c.l.b16 %v822
      %v1255 = vunpack.c.l.b16 %v823
      %v1256 = vunpack.c.l.b16 %v824
      %v1257 = vunpack.c.l.b16 %v825
      %v1258 = vunpack.c.l.b16 %v826
      %v1259 = vunpack.c.l.b16 %v827
      %v1260 = vunpack.c.l.b16 %v828
      %v1261 = vunpack.c.l.b16 %v829
      %v1262 = vunpack.c.l.b16 %v830
      %v1263 = vunpack.c.l.b16 %v831
      %v1264 = vunpack.c.l.b16 %v832
      %v1265 = vunpack.c.l.b16 %v833
      %v1266 = vunpack.c.l.b16 %v834
      %v1267 = vunpack.c.l.b16 %v835
      %v1268 = vunpack.c.l.b16 %v836
      %v1269 = vunpack.c.l.b16 %v837
      %v1270 = vunpack.c.l.b16 %v838
      %v1271 = vunpack.c.l.b16 %v839
      %v1272 = vunpack.c.l.b16 %v840
      %v1273 = vunpack.c.l.b16 %v841
      %v1274 = vunpack.c.l.b16 %v842
      %v1275 = vunpack.c.l.b16 %v843
      %v1276 = vunpack.c.l.b16 %v844
      %v1277 = vunpack.c.l.b16 %v845
      %v1278 = vunpack.c.l.b16 %v846
      %v1279 = vunpack.c.l.b16 %v847
      %v1280 = vunpack.c.l.b16 %v848
      %v1281 = vunpack.c.l.b16 %v849
      %v1282 = vunpack.c.l.b16 %v850
      %v1283 = vunpack.c.l.b16 %v851
      %v1284 = vunpack.c.l.b16 %v852
      %v1285 = vunpack.c.l.b16 %v853
      %v1286 = vunpack.c.l.b16 %v854
      %v1287 = vunpack.c.l.b16 %v855
      %v1288 = vunpack.c.l.b16 %v856
      %v1289 = vunpack.c.l.b16 %v857
      %v1290 = vunpack.c.l.b16 %v858
      %v1291 = vunpack.c.l.b16 %v859
      %v1292 = vunpack.c.l.b16 %v860
      %v1293 = vunpack.c.l.b16 %v861
      %v1294 = vunpack.c.l.b16 %v862
      %v1295 = vunpack.c.l.b16 %v863
      %v1296 = vunpack.c.l.b16 %v864
      %v1297 = vunpack.c.l.b16 %v865
      %v1298 = vunpack.c.l.b16 %v866
      %v1299 = vunpack.c.l.b16 %v867
      %v1300 = vunpack.c.l.b16 %v868
      %v1301 = vunpack.c.l.b16 %v869
      %v1302 = vunpack.c.l.b16 %v870
      %v1303 = vunpack.c.l.b16 %v871
      %v1304 = vunpack.c.l.b16 %v872
      %v1305 = vunpack.c.l.b16 %v873
      %v1306 = vunpack.c.l.b16 %v874
      %v1307 = vunpack.c.l.b16 %v875
      %v1308 = vunpack.c.l.b16 %v876
      %v1309 = vunpack.c.l.b16 %v877
      %v1310 = vunpack.c.l.b16 %v878
      %v1311 = vunpack.c.l.b16 %v879
      %v1312 = vunpack.c.l.b16 %v880
      %v1313 = vunpack.c.l.b16 %v881
      %v1314 = vunpack.c.l.b16 %v882
      %v1315 = vunpack.c.l.b16 %v883
      %v1316 = vunpack.c.l.b16 %v884
      %v1317 = vunpack.c.l.b16 %v885
      %v1318 = vunpack.c.l.b16 %v886
      %v1319 = vunpack.c.l.b16 %v887
      %v1320 = vunpack.c.l.b16 %v888
      %v1321 = vunpack.c.l.b16 %v889
      %v1322 = vunpack.c.l.b16 %v890
      %v1323 = vunpack.c.l.b16 %v891
      %v1324 = vunpack.c.l.b16 %v892
      %v1325 = vunpack.c.l.b16 %v893
      %v1326 = vunpack.c.l.b16 %v894
      %v1327 = vunpack.c.l.b16 %v895
      %v1328 = vunpack.c.l.b16 %v896
      %v1329 = vunpack.c.l.b16 %v897
      %v1330 = vunpack.c.l.b16 %v898
      %v1331 = vunpack.c.l.b16 %v899
      %v1332 = vunpack.c.l.b16 %v900
      %v1333 = vunpack.c.l.b16 %v901
      %v1334 = vunpack.c.l.b16 %v902
      %v1335 = vunpack.c.l.b16 %v903
      %v1336 = vunpack.c.l.b16 %v904
      %v1337 = vunpack.c.l.b16 %v905
      %v1338 = vunpack.c.l.b16 %v906
      %v1339 = vunpack.c.l.b16 %v907
      %v1340 = vunpack.c.l.b16 %v908
      %v1341 = vunpack.c.l.b16 %v909
      %v1342 = vunpack.c.l.b16 %v910
      %v1343 = vunpack.c.l.b16 %v911
      %v1344 = vunpack.c.l.b16 %v912
      %v1345 = vunpack.c.l.b16 %v913
      %v1346 = vunpack.c.l.b16 %v914
      %v1347 = vunpack.c.l.b16 %v915
      %v1348 = vunpack.c.l.b16 %v916
      %v1349 = vunpack.c.l.b16 %v917
      %v1350 = vunpack.c.l.b16 %v918
      %v1351 = vunpack.c.l.b16 %v919
      %v1352 = vunpack.c.l.b16 %v920
      %v1353 = vunpack.c.l.b16 %v921
      %v1354 = vunpack.c.l.b16 %v922
      %v1355 = vunpack.c.l.b16 %v923
      %v1356 = vunpack.c.l.b16 %v924
      %v1357 = vunpack.c.l.b16 %v925
      %v1358 = vunpack.c.l.b16 %v926
      %v1359 = vunpack.c.l.b16 %v927
      %v1360 = vunpack.c.l.b16 %v928
      %v1361 = vunpack.c.l.b16 %v929
      %v1362 = vunpack.c.l.b16 %v930
      %v1363 = vunpack.c.l.b16 %v931
      %v1364 = vunpack.c.l.b16 %v932
      %v1365 = vunpack.c.l.b16 %v933
      %v1366 = vunpack.c.l.b16 %v934
      %v1367 = vunpack.c.l.b16 %v935
      %v1368 = vunpack.c.l.b16 %v936
      %v1369 = vunpack.c.l.b16 %v937
      %v1370 = vunpack.c.l.b16 %v938
      %v1371 = vunpack.c.l.b16 %v939
      %v1372 = vunpack.c.l.b16 %v940
      %v1373 = vunpack.c.l.b16 %v941
      %v1374 = vunpack.c.l.b16 %v942
      %v1375 = vunpack.c.l.b16 %v943
      %v1376 = vunpack.c.l.b16 %v944
      %v1377 = vunpack.c.l.b16 %v945
      %v1378 = vunpack.c.l.b16 %v946
      %v1379 = vunpack.c.l.b16 %v947
      %v1380 = vunpack.c.l.b16 %v948
      %v1381 = vunpack.c.l.b16 %v949
      %v1382 = vunpack.c.l.b16 %v950
      %v1383 = vunpack.c.l.b16 %v951
      %v1384 = vunpack.c.l.b16 %v952
      %v1385 = vunpack.c.l.b16 %v953
      %v1386 = vunpack.c.l.b16 %v954
      %v1387 = vunpack.c.l.b16 %v955
      %v1388 = vunpack.c.l.b16 %v956
      %v1389 = vunpack.c.l.b16 %v957
      %v1390 = vunpack.c.l.b16 %v958
      %v1391 = vunpack.c.l.b16 %v959
      %v1392 = vunpack.c.l.b16 %v960
      %v1393 = vunpack.c.l.b16 %v961
      %v1394 = vunpack.c.l.b16 %v962
      %v1395 = vpack.c.b16 %v1252, %v1251
      %v1396 = vpack.c.b16 %v1254, %v1253
      %v1397 = vpack.c.b16 %v1256, %v1255
      %v1398 = vpack.c.b16 %v1258, %v1257
      %v1399 = vpack.c.b16 %v1260, %v1259
      %v1400 = vpack.c.b16 %v1262, %v1261
      %v1401 = vpack.c.b16 %v1264, %v1263
      %v1402 = vpack.c.b16 %v1266, %v1265
      %v1403 = vpack.c.b16 %v1268, %v1267
      %v1404 = vpack.c.b16 %v1270, %v1269
      %v1405 = vpack.c.b16 %v1272, %v1271
      %v1406 = vpack.c.b16 %v1274, %v1273
      %v1407 = vpack.c.b16 %v1276, %v1275
      %v1408 = vpack.c.b16 %v1278, %v1277
      %v1409 = vpack.c.b16 %v1280, %v1279
      %v1410 = vpack.c.b16 %v1282, %v1281
      %v1411 = vpack.c.b16 %v1284, %v1283
      %v1412 = vpack.c.b16 %v1286, %v1285
      %v1413 = vpack.c.b16 %v1288, %v1287
      %v1414 = vpack.c.b16 %v1290, %v1289
      %v1415 = vpack.c.b16 %v1292, %v1291
      %v1416 = vpack.c.b16 %v1294, %v1293
      %v1417 = vpack.c.b16 %v1296, %v1295
      %v1418 = vpack.c.b16 %v1298, %v1297
      %v1419 = vpack.c.b16 %v1300, %v1299
      %v1420 = vpack.c.b16 %v1302, %v1301
      %v1421 = vpack.c.b16 %v1304, %v1303
      %v1422 = vpack.c.b16 %v1306, %v1305
      %v1423 = vpack.c.b16 %v1308, %v1307
      %v1424 = vpack.c.b16 %v1310, %v1309
      %v1425 = vpack.c.b16 %v1312, %v1311
      %v1426 = vpack.c.b16 %v1314, %v1313
      %v1427 = vpack.c.b16 %v1316, %v1315
      %v1428 = vpack.c.b16 %v1318, %v1317
      %v1429 = vpack.c.b16 %v1320, %v1319
      %v1430 = vpack.c.b16 %v1322, %v1321
      %v1431 = vpack.c.b16 %v1324, %v1323
      %v1432 = vpack.c.b16 %v1326, %v1325
      %v1433 = vpack.c.b16 %v1328, %v1327
      %v1434 = vpack.c.b16 %v1330, %v1329
      %v1435 = vpack.c.b16 %v1332, %v1331
      %v1436 = vpack.c.b16 %v1334, %v1333
      %v1437 = vpack.c.b16 %v1336, %v1335
      %v1438 = vpack.c.b16 %v1338, %v1337
      %v1439 = vpack.c.b16 %v1340, %v1339
      %v1440 = vpack.c.b16 %v1342, %v1341
      %v1441 = vpack.c.b16 %v1344, %v1343
      %v1442 = vpack.c.b16 %v1346, %v1345
      %v1443 = vpack.c.b16 %v1348, %v1347
      %v1444 = vpack.c.b16 %v1350, %v1349
      %v1445 = vpack.c.b16 %v1352, %v1351
      %v1446 = vpack.c.b16 %v1354, %v1353
      %v1447 = vpack.c.b16 %v1356, %v1355
      %v1448 = vpack.c.b16 %v1358, %v1357
      %v1449 = vpack.c.b16 %v1360, %v1359
      %v1450 = vpack.c.b16 %v1362, %v1361
      %v1451 = vpack.c.b16 %v1364, %v1363
      %v1452 = vpack.c.b16 %v1366, %v1365
      %v1453 = vpack.c.b16 %v1368, %v1367
      %v1454 = vpack.c.b16 %v1370, %v1369
      %v1455 = vpack.c.b16 %v1372, %v1371
      %v1456 = vpack.c.b16 %v1374, %v1373
      %v1457 = vpack.c.b16 %v1376, %v1375
      %v1458 = vpack.c.b16 %v1378, %v1377
      %v1459 = vpack.c.b16 %v1380, %v1379
      %v1460 = vpack.c.b16 %v1382, %v1381
      %v1461 = vpack.c.b16 %v1384, %v1383
      %v1462 = vpack.c.b16 %v1386, %v1385
      %v1463 = vpack.c.b16 %v1388, %v1387
      %v1464 = vpack.c.b16 %v1390, %v1389
      %v1465 = vpack.c.b16 %v1392, %v1391
      %v1466 = vpack.c.b16 %v1394, %v1393
      %1539 = vmatprep.subr.bf16.mxu0 0
      %1540 = vmatpush1.bf16.msra.mxu0 %v1395
      %1541 = vmatprep.subr.bf16.mxu0 0
      %1542 = vmatpush1.bf16.msra.mxu0 %v1396
      %1543 = vmatprep.subr.bf16.mxu0 0
      %1544 = vmatpush1.bf16.msra.mxu0 %v1397
      %1545 = vmatprep.subr.bf16.mxu0 0
      %1546 = vmatpush1.bf16.msra.mxu0 %v1398
      %1547 = vmatprep.subr.bf16.mxu0 0
      %1548 = vmatpush1.bf16.msra.mxu0 %v1399
      %1549 = vmatprep.subr.bf16.mxu0 0
      %1550 = vmatpush1.bf16.msra.mxu0 %v1400
      %1551 = vmatprep.subr.bf16.mxu0 0
      %1552 = vmatpush1.bf16.msra.mxu0 %v1401
      %1553 = vmatprep.subr.bf16.mxu0 0
      %1554 = vmatpush1.bf16.msra.mxu0 %v1402
      %1555 = vmatprep.subr.bf16.mxu0 0
      %1556 = vmatpush1.bf16.msra.mxu0 %v1403
      %1557 = vmatprep.subr.bf16.mxu0 0
      %1558 = vmatpush1.bf16.msra.mxu0 %v1404
      %1559 = vmatprep.subr.bf16.mxu0 0
      %1560 = vmatpush1.bf16.msra.mxu0 %v1405
      %1561 = vmatprep.subr.bf16.mxu0 0
      %1562 = vmatpush1.bf16.msra.mxu0 %v1406
      %1563 = vmatprep.subr.bf16.mxu0 0
      %1564 = vmatpush1.bf16.msra.mxu0 %v1407
      %1565 = vmatprep.subr.bf16.mxu0 0
      %1566 = vmatpush1.bf16.msra.mxu0 %v1408
      %1567 = vmatprep.subr.bf16.mxu0 0
      %1568 = vmatpush1.bf16.msra.mxu0 %v1409
      %1569 = vmatprep.subr.bf16.mxu0 0
      %1570 = vmatpush1.bf16.msra.mxu0 %v1410
      %1571 = vmatprep.mubr.bf16.mxu0 %v964
      %1572 = vmatmul.mubr.bf16.gmra.mrb[0].mxu0 %v963
      %v1573 = vpop.f32.mrb[0].mxu0
      %v1574 = vadd.f32 0.0, %v1573
      %v1575 = vpop.f32.mrb[0].mxu0
      %v1576 = vpop.f32.mrb[0].mxu0
      %v1577 = vadd.f32 0.0, %v1576
      %v1578 = vpop.f32.mrb[0].mxu0
      %1579 = vmatprep.mubr.bf16.mxu0 %v973
      %1580 = vmatmul.mubr.bf16.gmra.mrb[0].mxu0 %v972
      %v1581 = vpop.f32.mrb[0].mxu0
      %v1582 = vadd.f32 0.0, %v1581
      %v1583 = vpop.f32.mrb[0].mxu0
      %v1584 = vpop.f32.mrb[0].mxu0
      %v1585 = vadd.f32 0.0, %v1584
      %v1586 = vpop.f32.mrb[0].mxu0
      %1587 = vmatprep.mubr.bf16.mxu0 %v982
      %1588 = vmatmul.mubr.bf16.gmra.mrb[0].mxu0 %v981
      %v1589 = vpop.f32.mrb[0].mxu0
      %v1590 = vadd.f32 0.0, %v1589
      %v1591 = vpop.f32.mrb[0].mxu0
      %v1592 = vpop.f32.mrb[0].mxu0
      %v1593 = vadd.f32 0.0, %v1592
      %v1594 = vpop.f32.mrb[0].mxu0
      %1595 = vmatprep.mubr.bf16.mxu0 %v991
      %1596 = vmatmul.mubr.bf16.gmra.mrb[0].mxu0 %v990
      %v1597 = vpop.f32.mrb[0].mxu0
      %v1598 = vadd.f32 0.0, %v1597
      %v1599 = vpop.f32.mrb[0].mxu0
      %v1600 = vpop.f32.mrb[0].mxu0
      %v1601 = vadd.f32 0.0, %v1600
      %v1602 = vpop.f32.mrb[0].mxu0
      %1603 = vmatprep.mubr.bf16.mxu0 %v1000
      %1604 = vmatmul.mubr.bf16.gmra.mrb[0].mxu0 %v999
      %v1605 = vpop.f32.mrb[0].mxu0
      %v1606 = vadd.f32 0.0, %v1605
      %v1607 = vpop.f32.mrb[0].mxu0
      %v1608 = vpop.f32.mrb[0].mxu0
      %v1609 = vadd.f32 0.0, %v1608
      %v1610 = vpop.f32.mrb[0].mxu0
      %1611 = vmatprep.mubr.bf16.mxu0 %v1009
      %1612 = vmatmul.mubr.bf16.gmra.mrb[0].mxu0 %v1008
      %v1613 = vpop.f32.mrb[0].mxu0
      %v1614 = vadd.f32 0.0, %v1613
      %v1615 = vpop.f32.mrb[0].mxu0
      %v1616 = vpop.f32.mrb[0].mxu0
      %v1617 = vadd.f32 0.0, %v1616
      %v1618 = vpop.f32.mrb[0].mxu0
      %1619 = vmatprep.mubr.bf16.mxu0 %v1018
      %1620 = vmatmul.mubr.bf16.gmra.mrb[0].mxu0 %v1017
      %v1621 = vpop.f32.mrb[0].mxu0
      %v1622 = vadd.f32 0.0, %v1621
      %v1623 = vpop.f32.mrb[0].mxu0
      %v1624 = vpop.f32.mrb[0].mxu0
      %v1625 = vadd.f32 0.0, %v1624
      %v1626 = vpop.f32.mrb[0].mxu0
      %1627 = vmatprep.mubr.bf16.mxu0 %v1027
      %1628 = vmatmul.mubr.bf16.gmra.mrb[0].mxu0 %v1026
      %v1629 = vpop.f32.mrb[0].mxu0
      %v1630 = vadd.f32 0.0, %v1629
      %v1631 = vpop.f32.mrb[0].mxu0
      %v1632 = vpop.f32.mrb[0].mxu0
      %v1633 = vadd.f32 0.0, %v1632
      %v1634 = vpop.f32.mrb[0].mxu0
      %1635 = vmatprep.mubr.bf16.mxu0 %v1036
      %1636 = vmatmul.mubr.bf16.gmra.mrb[0].mxu0 %v1035
      %v1637 = vpop.f32.mrb[0].mxu0
      %v1638 = vadd.f32 0.0, %v1637
      %v1639 = vpop.f32.mrb[0].mxu0
      %v1640 = vpop.f32.mrb[0].mxu0
      %v1641 = vadd.f32 0.0, %v1640
      %v1642 = vpop.f32.mrb[0].mxu0
      %1643 = vmatprep.mubr.bf16.mxu0 %v1045
      %1644 = vmatmul.mubr.bf16.gmra.mrb[0].mxu0 %v1044
      %v1645 = vpop.f32.mrb[0].mxu0
      %v1646 = vadd.f32 0.0, %v1645
      %v1647 = vpop.f32.mrb[0].mxu0
      %v1648 = vpop.f32.mrb[0].mxu0
      %v1649 = vadd.f32 0.0, %v1648
      %v1650 = vpop.f32.mrb[0].mxu0
      %1651 = vmatprep.mubr.bf16.mxu0 %v1054
      %1652 = vmatmul.mubr.bf16.gmra.mrb[0].mxu0 %v1053
      %v1653 = vpop.f32.mrb[0].mxu0
      %v1654 = vadd.f32 0.0, %v1653
      %v1655 = vpop.f32.mrb[0].mxu0
      %v1656 = vpop.f32.mrb[0].mxu0
      %v1657 = vadd.f32 0.0, %v1656
      %v1658 = vpop.f32.mrb[0].mxu0
      %1659 = vmatprep.mubr.bf16.mxu0 %v1063
      %1660 = vmatmul.mubr.bf16.gmra.mrb[0].mxu0 %v1062
      %v1661 = vpop.f32.mrb[0].mxu0
      %v1662 = vadd.f32 0.0, %v1661
      %v1663 = vpop.f32.mrb[0].mxu0
      %v1664 = vpop.f32.mrb[0].mxu0
      %v1665 = vadd.f32 0.0, %v1664
      %v1666 = vpop.f32.mrb[0].mxu0
      %1667 = vmatprep.mubr.bf16.mxu0 %v1072
      %1668 = vmatmul.mubr.bf16.gmra.mrb[0].mxu0 %v1071
      %v1669 = vpop.f32.mrb[0].mxu0
      %v1670 = vadd.f32 0.0, %v1669
      %v1671 = vpop.f32.mrb[0].mxu0
      %v1672 = vpop.f32.mrb[0].mxu0
      %v1673 = vadd.f32 0.0, %v1672
      %v1674 = vpop.f32.mrb[0].mxu0
      %1675 = vmatprep.mubr.bf16.mxu0 %v1081
      %1676 = vmatmul.mubr.bf16.gmra.mrb[0].mxu0 %v1080
      %v1677 = vpop.f32.mrb[0].mxu0
      %v1678 = vadd.f32 0.0, %v1677
      %v1679 = vpop.f32.mrb[0].mxu0
      %v1680 = vpop.f32.mrb[0].mxu0
      %v1681 = vadd.f32 0.0, %v1680
      %v1682 = vpop.f32.mrb[0].mxu0
      %1683 = vmatprep.mubr.bf16.mxu0 %v1090
      %1684 = vmatmul.mubr.bf16.gmra.mrb[0].mxu0 %v1089
      %v1685 = vpop.f32.mrb[0].mxu0
      %v1686 = vadd.f32 0.0, %v1685
      %v1687 = vpop.f32.mrb[0].mxu0
      %v1688 = vpop.f32.mrb[0].mxu0
      %v1689 = vadd.f32 0.0, %v1688
      %v1690 = vpop.f32.mrb[0].mxu0
      %1691 = vmatprep.mubr.bf16.mxu0 %v1099
      %1692 = vmatmul.mubr.bf16.gmra.mrb[0].mxu0 %v1098
      %v1693 = vpop.f32.mrb[0].mxu0
      %v1694 = vadd.f32 0.0, %v1693
      %v1695 = vpop.f32.mrb[0].mxu0
      %v1696 = vpop.f32.mrb[0].mxu0
      %v1697 = vadd.f32 0.0, %v1696
      %v1698 = vpop.f32.mrb[0].mxu0
      %1699 = vdwg.mxu0
      %1700 = vmatprep.subr.bf16.mxu0 0
      %1701 = vmatpush1.bf16.msra.mxu0 %v1411
      %1702 = vmatprep.subr.bf16.mxu0 0
      %1703 = vmatpush1.bf16.msra.mxu0 %v1412
      %1704 = vmatprep.subr.bf16.mxu0 0
      %1705 = vmatpush1.bf16.msra.mxu0 %v1413
      %1706 = vmatprep.subr.bf16.mxu0 0
      %1707 = vmatpush1.bf16.msra.mxu0 %v1414
      %1708 = vmatprep.subr.bf16.mxu0 0
      %1709 = vmatpush1.bf16.msra.mxu0 %v1415
      %1710 = vmatprep.subr.bf16.mxu0 0
      %1711 = vmatpush1.bf16.msra.mxu0 %v1416
      %1712 = vmatprep.subr.bf16.mxu0 0
      %1713 = vmatpush1.bf16.msra.mxu0 %v1417
      %1714 = vmatprep.subr.bf16.mxu0 0
      %1715 = vmatpush1.bf16.msra.mxu0 %v1418
      %1716 = vmatprep.subr.bf16.mxu0 0
      %1717 = vmatpush1.bf16.msra.mxu0 %v1419
      %1718 = vmatprep.subr.bf16.mxu0 0
      %1719 = vmatpush1.bf16.msra.mxu0 %v1420
      %1720 = vmatprep.subr.bf16.mxu0 0
      %1721 = vmatpush1.bf16.msra.mxu0 %v1421
      %1722 = vmatprep.subr.bf16.mxu0 0
      %1723 = vmatpush1.bf16.msra.mxu0 %v1422
      %1724 = vmatprep.subr.bf16.mxu0 0
      %1725 = vmatpush1.bf16.msra.mxu0 %v1423
      %1726 = vmatprep.subr.bf16.mxu0 0
      %1727 = vmatpush1.bf16.msra.mxu0 %v1424
      %1728 = vmatprep.subr.bf16.mxu0 0
      %1729 = vmatpush1.bf16.msra.mxu0 %v1425
      %1730 = vmatprep.subr.bf16.mxu0 0
      %1731 = vmatpush1.bf16.msra.mxu0 %v1426
      %1732 = vmatprep.mubr.bf16.mxu0 %v966
      %1733 = vmatmul.mubr.bf16.gmra.mrb[0].mxu0 %v965
      %v1734 = vpop.f32.mrb[0].mxu0
      %v1735 = vadd.f32 %v1574, %v1734
      %v1736 = vpop.f32.mrb[0].mxu0
      %v1737 = vpop.f32.mrb[0].mxu0
      %v1738 = vadd.f32 %v1577, %v1737
      %v1739 = vpop.f32.mrb[0].mxu0
      %1740 = vmatprep.mubr.bf16.mxu0 %v975
      %1741 = vmatmul.mubr.bf16.gmra.mrb[0].mxu0 %v974
      %v1742 = vpop.f32.mrb[0].mxu0
      %v1743 = vadd.f32 %v1582, %v1742
      %v1744 = vpop.f32.mrb[0].mxu0
      %v1745 = vpop.f32.mrb[0].mxu0
      %v1746 = vadd.f32 %v1585, %v1745
      %v1747 = vpop.f32.mrb[0].mxu0
      %1748 = vmatprep.mubr.bf16.mxu0 %v984
      %1749 = vmatmul.mubr.bf16.gmra.mrb[0].mxu0 %v983
      %v1750 = vpop.f32.mrb[0].mxu0
      %v1751 = vadd.f32 %v1590, %v1750
      %v1752 = vpop.f32.mrb[0].mxu0
      %v1753 = vpop.f32.mrb[0].mxu0
      %v1754 = vadd.f32 %v1593, %v1753
      %v1755 = vpop.f32.mrb[0].mxu0
      %1756 = vmatprep.mubr.bf16.mxu0 %v993
      %1757 = vmatmul.mubr.bf16.gmra.mrb[0].mxu0 %v992
      %v1758 = vpop.f32.mrb[0].mxu0
      %v1759 = vadd.f32 %v1598, %v1758
      %v1760 = vpop.f32.mrb[0].mxu0
      %v1761 = vpop.f32.mrb[0].mxu0
      %v1762 = vadd.f32 %v1601, %v1761
      %v1763 = vpop.f32.mrb[0].mxu0
      %1764 = vmatprep.mubr.bf16.mxu0 %v1002
      %1765 = vmatmul.mubr.bf16.gmra.mrb[0].mxu0 %v1001
      %v1766 = vpop.f32.mrb[0].mxu0
      %v1767 = vadd.f32 %v1606, %v1766
      %v1768 = vpop.f32.mrb[0].mxu0
      %v1769 = vpop.f32.mrb[0].mxu0
      %v1770 = vadd.f32 %v1609, %v1769
      %v1771 = vpop.f32.mrb[0].mxu0
      %1772 = vmatprep.mubr.bf16.mxu0 %v1011
      %1773 = vmatmul.mubr.bf16.gmra.mrb[0].mxu0 %v1010
      %v1774 = vpop.f32.mrb[0].mxu0
      %v1775 = vadd.f32 %v1614, %v1774
      %v1776 = vpop.f32.mrb[0].mxu0
      %v1777 = vpop.f32.mrb[0].mxu0
      %v1778 = vadd.f32 %v1617, %v1777
      %v1779 = vpop.f32.mrb[0].mxu0
      %1780 = vmatprep.mubr.bf16.mxu0 %v1020
      %1781 = vmatmul.mubr.bf16.gmra.mrb[0].mxu0 %v1019
      %v1782 = vpop.f32.mrb[0].mxu0
      %v1783 = vadd.f32 %v1622, %v1782
      %v1784 = vpop.f32.mrb[0].mxu0
      %v1785 = vpop.f32.mrb[0].mxu0
      %v1786 = vadd.f32 %v1625, %v1785
      %v1787 = vpop.f32.mrb[0].mxu0
      %1788 = vmatprep.mubr.bf16.mxu0 %v1029
      %1789 = vmatmul.mubr.bf16.gmra.mrb[0].mxu0 %v1028
      %v1790 = vpop.f32.mrb[0].mxu0
      %v1791 = vadd.f32 %v1630, %v1790
      %v1792 = vpop.f32.mrb[0].mxu0
      %v1793 = vpop.f32.mrb[0].mxu0
      %v1794 = vadd.f32 %v1633, %v1793
      %v1795 = vpop.f32.mrb[0].mxu0
      %1796 = vmatprep.mubr.bf16.mxu0 %v1038
      %1797 = vmatmul.mubr.bf16.gmra.mrb[0].mxu0 %v1037
      %v1798 = vpop.f32.mrb[0].mxu0
      %v1799 = vadd.f32 %v1638, %v1798
      %v1800 = vpop.f32.mrb[0].mxu0
      %v1801 = vpop.f32.mrb[0].mxu0
      %v1802 = vadd.f32 %v1641, %v1801
      %v1803 = vpop.f32.mrb[0].mxu0
      %1804 = vmatprep.mubr.bf16.mxu0 %v1047
      %1805 = vmatmul.mubr.bf16.gmra.mrb[0].mxu0 %v1046
      %v1806 = vpop.f32.mrb[0].mxu0
      %v1807 = vadd.f32 %v1646, %v1806
      %v1808 = vpop.f32.mrb[0].mxu0
      %v1809 = vpop.f32.mrb[0].mxu0
      %v1810 = vadd.f32 %v1649, %v1809
      %v1811 = vpop.f32.mrb[0].mxu0
      %1812 = vmatprep.mubr.bf16.mxu0 %v1056
      %1813 = vmatmul.mubr.bf16.gmra.mrb[0].mxu0 %v1055
      %v1814 = vpop.f32.mrb[0].mxu0
      %v1815 = vadd.f32 %v1654, %v1814
      %v1816 = vpop.f32.mrb[0].mxu0
      %v1817 = vpop.f32.mrb[0].mxu0
      %v1818 = vadd.f32 %v1657, %v1817
      %v1819 = vpop.f32.mrb[0].mxu0
      %1820 = vmatprep.mubr.bf16.mxu0 %v1065
      %1821 = vmatmul.mubr.bf16.gmra.mrb[0].mxu0 %v1064
      %v1822 = vpop.f32.mrb[0].mxu0
      %v1823 = vadd.f32 %v1662, %v1822
      %v1824 = vpop.f32.mrb[0].mxu0
      %v1825 = vpop.f32.mrb[0].mxu0
      %v1826 = vadd.f32 %v1665, %v1825
      %v1827 = vpop.f32.mrb[0].mxu0
      %1828 = vmatprep.mubr.bf16.mxu0 %v1074
      %1829 = vmatmul.mubr.bf16.gmra.mrb[0].mxu0 %v1073
      %v1830 = vpop.f32.mrb[0].mxu0
      %v1831 = vadd.f32 %v1670, %v1830
      %v1832 = vpop.f32.mrb[0].mxu0
      %v1833 = vpop.f32.mrb[0].mxu0
      %v1834 = vadd.f32 %v1673, %v1833
      %v1835 = vpop.f32.mrb[0].mxu0
      %1836 = vmatprep.mubr.bf16.mxu0 %v1083
      %1837 = vmatmul.mubr.bf16.gmra.mrb[0].mxu0 %v1082
      %v1838 = vpop.f32.mrb[0].mxu0
      %v1839 = vadd.f32 %v1678, %v1838
      %v1840 = vpop.f32.mrb[0].mxu0
      %v1841 = vpop.f32.mrb[0].mxu0
      %v1842 = vadd.f32 %v1681, %v1841
      %v1843 = vpop.f32.mrb[0].mxu0
      %1844 = vmatprep.mubr.bf16.mxu0 %v1092
      %1845 = vmatmul.mubr.bf16.gmra.mrb[0].mxu0 %v1091
      %v1846 = vpop.f32.mrb[0].mxu0
      %v1847 = vadd.f32 %v1686, %v1846
      %v1848 = vpop.f32.mrb[0].mxu0
      %v1849 = vpop.f32.mrb[0].mxu0
      %v1850 = vadd.f32 %v1689, %v1849
      %v1851 = vpop.f32.mrb[0].mxu0
      %1852 = vmatprep.mubr.bf16.mxu0 %v1101
      %1853 = vmatmul.mubr.bf16.gmra.mrb[0].mxu0 %v1100
      %v1854 = vpop.f32.mrb[0].mxu0
      %v1855 = vadd.f32 %v1694, %v1854
      %v1856 = vpop.f32.mrb[0].mxu0
      %v1857 = vpop.f32.mrb[0].mxu0
      %v1858 = vadd.f32 %v1697, %v1857
      %v1859 = vpop.f32.mrb[0].mxu0
      %1860 = vdwg.mxu0
      %1861 = vmatprep.subr.bf16.mxu0 0
      %1862 = vmatpush1.bf16.msra.mxu0 %v1427
      %1863 = vmatprep.subr.bf16.mxu0 0
      %1864 = vmatpush1.bf16.msra.mxu0 %v1428
      %1865 = vmatprep.subr.bf16.mxu0 0
      %1866 = vmatpush1.bf16.msra.mxu0 %v1429
      %1867 = vmatprep.subr.bf16.mxu0 0
      %1868 = vmatpush1.bf16.msra.mxu0 %v1430
      %1869 = vmatprep.subr.bf16.mxu0 0
      %1870 = vmatpush1.bf16.msra.mxu0 %v1431
      %1871 = vmatprep.subr.bf16.mxu0 0
      %1872 = vmatpush1.bf16.msra.mxu0 %v1432
      %1873 = vmatprep.subr.bf16.mxu0 0
      %1874 = vmatpush1.bf16.msra.mxu0 %v1433
      %1875 = vmatprep.subr.bf16.mxu0 0
      %1876 = vmatpush1.bf16.msra.mxu0 %v1434
      %1877 = vmatprep.subr.bf16.mxu0 0
      %1878 = vmatpush1.bf16.msra.mxu0 %v1435
      %1879 = vmatprep.subr.bf16.mxu0 0
      %1880 = vmatpush1.bf16.msra.mxu0 %v1436
      %1881 = vmatprep.subr.bf16.mxu0 0
      %1882 = vmatpush1.bf16.msra.mxu0 %v1437
      %1883 = vmatprep.subr.bf16.mxu0 0
      %1884 = vmatpush1.bf16.msra.mxu0 %v1438
      %1885 = vmatprep.subr.bf16.mxu0 0
      %1886 = vmatpush1.bf16.msra.mxu0 %v1439
      %1887 = vmatprep.subr.bf16.mxu0 0
      %1888 = vmatpush1.bf16.msra.mxu0 %v1440
      %1889 = vmatprep.subr.bf16.mxu0 0
      %1890 = vmatpush1.bf16.msra.mxu0 %v1441
      %1891 = vmatprep.subr.bf16.mxu0 0
      %1892 = vmatpush1.bf16.msra.mxu0 %v1442
      %1893 = vmatprep.mubr.bf16.mxu0 %v968
      %1894 = vmatmul.mubr.bf16.gmra.mrb[0].mxu0 %v967
      %v1895 = vpop.f32.mrb[0].mxu0
      %v1896 = vadd.f32 %v1735, %v1895
      %v1897 = vpop.f32.mrb[0].mxu0
      %v1898 = vpop.f32.mrb[0].mxu0
      %v1899 = vadd.f32 %v1738, %v1898
      %v1900 = vpop.f32.mrb[0].mxu0
      %1901 = vmatprep.mubr.bf16.mxu0 %v977
      %1902 = vmatmul.mubr.bf16.gmra.mrb[0].mxu0 %v976
      %v1903 = vpop.f32.mrb[0].mxu0
      %v1904 = vadd.f32 %v1743, %v1903
      %v1905 = vpop.f32.mrb[0].mxu0
      %v1906 = vpop.f32.mrb[0].mxu0
      %v1907 = vadd.f32 %v1746, %v1906
      %v1908 = vpop.f32.mrb[0].mxu0
      %1909 = vmatprep.mubr.bf16.mxu0 %v986
      %1910 = vmatmul.mubr.bf16.gmra.mrb[0].mxu0 %v985
      %v1911 = vpop.f32.mrb[0].mxu0
      %v1912 = vadd.f32 %v1751, %v1911
      %v1913 = vpop.f32.mrb[0].mxu0
      %v1914 = vpop.f32.mrb[0].mxu0
      %v1915 = vadd.f32 %v1754, %v1914
      %v1916 = vpop.f32.mrb[0].mxu0
      %1917 = vmatprep.mubr.bf16.mxu0 %v995
      %1918 = vmatmul.mubr.bf16.gmra.mrb[0].mxu0 %v994
      %v1919 = vpop.f32.mrb[0].mxu0
      %v1920 = vadd.f32 %v1759, %v1919
      %v1921 = vpop.f32.mrb[0].mxu0
      %v1922 = vpop.f32.mrb[0].mxu0
      %v1923 = vadd.f32 %v1762, %v1922
      %v1924 = vpop.f32.mrb[0].mxu0
      %1925 = vmatprep.mubr.bf16.mxu0 %v1004
      %1926 = vmatmul.mubr.bf16.gmra.mrb[0].mxu0 %v1003
      %v1927 = vpop.f32.mrb[0].mxu0
      %v1928 = vadd.f32 %v1767, %v1927
      %v1929 = vpop.f32.mrb[0].mxu0
      %v1930 = vpop.f32.mrb[0].mxu0
      %v1931 = vadd.f32 %v1770, %v1930
      %v1932 = vpop.f32.mrb[0].mxu0
      %1933 = vmatprep.mubr.bf16.mxu0 %v1013
      %1934 = vmatmul.mubr.bf16.gmra.mrb[0].mxu0 %v1012
      %v1935 = vpop.f32.mrb[0].mxu0
      %v1936 = vadd.f32 %v1775, %v1935
      %v1937 = vpop.f32.mrb[0].mxu0
      %v1938 = vpop.f32.mrb[0].mxu0
      %v1939 = vadd.f32 %v1778, %v1938
      %v1940 = vpop.f32.mrb[0].mxu0
      %1941 = vmatprep.mubr.bf16.mxu0 %v1022
      %1942 = vmatmul.mubr.bf16.gmra.mrb[0].mxu0 %v1021
      %v1943 = vpop.f32.mrb[0].mxu0
      %v1944 = vadd.f32 %v1783, %v1943
      %v1945 = vpop.f32.mrb[0].mxu0
      %v1946 = vpop.f32.mrb[0].mxu0
      %v1947 = vadd.f32 %v1786, %v1946
      %v1948 = vpop.f32.mrb[0].mxu0
      %1949 = vmatprep.mubr.bf16.mxu0 %v1031
      %1950 = vmatmul.mubr.bf16.gmra.mrb[0].mxu0 %v1030
      %v1951 = vpop.f32.mrb[0].mxu0
      %v1952 = vadd.f32 %v1791, %v1951
      %v1953 = vpop.f32.mrb[0].mxu0
      %v1954 = vpop.f32.mrb[0].mxu0
      %v1955 = vadd.f32 %v1794, %v1954
      %v1956 = vpop.f32.mrb[0].mxu0
      %1957 = vmatprep.mubr.bf16.mxu0 %v1040
      %1958 = vmatmul.mubr.bf16.gmra.mrb[0].mxu0 %v1039
      %v1959 = vpop.f32.mrb[0].mxu0
      %v1960 = vadd.f32 %v1799, %v1959
      %v1961 = vpop.f32.mrb[0].mxu0
      %v1962 = vpop.f32.mrb[0].mxu0
      %v1963 = vadd.f32 %v1802, %v1962
      %v1964 = vpop.f32.mrb[0].mxu0
      %1965 = vmatprep.mubr.bf16.mxu0 %v1049
      %1966 = vmatmul.mubr.bf16.gmra.mrb[0].mxu0 %v1048
      %v1967 = vpop.f32.mrb[0].mxu0
      %v1968 = vadd.f32 %v1807, %v1967
      %v1969 = vpop.f32.mrb[0].mxu0
      %v1970 = vpop.f32.mrb[0].mxu0
      %v1971 = vadd.f32 %v1810, %v1970
      %v1972 = vpop.f32.mrb[0].mxu0
      %1973 = vmatprep.mubr.bf16.mxu0 %v1058
      %1974 = vmatmul.mubr.bf16.gmra.mrb[0].mxu0 %v1057
      %v1975 = vpop.f32.mrb[0].mxu0
      %v1976 = vadd.f32 %v1815, %v1975
      %v1977 = vpop.f32.mrb[0].mxu0
      %v1978 = vpop.f32.mrb[0].mxu0
      %v1979 = vadd.f32 %v1818, %v1978
      %v1980 = vpop.f32.mrb[0].mxu0
      %1981 = vmatprep.mubr.bf16.mxu0 %v1067
      %1982 = vmatmul.mubr.bf16.gmra.mrb[0].mxu0 %v1066
      %v1983 = vpop.f32.mrb[0].mxu0
      %v1984 = vadd.f32 %v1823, %v1983
      %v1985 = vpop.f32.mrb[0].mxu0
      %v1986 = vpop.f32.mrb[0].mxu0
      %v1987 = vadd.f32 %v1826, %v1986
      %v1988 = vpop.f32.mrb[0].mxu0
      %1989 = vmatprep.mubr.bf16.mxu0 %v1076
      %1990 = vmatmul.mubr.bf16.gmra.mrb[0].mxu0 %v1075
      %v1991 = vpop.f32.mrb[0].mxu0
      %v1992 = vadd.f32 %v1831, %v1991
      %v1993 = vpop.f32.mrb[0].mxu0
      %v1994 = vpop.f32.mrb[0].mxu0
      %v1995 = vadd.f32 %v1834, %v1994
      %v1996 = vpop.f32.mrb[0].mxu0
      %1997 = vmatprep.mubr.bf16.mxu0 %v1085
      %1998 = vmatmul.mubr.bf16.gmra.mrb[0].mxu0 %v1084
      %v1999 = vpop.f32.mrb[0].mxu0
      %v2000 = vadd.f32 %v1839, %v1999
      %v2001 = vpop.f32.mrb[0].mxu0
      %v2002 = vpop.f32.mrb[0].mxu0
      %v2003 = vadd.f32 %v1842, %v2002
      %v2004 = vpop.f32.mrb[0].mxu0
      %2005 = vmatprep.mubr.bf16.mxu0 %v1094
      %2006 = vmatmul.mubr.bf16.gmra.mrb[0].mxu0 %v1093
      %v2007 = vpop.f32.mrb[0].mxu0
      %v2008 = vadd.f32 %v1847, %v2007
      %v2009 = vpop.f32.mrb[0].mxu0
      %v2010 = vpop.f32.mrb[0].mxu0
      %v2011 = vadd.f32 %v1850, %v2010
      %v2012 = vpop.f32.mrb[0].mxu0
      %2013 = vmatprep.mubr.bf16.mxu0 %v1103
      %2014 = vmatmul.mubr.bf16.gmra.mrb[0].mxu0 %v1102
      %v2015 = vpop.f32.mrb[0].mxu0
      %v2016 = vadd.f32 %v1855, %v2015
      %v2017 = vpop.f32.mrb[0].mxu0
      %v2018 = vpop.f32.mrb[0].mxu0
      %v2019 = vadd.f32 %v1858, %v2018
      %v2020 = vpop.f32.mrb[0].mxu0
      %2021 = vdwg.mxu0
      %2022 = vmatprep.subr.bf16.mxu0 0
      %2023 = vmatpush1.bf16.msra.mxu0 %v1443
      %2024 = vmatprep.subr.bf16.mxu0 0
      %2025 = vmatpush1.bf16.msra.mxu0 %v1444
      %2026 = vmatprep.subr.bf16.mxu0 0
      %2027 = vmatpush1.bf16.msra.mxu0 %v1445
      %2028 = vmatprep.subr.bf16.mxu0 0
      %2029 = vmatpush1.bf16.msra.mxu0 %v1446
      %2030 = vmatprep.subr.bf16.mxu0 0
      %2031 = vmatpush1.bf16.msra.mxu0 %v1447
      %2032 = vmatprep.subr.bf16.mxu0 0
      %2033 = vmatpush1.bf16.msra.mxu0 %v1448
      %2034 = vmatprep.subr.bf16.mxu0 0
      %2035 = vmatpush1.bf16.msra.mxu0 %v1449
      %2036 = vmatprep.subr.bf16.mxu0 0
      %2037 = vmatpush1.bf16.msra.mxu0 %v1450
      %2038 = vmatprep.subr.bf16.mxu0 0
      %2039 = vmatpush1.bf16.msra.mxu0 %v1451
      %2040 = vmatprep.subr.bf16.mxu0 0
      %2041 = vmatpush1.bf16.msra.mxu0 %v1452
      %2042 = vmatprep.subr.bf16.mxu0 0
      %2043 = vmatpush1.bf16.msra.mxu0 %v1453
      %2044 = vmatprep.subr.bf16.mxu0 0
      %2045 = vmatpush1.bf16.msra.mxu0 %v1454
      %2046 = vmatprep.subr.bf16.mxu0 0
      %2047 = vmatpush1.bf16.msra.mxu0 %v1455
      %2048 = vmatprep.subr.bf16.mxu0 0
      %2049 = vmatpush1.bf16.msra.mxu0 %v1456
      %2050 = vmatprep.subr.bf16.mxu0 0
      %2051 = vmatpush1.bf16.msra.mxu0 %v1457
      %2052 = vmatprep.subr.bf16.mxu0 0
      %2053 = vmatpush1.bf16.msra.mxu0 %v1458
      %2054 = vmatprep.mubr.bf16.mxu0 %v970
      %2055 = vmatmul.mubr.bf16.gmra.mrb[0].mxu0 %v969
      %v2056 = vpop.f32.mrb[0].mxu0
      %v2057 = vadd.f32 %v1896, %v2056
      %v2058 = vpop.f32.mrb[0].mxu0
      %v2059 = vpop.f32.mrb[0].mxu0
      %v2060 = vadd.f32 %v1899, %v2059
      %v2061 = vpop.f32.mrb[0].mxu0
      %2062 = vmatprep.mubr.bf16.mxu0 %v979
      %2063 = vmatmul.mubr.bf16.gmra.mrb[0].mxu0 %v978
      %v2064 = vpop.f32.mrb[0].mxu0
      %v2065 = vadd.f32 %v1904, %v2064
      %v2066 = vpop.f32.mrb[0].mxu0
      %v2067 = vpop.f32.mrb[0].mxu0
      %v2068 = vadd.f32 %v1907, %v2067
      %v2069 = vpop.f32.mrb[0].mxu0
      %2070 = vmatprep.mubr.bf16.mxu0 %v988
      %2071 = vmatmul.mubr.bf16.gmra.mrb[0].mxu0 %v987
      %v2072 = vpop.f32.mrb[0].mxu0
      %v2073 = vadd.f32 %v1912, %v2072
      %v2074 = vpop.f32.mrb[0].mxu0
      %v2075 = vpop.f32.mrb[0].mxu0
      %v2076 = vadd.f32 %v1915, %v2075
      %v2077 = vpop.f32.mrb[0].mxu0
      %2078 = vmatprep.mubr.bf16.mxu0 %v997
      %2079 = vmatmul.mubr.bf16.gmra.mrb[0].mxu0 %v996
      %v2080 = vpop.f32.mrb[0].mxu0
      %v2081 = vadd.f32 %v1920, %v2080
      %v2082 = vpop.f32.mrb[0].mxu0
      %v2083 = vpop.f32.mrb[0].mxu0
      %v2084 = vadd.f32 %v1923, %v2083
      %v2085 = vpop.f32.mrb[0].mxu0
      %2086 = vmatprep.mubr.bf16.mxu0 %v1006
      %2087 = vmatmul.mubr.bf16.gmra.mrb[0].mxu0 %v1005
      %v2088 = vpop.f32.mrb[0].mxu0
      %v2089 = vadd.f32 %v1928, %v2088
      %v2090 = vpop.f32.mrb[0].mxu0
      %v2091 = vpop.f32.mrb[0].mxu0
      %v2092 = vadd.f32 %v1931, %v2091
      %v2093 = vpop.f32.mrb[0].mxu0
      %2094 = vmatprep.mubr.bf16.mxu0 %v1015
      %2095 = vmatmul.mubr.bf16.gmra.mrb[0].mxu0 %v1014
      %v2096 = vpop.f32.mrb[0].mxu0
      %v2097 = vadd.f32 %v1936, %v2096
      %v2098 = vpop.f32.mrb[0].mxu0
      %v2099 = vpop.f32.mrb[0].mxu0
      %v2100 = vadd.f32 %v1939, %v2099
      %v2101 = vpop.f32.mrb[0].mxu0
      %2102 = vmatprep.mubr.bf16.mxu0 %v1024
      %2103 = vmatmul.mubr.bf16.gmra.mrb[0].mxu0 %v1023
      %v2104 = vpop.f32.mrb[0].mxu0
      %v2105 = vadd.f32 %v1944, %v2104
      %v2106 = vpop.f32.mrb[0].mxu0
      %v2107 = vpop.f32.mrb[0].mxu0
      %v2108 = vadd.f32 %v1947, %v2107
      %v2109 = vpop.f32.mrb[0].mxu0
      %2110 = vmatprep.mubr.bf16.mxu0 %v1033
      %2111 = vmatmul.mubr.bf16.gmra.mrb[0].mxu0 %v1032
      %v2112 = vpop.f32.mrb[0].mxu0
      %v2113 = vadd.f32 %v1952, %v2112
      %v2114 = vpop.f32.mrb[0].mxu0
      %v2115 = vpop.f32.mrb[0].mxu0
      %v2116 = vadd.f32 %v1955, %v2115
      %v2117 = vpop.f32.mrb[0].mxu0
      %2118 = vmatprep.mubr.bf16.mxu0 %v1042
      %2119 = vmatmul.mubr.bf16.gmra.mrb[0].mxu0 %v1041
      %v2120 = vpop.f32.mrb[0].mxu0
      %v2121 = vadd.f32 %v1960, %v2120
      %v2122 = vpop.f32.mrb[0].mxu0
      %v2123 = vpop.f32.mrb[0].mxu0
      %v2124 = vadd.f32 %v1963, %v2123
      %v2125 = vpop.f32.mrb[0].mxu0
      %2126 = vmatprep.mubr.bf16.mxu0 %v1051
      %2127 = vmatmul.mubr.bf16.gmra.mrb[0].mxu0 %v1050
      %v2128 = vpop.f32.mrb[0].mxu0
      %v2129 = vadd.f32 %v1968, %v2128
      %v2130 = vpop.f32.mrb[0].mxu0
      %v2131 = vpop.f32.mrb[0].mxu0
      %v2132 = vadd.f32 %v1971, %v2131
      %v2133 = vpop.f32.mrb[0].mxu0
      %2134 = vmatprep.mubr.bf16.mxu0 %v1060
      %2135 = vmatmul.mubr.bf16.gmra.mrb[0].mxu0 %v1059
      %v2136 = vpop.f32.mrb[0].mxu0
      %v2137 = vadd.f32 %v1976, %v2136
      %v2138 = vpop.f32.mrb[0].mxu0
      %v2139 = vpop.f32.mrb[0].mxu0
      %v2140 = vadd.f32 %v1979, %v2139
      %v2141 = vpop.f32.mrb[0].mxu0
      %2142 = vmatprep.mubr.bf16.mxu0 %v1069
      %2143 = vmatmul.mubr.bf16.gmra.mrb[0].mxu0 %v1068
      %v2144 = vpop.f32.mrb[0].mxu0
      %v2145 = vadd.f32 %v1984, %v2144
      %v2146 = vpop.f32.mrb[0].mxu0
      %v2147 = vpop.f32.mrb[0].mxu0
      %v2148 = vadd.f32 %v1987, %v2147
      %v2149 = vpop.f32.mrb[0].mxu0
      %2150 = vmatprep.mubr.bf16.mxu0 %v1078
      %2151 = vmatmul.mubr.bf16.gmra.mrb[0].mxu0 %v1077
      %v2152 = vpop.f32.mrb[0].mxu0
      %v2153 = vadd.f32 %v1992, %v2152
      %v2154 = vpop.f32.mrb[0].mxu0
      %v2155 = vpop.f32.mrb[0].mxu0
      %v2156 = vadd.f32 %v1995, %v2155
      %v2157 = vpop.f32.mrb[0].mxu0
      %2158 = vmatprep.mubr.bf16.mxu0 %v1087
      %2159 = vmatmul.mubr.bf16.gmra.mrb[0].mxu0 %v1086
      %v2160 = vpop.f32.mrb[0].mxu0
      %v2161 = vadd.f32 %v2000, %v2160
      %v2162 = vpop.f32.mrb[0].mxu0
      %v2163 = vpop.f32.mrb[0].mxu0
      %v2164 = vadd.f32 %v2003, %v2163
      %v2165 = vpop.f32.mrb[0].mxu0
      %2166 = vmatprep.mubr.bf16.mxu0 %v1096
      %2167 = vmatmul.mubr.bf16.gmra.mrb[0].mxu0 %v1095
      %v2168 = vpop.f32.mrb[0].mxu0
      %v2169 = vadd.f32 %v2008, %v2168
      %v2170 = vpop.f32.mrb[0].mxu0
      %v2171 = vpop.f32.mrb[0].mxu0
      %v2172 = vadd.f32 %v2011, %v2171
      %v2173 = vpop.f32.mrb[0].mxu0
      %2174 = vmatprep.mubr.bf16.mxu0 %v1105
      %2175 = vmatmul.mubr.bf16.gmra.mrb[0].mxu0 %v1104
      %v2176 = vpop.f32.mrb[0].mxu0
      %v2177 = vadd.f32 %v2016, %v2176
      %v2178 = vpop.f32.mrb[0].mxu0
      %v2179 = vpop.f32.mrb[0].mxu0
      %v2180 = vadd.f32 %v2019, %v2179
      %v2181 = vpop.f32.mrb[0].mxu0
      %2182 = vdwg.mxu0
      %2183 = vmatprep.subr.bf16.mxu0 0
      %2184 = vmatpush1.bf16.msra.mxu0 %v1459
      %2185 = vmatprep.subr.bf16.mxu0 0
      %2186 = vmatpush1.bf16.msra.mxu0 %v1460
      %2187 = vmatprep.subr.bf16.mxu0 0
      %2188 = vmatpush1.bf16.msra.mxu0 %v1461
      %2189 = vmatprep.subr.bf16.mxu0 0
      %2190 = vmatpush1.bf16.msra.mxu0 %v1462
      %2191 = vmatprep.subr.bf16.mxu0 0
      %2192 = vmatpush1.bf16.msra.mxu0 %v1463
      %2193 = vmatprep.subr.bf16.mxu0 0
      %2194 = vmatpush1.bf16.msra.mxu0 %v1464
      %2195 = vmatprep.subr.bf16.mxu0 0
      %2196 = vmatpush1.bf16.msra.mxu0 %v1465
      %2197 = vmatprep.subr.bf16.mxu0 0
      %2198 = vmatpush1.bf16.msra.mxu0 %v1466
      %2199 = vmatprep.subr.bf16.mxu0 0
      %2200 = vmatpush1.bf16.msra.mxu0 0
      %2201 = vmatprep.subr.bf16.mxu0 0
      %2202 = vmatpush1.bf16.msra.mxu0 0
      %2203 = vmatprep.subr.bf16.mxu0 0
      %2204 = vmatpush1.bf16.msra.mxu0 0
      %2205 = vmatprep.subr.bf16.mxu0 0
      %2206 = vmatpush1.bf16.msra.mxu0 0
      %2207 = vmatprep.subr.bf16.mxu0 0
      %2208 = vmatpush1.bf16.msra.mxu0 0
      %2209 = vmatprep.subr.bf16.mxu0 0
      %2210 = vmatpush1.bf16.msra.mxu0 0
      %2211 = vmatprep.subr.bf16.mxu0 0
      %2212 = vmatpush1.bf16.msra.mxu0 0
      %2213 = vmatprep.subr.bf16.mxu0 0
      %2214 = vmatpush1.bf16.msra.mxu0 0
      %2215 = vmatprep.mubr.bf16.mxu0 0
      %2216 = vmatmul.mubr.bf16.gmra.mrb[0].mxu0 %v971
      %v2217 = vpop.f32.mrb[0].mxu0
      %v2218 = vadd.f32 %v2057, %v2217
      %v2219 = vpop.f32.mrb[0].mxu0
      %v2220 = vpop.f32.mrb[0].mxu0
      %v2221 = vadd.f32 %v2060, %v2220
      %v2222 = vpop.f32.mrb[0].mxu0
      %2223 = vmatprep.mubr.bf16.mxu0 0
      %2224 = vmatmul.mubr.bf16.gmra.mrb[0].mxu0 %v980
      %v2225 = vpop.f32.mrb[0].mxu0
      %v2226 = vadd.f32 %v2065, %v2225
      %v2227 = vpop.f32.mrb[0].mxu0
      %v2228 = vpop.f32.mrb[0].mxu0
      %v2229 = vadd.f32 %v2068, %v2228
      %v2230 = vpop.f32.mrb[0].mxu0
      %2231 = vmatprep.mubr.bf16.mxu0 0
      %2232 = vmatmul.mubr.bf16.gmra.mrb[0].mxu0 %v989
      %v2233 = vpop.f32.mrb[0].mxu0
      %v2234 = vadd.f32 %v2073, %v2233
      %v2235 = vpop.f32.mrb[0].mxu0
      %v2236 = vpop.f32.mrb[0].mxu0
      %v2237 = vadd.f32 %v2076, %v2236
      %v2238 = vpop.f32.mrb[0].mxu0
      %2239 = vmatprep.mubr.bf16.mxu0 0
      %2240 = vmatmul.mubr.bf16.gmra.mrb[0].mxu0 %v998
      %v2241 = vpop.f32.mrb[0].mxu0
      %v2242 = vadd.f32 %v2081, %v2241
      %v2243 = vpop.f32.mrb[0].mxu0
      %v2244 = vpop.f32.mrb[0].mxu0
      %v2245 = vadd.f32 %v2084, %v2244
      %v2246 = vpop.f32.mrb[0].mxu0
      %2247 = vmatprep.mubr.bf16.mxu0 0
      %2248 = vmatmul.mubr.bf16.gmra.mrb[0].mxu0 %v1007
      %v2249 = vpop.f32.mrb[0].mxu0
      %v2250 = vadd.f32 %v2089, %v2249
      %v2251 = vpop.f32.mrb[0].mxu0
      %v2252 = vpop.f32.mrb[0].mxu0
      %v2253 = vadd.f32 %v2092, %v2252
      %v2254 = vpop.f32.mrb[0].mxu0
      %2255 = vmatprep.mubr.bf16.mxu0 0
      %2256 = vmatmul.mubr.bf16.gmra.mrb[0].mxu0 %v1016
      %v2257 = vpop.f32.mrb[0].mxu0
      %v2258 = vadd.f32 %v2097, %v2257
      %v2259 = vpop.f32.mrb[0].mxu0
      %v2260 = vpop.f32.mrb[0].mxu0
      %v2261 = vadd.f32 %v2100, %v2260
      %v2262 = vpop.f32.mrb[0].mxu0
      %2263 = vmatprep.mubr.bf16.mxu0 0
      %2264 = vmatmul.mubr.bf16.gmra.mrb[0].mxu0 %v1025
      %v2265 = vpop.f32.mrb[0].mxu0
      %v2266 = vadd.f32 %v2105, %v2265
      %v2267 = vpop.f32.mrb[0].mxu0
      %v2268 = vpop.f32.mrb[0].mxu0
      %v2269 = vadd.f32 %v2108, %v2268
      %v2270 = vpop.f32.mrb[0].mxu0
      %2271 = vmatprep.mubr.bf16.mxu0 0
      %2272 = vmatmul.mubr.bf16.gmra.mrb[0].mxu0 %v1034
      %v2273 = vpop.f32.mrb[0].mxu0
      %v2274 = vadd.f32 %v2113, %v2273
      %v2275 = vpop.f32.mrb[0].mxu0
      %v2276 = vpop.f32.mrb[0].mxu0
      %v2277 = vadd.f32 %v2116, %v2276
      %v2278 = vpop.f32.mrb[0].mxu0
      %2279 = vmatprep.mubr.bf16.mxu0 0
      %2280 = vmatmul.mubr.bf16.gmra.mrb[0].mxu0 %v1043
      %v2281 = vpop.f32.mrb[0].mxu0
      %v2282 = vadd.f32 %v2121, %v2281
      %v2283 = vpop.f32.mrb[0].mxu0
      %v2284 = vpop.f32.mrb[0].mxu0
      %v2285 = vadd.f32 %v2124, %v2284
      %v2286 = vpop.f32.mrb[0].mxu0
      %2287 = vmatprep.mubr.bf16.mxu0 0
      %2288 = vmatmul.mubr.bf16.gmra.mrb[0].mxu0 %v1052
      %v2289 = vpop.f32.mrb[0].mxu0
      %v2290 = vadd.f32 %v2129, %v2289
      %v2291 = vpop.f32.mrb[0].mxu0
      %v2292 = vpop.f32.mrb[0].mxu0
      %v2293 = vadd.f32 %v2132, %v2292
      %v2294 = vpop.f32.mrb[0].mxu0
      %2295 = vmatprep.mubr.bf16.mxu0 0
      %2296 = vmatmul.mubr.bf16.gmra.mrb[0].mxu0 %v1061
      %v2297 = vpop.f32.mrb[0].mxu0
      %v2298 = vadd.f32 %v2137, %v2297
      %v2299 = vpop.f32.mrb[0].mxu0
      %v2300 = vpop.f32.mrb[0].mxu0
      %v2301 = vadd.f32 %v2140, %v2300
      %v2302 = vpop.f32.mrb[0].mxu0
      %2303 = vmatprep.mubr.bf16.mxu0 0
      %2304 = vmatmul.mubr.bf16.gmra.mrb[0].mxu0 %v1070
      %v2305 = vpop.f32.mrb[0].mxu0
      %v2306 = vadd.f32 %v2145, %v2305
      %v2307 = vpop.f32.mrb[0].mxu0
      %v2308 = vpop.f32.mrb[0].mxu0
      %v2309 = vadd.f32 %v2148, %v2308
      %v2310 = vpop.f32.mrb[0].mxu0
      %2311 = vmatprep.mubr.bf16.mxu0 0
      %2312 = vmatmul.mubr.bf16.gmra.mrb[0].mxu0 %v1079
      %v2313 = vpop.f32.mrb[0].mxu0
      %v2314 = vadd.f32 %v2153, %v2313
      %v2315 = vpop.f32.mrb[0].mxu0
      %v2316 = vpop.f32.mrb[0].mxu0
      %v2317 = vadd.f32 %v2156, %v2316
      %v2318 = vpop.f32.mrb[0].mxu0
      %2319 = vmatprep.mubr.bf16.mxu0 0
      %2320 = vmatmul.mubr.bf16.gmra.mrb[0].mxu0 %v1088
      %v2321 = vpop.f32.mrb[0].mxu0
      %v2322 = vadd.f32 %v2161, %v2321
      %v2323 = vpop.f32.mrb[0].mxu0
      %v2324 = vpop.f32.mrb[0].mxu0
      %v2325 = vadd.f32 %v2164, %v2324
      %v2326 = vpop.f32.mrb[0].mxu0
      %2327 = vmatprep.mubr.bf16.mxu0 0
      %2328 = vmatmul.mubr.bf16.gmra.mrb[0].mxu0 %v1097
      %v2329 = vpop.f32.mrb[0].mxu0
      %v2330 = vadd.f32 %v2169, %v2329
      %v2331 = vpop.f32.mrb[0].mxu0
      %v2332 = vpop.f32.mrb[0].mxu0
      %v2333 = vadd.f32 %v2172, %v2332
      %v2334 = vpop.f32.mrb[0].mxu0
      %2335 = vmatprep.mubr.bf16.mxu0 0
      %2336 = vmatmul.mubr.bf16.gmra.mrb[0].mxu0 %v1106
      %v2337 = vpop.f32.mrb[0].mxu0
      %v2338 = vadd.f32 %v2177, %v2337
      %v2339 = vpop.f32.mrb[0].mxu0
      %v2340 = vpop.f32.mrb[0].mxu0
      %v2341 = vadd.f32 %v2180, %v2340
      %v2342 = vpop.f32.mrb[0].mxu0
      %2343 = vdwg.mxu0
      %v2344 = vmax.f32 %v2218, 0.0
      %v2345 = vmax.f32 %v2221, 0.0
      %v2346 = vmax.f32 %v2226, 0.0
      %v2347 = vmax.f32 %v2229, 0.0
      %v2348 = vmax.f32 %v2234, 0.0
      %v2349 = vmax.f32 %v2237, 0.0
      %v2350 = vmax.f32 %v2242, 0.0
      %v2351 = vmax.f32 %v2245, 0.0
      %v2352 = vmax.f32 %v2250, 0.0
      %v2353 = vmax.f32 %v2253, 0.0
      %v2354 = vmax.f32 %v2258, 0.0
      %v2355 = vmax.f32 %v2261, 0.0
      %v2356 = vmax.f32 %v2266, 0.0
      %v2357 = vmax.f32 %v2269, 0.0
      %v2358 = vmax.f32 %v2274, 0.0
      %v2359 = vmax.f32 %v2277, 0.0
      %v2360 = vmax.f32 %v2282, 0.0
      %v2361 = vmax.f32 %v2285, 0.0
      %v2362 = vmax.f32 %v2290, 0.0
      %v2363 = vmax.f32 %v2293, 0.0
      %v2364 = vmax.f32 %v2298, 0.0
      %v2365 = vmax.f32 %v2301, 0.0
      %v2366 = vmax.f32 %v2306, 0.0
      %v2367 = vmax.f32 %v2309, 0.0
      %v2368 = vmax.f32 %v2314, 0.0
      %v2369 = vmax.f32 %v2317, 0.0
      %v2370 = vmax.f32 %v2322, 0.0
      %v2371 = vmax.f32 %v2325, 0.0
      %v2372 = vmax.f32 %v2330, 0.0
      %v2373 = vmax.f32 %v2333, 0.0
      %v2374 = vmax.f32 %v2338, 0.0
      %v2375 = vmax.f32 %v2341, 0.0
      %2376 = vst [vmem:[%s208 + $0x8] sm:$0xff] %v2344
      %2377 = vst [vmem:[%s208 + $0x10] sm:$0xff] %v2345
      %2378 = vst [vmem:[%s208 + $0x28] sm:$0xff] %v2346
      %2379 = vst [vmem:[%s208 + $0x30] sm:$0xff] %v2347
      %2380 = vst [vmem:[%s208 + $0x48] sm:$0xff] %v2348
      %2381 = vst [vmem:[%s208 + $0x50] sm:$0xff] %v2349
      %2382 = vst [vmem:[%s208 + $0x68] sm:$0xff] %v2350
      %2383 = vst [vmem:[%s208 + $0x70] sm:$0xff] %v2351
      %2384 = vst [vmem:[%s208 + $0x88] sm:$0xff] %v2352
      %2385 = vst [vmem:[%s208 + $0x90] sm:$0xff] %v2353
      %2386 = vst [vmem:[%s208 + $0xa8] sm:$0xff] %v2354
      %2387 = vst [vmem:[%s208 + $0xb0] sm:$0xff] %v2355
      %2388 = vst [vmem:[%s208 + $0xc8] sm:$0xff] %v2356
      %2389 = vst [vmem:[%s208 + $0xd0] sm:$0xff] %v2357
      %2390 = vst [vmem:[%s208 + $0xe8] sm:$0xff] %v2358
      %2391 = vst [vmem:[%s208 + $0xf0] sm:$0xff] %v2359
      %2392 = vst [vmem:[%s208 + $0x108] sm:$0xff] %v2360
      %2393 = vst [vmem:[%s208 + $0x110] sm:$0xff] %v2361
      %2394 = vst [vmem:[%s208 + $0x128] sm:$0xff] %v2362
      %2395 = vst [vmem:[%s208 + $0x130] sm:$0xff] %v2363
      %2396 = vst [vmem:[%s208 + $0x148] sm:$0xff] %v2364
      %2397 = vst [vmem:[%s208 + $0x150] sm:$0xff] %v2365
      %2398 = vst [vmem:[%s208 + $0x168] sm:$0xff] %v2366
      %2399 = vst [vmem:[%s208 + $0x170] sm:$0xff] %v2367
      %2400 = vst [vmem:[%s208 + $0x188] sm:$0xff] %v2368
      %2401 = vst [vmem:[%s208 + $0x190] sm:$0xff] %v2369
      %2402 = vst [vmem:[%s208 + $0x1a8] sm:$0xff] %v2370
      %2403 = vst [vmem:[%s208 + $0x1b0] sm:$0xff] %v2371
      %2404 = vst [vmem:[%s208 + $0x1c8] sm:$0xff] %v2372
      %2405 = vst [vmem:[%s208 + $0x1d0] sm:$0xff] %v2373
      %2406 = vst [vmem:[%s208 + $0x1e8] sm:$0xff] %v2374
      %2407 = vst [vmem:[%s208 + $0x1f0] sm:$0xff] %v2375
      %v2408 = vld [vmem:[#allocation2 + $0x7] sm:$0xff]
      %v2409 = vld [vmem:[#allocation2 + $0xf] sm:$0xff]
      %v2410 = vld [vmem:[#allocation2 + $0x27] sm:$0xff]
      %v2411 = vld [vmem:[#allocation2 + $0x2f] sm:$0xff]
      %v2412 = vld [vmem:[#allocation2 + $0x47] sm:$0xff]
      %v2413 = vld [vmem:[#allocation2 + $0x4f] sm:$0xff]
      %v2414 = vld [vmem:[#allocation2 + $0x67] sm:$0xff]
      %v2415 = vld [vmem:[#allocation2 + $0x6f] sm:$0xff]
      %v2416 = vld [vmem:[#allocation2 + $0x87] sm:$0xff]
      %v2417 = vld [vmem:[#allocation2 + $0x8f] sm:$0xff]
      %v2418 = vld [vmem:[#allocation2 + $0xa7] sm:$0xff]
      %v2419 = vld [vmem:[#allocation2 + $0xaf] sm:$0xff]
      %v2420 = vld [vmem:[#allocation2 + $0xc7] sm:$0xff]
      %v2421 = vld [vmem:[#allocation2 + $0xcf] sm:$0xff]
      %v2422 = vld [vmem:[#allocation2 + $0xe7] sm:$0xff]
      %v2423 = vld [vmem:[#allocation2 + $0xef] sm:$0xff]
      %v2424 = vld [vmem:[#allocation2 + $0x107] sm:$0xff]
      %v2425 = vld [vmem:[#allocation2 + $0x10f] sm:$0xff]
      %v2426 = vld [vmem:[#allocation2 + $0x127] sm:$0xff]
      %v2427 = vld [vmem:[#allocation2 + $0x12f] sm:$0xff]
      %v2428 = vld [vmem:[#allocation2 + $0x147] sm:$0xff]
      %v2429 = vld [vmem:[#allocation2 + $0x14f] sm:$0xff]
      %v2430 = vld [vmem:[#allocation2 + $0x167] sm:$0xff]
      %v2431 = vld [vmem:[#allocation2 + $0x16f] sm:$0xff]
      %v2432 = vld [vmem:[#allocation2 + $0x187] sm:$0xff]
      %v2433 = vld [vmem:[#allocation2 + $0x18f] sm:$0xff]
      %v2434 = vld [vmem:[#allocation2 + $0x1a7] sm:$0xff]
      %v2435 = vld [vmem:[#allocation2 + $0x1af] sm:$0xff]
      %v2436 = vld [vmem:[#allocation2 + $0x1c7] sm:$0xff]
      %v2437 = vld [vmem:[#allocation2 + $0x1cf] sm:$0xff]
      %v2438 = vld [vmem:[#allocation2 + $0x1e7] sm:$0xff]
      %v2439 = vld [vmem:[#allocation2 + $0x1ef] sm:$0xff]
      %v2440 = vpack.c.bf16 %v2409, %v2408
      %v2441 = vpack.c.bf16 %v2411, %v2410
      %v2442 = vpack.c.bf16 %v2413, %v2412
      %v2443 = vpack.c.bf16 %v2415, %v2414
      %v2444 = vpack.c.bf16 %v2417, %v2416
      %v2445 = vpack.c.bf16 %v2419, %v2418
      %v2446 = vpack.c.bf16 %v2421, %v2420
      %v2447 = vpack.c.bf16 %v2423, %v2422
      %v2448 = vpack.c.bf16 %v2425, %v2424
      %v2449 = vpack.c.bf16 %v2427, %v2426
      %v2450 = vpack.c.bf16 %v2429, %v2428
      %v2451 = vpack.c.bf16 %v2431, %v2430
      %v2452 = vpack.c.bf16 %v2433, %v2432
      %v2453 = vpack.c.bf16 %v2435, %v2434
      %v2454 = vpack.c.bf16 %v2437, %v2436
      %v2455 = vpack.c.bf16 %v2439, %v2438
      %2456 = vst [vmem:[#allocation3] sm:$0xff] %v2440
      %2457 = vst [vmem:[#allocation3 + $0x48] sm:$0xff] %v2441
      %2458 = vst [vmem:[#allocation3 + $0x90] sm:$0xff] %v2442
      %2459 = vst [vmem:[#allocation3 + $0xd8] sm:$0xff] %v2443
      %2460 = vst [vmem:[#allocation3 + $0x120] sm:$0xff] %v2444
      %2461 = vst [vmem:[#allocation3 + $0x168] sm:$0xff] %v2445
      %2462 = vst [vmem:[#allocation3 + $0x1b0] sm:$0xff] %v2446
      %2463 = vst [vmem:[#allocation3 + $0x1f8] sm:$0xff] %v2447
      %2464 = vst [vmem:[#allocation3 + $0x240] sm:$0xff] %v2448
      %2465 = vst [vmem:[#allocation3 + $0x288] sm:$0xff] %v2449
      %2466 = vst [vmem:[#allocation3 + $0x2d0] sm:$0xff] %v2450
      %2467 = vst [vmem:[#allocation3 + $0x318] sm:$0xff] %v2451
      %2468 = vst [vmem:[#allocation3 + $0x360] sm:$0xff] %v2452
      %2469 = vst [vmem:[#allocation3 + $0x3a8] sm:$0xff] %v2453
      %2470 = vst [vmem:[#allocation3 + $0x3f0] sm:$0xff] %v2454
      %2471 = vst [vmem:[#allocation3 + $0x438] sm:$0xff] %v2455
      %v2472 = vld [vmem:[#allocation2 + $0x8] sm:$0xff]
      %v2473 = vld [vmem:[#allocation2 + $0x10] sm:$0xff]
      %v2474 = vld [vmem:[#allocation2 + $0x28] sm:$0xff]
      %v2475 = vld [vmem:[#allocation2 + $0x30] sm:$0xff]
      %v2476 = vld [vmem:[#allocation2 + $0x48] sm:$0xff]
      %v2477 = vld [vmem:[#allocation2 + $0x50] sm:$0xff]
      %v2478 = vld [vmem:[#allocation2 + $0x68] sm:$0xff]
      %v2479 = vld [vmem:[#allocation2 + $0x70] sm:$0xff]
      %v2480 = vld [vmem:[#allocation2 + $0x88] sm:$0xff]
      %v2481 = vld [vmem:[#allocation2 + $0x90] sm:$0xff]
      %v2482 = vld [vmem:[#allocation2 + $0xa8] sm:$0xff]
      %v2483 = vld [vmem:[#allocation2 + $0xb0] sm:$0xff]
      %v2484 = vld [vmem:[#allocation2 + $0xc8] sm:$0xff]
      %v2485 = vld [vmem:[#allocation2 + $0xd0] sm:$0xff]
      %v2486 = vld [vmem:[#allocation2 + $0xe8] sm:$0xff]
      %v2487 = vld [vmem:[#allocation2 + $0xf0] sm:$0xff]
      %v2488 = vld [vmem:[#allocation2 + $0x108] sm:$0xff]
      %v2489 = vld [vmem:[#allocation2 + $0x110] sm:$0xff]
      %v2490 = vld [vmem:[#allocation2 + $0x128] sm:$0xff]
      %v2491 = vld [vmem:[#allocation2 + $0x130] sm:$0xff]
      %v2492 = vld [vmem:[#allocation2 + $0x148] sm:$0xff]
      %v2493 = vld [vmem:[#allocation2 + $0x150] sm:$0xff]
      %v2494 = vld [vmem:[#allocation2 + $0x168] sm:$0xff]
      %v2495 = vld [vmem:[#allocation2 + $0x170] sm:$0xff]
      %v2496 = vld [vmem:[#allocation2 + $0x188] sm:$0xff]
      %v2497 = vld [vmem:[#allocation2 + $0x190] sm:$0xff]
      %v2498 = vld [vmem:[#allocation2 + $0x1a8] sm:$0xff]
      %v2499 = vld [vmem:[#allocation2 + $0x1b0] sm:$0xff]
      %v2500 = vld [vmem:[#allocation2 + $0x1c8] sm:$0xff]
      %v2501 = vld [vmem:[#allocation2 + $0x1d0] sm:$0xff]
      %v2502 = vld [vmem:[#allocation2 + $0x1e8] sm:$0xff]
      %v2503 = vld [vmem:[#allocation2 + $0x1f0] sm:$0xff]
      %v2504 = vpack.c.bf16 %v2473, %v2472
      %v2505 = vpack.c.bf16 %v2475, %v2474
      %v2506 = vpack.c.bf16 %v2477, %v2476
      %v2507 = vpack.c.bf16 %v2479, %v2478
      %v2508 = vpack.c.bf16 %v2481, %v2480
      %v2509 = vpack.c.bf16 %v2483, %v2482
      %v2510 = vpack.c.bf16 %v2485, %v2484
      %v2511 = vpack.c.bf16 %v2487, %v2486
      %v2512 = vpack.c.bf16 %v2489, %v2488
      %v2513 = vpack.c.bf16 %v2491, %v2490
      %v2514 = vpack.c.bf16 %v2493, %v2492
      %v2515 = vpack.c.bf16 %v2495, %v2494
      %v2516 = vpack.c.bf16 %v2497, %v2496
      %v2517 = vpack.c.bf16 %v2499, %v2498
      %v2518 = vpack.c.bf16 %v2501, %v2500
      %v2519 = vpack.c.bf16 %v2503, %v2502
      %2520 = vst [vmem:[#allocation3 + $0x8] sm:$0xff] %v2504
      %2521 = vst [vmem:[#allocation3 + $0x50] sm:$0xff] %v2505
      %2522 = vst [vmem:[#allocation3 + $0x98] sm:$0xff] %v2506
      %2523 = vst [vmem:[#allocation3 + $0xe0] sm:$0xff] %v2507
      %2524 = vst [vmem:[#allocation3 + $0x128] sm:$0xff] %v2508
      %2525 = vst [vmem:[#allocation3 + $0x170] sm:$0xff] %v2509
      %2526 = vst [vmem:[#allocation3 + $0x1b8] sm:$0xff] %v2510
      %2527 = vst [vmem:[#allocation3 + $0x200] sm:$0xff] %v2511
      %2528 = vst [vmem:[#allocation3 + $0x248] sm:$0xff] %v2512
      %2529 = vst [vmem:[#allocation3 + $0x290] sm:$0xff] %v2513
      %2530 = vst [vmem:[#allocation3 + $0x2d8] sm:$0xff] %v2514
      %2531 = vst [vmem:[#allocation3 + $0x320] sm:$0xff] %v2515
      %2532 = vst [vmem:[#allocation3 + $0x368] sm:$0xff] %v2516
      %2533 = vst [vmem:[#allocation3 + $0x3b0] sm:$0xff] %v2517
      %2534 = vst [vmem:[#allocation3 + $0x3f8] sm:$0xff] %v2518
      %2535 = vst [vmem:[#allocation3 + $0x440] sm:$0xff] %v2519
      %v2536 = vld [vmem:[#allocation2 + $0x9] sm:$0xff]
      %v2537 = vld [vmem:[#allocation2 + $0x11] sm:$0xff]
      %v2538 = vld [vmem:[#allocation2 + $0x29] sm:$0xff]
      %v2539 = vld [vmem:[#allocation2 + $0x31] sm:$0xff]
      %v2540 = vld [vmem:[#allocation2 + $0x49] sm:$0xff]
      %v2541 = vld [vmem:[#allocation2 + $0x51] sm:$0xff]
      %v2542 = vld [vmem:[#allocation2 + $0x69] sm:$0xff]
      %v2543 = vld [vmem:[#allocation2 + $0x71] sm:$0xff]
      %v2544 = vld [vmem:[#allocation2 + $0x89] sm:$0xff]
      %v2545 = vld [vmem:[#allocation2 + $0x91] sm:$0xff]
      %v2546 = vld [vmem:[#allocation2 + $0xa9] sm:$0xff]
      %v2547 = vld [vmem:[#allocation2 + $0xb1] sm:$0xff]
      %v2548 = vld [vmem:[#allocation2 + $0xc9] sm:$0xff]
      %v2549 = vld [vmem:[#allocation2 + $0xd1] sm:$0xff]
      %v2550 = vld [vmem:[#allocation2 + $0xe9] sm:$0xff]
      %v2551 = vld [vmem:[#allocation2 + $0xf1] sm:$0xff]
      %v2552 = vld [vmem:[#allocation2 + $0x109] sm:$0xff]
      %v2553 = vld [vmem:[#allocation2 + $0x111] sm:$0xff]
      %v2554 = vld [vmem:[#allocation2 + $0x129] sm:$0xff]
      %v2555 = vld [vmem:[#allocation2 + $0x131] sm:$0xff]
      %v2556 = vld [vmem:[#allocation2 + $0x149] sm:$0xff]
      %v2557 = vld [vmem:[#allocation2 + $0x151] sm:$0xff]
      %v2558 = vld [vmem:[#allocation2 + $0x169] sm:$0xff]
      %v2559 = vld [vmem:[#allocation2 + $0x171] sm:$0xff]
      %v2560 = vld [vmem:[#allocation2 + $0x189] sm:$0xff]
      %v2561 = vld [vmem:[#allocation2 + $0x191] sm:$0xff]
      %v2562 = vld [vmem:[#allocation2 + $0x1a9] sm:$0xff]
      %v2563 = vld [vmem:[#allocation2 + $0x1b1] sm:$0xff]
      %v2564 = vld [vmem:[#allocation2 + $0x1c9] sm:$0xff]
      %v2565 = vld [vmem:[#allocation2 + $0x1d1] sm:$0xff]
      %v2566 = vld [vmem:[#allocation2 + $0x1e9] sm:$0xff]
      %v2567 = vld [vmem:[#allocation2 + $0x1f1] sm:$0xff]
      %v2568 = vpack.c.bf16 %v2537, %v2536
      %v2569 = vpack.c.bf16 %v2539, %v2538
      %v2570 = vpack.c.bf16 %v2541, %v2540
      %v2571 = vpack.c.bf16 %v2543, %v2542
      %v2572 = vpack.c.bf16 %v2545, %v2544
      %v2573 = vpack.c.bf16 %v2547, %v2546
      %v2574 = vpack.c.bf16 %v2549, %v2548
      %v2575 = vpack.c.bf16 %v2551, %v2550
      %v2576 = vpack.c.bf16 %v2553, %v2552
      %v2577 = vpack.c.bf16 %v2555, %v2554
      %v2578 = vpack.c.bf16 %v2557, %v2556
      %v2579 = vpack.c.bf16 %v2559, %v2558
      %v2580 = vpack.c.bf16 %v2561, %v2560
      %v2581 = vpack.c.bf16 %v2563, %v2562
      %v2582 = vpack.c.bf16 %v2565, %v2564
      %v2583 = vpack.c.bf16 %v2567, %v2566
      %2584 = vst [vmem:[#allocation3 + $0x10] sm:$0xff] %v2568
      %2585 = vst [vmem:[#allocation3 + $0x58] sm:$0xff] %v2569
      %2586 = vst [vmem:[#allocation3 + $0xa0] sm:$0xff] %v2570
      %2587 = vst [vmem:[#allocation3 + $0xe8] sm:$0xff] %v2571
      %2588 = vst [vmem:[#allocation3 + $0x130] sm:$0xff] %v2572
      %2589 = vst [vmem:[#allocation3 + $0x178] sm:$0xff] %v2573
      %2590 = vst [vmem:[#allocation3 + $0x1c0] sm:$0xff] %v2574
      %2591 = vst [vmem:[#allocation3 + $0x208] sm:$0xff] %v2575
      %2592 = vst [vmem:[#allocation3 + $0x250] sm:$0xff] %v2576
      %2593 = vst [vmem:[#allocation3 + $0x298] sm:$0xff] %v2577
      %2594 = vst [vmem:[#allocation3 + $0x2e0] sm:$0xff] %v2578
      %2595 = vst [vmem:[#allocation3 + $0x328] sm:$0xff] %v2579
      %2596 = vst [vmem:[#allocation3 + $0x370] sm:$0xff] %v2580
      %2597 = vst [vmem:[#allocation3 + $0x3b8] sm:$0xff] %v2581
      %2598 = vst [vmem:[#allocation3 + $0x400] sm:$0xff] %v2582
      %2599 = vst [vmem:[#allocation3 + $0x448] sm:$0xff] %v2583
      %v2600 = vld [vmem:[%s208 + $0x7] sm:$0xff]
      %v2601 = vld [vmem:[%s208 + $0xf] sm:$0xff]
      %v2602 = vld [vmem:[%s208 + $0x27] sm:$0xff]
      %v2603 = vld [vmem:[%s208 + $0x2f] sm:$0xff]
      %v2604 = vld [vmem:[%s208 + $0x47] sm:$0xff]
      %v2605 = vld [vmem:[%s208 + $0x4f] sm:$0xff]
      %v2606 = vld [vmem:[%s208 + $0x67] sm:$0xff]
      %v2607 = vld [vmem:[%s208 + $0x6f] sm:$0xff]
      %v2608 = vld [vmem:[%s208 + $0x87] sm:$0xff]
      %v2609 = vld [vmem:[%s208 + $0x8f] sm:$0xff]
      %v2610 = vld [vmem:[%s208 + $0xa7] sm:$0xff]
      %v2611 = vld [vmem:[%s208 + $0xaf] sm:$0xff]
      %v2612 = vld [vmem:[%s208 + $0xc7] sm:$0xff]
      %v2613 = vld [vmem:[%s208 + $0xcf] sm:$0xff]
      %v2614 = vld [vmem:[%s208 + $0xe7] sm:$0xff]
      %v2615 = vld [vmem:[%s208 + $0xef] sm:$0xff]
      %v2616 = vld [vmem:[%s208 + $0x107] sm:$0xff]
      %v2617 = vld [vmem:[%s208 + $0x10f] sm:$0xff]
      %v2618 = vld [vmem:[%s208 + $0x127] sm:$0xff]
      %v2619 = vld [vmem:[%s208 + $0x12f] sm:$0xff]
      %v2620 = vld [vmem:[%s208 + $0x147] sm:$0xff]
      %v2621 = vld [vmem:[%s208 + $0x14f] sm:$0xff]
      %v2622 = vld [vmem:[%s208 + $0x167] sm:$0xff]
      %v2623 = vld [vmem:[%s208 + $0x16f] sm:$0xff]
      %v2624 = vld [vmem:[%s208 + $0x187] sm:$0xff]
      %v2625 = vld [vmem:[%s208 + $0x18f] sm:$0xff]
      %v2626 = vld [vmem:[%s208 + $0x1a7] sm:$0xff]
      %v2627 = vld [vmem:[%s208 + $0x1af] sm:$0xff]
      %v2628 = vld [vmem:[%s208 + $0x1c7] sm:$0xff]
      %v2629 = vld [vmem:[%s208 + $0x1cf] sm:$0xff]
      %v2630 = vld [vmem:[%s208 + $0x1e7] sm:$0xff]
      %v2631 = vld [vmem:[%s208 + $0x1ef] sm:$0xff]
      %v2632 = vpack.c.bf16 %v2601, %v2600
      %v2633 = vpack.c.bf16 %v2603, %v2602
      %v2634 = vpack.c.bf16 %v2605, %v2604
      %v2635 = vpack.c.bf16 %v2607, %v2606
      %v2636 = vpack.c.bf16 %v2609, %v2608
      %v2637 = vpack.c.bf16 %v2611, %v2610
      %v2638 = vpack.c.bf16 %v2613, %v2612
      %v2639 = vpack.c.bf16 %v2615, %v2614
      %v2640 = vpack.c.bf16 %v2617, %v2616
      %v2641 = vpack.c.bf16 %v2619, %v2618
      %v2642 = vpack.c.bf16 %v2621, %v2620
      %v2643 = vpack.c.bf16 %v2623, %v2622
      %v2644 = vpack.c.bf16 %v2625, %v2624
      %v2645 = vpack.c.bf16 %v2627, %v2626
      %v2646 = vpack.c.bf16 %v2629, %v2628
      %v2647 = vpack.c.bf16 %v2631, %v2630
      %2648 = vst [vmem:[#allocation3 + $0x18] sm:$0xff] %v2632
      %2649 = vst [vmem:[#allocation3 + $0x60] sm:$0xff] %v2633
      %2650 = vst [vmem:[#allocation3 + $0xa8] sm:$0xff] %v2634
      %2651 = vst [vmem:[#allocation3 + $0xf0] sm:$0xff] %v2635
      %2652 = vst [vmem:[#allocation3 + $0x138] sm:$0xff] %v2636
      %2653 = vst [vmem:[#allocation3 + $0x180] sm:$0xff] %v2637
      %2654 = vst [vmem:[#allocation3 + $0x1c8] sm:$0xff] %v2638
      %2655 = vst [vmem:[#allocation3 + $0x210] sm:$0xff] %v2639
      %2656 = vst [vmem:[#allocation3 + $0x258] sm:$0xff] %v2640
      %2657 = vst [vmem:[#allocation3 + $0x2a0] sm:$0xff] %v2641
      %2658 = vst [vmem:[#allocation3 + $0x2e8] sm:$0xff] %v2642
      %2659 = vst [vmem:[#allocation3 + $0x330] sm:$0xff] %v2643
      %2660 = vst [vmem:[#allocation3 + $0x378] sm:$0xff] %v2644
      %2661 = vst [vmem:[#allocation3 + $0x3c0] sm:$0xff] %v2645
      %2662 = vst [vmem:[#allocation3 + $0x408] sm:$0xff] %v2646
      %2663 = vst [vmem:[#allocation3 + $0x450] sm:$0xff] %v2647
      %v2664 = vld [vmem:[%s208 + $0x8] sm:$0xff]
      %v2665 = vld [vmem:[%s208 + $0x10] sm:$0xff]
      %v2666 = vld [vmem:[%s208 + $0x28] sm:$0xff]
      %v2667 = vld [vmem:[%s208 + $0x30] sm:$0xff]
      %v2668 = vld [vmem:[%s208 + $0x48] sm:$0xff]
      %v2669 = vld [vmem:[%s208 + $0x50] sm:$0xff]
      %v2670 = vld [vmem:[%s208 + $0x68] sm:$0xff]
      %v2671 = vld [vmem:[%s208 + $0x70] sm:$0xff]
      %v2672 = vld [vmem:[%s208 + $0x88] sm:$0xff]
      %v2673 = vld [vmem:[%s208 + $0x90] sm:$0xff]
      %v2674 = vld [vmem:[%s208 + $0xa8] sm:$0xff]
      %v2675 = vld [vmem:[%s208 + $0xb0] sm:$0xff]
      %v2676 = vld [vmem:[%s208 + $0xc8] sm:$0xff]
      %v2677 = vld [vmem:[%s208 + $0xd0] sm:$0xff]
      %v2678 = vld [vmem:[%s208 + $0xe8] sm:$0xff]
      %v2679 = vld [vmem:[%s208 + $0xf0] sm:$0xff]
      %v2680 = vld [vmem:[%s208 + $0x108] sm:$0xff]
      %v2681 = vld [vmem:[%s208 + $0x110] sm:$0xff]
      %v2682 = vld [vmem:[%s208 + $0x128] sm:$0xff]
      %v2683 = vld [vmem:[%s208 + $0x130] sm:$0xff]
      %v2684 = vld [vmem:[%s208 + $0x148] sm:$0xff]
      %v2685 = vld [vmem:[%s208 + $0x150] sm:$0xff]
      %v2686 = vld [vmem:[%s208 + $0x168] sm:$0xff]
      %v2687 = vld [vmem:[%s208 + $0x170] sm:$0xff]
      %v2688 = vld [vmem:[%s208 + $0x188] sm:$0xff]
      %v2689 = vld [vmem:[%s208 + $0x190] sm:$0xff]
      %v2690 = vld [vmem:[%s208 + $0x1a8] sm:$0xff]
      %v2691 = vld [vmem:[%s208 + $0x1b0] sm:$0xff]
      %v2692 = vld [vmem:[%s208 + $0x1c8] sm:$0xff]
      %v2693 = vld [vmem:[%s208 + $0x1d0] sm:$0xff]
      %v2694 = vld [vmem:[%s208 + $0x1e8] sm:$0xff]
      %v2695 = vld [vmem:[%s208 + $0x1f0] sm:$0xff]
      %v2696 = vpack.c.bf16 %v2665, %v2664
      %v2697 = vpack.c.bf16 %v2667, %v2666
      %v2698 = vpack.c.bf16 %v2669, %v2668
      %v2699 = vpack.c.bf16 %v2671, %v2670
      %v2700 = vpack.c.bf16 %v2673, %v2672
      %v2701 = vpack.c.bf16 %v2675, %v2674
      %v2702 = vpack.c.bf16 %v2677, %v2676
      %v2703 = vpack.c.bf16 %v2679, %v2678
      %v2704 = vpack.c.bf16 %v2681, %v2680
      %v2705 = vpack.c.bf16 %v2683, %v2682
      %v2706 = vpack.c.bf16 %v2685, %v2684
      %v2707 = vpack.c.bf16 %v2687, %v2686
      %v2708 = vpack.c.bf16 %v2689, %v2688
      %v2709 = vpack.c.bf16 %v2691, %v2690
      %v2710 = vpack.c.bf16 %v2693, %v2692
      %v2711 = vpack.c.bf16 %v2695, %v2694
      %2712 = vst [vmem:[#allocation3 + $0x20] sm:$0xff] %v2696
      %2713 = vst [vmem:[#allocation3 + $0x68] sm:$0xff] %v2697
      %2714 = vst [vmem:[#allocation3 + $0xb0] sm:$0xff] %v2698
      %2715 = vst [vmem:[#allocation3 + $0xf8] sm:$0xff] %v2699
      %2716 = vst [vmem:[#allocation3 + $0x140] sm:$0xff] %v2700
      %2717 = vst [vmem:[#allocation3 + $0x188] sm:$0xff] %v2701
      %2718 = vst [vmem:[#allocation3 + $0x1d0] sm:$0xff] %v2702
      %2719 = vst [vmem:[#allocation3 + $0x218] sm:$0xff] %v2703
      %2720 = vst [vmem:[#allocation3 + $0x260] sm:$0xff] %v2704
      %2721 = vst [vmem:[#allocation3 + $0x2a8] sm:$0xff] %v2705
      %2722 = vst [vmem:[#allocation3 + $0x2f0] sm:$0xff] %v2706
      %2723 = vst [vmem:[#allocation3 + $0x338] sm:$0xff] %v2707
      %2724 = vst [vmem:[#allocation3 + $0x380] sm:$0xff] %v2708
      %2725 = vst [vmem:[#allocation3 + $0x3c8] sm:$0xff] %v2709
      %2726 = vst [vmem:[#allocation3 + $0x410] sm:$0xff] %v2710
      %2727 = vst [vmem:[#allocation3 + $0x458] sm:$0xff] %v2711
      %v2728 = vld [vmem:[%s208 + $0x9] sm:$0xff]
      %v2729 = vld [vmem:[%s208 + $0x11] sm:$0xff]
      %v2730 = vld [vmem:[%s208 + $0x29] sm:$0xff]
      %v2731 = vld [vmem:[%s208 + $0x31] sm:$0xff]
      %v2732 = vld [vmem:[%s208 + $0x49] sm:$0xff]
      %v2733 = vld [vmem:[%s208 + $0x51] sm:$0xff]
      %v2734 = vld [vmem:[%s208 + $0x69] sm:$0xff]
      %v2735 = vld [vmem:[%s208 + $0x71] sm:$0xff]
      %v2736 = vld [vmem:[%s208 + $0x89] sm:$0xff]
      %v2737 = vld [vmem:[%s208 + $0x91] sm:$0xff]
      %v2738 = vld [vmem:[%s208 + $0xa9] sm:$0xff]
      %v2739 = vld [vmem:[%s208 + $0xb1] sm:$0xff]
      %v2740 = vld [vmem:[%s208 + $0xc9] sm:$0xff]
      %v2741 = vld [vmem:[%s208 + $0xd1] sm:$0xff]
      %v2742 = vld [vmem:[%s208 + $0xe9] sm:$0xff]
      %v2743 = vld [vmem:[%s208 + $0xf1] sm:$0xff]
      %v2744 = vld [vmem:[%s208 + $0x109] sm:$0xff]
      %v2745 = vld [vmem:[%s208 + $0x111] sm:$0xff]
      %v2746 = vld [vmem:[%s208 + $0x129] sm:$0xff]
      %v2747 = vld [vmem:[%s208 + $0x131] sm:$0xff]
      %v2748 = vld [vmem:[%s208 + $0x149] sm:$0xff]
      %v2749 = vld [vmem:[%s208 + $0x151] sm:$0xff]
      %v2750 = vld [vmem:[%s208 + $0x169] sm:$0xff]
      %v2751 = vld [vmem:[%s208 + $0x171] sm:$0xff]
      %v2752 = vld [vmem:[%s208 + $0x189] sm:$0xff]
      %v2753 = vld [vmem:[%s208 + $0x191] sm:$0xff]
      %v2754 = vld [vmem:[%s208 + $0x1a9] sm:$0xff]
      %v2755 = vld [vmem:[%s208 + $0x1b1] sm:$0xff]
      %v2756 = vld [vmem:[%s208 + $0x1c9] sm:$0xff]
      %v2757 = vld [vmem:[%s208 + $0x1d1] sm:$0xff]
      %v2758 = vld [vmem:[%s208 + $0x1e9] sm:$0xff]
      %v2759 = vld [vmem:[%s208 + $0x1f1] sm:$0xff]
      %v2760 = vpack.c.bf16 %v2729, %v2728
      %v2761 = vpack.c.bf16 %v2731, %v2730
      %v2762 = vpack.c.bf16 %v2733, %v2732
      %v2763 = vpack.c.bf16 %v2735, %v2734
      %v2764 = vpack.c.bf16 %v2737, %v2736
      %v2765 = vpack.c.bf16 %v2739, %v2738
      %v2766 = vpack.c.bf16 %v2741, %v2740
      %v2767 = vpack.c.bf16 %v2743, %v2742
      %v2768 = vpack.c.bf16 %v2745, %v2744
      %v2769 = vpack.c.bf16 %v2747, %v2746
      %v2770 = vpack.c.bf16 %v2749, %v2748
      %v2771 = vpack.c.bf16 %v2751, %v2750
      %v2772 = vpack.c.bf16 %v2753, %v2752
      %v2773 = vpack.c.bf16 %v2755, %v2754
      %v2774 = vpack.c.bf16 %v2757, %v2756
      %v2775 = vpack.c.bf16 %v2759, %v2758
      %2776 = vst [vmem:[#allocation3 + $0x28] sm:$0xff] %v2760
      %2777 = vst [vmem:[#allocation3 + $0x70] sm:$0xff] %v2761
      %2778 = vst [vmem:[#allocation3 + $0xb8] sm:$0xff] %v2762
      %2779 = vst [vmem:[#allocation3 + $0x100] sm:$0xff] %v2763
      %2780 = vst [vmem:[#allocation3 + $0x148] sm:$0xff] %v2764
      %2781 = vst [vmem:[#allocation3 + $0x190] sm:$0xff] %v2765
      %2782 = vst [vmem:[#allocation3 + $0x1d8] sm:$0xff] %v2766
      %2783 = vst [vmem:[#allocation3 + $0x220] sm:$0xff] %v2767
      %2784 = vst [vmem:[#allocation3 + $0x268] sm:$0xff] %v2768
      %2785 = vst [vmem:[#allocation3 + $0x2b0] sm:$0xff] %v2769
      %2786 = vst [vmem:[#allocation3 + $0x2f8] sm:$0xff] %v2770
      %2787 = vst [vmem:[#allocation3 + $0x340] sm:$0xff] %v2771
      %2788 = vst [vmem:[#allocation3 + $0x388] sm:$0xff] %v2772
      %2789 = vst [vmem:[#allocation3 + $0x3d0] sm:$0xff] %v2773
      %2790 = vst [vmem:[#allocation3 + $0x418] sm:$0xff] %v2774
      %2791 = vst [vmem:[#allocation3 + $0x460] sm:$0xff] %v2775
      %s2792 = scalar_lea.vmem [#allocation2], 64
      %v2793 = vld [vmem:[%s2792 + $0x7] sm:$0xff]
      %v2794 = vld [vmem:[%s2792 + $0xf] sm:$0xff]
      %v2795 = vld [vmem:[%s2792 + $0x27] sm:$0xff]
      %v2796 = vld [vmem:[%s2792 + $0x2f] sm:$0xff]
      %v2797 = vld [vmem:[%s2792 + $0x47] sm:$0xff]
      %v2798 = vld [vmem:[%s2792 + $0x4f] sm:$0xff]
      %v2799 = vld [vmem:[%s2792 + $0x67] sm:$0xff]
      %v2800 = vld [vmem:[%s2792 + $0x6f] sm:$0xff]
      %v2801 = vld [vmem:[%s2792 + $0x87] sm:$0xff]
      %v2802 = vld [vmem:[%s2792 + $0x8f] sm:$0xff]
      %v2803 = vld [vmem:[%s2792 + $0xa7] sm:$0xff]
      %v2804 = vld [vmem:[%s2792 + $0xaf] sm:$0xff]
      %v2805 = vld [vmem:[%s2792 + $0xc7] sm:$0xff]
      %v2806 = vld [vmem:[%s2792 + $0xcf] sm:$0xff]
      %v2807 = vld [vmem:[%s2792 + $0xe7] sm:$0xff]
      %v2808 = vld [vmem:[%s2792 + $0xef] sm:$0xff]
      %v2809 = vld [vmem:[%s2792 + $0x107] sm:$0xff]
      %v2810 = vld [vmem:[%s2792 + $0x10f] sm:$0xff]
      %v2811 = vld [vmem:[%s2792 + $0x127] sm:$0xff]
      %v2812 = vld [vmem:[%s2792 + $0x12f] sm:$0xff]
      %v2813 = vld [vmem:[%s2792 + $0x147] sm:$0xff]
      %v2814 = vld [vmem:[%s2792 + $0x14f] sm:$0xff]
      %v2815 = vld [vmem:[%s2792 + $0x167] sm:$0xff]
      %v2816 = vld [vmem:[%s2792 + $0x16f] sm:$0xff]
      %v2817 = vld [vmem:[%s2792 + $0x187] sm:$0xff]
      %v2818 = vld [vmem:[%s2792 + $0x18f] sm:$0xff]
      %v2819 = vld [vmem:[%s2792 + $0x1a7] sm:$0xff]
      %v2820 = vld [vmem:[%s2792 + $0x1af] sm:$0xff]
      %v2821 = vld [vmem:[%s2792 + $0x1c7] sm:$0xff]
      %v2822 = vld [vmem:[%s2792 + $0x1cf] sm:$0xff]
      %v2823 = vld [vmem:[%s2792 + $0x1e7] sm:$0xff]
      %v2824 = vld [vmem:[%s2792 + $0x1ef] sm:$0xff]
      %v2825 = vpack.c.bf16 %v2794, %v2793
      %v2826 = vpack.c.bf16 %v2796, %v2795
      %v2827 = vpack.c.bf16 %v2798, %v2797
      %v2828 = vpack.c.bf16 %v2800, %v2799
      %v2829 = vpack.c.bf16 %v2802, %v2801
      %v2830 = vpack.c.bf16 %v2804, %v2803
      %v2831 = vpack.c.bf16 %v2806, %v2805
      %v2832 = vpack.c.bf16 %v2808, %v2807
      %v2833 = vpack.c.bf16 %v2810, %v2809
      %v2834 = vpack.c.bf16 %v2812, %v2811
      %v2835 = vpack.c.bf16 %v2814, %v2813
      %v2836 = vpack.c.bf16 %v2816, %v2815
      %v2837 = vpack.c.bf16 %v2818, %v2817
      %v2838 = vpack.c.bf16 %v2820, %v2819
      %v2839 = vpack.c.bf16 %v2822, %v2821
      %v2840 = vpack.c.bf16 %v2824, %v2823
      %2841 = vst [vmem:[#allocation3 + $0x30] sm:$0xff] %v2825
      %2842 = vst [vmem:[#allocation3 + $0x78] sm:$0xff] %v2826
      %2843 = vst [vmem:[#allocation3 + $0xc0] sm:$0xff] %v2827
      %2844 = vst [vmem:[#allocation3 + $0x108] sm:$0xff] %v2828
      %2845 = vst [vmem:[#allocation3 + $0x150] sm:$0xff] %v2829
      %2846 = vst [vmem:[#allocation3 + $0x198] sm:$0xff] %v2830
      %2847 = vst [vmem:[#allocation3 + $0x1e0] sm:$0xff] %v2831
      %2848 = vst [vmem:[#allocation3 + $0x228] sm:$0xff] %v2832
      %2849 = vst [vmem:[#allocation3 + $0x270] sm:$0xff] %v2833
      %2850 = vst [vmem:[#allocation3 + $0x2b8] sm:$0xff] %v2834
      %2851 = vst [vmem:[#allocation3 + $0x300] sm:$0xff] %v2835
      %2852 = vst [vmem:[#allocation3 + $0x348] sm:$0xff] %v2836
      %2853 = vst [vmem:[#allocation3 + $0x390] sm:$0xff] %v2837
      %2854 = vst [vmem:[#allocation3 + $0x3d8] sm:$0xff] %v2838
      %2855 = vst [vmem:[#allocation3 + $0x420] sm:$0xff] %v2839
      %2856 = vst [vmem:[#allocation3 + $0x468] sm:$0xff] %v2840
      %v2857 = vld [vmem:[%s2792 + $0x8] sm:$0xff]
      %v2858 = vld [vmem:[%s2792 + $0x10] sm:$0xff]
      %v2859 = vld [vmem:[%s2792 + $0x28] sm:$0xff]
      %v2860 = vld [vmem:[%s2792 + $0x30] sm:$0xff]
      %v2861 = vld [vmem:[%s2792 + $0x48] sm:$0xff]
      %v2862 = vld [vmem:[%s2792 + $0x50] sm:$0xff]
      %v2863 = vld [vmem:[%s2792 + $0x68] sm:$0xff]
      %v2864 = vld [vmem:[%s2792 + $0x70] sm:$0xff]
      %v2865 = vld [vmem:[%s2792 + $0x88] sm:$0xff]
      %v2866 = vld [vmem:[%s2792 + $0x90] sm:$0xff]
      %v2867 = vld [vmem:[%s2792 + $0xa8] sm:$0xff]
      %v2868 = vld [vmem:[%s2792 + $0xb0] sm:$0xff]
      %v2869 = vld [vmem:[%s2792 + $0xc8] sm:$0xff]
      %v2870 = vld [vmem:[%s2792 + $0xd0] sm:$0xff]
      %v2871 = vld [vmem:[%s2792 + $0xe8] sm:$0xff]
      %v2872 = vld [vmem:[%s2792 + $0xf0] sm:$0xff]
      %v2873 = vld [vmem:[%s2792 + $0x108] sm:$0xff]
      %v2874 = vld [vmem:[%s2792 + $0x110] sm:$0xff]
      %v2875 = vld [vmem:[%s2792 + $0x128] sm:$0xff]
      %v2876 = vld [vmem:[%s2792 + $0x130] sm:$0xff]
      %v2877 = vld [vmem:[%s2792 + $0x148] sm:$0xff]
      %v2878 = vld [vmem:[%s2792 + $0x150] sm:$0xff]
      %v2879 = vld [vmem:[%s2792 + $0x168] sm:$0xff]
      %v2880 = vld [vmem:[%s2792 + $0x170] sm:$0xff]
      %v2881 = vld [vmem:[%s2792 + $0x188] sm:$0xff]
      %v2882 = vld [vmem:[%s2792 + $0x190] sm:$0xff]
      %v2883 = vld [vmem:[%s2792 + $0x1a8] sm:$0xff]
      %v2884 = vld [vmem:[%s2792 + $0x1b0] sm:$0xff]
      %v2885 = vld [vmem:[%s2792 + $0x1c8] sm:$0xff]
      %v2886 = vld [vmem:[%s2792 + $0x1d0] sm:$0xff]
      %v2887 = vld [vmem:[%s2792 + $0x1e8] sm:$0xff]
      %v2888 = vld [vmem:[%s2792 + $0x1f0] sm:$0xff]
      %v2889 = vpack.c.bf16 %v2858, %v2857
      %v2890 = vpack.c.bf16 %v2860, %v2859
      %v2891 = vpack.c.bf16 %v2862, %v2861
      %v2892 = vpack.c.bf16 %v2864, %v2863
      %v2893 = vpack.c.bf16 %v2866, %v2865
      %v2894 = vpack.c.bf16 %v2868, %v2867
      %v2895 = vpack.c.bf16 %v2870, %v2869
      %v2896 = vpack.c.bf16 %v2872, %v2871
      %v2897 = vpack.c.bf16 %v2874, %v2873
      %v2898 = vpack.c.bf16 %v2876, %v2875
      %v2899 = vpack.c.bf16 %v2878, %v2877
      %v2900 = vpack.c.bf16 %v2880, %v2879
      %v2901 = vpack.c.bf16 %v2882, %v2881
      %v2902 = vpack.c.bf16 %v2884, %v2883
      %v2903 = vpack.c.bf16 %v2886, %v2885
      %v2904 = vpack.c.bf16 %v2888, %v2887
      %2905 = vst [vmem:[#allocation3 + $0x38] sm:$0xff] %v2889
      %2906 = vst [vmem:[#allocation3 + $0x80] sm:$0xff] %v2890
      %2907 = vst [vmem:[#allocation3 + $0xc8] sm:$0xff] %v2891
      %2908 = vst [vmem:[#allocation3 + $0x110] sm:$0xff] %v2892
      %2909 = vst [vmem:[#allocation3 + $0x158] sm:$0xff] %v2893
      %2910 = vst [vmem:[#allocation3 + $0x1a0] sm:$0xff] %v2894
      %2911 = vst [vmem:[#allocation3 + $0x1e8] sm:$0xff] %v2895
      %2912 = vst [vmem:[#allocation3 + $0x230] sm:$0xff] %v2896
      %2913 = vst [vmem:[#allocation3 + $0x278] sm:$0xff] %v2897
      %2914 = vst [vmem:[#allocation3 + $0x2c0] sm:$0xff] %v2898
      %2915 = vst [vmem:[#allocation3 + $0x308] sm:$0xff] %v2899
      %2916 = vst [vmem:[#allocation3 + $0x350] sm:$0xff] %v2900
      %2917 = vst [vmem:[#allocation3 + $0x398] sm:$0xff] %v2901
      %2918 = vst [vmem:[#allocation3 + $0x3e0] sm:$0xff] %v2902
      %2919 = vst [vmem:[#allocation3 + $0x428] sm:$0xff] %v2903
      %2920 = vst [vmem:[#allocation3 + $0x470] sm:$0xff] %v2904
      %v2921 = vld [vmem:[%s2792 + $0x9] sm:$0xff]
      %v2922 = vld [vmem:[%s2792 + $0x11] sm:$0xff]
      %v2923 = vld [vmem:[%s2792 + $0x29] sm:$0xff]
      %v2924 = vld [vmem:[%s2792 + $0x31] sm:$0xff]
      %v2925 = vld [vmem:[%s2792 + $0x49] sm:$0xff]
      %v2926 = vld [vmem:[%s2792 + $0x51] sm:$0xff]
      %v2927 = vld [vmem:[%s2792 + $0x69] sm:$0xff]
      %v2928 = vld [vmem:[%s2792 + $0x71] sm:$0xff]
      %v2929 = vld [vmem:[%s2792 + $0x89] sm:$0xff]
      %v2930 = vld [vmem:[%s2792 + $0x91] sm:$0xff]
      %v2931 = vld [vmem:[%s2792 + $0xa9] sm:$0xff]
      %v2932 = vld [vmem:[%s2792 + $0xb1] sm:$0xff]
      %v2933 = vld [vmem:[%s2792 + $0xc9] sm:$0xff]
      %v2934 = vld [vmem:[%s2792 + $0xd1] sm:$0xff]
      %v2935 = vld [vmem:[%s2792 + $0xe9] sm:$0xff]
      %v2936 = vld [vmem:[%s2792 + $0xf1] sm:$0xff]
      %v2937 = vld [vmem:[%s2792 + $0x109] sm:$0xff]
      %v2938 = vld [vmem:[%s2792 + $0x111] sm:$0xff]
      %v2939 = vld [vmem:[%s2792 + $0x129] sm:$0xff]
      %v2940 = vld [vmem:[%s2792 + $0x131] sm:$0xff]
      %v2941 = vld [vmem:[%s2792 + $0x149] sm:$0xff]
      %v2942 = vld [vmem:[%s2792 + $0x151] sm:$0xff]
      %v2943 = vld [vmem:[%s2792 + $0x169] sm:$0xff]
      %v2944 = vld [vmem:[%s2792 + $0x171] sm:$0xff]
      %v2945 = vld [vmem:[%s2792 + $0x189] sm:$0xff]
      %v2946 = vld [vmem:[%s2792 + $0x191] sm:$0xff]
      %v2947 = vld [vmem:[%s2792 + $0x1a9] sm:$0xff]
      %v2948 = vld [vmem:[%s2792 + $0x1b1] sm:$0xff]
      %v2949 = vld [vmem:[%s2792 + $0x1c9] sm:$0xff]
      %v2950 = vld [vmem:[%s2792 + $0x1d1] sm:$0xff]
      %v2951 = vld [vmem:[%s2792 + $0x1e9] sm:$0xff]
      %v2952 = vld [vmem:[%s2792 + $0x1f1] sm:$0xff]
      %v2953 = vpack.c.bf16 %v2922, %v2921
      %v2954 = vpack.c.bf16 %v2924, %v2923
      %v2955 = vpack.c.bf16 %v2926, %v2925
      %v2956 = vpack.c.bf16 %v2928, %v2927
      %v2957 = vpack.c.bf16 %v2930, %v2929
      %v2958 = vpack.c.bf16 %v2932, %v2931
      %v2959 = vpack.c.bf16 %v2934, %v2933
      %v2960 = vpack.c.bf16 %v2936, %v2935
      %v2961 = vpack.c.bf16 %v2938, %v2937
      %v2962 = vpack.c.bf16 %v2940, %v2939
      %v2963 = vpack.c.bf16 %v2942, %v2941
      %v2964 = vpack.c.bf16 %v2944, %v2943
      %v2965 = vpack.c.bf16 %v2946, %v2945
      %v2966 = vpack.c.bf16 %v2948, %v2947
      %v2967 = vpack.c.bf16 %v2950, %v2949
      %v2968 = vpack.c.bf16 %v2952, %v2951
      %2969 = vst [vmem:[#allocation3 + $0x40] sm:$0xff] %v2953
      %2970 = vst [vmem:[#allocation3 + $0x88] sm:$0xff] %v2954
      %2971 = vst [vmem:[#allocation3 + $0xd0] sm:$0xff] %v2955
      %2972 = vst [vmem:[#allocation3 + $0x118] sm:$0xff] %v2956
      %2973 = vst [vmem:[#allocation3 + $0x160] sm:$0xff] %v2957
      %2974 = vst [vmem:[#allocation3 + $0x1a8] sm:$0xff] %v2958
      %2975 = vst [vmem:[#allocation3 + $0x1f0] sm:$0xff] %v2959
      %2976 = vst [vmem:[#allocation3 + $0x238] sm:$0xff] %v2960
      %2977 = vst [vmem:[#allocation3 + $0x280] sm:$0xff] %v2961
      %2978 = vst [vmem:[#allocation3 + $0x2c8] sm:$0xff] %v2962
      %2979 = vst [vmem:[#allocation3 + $0x310] sm:$0xff] %v2963
      %2980 = vst [vmem:[#allocation3 + $0x358] sm:$0xff] %v2964
      %2981 = vst [vmem:[#allocation3 + $0x3a0] sm:$0xff] %v2965
      %2982 = vst [vmem:[#allocation3 + $0x3e8] sm:$0xff] %v2966
      %2983 = vst [vmem:[#allocation3 + $0x430] sm:$0xff] %v2967
      %2984 = vst [vmem:[#allocation3 + $0x478] sm:$0xff] %v2968
      %v2985 = vld [vmem:[%s2] sm:$0xf]
      %v2986 = vld [vmem:[%s2 + $0x4] sm:$0xf]
      %v2987 = vld [vmem:[%s2 + $0x8] sm:$0xf]
      %v2988 = vld [vmem:[%s2 + $0xc] sm:$0xf]
      %v2989 = vld [vmem:[%s2 + $0x10] sm:$0xf]
      %v2990 = vld [vmem:[%s2 + $0x14] sm:$0xf]
      %v2991 = vld [vmem:[%s2 + $0x18] sm:$0xf]
      %v2992 = vld [vmem:[%s2 + $0x1c] sm:$0xf]
      %v2993 = vld [vmem:[%s2 + $0x20] sm:$0xf]
      %v2994 = vld [vmem:[%s2 + $0x24] sm:$0xf]
      %v2995 = vld [vmem:[%s2 + $0x28] sm:$0xf]
      %v2996 = vld [vmem:[%s2 + $0x2c] sm:$0xf]
      %v2997 = vld [vmem:[%s2 + $0x30] sm:$0xf]
      %v2998 = vld [vmem:[%s2 + $0x34] sm:$0xf]
      %v2999 = vld [vmem:[%s2 + $0x38] sm:$0xf]
      %v3000 = vld [vmem:[%s2 + $0x3c] sm:$0xf]
      %v3001 = vld [vmem:[%s2 + $0x40] sm:$0xf]
      %v3002 = vld [vmem:[%s2 + $0x44] sm:$0xf]
      %v3003 = vld [vmem:[%s2 + $0x48] sm:$0xf]
      %v3004 = vld [vmem:[%s2 + $0x4c] sm:$0xf]
      %v3005 = vld [vmem:[%s2 + $0x50] sm:$0xf]
      %v3006 = vld [vmem:[%s2 + $0x54] sm:$0xf]
      %v3007 = vld [vmem:[%s2 + $0x58] sm:$0xf]
      %v3008 = vld [vmem:[%s2 + $0x5c] sm:$0xf]
      %v3009 = vld [vmem:[%s2 + $0x60] sm:$0xf]
      %v3010 = vld [vmem:[%s2 + $0x64] sm:$0xf]
      %v3011 = vld [vmem:[%s2 + $0x68] sm:$0xf]
      %v3012 = vld [vmem:[%s2 + $0x6c] sm:$0xf]
      %v3013 = vld [vmem:[%s2 + $0x70] sm:$0xf]
      %v3014 = vld [vmem:[%s2 + $0x74] sm:$0xf]
      %v3015 = vld [vmem:[%s2 + $0x78] sm:$0xf]
      %v3016 = vld [vmem:[%s2 + $0x7c] sm:$0xf]
      %v3017 = vld [vmem:[%s2 + $0x80] sm:$0xf]
      %v3018 = vld [vmem:[%s2 + $0x84] sm:$0xf]
      %v3019 = vld [vmem:[%s2 + $0x88] sm:$0xf]
      %v3020 = vld [vmem:[%s2 + $0x8c] sm:$0xf]
      %v3021 = vld [vmem:[%s2 + $0x90] sm:$0xf]
      %v3022 = vld [vmem:[%s2 + $0x94] sm:$0xf]
      %v3023 = vld [vmem:[%s2 + $0x98] sm:$0xf]
      %v3024 = vld [vmem:[%s2 + $0x9c] sm:$0xf]
      %v3025 = vld [vmem:[%s2 + $0xa0] sm:$0xf]
      %v3026 = vld [vmem:[%s2 + $0xa4] sm:$0xf]
      %v3027 = vld [vmem:[%s2 + $0xa8] sm:$0xf]
      %v3028 = vld [vmem:[%s2 + $0xac] sm:$0xf]
      %v3029 = vld [vmem:[%s2 + $0xb0] sm:$0xf]
      %v3030 = vld [vmem:[%s2 + $0xb4] sm:$0xf]
      %v3031 = vld [vmem:[%s2 + $0xb8] sm:$0xf]
      %v3032 = vld [vmem:[%s2 + $0xbc] sm:$0xf]
      %v3033 = vld [vmem:[%s2 + $0xc0] sm:$0xf]
      %v3034 = vld [vmem:[%s2 + $0xc4] sm:$0xf]
      %v3035 = vld [vmem:[%s2 + $0xc8] sm:$0xf]
      %v3036 = vld [vmem:[%s2 + $0xcc] sm:$0xf]
      %v3037 = vld [vmem:[%s2 + $0xd0] sm:$0xf]
      %v3038 = vld [vmem:[%s2 + $0xd4] sm:$0xf]
      %v3039 = vld [vmem:[%s2 + $0xd8] sm:$0xf]
      %v3040 = vld [vmem:[%s2 + $0xdc] sm:$0xf]
      %v3041 = vld [vmem:[%s2 + $0xe0] sm:$0xf]
      %v3042 = vld [vmem:[%s2 + $0xe4] sm:$0xf]
      %v3043 = vld [vmem:[%s2 + $0xe8] sm:$0xf]
      %v3044 = vld [vmem:[%s2 + $0xec] sm:$0xf]
      %v3045 = vld [vmem:[%s2 + $0xf0] sm:$0xf]
      %v3046 = vld [vmem:[%s2 + $0xf4] sm:$0xf]
      %v3047 = vld [vmem:[%s2 + $0xf8] sm:$0xf]
      %v3048 = vld [vmem:[%s2 + $0xfc] sm:$0xf]
      %v3049 = vld [vmem:[%s2 + $0x100] sm:$0xf]
      %v3050 = vld [vmem:[%s2 + $0x104] sm:$0xf]
      %v3051 = vld [vmem:[%s2 + $0x108] sm:$0xf]
      %v3052 = vld [vmem:[%s2 + $0x10c] sm:$0xf]
      %v3053 = vld [vmem:[%s2 + $0x110] sm:$0xf]
      %v3054 = vld [vmem:[%s2 + $0x114] sm:$0xf]
      %v3055 = vld [vmem:[%s2 + $0x118] sm:$0xf]
      %v3056 = vld [vmem:[%s2 + $0x11c] sm:$0xf]
      %v3057 = vld [vmem:[%s2 + $0x120] sm:$0xf]
      %v3058 = vld [vmem:[%s2 + $0x124] sm:$0xf]
      %v3059 = vld [vmem:[%s2 + $0x128] sm:$0xf]
      %v3060 = vld [vmem:[%s2 + $0x12c] sm:$0xf]
      %v3061 = vld [vmem:[%s2 + $0x130] sm:$0xf]
      %v3062 = vld [vmem:[%s2 + $0x134] sm:$0xf]
      %v3063 = vld [vmem:[%s2 + $0x138] sm:$0xf]
      %v3064 = vld [vmem:[%s2 + $0x13c] sm:$0xf]
      %v3065 = vld [vmem:[%s2 + $0x140] sm:$0xf]
      %v3066 = vld [vmem:[%s2 + $0x144] sm:$0xf]
      %v3067 = vld [vmem:[%s2 + $0x148] sm:$0xf]
      %v3068 = vld [vmem:[%s2 + $0x14c] sm:$0xf]
      %v3069 = vld [vmem:[%s2 + $0x150] sm:$0xf]
      %v3070 = vld [vmem:[%s2 + $0x154] sm:$0xf]
      %v3071 = vld [vmem:[%s2 + $0x158] sm:$0xf]
      %v3072 = vld [vmem:[%s2 + $0x15c] sm:$0xf]
      %v3073 = vld [vmem:[%s2 + $0x160] sm:$0xf]
      %v3074 = vld [vmem:[%s2 + $0x164] sm:$0xf]
      %v3075 = vld [vmem:[%s2 + $0x168] sm:$0xf]
      %v3076 = vld [vmem:[%s2 + $0x16c] sm:$0xf]
      %v3077 = vld [vmem:[%s2 + $0x170] sm:$0xf]
      %v3078 = vld [vmem:[%s2 + $0x174] sm:$0xf]
      %v3079 = vld [vmem:[%s2 + $0x178] sm:$0xf]
      %v3080 = vld [vmem:[%s2 + $0x17c] sm:$0xf]
      %v3081 = vld [vmem:[%s2 + $0x180] sm:$0xf]
      %v3082 = vld [vmem:[%s2 + $0x184] sm:$0xf]
      %v3083 = vld [vmem:[%s2 + $0x188] sm:$0xf]
      %v3084 = vld [vmem:[%s2 + $0x18c] sm:$0xf]
      %v3085 = vld [vmem:[%s2 + $0x190] sm:$0xf]
      %v3086 = vld [vmem:[%s2 + $0x194] sm:$0xf]
      %v3087 = vld [vmem:[%s2 + $0x198] sm:$0xf]
      %v3088 = vld [vmem:[%s2 + $0x19c] sm:$0xf]
      %v3089 = vld [vmem:[%s2 + $0x1a0] sm:$0xf]
      %v3090 = vld [vmem:[%s2 + $0x1a4] sm:$0xf]
      %v3091 = vld [vmem:[%s2 + $0x1a8] sm:$0xf]
      %v3092 = vld [vmem:[%s2 + $0x1ac] sm:$0xf]
      %v3093 = vld [vmem:[%s2 + $0x1b0] sm:$0xf]
      %v3094 = vld [vmem:[%s2 + $0x1b4] sm:$0xf]
      %v3095 = vld [vmem:[%s2 + $0x1b8] sm:$0xf]
      %v3096 = vld [vmem:[%s2 + $0x1bc] sm:$0xf]
      %v3097 = vld [vmem:[%s2 + $0x1c0] sm:$0xf]
      %v3098 = vld [vmem:[%s2 + $0x1c4] sm:$0xf]
      %v3099 = vld [vmem:[%s2 + $0x1c8] sm:$0xf]
      %v3100 = vld [vmem:[%s2 + $0x1cc] sm:$0xf]
      %v3101 = vld [vmem:[%s2 + $0x1d0] sm:$0xf]
      %v3102 = vld [vmem:[%s2 + $0x1d4] sm:$0xf]
      %v3103 = vld [vmem:[%s2 + $0x1d8] sm:$0xf]
      %v3104 = vld [vmem:[%s2 + $0x1dc] sm:$0xf]
      %v3105 = vld [vmem:[%s2 + $0x1e0] sm:$0xf]
      %v3106 = vld [vmem:[%s2 + $0x1e4] sm:$0xf]
      %v3107 = vld [vmem:[%s2 + $0x1e8] sm:$0xf]
      %v3108 = vld [vmem:[%s2 + $0x1ec] sm:$0xf]
      %v3109 = vld [vmem:[%s2 + $0x1f0] sm:$0xf]
      %v3110 = vld [vmem:[%s2 + $0x1f4] sm:$0xf]
      %v3111 = vld [vmem:[%s2 + $0x1f8] sm:$0xf]
      %v3112 = vld [vmem:[%s2 + $0x1fc] sm:$0xf]
      %v3113 = vld [vmem:[%s2 + $0x200] sm:$0xf]
      %v3114 = vld [vmem:[%s2 + $0x204] sm:$0xf]
      %v3115 = vld [vmem:[%s2 + $0x208] sm:$0xf]
      %v3116 = vld [vmem:[%s2 + $0x20c] sm:$0xf]
      %v3117 = vld [vmem:[%s2 + $0x210] sm:$0xf]
      %v3118 = vld [vmem:[%s2 + $0x214] sm:$0xf]
      %v3119 = vld [vmem:[%s2 + $0x218] sm:$0xf]
      %v3120 = vld [vmem:[%s2 + $0x21c] sm:$0xf]
      %v3121 = vld [vmem:[%s2 + $0x220] sm:$0xf]
      %v3122 = vld [vmem:[%s2 + $0x224] sm:$0xf]
      %v3123 = vld [vmem:[%s2 + $0x228] sm:$0xf]
      %v3124 = vld [vmem:[%s2 + $0x22c] sm:$0xf]
      %v3125 = vld [vmem:[%s2 + $0x230] sm:$0xf]
      %v3126 = vld [vmem:[%s2 + $0x234] sm:$0xf]
      %v3127 = vld [vmem:[%s2 + $0x238] sm:$0xf]
      %v3128 = vld [vmem:[%s2 + $0x23c] sm:$0xf]
      %v3129 = vld [vmem:[#allocation3] sm:$0xff]
      %v3130 = vld [vmem:[#allocation3 + $0x8] sm:$0xff]
      %v3131 = vld [vmem:[#allocation3 + $0x10] sm:$0xff]
      %v3132 = vld [vmem:[#allocation3 + $0x18] sm:$0xff]
      %v3133 = vld [vmem:[#allocation3 + $0x20] sm:$0xff]
      %v3134 = vld [vmem:[#allocation3 + $0x28] sm:$0xff]
      %v3135 = vld [vmem:[#allocation3 + $0x30] sm:$0xff]
      %v3136 = vld [vmem:[#allocation3 + $0x38] sm:$0xff]
      %v3137 = vld [vmem:[#allocation3 + $0x40] sm:$0xff]
      %v3138 = vld [vmem:[#allocation3 + $0x48] sm:$0xff]
      %v3139 = vld [vmem:[#allocation3 + $0x50] sm:$0xff]
      %v3140 = vld [vmem:[#allocation3 + $0x58] sm:$0xff]
      %v3141 = vld [vmem:[#allocation3 + $0x60] sm:$0xff]
      %v3142 = vld [vmem:[#allocation3 + $0x68] sm:$0xff]
      %v3143 = vld [vmem:[#allocation3 + $0x70] sm:$0xff]
      %v3144 = vld [vmem:[#allocation3 + $0x78] sm:$0xff]
      %v3145 = vld [vmem:[#allocation3 + $0x80] sm:$0xff]
      %v3146 = vld [vmem:[#allocation3 + $0x88] sm:$0xff]
      %v3147 = vld [vmem:[#allocation3 + $0x90] sm:$0xff]
      %v3148 = vld [vmem:[#allocation3 + $0x98] sm:$0xff]
      %v3149 = vld [vmem:[#allocation3 + $0xa0] sm:$0xff]
      %v3150 = vld [vmem:[#allocation3 + $0xa8] sm:$0xff]
      %v3151 = vld [vmem:[#allocation3 + $0xb0] sm:$0xff]
      %v3152 = vld [vmem:[#allocation3 + $0xb8] sm:$0xff]
      %v3153 = vld [vmem:[#allocation3 + $0xc0] sm:$0xff]
      %v3154 = vld [vmem:[#allocation3 + $0xc8] sm:$0xff]
      %v3155 = vld [vmem:[#allocation3 + $0xd0] sm:$0xff]
      %v3156 = vld [vmem:[#allocation3 + $0xd8] sm:$0xff]
      %v3157 = vld [vmem:[#allocation3 + $0xe0] sm:$0xff]
      %v3158 = vld [vmem:[#allocation3 + $0xe8] sm:$0xff]
      %v3159 = vld [vmem:[#allocation3 + $0xf0] sm:$0xff]
      %v3160 = vld [vmem:[#allocation3 + $0xf8] sm:$0xff]
      %v3161 = vld [vmem:[#allocation3 + $0x100] sm:$0xff]
      %v3162 = vld [vmem:[#allocation3 + $0x108] sm:$0xff]
      %v3163 = vld [vmem:[#allocation3 + $0x110] sm:$0xff]
      %v3164 = vld [vmem:[#allocation3 + $0x118] sm:$0xff]
      %v3165 = vld [vmem:[#allocation3 + $0x120] sm:$0xff]
      %v3166 = vld [vmem:[#allocation3 + $0x128] sm:$0xff]
      %v3167 = vld [vmem:[#allocation3 + $0x130] sm:$0xff]
      %v3168 = vld [vmem:[#allocation3 + $0x138] sm:$0xff]
      %v3169 = vld [vmem:[#allocation3 + $0x140] sm:$0xff]
      %v3170 = vld [vmem:[#allocation3 + $0x148] sm:$0xff]
      %v3171 = vld [vmem:[#allocation3 + $0x150] sm:$0xff]
      %v3172 = vld [vmem:[#allocation3 + $0x158] sm:$0xff]
      %v3173 = vld [vmem:[#allocation3 + $0x160] sm:$0xff]
      %v3174 = vld [vmem:[#allocation3 + $0x168] sm:$0xff]
      %v3175 = vld [vmem:[#allocation3 + $0x170] sm:$0xff]
      %v3176 = vld [vmem:[#allocation3 + $0x178] sm:$0xff]
      %v3177 = vld [vmem:[#allocation3 + $0x180] sm:$0xff]
      %v3178 = vld [vmem:[#allocation3 + $0x188] sm:$0xff]
      %v3179 = vld [vmem:[#allocation3 + $0x190] sm:$0xff]
      %v3180 = vld [vmem:[#allocation3 + $0x198] sm:$0xff]
      %v3181 = vld [vmem:[#allocation3 + $0x1a0] sm:$0xff]
      %v3182 = vld [vmem:[#allocation3 + $0x1a8] sm:$0xff]
      %v3183 = vld [vmem:[#allocation3 + $0x1b0] sm:$0xff]
      %v3184 = vld [vmem:[#allocation3 + $0x1b8] sm:$0xff]
      %v3185 = vld [vmem:[#allocation3 + $0x1c0] sm:$0xff]
      %v3186 = vld [vmem:[#allocation3 + $0x1c8] sm:$0xff]
      %v3187 = vld [vmem:[#allocation3 + $0x1d0] sm:$0xff]
      %v3188 = vld [vmem:[#allocation3 + $0x1d8] sm:$0xff]
      %v3189 = vld [vmem:[#allocation3 + $0x1e0] sm:$0xff]
      %v3190 = vld [vmem:[#allocation3 + $0x1e8] sm:$0xff]
      %v3191 = vld [vmem:[#allocation3 + $0x1f0] sm:$0xff]
      %v3192 = vld [vmem:[#allocation3 + $0x1f8] sm:$0xff]
      %v3193 = vld [vmem:[#allocation3 + $0x200] sm:$0xff]
      %v3194 = vld [vmem:[#allocation3 + $0x208] sm:$0xff]
      %v3195 = vld [vmem:[#allocation3 + $0x210] sm:$0xff]
      %v3196 = vld [vmem:[#allocation3 + $0x218] sm:$0xff]
      %v3197 = vld [vmem:[#allocation3 + $0x220] sm:$0xff]
      %v3198 = vld [vmem:[#allocation3 + $0x228] sm:$0xff]
      %v3199 = vld [vmem:[#allocation3 + $0x230] sm:$0xff]
      %v3200 = vld [vmem:[#allocation3 + $0x238] sm:$0xff]
      %v3201 = vld [vmem:[#allocation3 + $0x240] sm:$0xff]
      %v3202 = vld [vmem:[#allocation3 + $0x248] sm:$0xff]
      %v3203 = vld [vmem:[#allocation3 + $0x250] sm:$0xff]
      %v3204 = vld [vmem:[#allocation3 + $0x258] sm:$0xff]
      %v3205 = vld [vmem:[#allocation3 + $0x260] sm:$0xff]
      %v3206 = vld [vmem:[#allocation3 + $0x268] sm:$0xff]
      %v3207 = vld [vmem:[#allocation3 + $0x270] sm:$0xff]
      %v3208 = vld [vmem:[#allocation3 + $0x278] sm:$0xff]
      %v3209 = vld [vmem:[#allocation3 + $0x280] sm:$0xff]
      %v3210 = vld [vmem:[#allocation3 + $0x288] sm:$0xff]
      %v3211 = vld [vmem:[#allocation3 + $0x290] sm:$0xff]
      %v3212 = vld [vmem:[#allocation3 + $0x298] sm:$0xff]
      %v3213 = vld [vmem:[#allocation3 + $0x2a0] sm:$0xff]
      %v3214 = vld [vmem:[#allocation3 + $0x2a8] sm:$0xff]
      %v3215 = vld [vmem:[#allocation3 + $0x2b0] sm:$0xff]
      %v3216 = vld [vmem:[#allocation3 + $0x2b8] sm:$0xff]
      %v3217 = vld [vmem:[#allocation3 + $0x2c0] sm:$0xff]
      %v3218 = vld [vmem:[#allocation3 + $0x2c8] sm:$0xff]
      %v3219 = vld [vmem:[#allocation3 + $0x2d0] sm:$0xff]
      %v3220 = vld [vmem:[#allocation3 + $0x2d8] sm:$0xff]
      %v3221 = vld [vmem:[#allocation3 + $0x2e0] sm:$0xff]
      %v3222 = vld [vmem:[#allocation3 + $0x2e8] sm:$0xff]
      %v3223 = vld [vmem:[#allocation3 + $0x2f0] sm:$0xff]
      %v3224 = vld [vmem:[#allocation3 + $0x2f8] sm:$0xff]
      %v3225 = vld [vmem:[#allocation3 + $0x300] sm:$0xff]
      %v3226 = vld [vmem:[#allocation3 + $0x308] sm:$0xff]
      %v3227 = vld [vmem:[#allocation3 + $0x310] sm:$0xff]
      %v3228 = vld [vmem:[#allocation3 + $0x318] sm:$0xff]
      %v3229 = vld [vmem:[#allocation3 + $0x320] sm:$0xff]
      %v3230 = vld [vmem:[#allocation3 + $0x328] sm:$0xff]
      %v3231 = vld [vmem:[#allocation3 + $0x330] sm:$0xff]
      %v3232 = vld [vmem:[#allocation3 + $0x338] sm:$0xff]
      %v3233 = vld [vmem:[#allocation3 + $0x340] sm:$0xff]
      %v3234 = vld [vmem:[#allocation3 + $0x348] sm:$0xff]
      %v3235 = vld [vmem:[#allocation3 + $0x350] sm:$0xff]
      %v3236 = vld [vmem:[#allocation3 + $0x358] sm:$0xff]
      %v3237 = vld [vmem:[#allocation3 + $0x360] sm:$0xff]
      %v3238 = vld [vmem:[#allocation3 + $0x368] sm:$0xff]
      %v3239 = vld [vmem:[#allocation3 + $0x370] sm:$0xff]
      %v3240 = vld [vmem:[#allocation3 + $0x378] sm:$0xff]
      %v3241 = vld [vmem:[#allocation3 + $0x380] sm:$0xff]
      %v3242 = vld [vmem:[#allocation3 + $0x388] sm:$0xff]
      %v3243 = vld [vmem:[#allocation3 + $0x390] sm:$0xff]
      %v3244 = vld [vmem:[#allocation3 + $0x398] sm:$0xff]
      %v3245 = vld [vmem:[#allocation3 + $0x3a0] sm:$0xff]
      %v3246 = vld [vmem:[#allocation3 + $0x3a8] sm:$0xff]
      %v3247 = vld [vmem:[#allocation3 + $0x3b0] sm:$0xff]
      %v3248 = vld [vmem:[#allocation3 + $0x3b8] sm:$0xff]
      %v3249 = vld [vmem:[#allocation3 + $0x3c0] sm:$0xff]
      %v3250 = vld [vmem:[#allocation3 + $0x3c8] sm:$0xff]
      %v3251 = vld [vmem:[#allocation3 + $0x3d0] sm:$0xff]
      %v3252 = vld [vmem:[#allocation3 + $0x3d8] sm:$0xff]
      %v3253 = vld [vmem:[#allocation3 + $0x3e0] sm:$0xff]
      %v3254 = vld [vmem:[#allocation3 + $0x3e8] sm:$0xff]
      %v3255 = vld [vmem:[#allocation3 + $0x3f0] sm:$0xff]
      %v3256 = vld [vmem:[#allocation3 + $0x3f8] sm:$0xff]
      %v3257 = vld [vmem:[#allocation3 + $0x400] sm:$0xff]
      %v3258 = vld [vmem:[#allocation3 + $0x408] sm:$0xff]
      %v3259 = vld [vmem:[#allocation3 + $0x410] sm:$0xff]
      %v3260 = vld [vmem:[#allocation3 + $0x418] sm:$0xff]
      %v3261 = vld [vmem:[#allocation3 + $0x420] sm:$0xff]
      %v3262 = vld [vmem:[#allocation3 + $0x428] sm:$0xff]
      %v3263 = vld [vmem:[#allocation3 + $0x430] sm:$0xff]
      %v3264 = vld [vmem:[#allocation3 + $0x438] sm:$0xff]
      %v3265 = vld [vmem:[#allocation3 + $0x440] sm:$0xff]
      %v3266 = vld [vmem:[#allocation3 + $0x448] sm:$0xff]
      %v3267 = vld [vmem:[#allocation3 + $0x450] sm:$0xff]
      %v3268 = vld [vmem:[#allocation3 + $0x458] sm:$0xff]
      %v3269 = vld [vmem:[#allocation3 + $0x460] sm:$0xff]
      %v3270 = vld [vmem:[#allocation3 + $0x468] sm:$0xff]
      %v3271 = vld [vmem:[#allocation3 + $0x470] sm:$0xff]
      %v3272 = vld [vmem:[#allocation3 + $0x478] sm:$0xff]
      %v3417 = vunpack.c.l.b16 %v2985
      %v3418 = vunpack.c.l.b16 %v2986
      %v3419 = vunpack.c.l.b16 %v2987
      %v3420 = vunpack.c.l.b16 %v2988
      %v3421 = vunpack.c.l.b16 %v2989
      %v3422 = vunpack.c.l.b16 %v2990
      %v3423 = vunpack.c.l.b16 %v2991
      %v3424 = vunpack.c.l.b16 %v2992
      %v3425 = vunpack.c.l.b16 %v2993
      %v3426 = vunpack.c.l.b16 %v2994
      %v3427 = vunpack.c.l.b16 %v2995
      %v3428 = vunpack.c.l.b16 %v2996
      %v3429 = vunpack.c.l.b16 %v2997
      %v3430 = vunpack.c.l.b16 %v2998
      %v3431 = vunpack.c.l.b16 %v2999
      %v3432 = vunpack.c.l.b16 %v3000
      %v3433 = vunpack.c.l.b16 %v3001
      %v3434 = vunpack.c.l.b16 %v3002
      %v3435 = vunpack.c.l.b16 %v3003
      %v3436 = vunpack.c.l.b16 %v3004
      %v3437 = vunpack.c.l.b16 %v3005
      %v3438 = vunpack.c.l.b16 %v3006
      %v3439 = vunpack.c.l.b16 %v3007
      %v3440 = vunpack.c.l.b16 %v3008
      %v3441 = vunpack.c.l.b16 %v3009
      %v3442 = vunpack.c.l.b16 %v3010
      %v3443 = vunpack.c.l.b16 %v3011
      %v3444 = vunpack.c.l.b16 %v3012
      %v3445 = vunpack.c.l.b16 %v3013
      %v3446 = vunpack.c.l.b16 %v3014
      %v3447 = vunpack.c.l.b16 %v3015
      %v3448 = vunpack.c.l.b16 %v3016
      %v3449 = vunpack.c.l.b16 %v3017
      %v3450 = vunpack.c.l.b16 %v3018
      %v3451 = vunpack.c.l.b16 %v3019
      %v3452 = vunpack.c.l.b16 %v3020
      %v3453 = vunpack.c.l.b16 %v3021
      %v3454 = vunpack.c.l.b16 %v3022
      %v3455 = vunpack.c.l.b16 %v3023
      %v3456 = vunpack.c.l.b16 %v3024
      %v3457 = vunpack.c.l.b16 %v3025
      %v3458 = vunpack.c.l.b16 %v3026
      %v3459 = vunpack.c.l.b16 %v3027
      %v3460 = vunpack.c.l.b16 %v3028
      %v3461 = vunpack.c.l.b16 %v3029
      %v3462 = vunpack.c.l.b16 %v3030
      %v3463 = vunpack.c.l.b16 %v3031
      %v3464 = vunpack.c.l.b16 %v3032
      %v3465 = vunpack.c.l.b16 %v3033
      %v3466 = vunpack.c.l.b16 %v3034
      %v3467 = vunpack.c.l.b16 %v3035
      %v3468 = vunpack.c.l.b16 %v3036
      %v3469 = vunpack.c.l.b16 %v3037
      %v3470 = vunpack.c.l.b16 %v3038
      %v3471 = vunpack.c.l.b16 %v3039
      %v3472 = vunpack.c.l.b16 %v3040
      %v3473 = vunpack.c.l.b16 %v3041
      %v3474 = vunpack.c.l.b16 %v3042
      %v3475 = vunpack.c.l.b16 %v3043
      %v3476 = vunpack.c.l.b16 %v3044
      %v3477 = vunpack.c.l.b16 %v3045
      %v3478 = vunpack.c.l.b16 %v3046
      %v3479 = vunpack.c.l.b16 %v3047
      %v3480 = vunpack.c.l.b16 %v3048
      %v3481 = vunpack.c.l.b16 %v3049
      %v3482 = vunpack.c.l.b16 %v3050
      %v3483 = vunpack.c.l.b16 %v3051
      %v3484 = vunpack.c.l.b16 %v3052
      %v3485 = vunpack.c.l.b16 %v3053
      %v3486 = vunpack.c.l.b16 %v3054
      %v3487 = vunpack.c.l.b16 %v3055
      %v3488 = vunpack.c.l.b16 %v3056
      %v3489 = vunpack.c.l.b16 %v3057
      %v3490 = vunpack.c.l.b16 %v3058
      %v3491 = vunpack.c.l.b16 %v3059
      %v3492 = vunpack.c.l.b16 %v3060
      %v3493 = vunpack.c.l.b16 %v3061
      %v3494 = vunpack.c.l.b16 %v3062
      %v3495 = vunpack.c.l.b16 %v3063
      %v3496 = vunpack.c.l.b16 %v3064
      %v3497 = vunpack.c.l.b16 %v3065
      %v3498 = vunpack.c.l.b16 %v3066
      %v3499 = vunpack.c.l.b16 %v3067
      %v3500 = vunpack.c.l.b16 %v3068
      %v3501 = vunpack.c.l.b16 %v3069
      %v3502 = vunpack.c.l.b16 %v3070
      %v3503 = vunpack.c.l.b16 %v3071
      %v3504 = vunpack.c.l.b16 %v3072
      %v3505 = vunpack.c.l.b16 %v3073
      %v3506 = vunpack.c.l.b16 %v3074
      %v3507 = vunpack.c.l.b16 %v3075
      %v3508 = vunpack.c.l.b16 %v3076
      %v3509 = vunpack.c.l.b16 %v3077
      %v3510 = vunpack.c.l.b16 %v3078
      %v3511 = vunpack.c.l.b16 %v3079
      %v3512 = vunpack.c.l.b16 %v3080
      %v3513 = vunpack.c.l.b16 %v3081
      %v3514 = vunpack.c.l.b16 %v3082
      %v3515 = vunpack.c.l.b16 %v3083
      %v3516 = vunpack.c.l.b16 %v3084
      %v3517 = vunpack.c.l.b16 %v3085
      %v3518 = vunpack.c.l.b16 %v3086
      %v3519 = vunpack.c.l.b16 %v3087
      %v3520 = vunpack.c.l.b16 %v3088
      %v3521 = vunpack.c.l.b16 %v3089
      %v3522 = vunpack.c.l.b16 %v3090
      %v3523 = vunpack.c.l.b16 %v3091
      %v3524 = vunpack.c.l.b16 %v3092
      %v3525 = vunpack.c.l.b16 %v3093
      %v3526 = vunpack.c.l.b16 %v3094
      %v3527 = vunpack.c.l.b16 %v3095
      %v3528 = vunpack.c.l.b16 %v3096
      %v3529 = vunpack.c.l.b16 %v3097
      %v3530 = vunpack.c.l.b16 %v3098
      %v3531 = vunpack.c.l.b16 %v3099
      %v3532 = vunpack.c.l.b16 %v3100
      %v3533 = vunpack.c.l.b16 %v3101
      %v3534 = vunpack.c.l.b16 %v3102
      %v3535 = vunpack.c.l.b16 %v3103
      %v3536 = vunpack.c.l.b16 %v3104
      %v3537 = vunpack.c.l.b16 %v3105
      %v3538 = vunpack.c.l.b16 %v3106
      %v3539 = vunpack.c.l.b16 %v3107
      %v3540 = vunpack.c.l.b16 %v3108
      %v3541 = vunpack.c.l.b16 %v3109
      %v3542 = vunpack.c.l.b16 %v3110
      %v3543 = vunpack.c.l.b16 %v3111
      %v3544 = vunpack.c.l.b16 %v3112
      %v3545 = vunpack.c.l.b16 %v3113
      %v3546 = vunpack.c.l.b16 %v3114
      %v3547 = vunpack.c.l.b16 %v3115
      %v3548 = vunpack.c.l.b16 %v3116
      %v3549 = vunpack.c.l.b16 %v3117
      %v3550 = vunpack.c.l.b16 %v3118
      %v3551 = vunpack.c.l.b16 %v3119
      %v3552 = vunpack.c.l.b16 %v3120
      %v3553 = vunpack.c.l.b16 %v3121
      %v3554 = vunpack.c.l.b16 %v3122
      %v3555 = vunpack.c.l.b16 %v3123
      %v3556 = vunpack.c.l.b16 %v3124
      %v3557 = vunpack.c.l.b16 %v3125
      %v3558 = vunpack.c.l.b16 %v3126
      %v3559 = vunpack.c.l.b16 %v3127
      %v3560 = vunpack.c.l.b16 %v3128
      %v3561 = vpack.c.b16 %v3418, %v3417
      %v3562 = vpack.c.b16 %v3420, %v3419
      %v3563 = vpack.c.b16 %v3422, %v3421
      %v3564 = vpack.c.b16 %v3424, %v3423
      %v3565 = vpack.c.b16 %v3426, %v3425
      %v3566 = vpack.c.b16 %v3428, %v3427
      %v3567 = vpack.c.b16 %v3430, %v3429
      %v3568 = vpack.c.b16 %v3432, %v3431
      %v3569 = vpack.c.b16 %v3434, %v3433
      %v3570 = vpack.c.b16 %v3436, %v3435
      %v3571 = vpack.c.b16 %v3438, %v3437
      %v3572 = vpack.c.b16 %v3440, %v3439
      %v3573 = vpack.c.b16 %v3442, %v3441
      %v3574 = vpack.c.b16 %v3444, %v3443
      %v3575 = vpack.c.b16 %v3446, %v3445
      %v3576 = vpack.c.b16 %v3448, %v3447
      %v3577 = vpack.c.b16 %v3450, %v3449
      %v3578 = vpack.c.b16 %v3452, %v3451
      %v3579 = vpack.c.b16 %v3454, %v3453
      %v3580 = vpack.c.b16 %v3456, %v3455
      %v3581 = vpack.c.b16 %v3458, %v3457
      %v3582 = vpack.c.b16 %v3460, %v3459
      %v3583 = vpack.c.b16 %v3462, %v3461
      %v3584 = vpack.c.b16 %v3464, %v3463
      %v3585 = vpack.c.b16 %v3466, %v3465
      %v3586 = vpack.c.b16 %v3468, %v3467
      %v3587 = vpack.c.b16 %v3470, %v3469
      %v3588 = vpack.c.b16 %v3472, %v3471
      %v3589 = vpack.c.b16 %v3474, %v3473
      %v3590 = vpack.c.b16 %v3476, %v3475
      %v3591 = vpack.c.b16 %v3478, %v3477
      %v3592 = vpack.c.b16 %v3480, %v3479
      %v3593 = vpack.c.b16 %v3482, %v3481
      %v3594 = vpack.c.b16 %v3484, %v3483
      %v3595 = vpack.c.b16 %v3486, %v3485
      %v3596 = vpack.c.b16 %v3488, %v3487
      %v3597 = vpack.c.b16 %v3490, %v3489
      %v3598 = vpack.c.b16 %v3492, %v3491
      %v3599 = vpack.c.b16 %v3494, %v3493
      %v3600 = vpack.c.b16 %v3496, %v3495
      %v3601 = vpack.c.b16 %v3498, %v3497
      %v3602 = vpack.c.b16 %v3500, %v3499
      %v3603 = vpack.c.b16 %v3502, %v3501
      %v3604 = vpack.c.b16 %v3504, %v3503
      %v3605 = vpack.c.b16 %v3506, %v3505
      %v3606 = vpack.c.b16 %v3508, %v3507
      %v3607 = vpack.c.b16 %v3510, %v3509
      %v3608 = vpack.c.b16 %v3512, %v3511
      %v3609 = vpack.c.b16 %v3514, %v3513
      %v3610 = vpack.c.b16 %v3516, %v3515
      %v3611 = vpack.c.b16 %v3518, %v3517
      %v3612 = vpack.c.b16 %v3520, %v3519
      %v3613 = vpack.c.b16 %v3522, %v3521
      %v3614 = vpack.c.b16 %v3524, %v3523
      %v3615 = vpack.c.b16 %v3526, %v3525
      %v3616 = vpack.c.b16 %v3528, %v3527
      %v3617 = vpack.c.b16 %v3530, %v3529
      %v3618 = vpack.c.b16 %v3532, %v3531
      %v3619 = vpack.c.b16 %v3534, %v3533
      %v3620 = vpack.c.b16 %v3536, %v3535
      %v3621 = vpack.c.b16 %v3538, %v3537
      %v3622 = vpack.c.b16 %v3540, %v3539
      %v3623 = vpack.c.b16 %v3542, %v3541
      %v3624 = vpack.c.b16 %v3544, %v3543
      %v3625 = vpack.c.b16 %v3546, %v3545
      %v3626 = vpack.c.b16 %v3548, %v3547
      %v3627 = vpack.c.b16 %v3550, %v3549
      %v3628 = vpack.c.b16 %v3552, %v3551
      %v3629 = vpack.c.b16 %v3554, %v3553
      %v3630 = vpack.c.b16 %v3556, %v3555
      %v3631 = vpack.c.b16 %v3558, %v3557
      %v3632 = vpack.c.b16 %v3560, %v3559
      %3705 = vmatprep.subr.bf16.mxu0 0
      %3706 = vmatpush1.bf16.msra.mxu0 %v3561
      %3707 = vmatprep.subr.bf16.mxu0 0
      %3708 = vmatpush1.bf16.msra.mxu0 %v3562
      %3709 = vmatprep.subr.bf16.mxu0 0
      %3710 = vmatpush1.bf16.msra.mxu0 %v3563
      %3711 = vmatprep.subr.bf16.mxu0 0
      %3712 = vmatpush1.bf16.msra.mxu0 %v3564
      %3713 = vmatprep.subr.bf16.mxu0 0
      %3714 = vmatpush1.bf16.msra.mxu0 %v3565
      %3715 = vmatprep.subr.bf16.mxu0 0
      %3716 = vmatpush1.bf16.msra.mxu0 %v3566
      %3717 = vmatprep.subr.bf16.mxu0 0
      %3718 = vmatpush1.bf16.msra.mxu0 %v3567
      %3719 = vmatprep.subr.bf16.mxu0 0
      %3720 = vmatpush1.bf16.msra.mxu0 %v3568
      %3721 = vmatprep.subr.bf16.mxu0 0
      %3722 = vmatpush1.bf16.msra.mxu0 %v3569
      %3723 = vmatprep.subr.bf16.mxu0 0
      %3724 = vmatpush1.bf16.msra.mxu0 %v3570
      %3725 = vmatprep.subr.bf16.mxu0 0
      %3726 = vmatpush1.bf16.msra.mxu0 %v3571
      %3727 = vmatprep.subr.bf16.mxu0 0
      %3728 = vmatpush1.bf16.msra.mxu0 %v3572
      %3729 = vmatprep.subr.bf16.mxu0 0
      %3730 = vmatpush1.bf16.msra.mxu0 %v3573
      %3731 = vmatprep.subr.bf16.mxu0 0
      %3732 = vmatpush1.bf16.msra.mxu0 %v3574
      %3733 = vmatprep.subr.bf16.mxu0 0
      %3734 = vmatpush1.bf16.msra.mxu0 %v3575
      %3735 = vmatprep.subr.bf16.mxu0 0
      %3736 = vmatpush1.bf16.msra.mxu0 %v3576
      %3737 = vmatprep.mubr.bf16.mxu0 %v3130
      %3738 = vmatmul.mubr.bf16.gmra.mrb[0].mxu0 %v3129
      %v3739 = vpop.f32.mrb[0].mxu0
      %v3740 = vadd.f32 0.0, %v3739
      %v3741 = vpop.f32.mrb[0].mxu0
      %v3742 = vpop.f32.mrb[0].mxu0
      %v3743 = vadd.f32 0.0, %v3742
      %v3744 = vpop.f32.mrb[0].mxu0
      %3745 = vmatprep.mubr.bf16.mxu0 %v3139
      %3746 = vmatmul.mubr.bf16.gmra.mrb[0].mxu0 %v3138
      %v3747 = vpop.f32.mrb[0].mxu0
      %v3748 = vadd.f32 0.0, %v3747
      %v3749 = vpop.f32.mrb[0].mxu0
      %v3750 = vpop.f32.mrb[0].mxu0
      %v3751 = vadd.f32 0.0, %v3750
      %v3752 = vpop.f32.mrb[0].mxu0
      %3753 = vmatprep.mubr.bf16.mxu0 %v3148
      %3754 = vmatmul.mubr.bf16.gmra.mrb[0].mxu0 %v3147
      %v3755 = vpop.f32.mrb[0].mxu0
      %v3756 = vadd.f32 0.0, %v3755
      %v3757 = vpop.f32.mrb[0].mxu0
      %v3758 = vpop.f32.mrb[0].mxu0
      %v3759 = vadd.f32 0.0, %v3758
      %v3760 = vpop.f32.mrb[0].mxu0
      %3761 = vmatprep.mubr.bf16.mxu0 %v3157
      %3762 = vmatmul.mubr.bf16.gmra.mrb[0].mxu0 %v3156
      %v3763 = vpop.f32.mrb[0].mxu0
      %v3764 = vadd.f32 0.0, %v3763
      %v3765 = vpop.f32.mrb[0].mxu0
      %v3766 = vpop.f32.mrb[0].mxu0
      %v3767 = vadd.f32 0.0, %v3766
      %v3768 = vpop.f32.mrb[0].mxu0
      %3769 = vmatprep.mubr.bf16.mxu0 %v3166
      %3770 = vmatmul.mubr.bf16.gmra.mrb[0].mxu0 %v3165
      %v3771 = vpop.f32.mrb[0].mxu0
      %v3772 = vadd.f32 0.0, %v3771
      %v3773 = vpop.f32.mrb[0].mxu0
      %v3774 = vpop.f32.mrb[0].mxu0
      %v3775 = vadd.f32 0.0, %v3774
      %v3776 = vpop.f32.mrb[0].mxu0
      %3777 = vmatprep.mubr.bf16.mxu0 %v3175
      %3778 = vmatmul.mubr.bf16.gmra.mrb[0].mxu0 %v3174
      %v3779 = vpop.f32.mrb[0].mxu0
      %v3780 = vadd.f32 0.0, %v3779
      %v3781 = vpop.f32.mrb[0].mxu0
      %v3782 = vpop.f32.mrb[0].mxu0
      %v3783 = vadd.f32 0.0, %v3782
      %v3784 = vpop.f32.mrb[0].mxu0
      %3785 = vmatprep.mubr.bf16.mxu0 %v3184
      %3786 = vmatmul.mubr.bf16.gmra.mrb[0].mxu0 %v3183
      %v3787 = vpop.f32.mrb[0].mxu0
      %v3788 = vadd.f32 0.0, %v3787
      %v3789 = vpop.f32.mrb[0].mxu0
      %v3790 = vpop.f32.mrb[0].mxu0
      %v3791 = vadd.f32 0.0, %v3790
      %v3792 = vpop.f32.mrb[0].mxu0
      %3793 = vmatprep.mubr.bf16.mxu0 %v3193
      %3794 = vmatmul.mubr.bf16.gmra.mrb[0].mxu0 %v3192
      %v3795 = vpop.f32.mrb[0].mxu0
      %v3796 = vadd.f32 0.0, %v3795
      %v3797 = vpop.f32.mrb[0].mxu0
      %v3798 = vpop.f32.mrb[0].mxu0
      %v3799 = vadd.f32 0.0, %v3798
      %v3800 = vpop.f32.mrb[0].mxu0
      %3801 = vmatprep.mubr.bf16.mxu0 %v3202
      %3802 = vmatmul.mubr.bf16.gmra.mrb[0].mxu0 %v3201
      %v3803 = vpop.f32.mrb[0].mxu0
      %v3804 = vadd.f32 0.0, %v3803
      %v3805 = vpop.f32.mrb[0].mxu0
      %v3806 = vpop.f32.mrb[0].mxu0
      %v3807 = vadd.f32 0.0, %v3806
      %v3808 = vpop.f32.mrb[0].mxu0
      %3809 = vmatprep.mubr.bf16.mxu0 %v3211
      %3810 = vmatmul.mubr.bf16.gmra.mrb[0].mxu0 %v3210
      %v3811 = vpop.f32.mrb[0].mxu0
      %v3812 = vadd.f32 0.0, %v3811
      %v3813 = vpop.f32.mrb[0].mxu0
      %v3814 = vpop.f32.mrb[0].mxu0
      %v3815 = vadd.f32 0.0, %v3814
      %v3816 = vpop.f32.mrb[0].mxu0
      %3817 = vmatprep.mubr.bf16.mxu0 %v3220
      %3818 = vmatmul.mubr.bf16.gmra.mrb[0].mxu0 %v3219
      %v3819 = vpop.f32.mrb[0].mxu0
      %v3820 = vadd.f32 0.0, %v3819
      %v3821 = vpop.f32.mrb[0].mxu0
      %v3822 = vpop.f32.mrb[0].mxu0
      %v3823 = vadd.f32 0.0, %v3822
      %v3824 = vpop.f32.mrb[0].mxu0
      %3825 = vmatprep.mubr.bf16.mxu0 %v3229
      %3826 = vmatmul.mubr.bf16.gmra.mrb[0].mxu0 %v3228
      %v3827 = vpop.f32.mrb[0].mxu0
      %v3828 = vadd.f32 0.0, %v3827
      %v3829 = vpop.f32.mrb[0].mxu0
      %v3830 = vpop.f32.mrb[0].mxu0
      %v3831 = vadd.f32 0.0, %v3830
      %v3832 = vpop.f32.mrb[0].mxu0
      %3833 = vmatprep.mubr.bf16.mxu0 %v3238
      %3834 = vmatmul.mubr.bf16.gmra.mrb[0].mxu0 %v3237
      %v3835 = vpop.f32.mrb[0].mxu0
      %v3836 = vadd.f32 0.0, %v3835
      %v3837 = vpop.f32.mrb[0].mxu0
      %v3838 = vpop.f32.mrb[0].mxu0
      %v3839 = vadd.f32 0.0, %v3838
      %v3840 = vpop.f32.mrb[0].mxu0
      %3841 = vmatprep.mubr.bf16.mxu0 %v3247
      %3842 = vmatmul.mubr.bf16.gmra.mrb[0].mxu0 %v3246
      %v3843 = vpop.f32.mrb[0].mxu0
      %v3844 = vadd.f32 0.0, %v3843
      %v3845 = vpop.f32.mrb[0].mxu0
      %v3846 = vpop.f32.mrb[0].mxu0
      %v3847 = vadd.f32 0.0, %v3846
      %v3848 = vpop.f32.mrb[0].mxu0
      %3849 = vmatprep.mubr.bf16.mxu0 %v3256
      %3850 = vmatmul.mubr.bf16.gmra.mrb[0].mxu0 %v3255
      %v3851 = vpop.f32.mrb[0].mxu0
      %v3852 = vadd.f32 0.0, %v3851
      %v3853 = vpop.f32.mrb[0].mxu0
      %v3854 = vpop.f32.mrb[0].mxu0
      %v3855 = vadd.f32 0.0, %v3854
      %v3856 = vpop.f32.mrb[0].mxu0
      %3857 = vmatprep.mubr.bf16.mxu0 %v3265
      %3858 = vmatmul.mubr.bf16.gmra.mrb[0].mxu0 %v3264
      %v3859 = vpop.f32.mrb[0].mxu0
      %v3860 = vadd.f32 0.0, %v3859
      %v3861 = vpop.f32.mrb[0].mxu0
      %v3862 = vpop.f32.mrb[0].mxu0
      %v3863 = vadd.f32 0.0, %v3862
      %v3864 = vpop.f32.mrb[0].mxu0
      %3865 = vdwg.mxu0
      %3866 = vmatprep.subr.bf16.mxu0 0
      %3867 = vmatpush1.bf16.msra.mxu0 %v3577
      %3868 = vmatprep.subr.bf16.mxu0 0
      %3869 = vmatpush1.bf16.msra.mxu0 %v3578
      %3870 = vmatprep.subr.bf16.mxu0 0
      %3871 = vmatpush1.bf16.msra.mxu0 %v3579
      %3872 = vmatprep.subr.bf16.mxu0 0
      %3873 = vmatpush1.bf16.msra.mxu0 %v3580
      %3874 = vmatprep.subr.bf16.mxu0 0
      %3875 = vmatpush1.bf16.msra.mxu0 %v3581
      %3876 = vmatprep.subr.bf16.mxu0 0
      %3877 = vmatpush1.bf16.msra.mxu0 %v3582
      %3878 = vmatprep.subr.bf16.mxu0 0
      %3879 = vmatpush1.bf16.msra.mxu0 %v3583
      %3880 = vmatprep.subr.bf16.mxu0 0
      %3881 = vmatpush1.bf16.msra.mxu0 %v3584
      %3882 = vmatprep.subr.bf16.mxu0 0
      %3883 = vmatpush1.bf16.msra.mxu0 %v3585
      %3884 = vmatprep.subr.bf16.mxu0 0
      %3885 = vmatpush1.bf16.msra.mxu0 %v3586
      %3886 = vmatprep.subr.bf16.mxu0 0
      %3887 = vmatpush1.bf16.msra.mxu0 %v3587
      %3888 = vmatprep.subr.bf16.mxu0 0
      %3889 = vmatpush1.bf16.msra.mxu0 %v3588
      %3890 = vmatprep.subr.bf16.mxu0 0
      %3891 = vmatpush1.bf16.msra.mxu0 %v3589
      %3892 = vmatprep.subr.bf16.mxu0 0
      %3893 = vmatpush1.bf16.msra.mxu0 %v3590
      %3894 = vmatprep.subr.bf16.mxu0 0
      %3895 = vmatpush1.bf16.msra.mxu0 %v3591
      %3896 = vmatprep.subr.bf16.mxu0 0
      %3897 = vmatpush1.bf16.msra.mxu0 %v3592
      %3898 = vmatprep.mubr.bf16.mxu0 %v3132
      %3899 = vmatmul.mubr.bf16.gmra.mrb[0].mxu0 %v3131
      %v3900 = vpop.f32.mrb[0].mxu0
      %v3901 = vadd.f32 %v3740, %v3900
      %v3902 = vpop.f32.mrb[0].mxu0
      %v3903 = vpop.f32.mrb[0].mxu0
      %v3904 = vadd.f32 %v3743, %v3903
      %v3905 = vpop.f32.mrb[0].mxu0
      %3906 = vmatprep.mubr.bf16.mxu0 %v3141
      %3907 = vmatmul.mubr.bf16.gmra.mrb[0].mxu0 %v3140
      %v3908 = vpop.f32.mrb[0].mxu0
      %v3909 = vadd.f32 %v3748, %v3908
      %v3910 = vpop.f32.mrb[0].mxu0
      %v3911 = vpop.f32.mrb[0].mxu0
      %v3912 = vadd.f32 %v3751, %v3911
      %v3913 = vpop.f32.mrb[0].mxu0
      %3914 = vmatprep.mubr.bf16.mxu0 %v3150
      %3915 = vmatmul.mubr.bf16.gmra.mrb[0].mxu0 %v3149
      %v3916 = vpop.f32.mrb[0].mxu0
      %v3917 = vadd.f32 %v3756, %v3916
      %v3918 = vpop.f32.mrb[0].mxu0
      %v3919 = vpop.f32.mrb[0].mxu0
      %v3920 = vadd.f32 %v3759, %v3919
      %v3921 = vpop.f32.mrb[0].mxu0
      %3922 = vmatprep.mubr.bf16.mxu0 %v3159
      %3923 = vmatmul.mubr.bf16.gmra.mrb[0].mxu0 %v3158
      %v3924 = vpop.f32.mrb[0].mxu0
      %v3925 = vadd.f32 %v3764, %v3924
      %v3926 = vpop.f32.mrb[0].mxu0
      %v3927 = vpop.f32.mrb[0].mxu0
      %v3928 = vadd.f32 %v3767, %v3927
      %v3929 = vpop.f32.mrb[0].mxu0
      %3930 = vmatprep.mubr.bf16.mxu0 %v3168
      %3931 = vmatmul.mubr.bf16.gmra.mrb[0].mxu0 %v3167
      %v3932 = vpop.f32.mrb[0].mxu0
      %v3933 = vadd.f32 %v3772, %v3932
      %v3934 = vpop.f32.mrb[0].mxu0
      %v3935 = vpop.f32.mrb[0].mxu0
      %v3936 = vadd.f32 %v3775, %v3935
      %v3937 = vpop.f32.mrb[0].mxu0
      %3938 = vmatprep.mubr.bf16.mxu0 %v3177
      %3939 = vmatmul.mubr.bf16.gmra.mrb[0].mxu0 %v3176
      %v3940 = vpop.f32.mrb[0].mxu0
      %v3941 = vadd.f32 %v3780, %v3940
      %v3942 = vpop.f32.mrb[0].mxu0
      %v3943 = vpop.f32.mrb[0].mxu0
      %v3944 = vadd.f32 %v3783, %v3943
      %v3945 = vpop.f32.mrb[0].mxu0
      %3946 = vmatprep.mubr.bf16.mxu0 %v3186
      %3947 = vmatmul.mubr.bf16.gmra.mrb[0].mxu0 %v3185
      %v3948 = vpop.f32.mrb[0].mxu0
      %v3949 = vadd.f32 %v3788, %v3948
      %v3950 = vpop.f32.mrb[0].mxu0
      %v3951 = vpop.f32.mrb[0].mxu0
      %v3952 = vadd.f32 %v3791, %v3951
      %v3953 = vpop.f32.mrb[0].mxu0
      %3954 = vmatprep.mubr.bf16.mxu0 %v3195
      %3955 = vmatmul.mubr.bf16.gmra.mrb[0].mxu0 %v3194
      %v3956 = vpop.f32.mrb[0].mxu0
      %v3957 = vadd.f32 %v3796, %v3956
      %v3958 = vpop.f32.mrb[0].mxu0
      %v3959 = vpop.f32.mrb[0].mxu0
      %v3960 = vadd.f32 %v3799, %v3959
      %v3961 = vpop.f32.mrb[0].mxu0
      %3962 = vmatprep.mubr.bf16.mxu0 %v3204
      %3963 = vmatmul.mubr.bf16.gmra.mrb[0].mxu0 %v3203
      %v3964 = vpop.f32.mrb[0].mxu0
      %v3965 = vadd.f32 %v3804, %v3964
      %v3966 = vpop.f32.mrb[0].mxu0
      %v3967 = vpop.f32.mrb[0].mxu0
      %v3968 = vadd.f32 %v3807, %v3967
      %v3969 = vpop.f32.mrb[0].mxu0
      %3970 = vmatprep.mubr.bf16.mxu0 %v3213
      %3971 = vmatmul.mubr.bf16.gmra.mrb[0].mxu0 %v3212
      %v3972 = vpop.f32.mrb[0].mxu0
      %v3973 = vadd.f32 %v3812, %v3972
      %v3974 = vpop.f32.mrb[0].mxu0
      %v3975 = vpop.f32.mrb[0].mxu0
      %v3976 = vadd.f32 %v3815, %v3975
      %v3977 = vpop.f32.mrb[0].mxu0
      %3978 = vmatprep.mubr.bf16.mxu0 %v3222
      %3979 = vmatmul.mubr.bf16.gmra.mrb[0].mxu0 %v3221
      %v3980 = vpop.f32.mrb[0].mxu0
      %v3981 = vadd.f32 %v3820, %v3980
      %v3982 = vpop.f32.mrb[0].mxu0
      %v3983 = vpop.f32.mrb[0].mxu0
      %v3984 = vadd.f32 %v3823, %v3983
      %v3985 = vpop.f32.mrb[0].mxu0
      %3986 = vmatprep.mubr.bf16.mxu0 %v3231
      %3987 = vmatmul.mubr.bf16.gmra.mrb[0].mxu0 %v3230
      %v3988 = vpop.f32.mrb[0].mxu0
      %v3989 = vadd.f32 %v3828, %v3988
      %v3990 = vpop.f32.mrb[0].mxu0
      %v3991 = vpop.f32.mrb[0].mxu0
      %v3992 = vadd.f32 %v3831, %v3991
      %v3993 = vpop.f32.mrb[0].mxu0
      %3994 = vmatprep.mubr.bf16.mxu0 %v3240
      %3995 = vmatmul.mubr.bf16.gmra.mrb[0].mxu0 %v3239
      %v3996 = vpop.f32.mrb[0].mxu0
      %v3997 = vadd.f32 %v3836, %v3996
      %v3998 = vpop.f32.mrb[0].mxu0
      %v3999 = vpop.f32.mrb[0].mxu0
      %v4000 = vadd.f32 %v3839, %v3999
      %v4001 = vpop.f32.mrb[0].mxu0
      %4002 = vmatprep.mubr.bf16.mxu0 %v3249
      %4003 = vmatmul.mubr.bf16.gmra.mrb[0].mxu0 %v3248
      %v4004 = vpop.f32.mrb[0].mxu0
      %v4005 = vadd.f32 %v3844, %v4004
      %v4006 = vpop.f32.mrb[0].mxu0
      %v4007 = vpop.f32.mrb[0].mxu0
      %v4008 = vadd.f32 %v3847, %v4007
      %v4009 = vpop.f32.mrb[0].mxu0
      %4010 = vmatprep.mubr.bf16.mxu0 %v3258
      %4011 = vmatmul.mubr.bf16.gmra.mrb[0].mxu0 %v3257
      %v4012 = vpop.f32.mrb[0].mxu0
      %v4013 = vadd.f32 %v3852, %v4012
      %v4014 = vpop.f32.mrb[0].mxu0
      %v4015 = vpop.f32.mrb[0].mxu0
      %v4016 = vadd.f32 %v3855, %v4015
      %v4017 = vpop.f32.mrb[0].mxu0
      %4018 = vmatprep.mubr.bf16.mxu0 %v3267
      %4019 = vmatmul.mubr.bf16.gmra.mrb[0].mxu0 %v3266
      %v4020 = vpop.f32.mrb[0].mxu0
      %v4021 = vadd.f32 %v3860, %v4020
      %v4022 = vpop.f32.mrb[0].mxu0
      %v4023 = vpop.f32.mrb[0].mxu0
      %v4024 = vadd.f32 %v3863, %v4023
      %v4025 = vpop.f32.mrb[0].mxu0
      %4026 = vdwg.mxu0
      %4027 = vmatprep.subr.bf16.mxu0 0
      %4028 = vmatpush1.bf16.msra.mxu0 %v3593
      %4029 = vmatprep.subr.bf16.mxu0 0
      %4030 = vmatpush1.bf16.msra.mxu0 %v3594
      %4031 = vmatprep.subr.bf16.mxu0 0
      %4032 = vmatpush1.bf16.msra.mxu0 %v3595
      %4033 = vmatprep.subr.bf16.mxu0 0
      %4034 = vmatpush1.bf16.msra.mxu0 %v3596
      %4035 = vmatprep.subr.bf16.mxu0 0
      %4036 = vmatpush1.bf16.msra.mxu0 %v3597
      %4037 = vmatprep.subr.bf16.mxu0 0
      %4038 = vmatpush1.bf16.msra.mxu0 %v3598
      %4039 = vmatprep.subr.bf16.mxu0 0
      %4040 = vmatpush1.bf16.msra.mxu0 %v3599
      %4041 = vmatprep.subr.bf16.mxu0 0
      %4042 = vmatpush1.bf16.msra.mxu0 %v3600
      %4043 = vmatprep.subr.bf16.mxu0 0
      %4044 = vmatpush1.bf16.msra.mxu0 %v3601
      %4045 = vmatprep.subr.bf16.mxu0 0
      %4046 = vmatpush1.bf16.msra.mxu0 %v3602
      %4047 = vmatprep.subr.bf16.mxu0 0
      %4048 = vmatpush1.bf16.msra.mxu0 %v3603
      %4049 = vmatprep.subr.bf16.mxu0 0
      %4050 = vmatpush1.bf16.msra.mxu0 %v3604
      %4051 = vmatprep.subr.bf16.mxu0 0
      %4052 = vmatpush1.bf16.msra.mxu0 %v3605
      %4053 = vmatprep.subr.bf16.mxu0 0
      %4054 = vmatpush1.bf16.msra.mxu0 %v3606
      %4055 = vmatprep.subr.bf16.mxu0 0
      %4056 = vmatpush1.bf16.msra.mxu0 %v3607
      %4057 = vmatprep.subr.bf16.mxu0 0
      %4058 = vmatpush1.bf16.msra.mxu0 %v3608
      %4059 = vmatprep.mubr.bf16.mxu0 %v3134
      %4060 = vmatmul.mubr.bf16.gmra.mrb[0].mxu0 %v3133
      %v4061 = vpop.f32.mrb[0].mxu0
      %v4062 = vadd.f32 %v3901, %v4061
      %v4063 = vpop.f32.mrb[0].mxu0
      %v4064 = vpop.f32.mrb[0].mxu0
      %v4065 = vadd.f32 %v3904, %v4064
      %v4066 = vpop.f32.mrb[0].mxu0
      %4067 = vmatprep.mubr.bf16.mxu0 %v3143
      %4068 = vmatmul.mubr.bf16.gmra.mrb[0].mxu0 %v3142
      %v4069 = vpop.f32.mrb[0].mxu0
      %v4070 = vadd.f32 %v3909, %v4069
      %v4071 = vpop.f32.mrb[0].mxu0
      %v4072 = vpop.f32.mrb[0].mxu0
      %v4073 = vadd.f32 %v3912, %v4072
      %v4074 = vpop.f32.mrb[0].mxu0
      %4075 = vmatprep.mubr.bf16.mxu0 %v3152
      %4076 = vmatmul.mubr.bf16.gmra.mrb[0].mxu0 %v3151
      %v4077 = vpop.f32.mrb[0].mxu0
      %v4078 = vadd.f32 %v3917, %v4077
      %v4079 = vpop.f32.mrb[0].mxu0
      %v4080 = vpop.f32.mrb[0].mxu0
      %v4081 = vadd.f32 %v3920, %v4080
      %v4082 = vpop.f32.mrb[0].mxu0
      %4083 = vmatprep.mubr.bf16.mxu0 %v3161
      %4084 = vmatmul.mubr.bf16.gmra.mrb[0].mxu0 %v3160
      %v4085 = vpop.f32.mrb[0].mxu0
      %v4086 = vadd.f32 %v3925, %v4085
      %v4087 = vpop.f32.mrb[0].mxu0
      %v4088 = vpop.f32.mrb[0].mxu0
      %v4089 = vadd.f32 %v3928, %v4088
      %v4090 = vpop.f32.mrb[0].mxu0
      %4091 = vmatprep.mubr.bf16.mxu0 %v3170
      %4092 = vmatmul.mubr.bf16.gmra.mrb[0].mxu0 %v3169
      %v4093 = vpop.f32.mrb[0].mxu0
      %v4094 = vadd.f32 %v3933, %v4093
      %v4095 = vpop.f32.mrb[0].mxu0
      %v4096 = vpop.f32.mrb[0].mxu0
      %v4097 = vadd.f32 %v3936, %v4096
      %v4098 = vpop.f32.mrb[0].mxu0
      %4099 = vmatprep.mubr.bf16.mxu0 %v3179
      %4100 = vmatmul.mubr.bf16.gmra.mrb[0].mxu0 %v3178
      %v4101 = vpop.f32.mrb[0].mxu0
      %v4102 = vadd.f32 %v3941, %v4101
      %v4103 = vpop.f32.mrb[0].mxu0
      %v4104 = vpop.f32.mrb[0].mxu0
      %v4105 = vadd.f32 %v3944, %v4104
      %v4106 = vpop.f32.mrb[0].mxu0
      %4107 = vmatprep.mubr.bf16.mxu0 %v3188
      %4108 = vmatmul.mubr.bf16.gmra.mrb[0].mxu0 %v3187
      %v4109 = vpop.f32.mrb[0].mxu0
      %v4110 = vadd.f32 %v3949, %v4109
      %v4111 = vpop.f32.mrb[0].mxu0
      %v4112 = vpop.f32.mrb[0].mxu0
      %v4113 = vadd.f32 %v3952, %v4112
      %v4114 = vpop.f32.mrb[0].mxu0
      %4115 = vmatprep.mubr.bf16.mxu0 %v3197
      %4116 = vmatmul.mubr.bf16.gmra.mrb[0].mxu0 %v3196
      %v4117 = vpop.f32.mrb[0].mxu0
      %v4118 = vadd.f32 %v3957, %v4117
      %v4119 = vpop.f32.mrb[0].mxu0
      %v4120 = vpop.f32.mrb[0].mxu0
      %v4121 = vadd.f32 %v3960, %v4120
      %v4122 = vpop.f32.mrb[0].mxu0
      %4123 = vmatprep.mubr.bf16.mxu0 %v3206
      %4124 = vmatmul.mubr.bf16.gmra.mrb[0].mxu0 %v3205
      %v4125 = vpop.f32.mrb[0].mxu0
      %v4126 = vadd.f32 %v3965, %v4125
      %v4127 = vpop.f32.mrb[0].mxu0
      %v4128 = vpop.f32.mrb[0].mxu0
      %v4129 = vadd.f32 %v3968, %v4128
      %v4130 = vpop.f32.mrb[0].mxu0
      %4131 = vmatprep.mubr.bf16.mxu0 %v3215
      %4132 = vmatmul.mubr.bf16.gmra.mrb[0].mxu0 %v3214
      %v4133 = vpop.f32.mrb[0].mxu0
      %v4134 = vadd.f32 %v3973, %v4133
      %v4135 = vpop.f32.mrb[0].mxu0
      %v4136 = vpop.f32.mrb[0].mxu0
      %v4137 = vadd.f32 %v3976, %v4136
      %v4138 = vpop.f32.mrb[0].mxu0
      %4139 = vmatprep.mubr.bf16.mxu0 %v3224
      %4140 = vmatmul.mubr.bf16.gmra.mrb[0].mxu0 %v3223
      %v4141 = vpop.f32.mrb[0].mxu0
      %v4142 = vadd.f32 %v3981, %v4141
      %v4143 = vpop.f32.mrb[0].mxu0
      %v4144 = vpop.f32.mrb[0].mxu0
      %v4145 = vadd.f32 %v3984, %v4144
      %v4146 = vpop.f32.mrb[0].mxu0
      %4147 = vmatprep.mubr.bf16.mxu0 %v3233
      %4148 = vmatmul.mubr.bf16.gmra.mrb[0].mxu0 %v3232
      %v4149 = vpop.f32.mrb[0].mxu0
      %v4150 = vadd.f32 %v3989, %v4149
      %v4151 = vpop.f32.mrb[0].mxu0
      %v4152 = vpop.f32.mrb[0].mxu0
      %v4153 = vadd.f32 %v3992, %v4152
      %v4154 = vpop.f32.mrb[0].mxu0
      %4155 = vmatprep.mubr.bf16.mxu0 %v3242
      %4156 = vmatmul.mubr.bf16.gmra.mrb[0].mxu0 %v3241
      %v4157 = vpop.f32.mrb[0].mxu0
      %v4158 = vadd.f32 %v3997, %v4157
      %v4159 = vpop.f32.mrb[0].mxu0
      %v4160 = vpop.f32.mrb[0].mxu0
      %v4161 = vadd.f32 %v4000, %v4160
      %v4162 = vpop.f32.mrb[0].mxu0
      %4163 = vmatprep.mubr.bf16.mxu0 %v3251
      %4164 = vmatmul.mubr.bf16.gmra.mrb[0].mxu0 %v3250
      %v4165 = vpop.f32.mrb[0].mxu0
      %v4166 = vadd.f32 %v4005, %v4165
      %v4167 = vpop.f32.mrb[0].mxu0
      %v4168 = vpop.f32.mrb[0].mxu0
      %v4169 = vadd.f32 %v4008, %v4168
      %v4170 = vpop.f32.mrb[0].mxu0
      %4171 = vmatprep.mubr.bf16.mxu0 %v3260
      %4172 = vmatmul.mubr.bf16.gmra.mrb[0].mxu0 %v3259
      %v4173 = vpop.f32.mrb[0].mxu0
      %v4174 = vadd.f32 %v4013, %v4173
      %v4175 = vpop.f32.mrb[0].mxu0
      %v4176 = vpop.f32.mrb[0].mxu0
      %v4177 = vadd.f32 %v4016, %v4176
      %v4178 = vpop.f32.mrb[0].mxu0
      %4179 = vmatprep.mubr.bf16.mxu0 %v3269
      %4180 = vmatmul.mubr.bf16.gmra.mrb[0].mxu0 %v3268
      %v4181 = vpop.f32.mrb[0].mxu0
      %v4182 = vadd.f32 %v4021, %v4181
      %v4183 = vpop.f32.mrb[0].mxu0
      %v4184 = vpop.f32.mrb[0].mxu0
      %v4185 = vadd.f32 %v4024, %v4184
      %v4186 = vpop.f32.mrb[0].mxu0
      %4187 = vdwg.mxu0
      %4188 = vmatprep.subr.bf16.mxu0 0
      %4189 = vmatpush1.bf16.msra.mxu0 %v3609
      %4190 = vmatprep.subr.bf16.mxu0 0
      %4191 = vmatpush1.bf16.msra.mxu0 %v3610
      %4192 = vmatprep.subr.bf16.mxu0 0
      %4193 = vmatpush1.bf16.msra.mxu0 %v3611
      %4194 = vmatprep.subr.bf16.mxu0 0
      %4195 = vmatpush1.bf16.msra.mxu0 %v3612
      %4196 = vmatprep.subr.bf16.mxu0 0
      %4197 = vmatpush1.bf16.msra.mxu0 %v3613
      %4198 = vmatprep.subr.bf16.mxu0 0
      %4199 = vmatpush1.bf16.msra.mxu0 %v3614
      %4200 = vmatprep.subr.bf16.mxu0 0
      %4201 = vmatpush1.bf16.msra.mxu0 %v3615
      %4202 = vmatprep.subr.bf16.mxu0 0
      %4203 = vmatpush1.bf16.msra.mxu0 %v3616
      %4204 = vmatprep.subr.bf16.mxu0 0
      %4205 = vmatpush1.bf16.msra.mxu0 %v3617
      %4206 = vmatprep.subr.bf16.mxu0 0
      %4207 = vmatpush1.bf16.msra.mxu0 %v3618
      %4208 = vmatprep.subr.bf16.mxu0 0
      %4209 = vmatpush1.bf16.msra.mxu0 %v3619
      %4210 = vmatprep.subr.bf16.mxu0 0
      %4211 = vmatpush1.bf16.msra.mxu0 %v3620
      %4212 = vmatprep.subr.bf16.mxu0 0
      %4213 = vmatpush1.bf16.msra.mxu0 %v3621
      %4214 = vmatprep.subr.bf16.mxu0 0
      %4215 = vmatpush1.bf16.msra.mxu0 %v3622
      %4216 = vmatprep.subr.bf16.mxu0 0
      %4217 = vmatpush1.bf16.msra.mxu0 %v3623
      %4218 = vmatprep.subr.bf16.mxu0 0
      %4219 = vmatpush1.bf16.msra.mxu0 %v3624
      %4220 = vmatprep.mubr.bf16.mxu0 %v3136
      %4221 = vmatmul.mubr.bf16.gmra.mrb[0].mxu0 %v3135
      %v4222 = vpop.f32.mrb[0].mxu0
      %v4223 = vadd.f32 %v4062, %v4222
      %v4224 = vpop.f32.mrb[0].mxu0
      %v4225 = vpop.f32.mrb[0].mxu0
      %v4226 = vadd.f32 %v4065, %v4225
      %v4227 = vpop.f32.mrb[0].mxu0
      %4228 = vmatprep.mubr.bf16.mxu0 %v3145
      %4229 = vmatmul.mubr.bf16.gmra.mrb[0].mxu0 %v3144
      %v4230 = vpop.f32.mrb[0].mxu0
      %v4231 = vadd.f32 %v4070, %v4230
      %v4232 = vpop.f32.mrb[0].mxu0
      %v4233 = vpop.f32.mrb[0].mxu0
      %v4234 = vadd.f32 %v4073, %v4233
      %v4235 = vpop.f32.mrb[0].mxu0
      %4236 = vmatprep.mubr.bf16.mxu0 %v3154
      %4237 = vmatmul.mubr.bf16.gmra.mrb[0].mxu0 %v3153
      %v4238 = vpop.f32.mrb[0].mxu0
      %v4239 = vadd.f32 %v4078, %v4238
      %v4240 = vpop.f32.mrb[0].mxu0
      %v4241 = vpop.f32.mrb[0].mxu0
      %v4242 = vadd.f32 %v4081, %v4241
      %v4243 = vpop.f32.mrb[0].mxu0
      %4244 = vmatprep.mubr.bf16.mxu0 %v3163
      %4245 = vmatmul.mubr.bf16.gmra.mrb[0].mxu0 %v3162
      %v4246 = vpop.f32.mrb[0].mxu0
      %v4247 = vadd.f32 %v4086, %v4246
      %v4248 = vpop.f32.mrb[0].mxu0
      %v4249 = vpop.f32.mrb[0].mxu0
      %v4250 = vadd.f32 %v4089, %v4249
      %v4251 = vpop.f32.mrb[0].mxu0
      %4252 = vmatprep.mubr.bf16.mxu0 %v3172
      %4253 = vmatmul.mubr.bf16.gmra.mrb[0].mxu0 %v3171
      %v4254 = vpop.f32.mrb[0].mxu0
      %v4255 = vadd.f32 %v4094, %v4254
      %v4256 = vpop.f32.mrb[0].mxu0
      %v4257 = vpop.f32.mrb[0].mxu0
      %v4258 = vadd.f32 %v4097, %v4257
      %v4259 = vpop.f32.mrb[0].mxu0
      %4260 = vmatprep.mubr.bf16.mxu0 %v3181
      %4261 = vmatmul.mubr.bf16.gmra.mrb[0].mxu0 %v3180
      %v4262 = vpop.f32.mrb[0].mxu0
      %v4263 = vadd.f32 %v4102, %v4262
      %v4264 = vpop.f32.mrb[0].mxu0
      %v4265 = vpop.f32.mrb[0].mxu0
      %v4266 = vadd.f32 %v4105, %v4265
      %v4267 = vpop.f32.mrb[0].mxu0
      %4268 = vmatprep.mubr.bf16.mxu0 %v3190
      %4269 = vmatmul.mubr.bf16.gmra.mrb[0].mxu0 %v3189
      %v4270 = vpop.f32.mrb[0].mxu0
      %v4271 = vadd.f32 %v4110, %v4270
      %v4272 = vpop.f32.mrb[0].mxu0
      %v4273 = vpop.f32.mrb[0].mxu0
      %v4274 = vadd.f32 %v4113, %v4273
      %v4275 = vpop.f32.mrb[0].mxu0
      %4276 = vmatprep.mubr.bf16.mxu0 %v3199
      %4277 = vmatmul.mubr.bf16.gmra.mrb[0].mxu0 %v3198
      %v4278 = vpop.f32.mrb[0].mxu0
      %v4279 = vadd.f32 %v4118, %v4278
      %v4280 = vpop.f32.mrb[0].mxu0
      %v4281 = vpop.f32.mrb[0].mxu0
      %v4282 = vadd.f32 %v4121, %v4281
      %v4283 = vpop.f32.mrb[0].mxu0
      %4284 = vmatprep.mubr.bf16.mxu0 %v3208
      %4285 = vmatmul.mubr.bf16.gmra.mrb[0].mxu0 %v3207
      %v4286 = vpop.f32.mrb[0].mxu0
      %v4287 = vadd.f32 %v4126, %v4286
      %v4288 = vpop.f32.mrb[0].mxu0
      %v4289 = vpop.f32.mrb[0].mxu0
      %v4290 = vadd.f32 %v4129, %v4289
      %v4291 = vpop.f32.mrb[0].mxu0
      %4292 = vmatprep.mubr.bf16.mxu0 %v3217
      %4293 = vmatmul.mubr.bf16.gmra.mrb[0].mxu0 %v3216
      %v4294 = vpop.f32.mrb[0].mxu0
      %v4295 = vadd.f32 %v4134, %v4294
      %v4296 = vpop.f32.mrb[0].mxu0
      %v4297 = vpop.f32.mrb[0].mxu0
      %v4298 = vadd.f32 %v4137, %v4297
      %v4299 = vpop.f32.mrb[0].mxu0
      %4300 = vmatprep.mubr.bf16.mxu0 %v3226
      %4301 = vmatmul.mubr.bf16.gmra.mrb[0].mxu0 %v3225
      %v4302 = vpop.f32.mrb[0].mxu0
      %v4303 = vadd.f32 %v4142, %v4302
      %v4304 = vpop.f32.mrb[0].mxu0
      %v4305 = vpop.f32.mrb[0].mxu0
      %v4306 = vadd.f32 %v4145, %v4305
      %v4307 = vpop.f32.mrb[0].mxu0
      %4308 = vmatprep.mubr.bf16.mxu0 %v3235
      %4309 = vmatmul.mubr.bf16.gmra.mrb[0].mxu0 %v3234
      %v4310 = vpop.f32.mrb[0].mxu0
      %v4311 = vadd.f32 %v4150, %v4310
      %v4312 = vpop.f32.mrb[0].mxu0
      %v4313 = vpop.f32.mrb[0].mxu0
      %v4314 = vadd.f32 %v4153, %v4313
      %v4315 = vpop.f32.mrb[0].mxu0
      %4316 = vmatprep.mubr.bf16.mxu0 %v3244
      %4317 = vmatmul.mubr.bf16.gmra.mrb[0].mxu0 %v3243
      %v4318 = vpop.f32.mrb[0].mxu0
      %v4319 = vadd.f32 %v4158, %v4318
      %v4320 = vpop.f32.mrb[0].mxu0
      %v4321 = vpop.f32.mrb[0].mxu0
      %v4322 = vadd.f32 %v4161, %v4321
      %v4323 = vpop.f32.mrb[0].mxu0
      %4324 = vmatprep.mubr.bf16.mxu0 %v3253
      %4325 = vmatmul.mubr.bf16.gmra.mrb[0].mxu0 %v3252
      %v4326 = vpop.f32.mrb[0].mxu0
      %v4327 = vadd.f32 %v4166, %v4326
      %v4328 = vpop.f32.mrb[0].mxu0
      %v4329 = vpop.f32.mrb[0].mxu0
      %v4330 = vadd.f32 %v4169, %v4329
      %v4331 = vpop.f32.mrb[0].mxu0
      %4332 = vmatprep.mubr.bf16.mxu0 %v3262
      %4333 = vmatmul.mubr.bf16.gmra.mrb[0].mxu0 %v3261
      %v4334 = vpop.f32.mrb[0].mxu0
      %v4335 = vadd.f32 %v4174, %v4334
      %v4336 = vpop.f32.mrb[0].mxu0
      %v4337 = vpop.f32.mrb[0].mxu0
      %v4338 = vadd.f32 %v4177, %v4337
      %v4339 = vpop.f32.mrb[0].mxu0
      %4340 = vmatprep.mubr.bf16.mxu0 %v3271
      %4341 = vmatmul.mubr.bf16.gmra.mrb[0].mxu0 %v3270
      %v4342 = vpop.f32.mrb[0].mxu0
      %v4343 = vadd.f32 %v4182, %v4342
      %v4344 = vpop.f32.mrb[0].mxu0
      %v4345 = vpop.f32.mrb[0].mxu0
      %v4346 = vadd.f32 %v4185, %v4345
      %v4347 = vpop.f32.mrb[0].mxu0
      %4348 = vdwg.mxu0
      %4349 = vmatprep.subr.bf16.mxu0 0
      %4350 = vmatpush1.bf16.msra.mxu0 %v3625
      %4351 = vmatprep.subr.bf16.mxu0 0
      %4352 = vmatpush1.bf16.msra.mxu0 %v3626
      %4353 = vmatprep.subr.bf16.mxu0 0
      %4354 = vmatpush1.bf16.msra.mxu0 %v3627
      %4355 = vmatprep.subr.bf16.mxu0 0
      %4356 = vmatpush1.bf16.msra.mxu0 %v3628
      %4357 = vmatprep.subr.bf16.mxu0 0
      %4358 = vmatpush1.bf16.msra.mxu0 %v3629
      %4359 = vmatprep.subr.bf16.mxu0 0
      %4360 = vmatpush1.bf16.msra.mxu0 %v3630
      %4361 = vmatprep.subr.bf16.mxu0 0
      %4362 = vmatpush1.bf16.msra.mxu0 %v3631
      %4363 = vmatprep.subr.bf16.mxu0 0
      %4364 = vmatpush1.bf16.msra.mxu0 %v3632
      %4365 = vmatprep.subr.bf16.mxu0 0
      %4366 = vmatpush1.bf16.msra.mxu0 0
      %4367 = vmatprep.subr.bf16.mxu0 0
      %4368 = vmatpush1.bf16.msra.mxu0 0
      %4369 = vmatprep.subr.bf16.mxu0 0
      %4370 = vmatpush1.bf16.msra.mxu0 0
      %4371 = vmatprep.subr.bf16.mxu0 0
      %4372 = vmatpush1.bf16.msra.mxu0 0
      %4373 = vmatprep.subr.bf16.mxu0 0
      %4374 = vmatpush1.bf16.msra.mxu0 0
      %4375 = vmatprep.subr.bf16.mxu0 0
      %4376 = vmatpush1.bf16.msra.mxu0 0
      %4377 = vmatprep.subr.bf16.mxu0 0
      %4378 = vmatpush1.bf16.msra.mxu0 0
      %4379 = vmatprep.subr.bf16.mxu0 0
      %4380 = vmatpush1.bf16.msra.mxu0 0
      %4381 = vmatprep.mubr.bf16.mxu0 0
      %4382 = vmatmul.mubr.bf16.gmra.mrb[0].mxu0 %v3137
      %v4383 = vpop.f32.mrb[0].mxu0
      %v4384 = vadd.f32 %v4223, %v4383
      %v4385 = vpop.f32.mrb[0].mxu0
      %v4386 = vpop.f32.mrb[0].mxu0
      %v4387 = vadd.f32 %v4226, %v4386
      %v4388 = vpop.f32.mrb[0].mxu0
      %4389 = vmatprep.mubr.bf16.mxu0 0
      %4390 = vmatmul.mubr.bf16.gmra.mrb[0].mxu0 %v3146
      %v4391 = vpop.f32.mrb[0].mxu0
      %v4392 = vadd.f32 %v4231, %v4391
      %v4393 = vpop.f32.mrb[0].mxu0
      %v4394 = vpop.f32.mrb[0].mxu0
      %v4395 = vadd.f32 %v4234, %v4394
      %v4396 = vpop.f32.mrb[0].mxu0
      %4397 = vmatprep.mubr.bf16.mxu0 0
      %4398 = vmatmul.mubr.bf16.gmra.mrb[0].mxu0 %v3155
      %v4399 = vpop.f32.mrb[0].mxu0
      %v4400 = vadd.f32 %v4239, %v4399
      %v4401 = vpop.f32.mrb[0].mxu0
      %v4402 = vpop.f32.mrb[0].mxu0
      %v4403 = vadd.f32 %v4242, %v4402
      %v4404 = vpop.f32.mrb[0].mxu0
      %4405 = vmatprep.mubr.bf16.mxu0 0
      %4406 = vmatmul.mubr.bf16.gmra.mrb[0].mxu0 %v3164
      %v4407 = vpop.f32.mrb[0].mxu0
      %v4408 = vadd.f32 %v4247, %v4407
      %v4409 = vpop.f32.mrb[0].mxu0
      %v4410 = vpop.f32.mrb[0].mxu0
      %v4411 = vadd.f32 %v4250, %v4410
      %v4412 = vpop.f32.mrb[0].mxu0
      %4413 = vmatprep.mubr.bf16.mxu0 0
      %4414 = vmatmul.mubr.bf16.gmra.mrb[0].mxu0 %v3173
      %v4415 = vpop.f32.mrb[0].mxu0
      %v4416 = vadd.f32 %v4255, %v4415
      %v4417 = vpop.f32.mrb[0].mxu0
      %v4418 = vpop.f32.mrb[0].mxu0
      %v4419 = vadd.f32 %v4258, %v4418
      %v4420 = vpop.f32.mrb[0].mxu0
      %4421 = vmatprep.mubr.bf16.mxu0 0
      %4422 = vmatmul.mubr.bf16.gmra.mrb[0].mxu0 %v3182
      %v4423 = vpop.f32.mrb[0].mxu0
      %v4424 = vadd.f32 %v4263, %v4423
      %v4425 = vpop.f32.mrb[0].mxu0
      %v4426 = vpop.f32.mrb[0].mxu0
      %v4427 = vadd.f32 %v4266, %v4426
      %v4428 = vpop.f32.mrb[0].mxu0
      %4429 = vmatprep.mubr.bf16.mxu0 0
      %4430 = vmatmul.mubr.bf16.gmra.mrb[0].mxu0 %v3191
      %v4431 = vpop.f32.mrb[0].mxu0
      %v4432 = vadd.f32 %v4271, %v4431
      %v4433 = vpop.f32.mrb[0].mxu0
      %v4434 = vpop.f32.mrb[0].mxu0
      %v4435 = vadd.f32 %v4274, %v4434
      %v4436 = vpop.f32.mrb[0].mxu0
      %4437 = vmatprep.mubr.bf16.mxu0 0
      %4438 = vmatmul.mubr.bf16.gmra.mrb[0].mxu0 %v3200
      %v4439 = vpop.f32.mrb[0].mxu0
      %v4440 = vadd.f32 %v4279, %v4439
      %v4441 = vpop.f32.mrb[0].mxu0
      %v4442 = vpop.f32.mrb[0].mxu0
      %v4443 = vadd.f32 %v4282, %v4442
      %v4444 = vpop.f32.mrb[0].mxu0
      %4445 = vmatprep.mubr.bf16.mxu0 0
      %4446 = vmatmul.mubr.bf16.gmra.mrb[0].mxu0 %v3209
      %v4447 = vpop.f32.mrb[0].mxu0
      %v4448 = vadd.f32 %v4287, %v4447
      %v4449 = vpop.f32.mrb[0].mxu0
      %v4450 = vpop.f32.mrb[0].mxu0
      %v4451 = vadd.f32 %v4290, %v4450
      %v4452 = vpop.f32.mrb[0].mxu0
      %4453 = vmatprep.mubr.bf16.mxu0 0
      %4454 = vmatmul.mubr.bf16.gmra.mrb[0].mxu0 %v3218
      %v4455 = vpop.f32.mrb[0].mxu0
      %v4456 = vadd.f32 %v4295, %v4455
      %v4457 = vpop.f32.mrb[0].mxu0
      %v4458 = vpop.f32.mrb[0].mxu0
      %v4459 = vadd.f32 %v4298, %v4458
      %v4460 = vpop.f32.mrb[0].mxu0
      %4461 = vmatprep.mubr.bf16.mxu0 0
      %4462 = vmatmul.mubr.bf16.gmra.mrb[0].mxu0 %v3227
      %v4463 = vpop.f32.mrb[0].mxu0
      %v4464 = vadd.f32 %v4303, %v4463
      %v4465 = vpop.f32.mrb[0].mxu0
      %v4466 = vpop.f32.mrb[0].mxu0
      %v4467 = vadd.f32 %v4306, %v4466
      %v4468 = vpop.f32.mrb[0].mxu0
      %4469 = vmatprep.mubr.bf16.mxu0 0
      %4470 = vmatmul.mubr.bf16.gmra.mrb[0].mxu0 %v3236
      %v4471 = vpop.f32.mrb[0].mxu0
      %v4472 = vadd.f32 %v4311, %v4471
      %v4473 = vpop.f32.mrb[0].mxu0
      %v4474 = vpop.f32.mrb[0].mxu0
      %v4475 = vadd.f32 %v4314, %v4474
      %v4476 = vpop.f32.mrb[0].mxu0
      %4477 = vmatprep.mubr.bf16.mxu0 0
      %4478 = vmatmul.mubr.bf16.gmra.mrb[0].mxu0 %v3245
      %v4479 = vpop.f32.mrb[0].mxu0
      %v4480 = vadd.f32 %v4319, %v4479
      %v4481 = vpop.f32.mrb[0].mxu0
      %v4482 = vpop.f32.mrb[0].mxu0
      %v4483 = vadd.f32 %v4322, %v4482
      %v4484 = vpop.f32.mrb[0].mxu0
      %4485 = vmatprep.mubr.bf16.mxu0 0
      %4486 = vmatmul.mubr.bf16.gmra.mrb[0].mxu0 %v3254
      %v4487 = vpop.f32.mrb[0].mxu0
      %v4488 = vadd.f32 %v4327, %v4487
      %v4489 = vpop.f32.mrb[0].mxu0
      %v4490 = vpop.f32.mrb[0].mxu0
      %v4491 = vadd.f32 %v4330, %v4490
      %v4492 = vpop.f32.mrb[0].mxu0
      %4493 = vmatprep.mubr.bf16.mxu0 0
      %4494 = vmatmul.mubr.bf16.gmra.mrb[0].mxu0 %v3263
      %v4495 = vpop.f32.mrb[0].mxu0
      %v4496 = vadd.f32 %v4335, %v4495
      %v4497 = vpop.f32.mrb[0].mxu0
      %v4498 = vpop.f32.mrb[0].mxu0
      %v4499 = vadd.f32 %v4338, %v4498
      %v4500 = vpop.f32.mrb[0].mxu0
      %4501 = vmatprep.mubr.bf16.mxu0 0
      %4502 = vmatmul.mubr.bf16.gmra.mrb[0].mxu0 %v3272
      %v4503 = vpop.f32.mrb[0].mxu0
      %v4504 = vadd.f32 %v4343, %v4503
      %v4505 = vpop.f32.mrb[0].mxu0
      %v4506 = vpop.f32.mrb[0].mxu0
      %v4507 = vadd.f32 %v4346, %v4506
      %v4508 = vpop.f32.mrb[0].mxu0
      %4509 = vdwg.mxu0
      %v4510 = vmax.f32 %v4384, 0.0
      %v4511 = vmax.f32 %v4387, 0.0
      %v4512 = vmax.f32 %v4392, 0.0
      %v4513 = vmax.f32 %v4395, 0.0
      %v4514 = vmax.f32 %v4400, 0.0
      %v4515 = vmax.f32 %v4403, 0.0
      %v4516 = vmax.f32 %v4408, 0.0
      %v4517 = vmax.f32 %v4411, 0.0
      %v4518 = vmax.f32 %v4416, 0.0
      %v4519 = vmax.f32 %v4419, 0.0
      %v4520 = vmax.f32 %v4424, 0.0
      %v4521 = vmax.f32 %v4427, 0.0
      %v4522 = vmax.f32 %v4432, 0.0
      %v4523 = vmax.f32 %v4435, 0.0
      %v4524 = vmax.f32 %v4440, 0.0
      %v4525 = vmax.f32 %v4443, 0.0
      %v4526 = vmax.f32 %v4448, 0.0
      %v4527 = vmax.f32 %v4451, 0.0
      %v4528 = vmax.f32 %v4456, 0.0
      %v4529 = vmax.f32 %v4459, 0.0
      %v4530 = vmax.f32 %v4464, 0.0
      %v4531 = vmax.f32 %v4467, 0.0
      %v4532 = vmax.f32 %v4472, 0.0
      %v4533 = vmax.f32 %v4475, 0.0
      %v4534 = vmax.f32 %v4480, 0.0
      %v4535 = vmax.f32 %v4483, 0.0
      %v4536 = vmax.f32 %v4488, 0.0
      %v4537 = vmax.f32 %v4491, 0.0
      %v4538 = vmax.f32 %v4496, 0.0
      %v4539 = vmax.f32 %v4499, 0.0
      %v4540 = vmax.f32 %v4504, 0.0
      %v4541 = vmax.f32 %v4507, 0.0
      %4542 = vst [vmem:[%s208 + $0x8] sm:$0xff] %v4510
      %4543 = vst [vmem:[%s208 + $0x10] sm:$0xff] %v4511
      %4544 = vst [vmem:[%s208 + $0x28] sm:$0xff] %v4512
      %4545 = vst [vmem:[%s208 + $0x30] sm:$0xff] %v4513
      %4546 = vst [vmem:[%s208 + $0x48] sm:$0xff] %v4514
      %4547 = vst [vmem:[%s208 + $0x50] sm:$0xff] %v4515
      %4548 = vst [vmem:[%s208 + $0x68] sm:$0xff] %v4516
      %4549 = vst [vmem:[%s208 + $0x70] sm:$0xff] %v4517
      %4550 = vst [vmem:[%s208 + $0x88] sm:$0xff] %v4518
      %4551 = vst [vmem:[%s208 + $0x90] sm:$0xff] %v4519
      %4552 = vst [vmem:[%s208 + $0xa8] sm:$0xff] %v4520
      %4553 = vst [vmem:[%s208 + $0xb0] sm:$0xff] %v4521
      %4554 = vst [vmem:[%s208 + $0xc8] sm:$0xff] %v4522
      %4555 = vst [vmem:[%s208 + $0xd0] sm:$0xff] %v4523
      %4556 = vst [vmem:[%s208 + $0xe8] sm:$0xff] %v4524
      %4557 = vst [vmem:[%s208 + $0xf0] sm:$0xff] %v4525
      %4558 = vst [vmem:[%s208 + $0x108] sm:$0xff] %v4526
      %4559 = vst [vmem:[%s208 + $0x110] sm:$0xff] %v4527
      %4560 = vst [vmem:[%s208 + $0x128] sm:$0xff] %v4528
      %4561 = vst [vmem:[%s208 + $0x130] sm:$0xff] %v4529
      %4562 = vst [vmem:[%s208 + $0x148] sm:$0xff] %v4530
      %4563 = vst [vmem:[%s208 + $0x150] sm:$0xff] %v4531
      %4564 = vst [vmem:[%s208 + $0x168] sm:$0xff] %v4532
      %4565 = vst [vmem:[%s208 + $0x170] sm:$0xff] %v4533
      %4566 = vst [vmem:[%s208 + $0x188] sm:$0xff] %v4534
      %4567 = vst [vmem:[%s208 + $0x190] sm:$0xff] %v4535
      %4568 = vst [vmem:[%s208 + $0x1a8] sm:$0xff] %v4536
      %4569 = vst [vmem:[%s208 + $0x1b0] sm:$0xff] %v4537
      %4570 = vst [vmem:[%s208 + $0x1c8] sm:$0xff] %v4538
      %4571 = vst [vmem:[%s208 + $0x1d0] sm:$0xff] %v4539
      %4572 = vst [vmem:[%s208 + $0x1e8] sm:$0xff] %v4540
      %4573 = vst [vmem:[%s208 + $0x1f0] sm:$0xff] %v4541
      %v4574 = vld [vmem:[#allocation2 + $0x7] sm:$0xff]
      %v4575 = vld [vmem:[#allocation2 + $0xf] sm:$0xff]
      %v4576 = vld [vmem:[#allocation2 + $0x27] sm:$0xff]
      %v4577 = vld [vmem:[#allocation2 + $0x2f] sm:$0xff]
      %v4578 = vld [vmem:[#allocation2 + $0x47] sm:$0xff]
      %v4579 = vld [vmem:[#allocation2 + $0x4f] sm:$0xff]
      %v4580 = vld [vmem:[#allocation2 + $0x67] sm:$0xff]
      %v4581 = vld [vmem:[#allocation2 + $0x6f] sm:$0xff]
      %v4582 = vld [vmem:[#allocation2 + $0x87] sm:$0xff]
      %v4583 = vld [vmem:[#allocation2 + $0x8f] sm:$0xff]
      %v4584 = vld [vmem:[#allocation2 + $0xa7] sm:$0xff]
      %v4585 = vld [vmem:[#allocation2 + $0xaf] sm:$0xff]
      %v4586 = vld [vmem:[#allocation2 + $0xc7] sm:$0xff]
      %v4587 = vld [vmem:[#allocation2 + $0xcf] sm:$0xff]
      %v4588 = vld [vmem:[#allocation2 + $0xe7] sm:$0xff]
      %v4589 = vld [vmem:[#allocation2 + $0xef] sm:$0xff]
      %v4590 = vld [vmem:[#allocation2 + $0x107] sm:$0xff]
      %v4591 = vld [vmem:[#allocation2 + $0x10f] sm:$0xff]
      %v4592 = vld [vmem:[#allocation2 + $0x127] sm:$0xff]
      %v4593 = vld [vmem:[#allocation2 + $0x12f] sm:$0xff]
      %v4594 = vld [vmem:[#allocation2 + $0x147] sm:$0xff]
      %v4595 = vld [vmem:[#allocation2 + $0x14f] sm:$0xff]
      %v4596 = vld [vmem:[#allocation2 + $0x167] sm:$0xff]
      %v4597 = vld [vmem:[#allocation2 + $0x16f] sm:$0xff]
      %v4598 = vld [vmem:[#allocation2 + $0x187] sm:$0xff]
      %v4599 = vld [vmem:[#allocation2 + $0x18f] sm:$0xff]
      %v4600 = vld [vmem:[#allocation2 + $0x1a7] sm:$0xff]
      %v4601 = vld [vmem:[#allocation2 + $0x1af] sm:$0xff]
      %v4602 = vld [vmem:[#allocation2 + $0x1c7] sm:$0xff]
      %v4603 = vld [vmem:[#allocation2 + $0x1cf] sm:$0xff]
      %v4604 = vld [vmem:[#allocation2 + $0x1e7] sm:$0xff]
      %v4605 = vld [vmem:[#allocation2 + $0x1ef] sm:$0xff]
      %v4606 = vpack.c.bf16 %v4575, %v4574
      %v4607 = vpack.c.bf16 %v4577, %v4576
      %v4608 = vpack.c.bf16 %v4579, %v4578
      %v4609 = vpack.c.bf16 %v4581, %v4580
      %v4610 = vpack.c.bf16 %v4583, %v4582
      %v4611 = vpack.c.bf16 %v4585, %v4584
      %v4612 = vpack.c.bf16 %v4587, %v4586
      %v4613 = vpack.c.bf16 %v4589, %v4588
      %v4614 = vpack.c.bf16 %v4591, %v4590
      %v4615 = vpack.c.bf16 %v4593, %v4592
      %v4616 = vpack.c.bf16 %v4595, %v4594
      %v4617 = vpack.c.bf16 %v4597, %v4596
      %v4618 = vpack.c.bf16 %v4599, %v4598
      %v4619 = vpack.c.bf16 %v4601, %v4600
      %v4620 = vpack.c.bf16 %v4603, %v4602
      %v4621 = vpack.c.bf16 %v4605, %v4604
      %4622 = vst [vmem:[#allocation3] sm:$0xff] %v4606
      %4623 = vst [vmem:[#allocation3 + $0x48] sm:$0xff] %v4607
      %4624 = vst [vmem:[#allocation3 + $0x90] sm:$0xff] %v4608
      %4625 = vst [vmem:[#allocation3 + $0xd8] sm:$0xff] %v4609
      %4626 = vst [vmem:[#allocation3 + $0x120] sm:$0xff] %v4610
      %4627 = vst [vmem:[#allocation3 + $0x168] sm:$0xff] %v4611
      %4628 = vst [vmem:[#allocation3 + $0x1b0] sm:$0xff] %v4612
      %4629 = vst [vmem:[#allocation3 + $0x1f8] sm:$0xff] %v4613
      %4630 = vst [vmem:[#allocation3 + $0x240] sm:$0xff] %v4614
      %4631 = vst [vmem:[#allocation3 + $0x288] sm:$0xff] %v4615
      %4632 = vst [vmem:[#allocation3 + $0x2d0] sm:$0xff] %v4616
      %4633 = vst [vmem:[#allocation3 + $0x318] sm:$0xff] %v4617
      %4634 = vst [vmem:[#allocation3 + $0x360] sm:$0xff] %v4618
      %4635 = vst [vmem:[#allocation3 + $0x3a8] sm:$0xff] %v4619
      %4636 = vst [vmem:[#allocation3 + $0x3f0] sm:$0xff] %v4620
      %4637 = vst [vmem:[#allocation3 + $0x438] sm:$0xff] %v4621
      %v4638 = vld [vmem:[#allocation2 + $0x8] sm:$0xff]
      %v4639 = vld [vmem:[#allocation2 + $0x10] sm:$0xff]
      %v4640 = vld [vmem:[#allocation2 + $0x28] sm:$0xff]
      %v4641 = vld [vmem:[#allocation2 + $0x30] sm:$0xff]
      %v4642 = vld [vmem:[#allocation2 + $0x48] sm:$0xff]
      %v4643 = vld [vmem:[#allocation2 + $0x50] sm:$0xff]
      %v4644 = vld [vmem:[#allocation2 + $0x68] sm:$0xff]
      %v4645 = vld [vmem:[#allocation2 + $0x70] sm:$0xff]
      %v4646 = vld [vmem:[#allocation2 + $0x88] sm:$0xff]
      %v4647 = vld [vmem:[#allocation2 + $0x90] sm:$0xff]
      %v4648 = vld [vmem:[#allocation2 + $0xa8] sm:$0xff]
      %v4649 = vld [vmem:[#allocation2 + $0xb0] sm:$0xff]
      %v4650 = vld [vmem:[#allocation2 + $0xc8] sm:$0xff]
      %v4651 = vld [vmem:[#allocation2 + $0xd0] sm:$0xff]
      %v4652 = vld [vmem:[#allocation2 + $0xe8] sm:$0xff]
      %v4653 = vld [vmem:[#allocation2 + $0xf0] sm:$0xff]
      %v4654 = vld [vmem:[#allocation2 + $0x108] sm:$0xff]
      %v4655 = vld [vmem:[#allocation2 + $0x110] sm:$0xff]
      %v4656 = vld [vmem:[#allocation2 + $0x128] sm:$0xff]
      %v4657 = vld [vmem:[#allocation2 + $0x130] sm:$0xff]
      %v4658 = vld [vmem:[#allocation2 + $0x148] sm:$0xff]
      %v4659 = vld [vmem:[#allocation2 + $0x150] sm:$0xff]
      %v4660 = vld [vmem:[#allocation2 + $0x168] sm:$0xff]
      %v4661 = vld [vmem:[#allocation2 + $0x170] sm:$0xff]
      %v4662 = vld [vmem:[#allocation2 + $0x188] sm:$0xff]
      %v4663 = vld [vmem:[#allocation2 + $0x190] sm:$0xff]
      %v4664 = vld [vmem:[#allocation2 + $0x1a8] sm:$0xff]
      %v4665 = vld [vmem:[#allocation2 + $0x1b0] sm:$0xff]
      %v4666 = vld [vmem:[#allocation2 + $0x1c8] sm:$0xff]
      %v4667 = vld [vmem:[#allocation2 + $0x1d0] sm:$0xff]
      %v4668 = vld [vmem:[#allocation2 + $0x1e8] sm:$0xff]
      %v4669 = vld [vmem:[#allocation2 + $0x1f0] sm:$0xff]
      %v4670 = vpack.c.bf16 %v4639, %v4638
      %v4671 = vpack.c.bf16 %v4641, %v4640
      %v4672 = vpack.c.bf16 %v4643, %v4642
      %v4673 = vpack.c.bf16 %v4645, %v4644
      %v4674 = vpack.c.bf16 %v4647, %v4646
      %v4675 = vpack.c.bf16 %v4649, %v4648
      %v4676 = vpack.c.bf16 %v4651, %v4650
      %v4677 = vpack.c.bf16 %v4653, %v4652
      %v4678 = vpack.c.bf16 %v4655, %v4654
      %v4679 = vpack.c.bf16 %v4657, %v4656
      %v4680 = vpack.c.bf16 %v4659, %v4658
      %v4681 = vpack.c.bf16 %v4661, %v4660
      %v4682 = vpack.c.bf16 %v4663, %v4662
      %v4683 = vpack.c.bf16 %v4665, %v4664
      %v4684 = vpack.c.bf16 %v4667, %v4666
      %v4685 = vpack.c.bf16 %v4669, %v4668
      %4686 = vst [vmem:[#allocation3 + $0x8] sm:$0xff] %v4670
      %4687 = vst [vmem:[#allocation3 + $0x50] sm:$0xff] %v4671
      %4688 = vst [vmem:[#allocation3 + $0x98] sm:$0xff] %v4672
      %4689 = vst [vmem:[#allocation3 + $0xe0] sm:$0xff] %v4673
      %4690 = vst [vmem:[#allocation3 + $0x128] sm:$0xff] %v4674
      %4691 = vst [vmem:[#allocation3 + $0x170] sm:$0xff] %v4675
      %4692 = vst [vmem:[#allocation3 + $0x1b8] sm:$0xff] %v4676
      %4693 = vst [vmem:[#allocation3 + $0x200] sm:$0xff] %v4677
      %4694 = vst [vmem:[#allocation3 + $0x248] sm:$0xff] %v4678
      %4695 = vst [vmem:[#allocation3 + $0x290] sm:$0xff] %v4679
      %4696 = vst [vmem:[#allocation3 + $0x2d8] sm:$0xff] %v4680
      %4697 = vst [vmem:[#allocation3 + $0x320] sm:$0xff] %v4681
      %4698 = vst [vmem:[#allocation3 + $0x368] sm:$0xff] %v4682
      %4699 = vst [vmem:[#allocation3 + $0x3b0] sm:$0xff] %v4683
      %4700 = vst [vmem:[#allocation3 + $0x3f8] sm:$0xff] %v4684
      %4701 = vst [vmem:[#allocation3 + $0x440] sm:$0xff] %v4685
      %v4702 = vld [vmem:[#allocation2 + $0x9] sm:$0xff]
      %v4703 = vld [vmem:[#allocation2 + $0x11] sm:$0xff]
      %v4704 = vld [vmem:[#allocation2 + $0x29] sm:$0xff]
      %v4705 = vld [vmem:[#allocation2 + $0x31] sm:$0xff]
      %v4706 = vld [vmem:[#allocation2 + $0x49] sm:$0xff]
      %v4707 = vld [vmem:[#allocation2 + $0x51] sm:$0xff]
      %v4708 = vld [vmem:[#allocation2 + $0x69] sm:$0xff]
      %v4709 = vld [vmem:[#allocation2 + $0x71] sm:$0xff]
      %v4710 = vld [vmem:[#allocation2 + $0x89] sm:$0xff]
      %v4711 = vld [vmem:[#allocation2 + $0x91] sm:$0xff]
      %v4712 = vld [vmem:[#allocation2 + $0xa9] sm:$0xff]
      %v4713 = vld [vmem:[#allocation2 + $0xb1] sm:$0xff]
      %v4714 = vld [vmem:[#allocation2 + $0xc9] sm:$0xff]
      %v4715 = vld [vmem:[#allocation2 + $0xd1] sm:$0xff]
      %v4716 = vld [vmem:[#allocation2 + $0xe9] sm:$0xff]
      %v4717 = vld [vmem:[#allocation2 + $0xf1] sm:$0xff]
      %v4718 = vld [vmem:[#allocation2 + $0x109] sm:$0xff]
      %v4719 = vld [vmem:[#allocation2 + $0x111] sm:$0xff]
      %v4720 = vld [vmem:[#allocation2 + $0x129] sm:$0xff]
      %v4721 = vld [vmem:[#allocation2 + $0x131] sm:$0xff]
      %v4722 = vld [vmem:[#allocation2 + $0x149] sm:$0xff]
      %v4723 = vld [vmem:[#allocation2 + $0x151] sm:$0xff]
      %v4724 = vld [vmem:[#allocation2 + $0x169] sm:$0xff]
      %v4725 = vld [vmem:[#allocation2 + $0x171] sm:$0xff]
      %v4726 = vld [vmem:[#allocation2 + $0x189] sm:$0xff]
      %v4727 = vld [vmem:[#allocation2 + $0x191] sm:$0xff]
      %v4728 = vld [vmem:[#allocation2 + $0x1a9] sm:$0xff]
      %v4729 = vld [vmem:[#allocation2 + $0x1b1] sm:$0xff]
      %v4730 = vld [vmem:[#allocation2 + $0x1c9] sm:$0xff]
      %v4731 = vld [vmem:[#allocation2 + $0x1d1] sm:$0xff]
      %v4732 = vld [vmem:[#allocation2 + $0x1e9] sm:$0xff]
      %v4733 = vld [vmem:[#allocation2 + $0x1f1] sm:$0xff]
      %v4734 = vpack.c.bf16 %v4703, %v4702
      %v4735 = vpack.c.bf16 %v4705, %v4704
      %v4736 = vpack.c.bf16 %v4707, %v4706
      %v4737 = vpack.c.bf16 %v4709, %v4708
      %v4738 = vpack.c.bf16 %v4711, %v4710
      %v4739 = vpack.c.bf16 %v4713, %v4712
      %v4740 = vpack.c.bf16 %v4715, %v4714
      %v4741 = vpack.c.bf16 %v4717, %v4716
      %v4742 = vpack.c.bf16 %v4719, %v4718
      %v4743 = vpack.c.bf16 %v4721, %v4720
      %v4744 = vpack.c.bf16 %v4723, %v4722
      %v4745 = vpack.c.bf16 %v4725, %v4724
      %v4746 = vpack.c.bf16 %v4727, %v4726
      %v4747 = vpack.c.bf16 %v4729, %v4728
      %v4748 = vpack.c.bf16 %v4731, %v4730
      %v4749 = vpack.c.bf16 %v4733, %v4732
      %4750 = vst [vmem:[#allocation3 + $0x10] sm:$0xff] %v4734
      %4751 = vst [vmem:[#allocation3 + $0x58] sm:$0xff] %v4735
      %4752 = vst [vmem:[#allocation3 + $0xa0] sm:$0xff] %v4736
      %4753 = vst [vmem:[#allocation3 + $0xe8] sm:$0xff] %v4737
      %4754 = vst [vmem:[#allocation3 + $0x130] sm:$0xff] %v4738
      %4755 = vst [vmem:[#allocation3 + $0x178] sm:$0xff] %v4739
      %4756 = vst [vmem:[#allocation3 + $0x1c0] sm:$0xff] %v4740
      %4757 = vst [vmem:[#allocation3 + $0x208] sm:$0xff] %v4741
      %4758 = vst [vmem:[#allocation3 + $0x250] sm:$0xff] %v4742
      %4759 = vst [vmem:[#allocation3 + $0x298] sm:$0xff] %v4743
      %4760 = vst [vmem:[#allocation3 + $0x2e0] sm:$0xff] %v4744
      %4761 = vst [vmem:[#allocation3 + $0x328] sm:$0xff] %v4745
      %4762 = vst [vmem:[#allocation3 + $0x370] sm:$0xff] %v4746
      %4763 = vst [vmem:[#allocation3 + $0x3b8] sm:$0xff] %v4747
      %4764 = vst [vmem:[#allocation3 + $0x400] sm:$0xff] %v4748
      %4765 = vst [vmem:[#allocation3 + $0x448] sm:$0xff] %v4749
      %v4766 = vld [vmem:[%s208 + $0x7] sm:$0xff]
      %v4767 = vld [vmem:[%s208 + $0xf] sm:$0xff]
      %v4768 = vld [vmem:[%s208 + $0x27] sm:$0xff]
      %v4769 = vld [vmem:[%s208 + $0x2f] sm:$0xff]
      %v4770 = vld [vmem:[%s208 + $0x47] sm:$0xff]
      %v4771 = vld [vmem:[%s208 + $0x4f] sm:$0xff]
      %v4772 = vld [vmem:[%s208 + $0x67] sm:$0xff]
      %v4773 = vld [vmem:[%s208 + $0x6f] sm:$0xff]
      %v4774 = vld [vmem:[%s208 + $0x87] sm:$0xff]
      %v4775 = vld [vmem:[%s208 + $0x8f] sm:$0xff]
      %v4776 = vld [vmem:[%s208 + $0xa7] sm:$0xff]
      %v4777 = vld [vmem:[%s208 + $0xaf] sm:$0xff]
      %v4778 = vld [vmem:[%s208 + $0xc7] sm:$0xff]
      %v4779 = vld [vmem:[%s208 + $0xcf] sm:$0xff]
      %v4780 = vld [vmem:[%s208 + $0xe7] sm:$0xff]
      %v4781 = vld [vmem:[%s208 + $0xef] sm:$0xff]
      %v4782 = vld [vmem:[%s208 + $0x107] sm:$0xff]
      %v4783 = vld [vmem:[%s208 + $0x10f] sm:$0xff]
      %v4784 = vld [vmem:[%s208 + $0x127] sm:$0xff]
      %v4785 = vld [vmem:[%s208 + $0x12f] sm:$0xff]
      %v4786 = vld [vmem:[%s208 + $0x147] sm:$0xff]
      %v4787 = vld [vmem:[%s208 + $0x14f] sm:$0xff]
      %v4788 = vld [vmem:[%s208 + $0x167] sm:$0xff]
      %v4789 = vld [vmem:[%s208 + $0x16f] sm:$0xff]
      %v4790 = vld [vmem:[%s208 + $0x187] sm:$0xff]
      %v4791 = vld [vmem:[%s208 + $0x18f] sm:$0xff]
      %v4792 = vld [vmem:[%s208 + $0x1a7] sm:$0xff]
      %v4793 = vld [vmem:[%s208 + $0x1af] sm:$0xff]
      %v4794 = vld [vmem:[%s208 + $0x1c7] sm:$0xff]
      %v4795 = vld [vmem:[%s208 + $0x1cf] sm:$0xff]
      %v4796 = vld [vmem:[%s208 + $0x1e7] sm:$0xff]
      %v4797 = vld [vmem:[%s208 + $0x1ef] sm:$0xff]
      %v4798 = vpack.c.bf16 %v4767, %v4766
      %v4799 = vpack.c.bf16 %v4769, %v4768
      %v4800 = vpack.c.bf16 %v4771, %v4770
      %v4801 = vpack.c.bf16 %v4773, %v4772
      %v4802 = vpack.c.bf16 %v4775, %v4774
      %v4803 = vpack.c.bf16 %v4777, %v4776
      %v4804 = vpack.c.bf16 %v4779, %v4778
      %v4805 = vpack.c.bf16 %v4781, %v4780
      %v4806 = vpack.c.bf16 %v4783, %v4782
      %v4807 = vpack.c.bf16 %v4785, %v4784
      %v4808 = vpack.c.bf16 %v4787, %v4786
      %v4809 = vpack.c.bf16 %v4789, %v4788
      %v4810 = vpack.c.bf16 %v4791, %v4790
      %v4811 = vpack.c.bf16 %v4793, %v4792
      %v4812 = vpack.c.bf16 %v4795, %v4794
      %v4813 = vpack.c.bf16 %v4797, %v4796
      %4814 = vst [vmem:[#allocation3 + $0x18] sm:$0xff] %v4798
      %4815 = vst [vmem:[#allocation3 + $0x60] sm:$0xff] %v4799
      %4816 = vst [vmem:[#allocation3 + $0xa8] sm:$0xff] %v4800
      %4817 = vst [vmem:[#allocation3 + $0xf0] sm:$0xff] %v4801
      %4818 = vst [vmem:[#allocation3 + $0x138] sm:$0xff] %v4802
      %4819 = vst [vmem:[#allocation3 + $0x180] sm:$0xff] %v4803
      %4820 = vst [vmem:[#allocation3 + $0x1c8] sm:$0xff] %v4804
      %4821 = vst [vmem:[#allocation3 + $0x210] sm:$0xff] %v4805
      %4822 = vst [vmem:[#allocation3 + $0x258] sm:$0xff] %v4806
      %4823 = vst [vmem:[#allocation3 + $0x2a0] sm:$0xff] %v4807
      %4824 = vst [vmem:[#allocation3 + $0x2e8] sm:$0xff] %v4808
      %4825 = vst [vmem:[#allocation3 + $0x330] sm:$0xff] %v4809
      %4826 = vst [vmem:[#allocation3 + $0x378] sm:$0xff] %v4810
      %4827 = vst [vmem:[#allocation3 + $0x3c0] sm:$0xff] %v4811
      %4828 = vst [vmem:[#allocation3 + $0x408] sm:$0xff] %v4812
      %4829 = vst [vmem:[#allocation3 + $0x450] sm:$0xff] %v4813
      %v4830 = vld [vmem:[%s208 + $0x8] sm:$0xff]
      %v4831 = vld [vmem:[%s208 + $0x10] sm:$0xff]
      %v4832 = vld [vmem:[%s208 + $0x28] sm:$0xff]
      %v4833 = vld [vmem:[%s208 + $0x30] sm:$0xff]
      %v4834 = vld [vmem:[%s208 + $0x48] sm:$0xff]
      %v4835 = vld [vmem:[%s208 + $0x50] sm:$0xff]
      %v4836 = vld [vmem:[%s208 + $0x68] sm:$0xff]
      %v4837 = vld [vmem:[%s208 + $0x70] sm:$0xff]
      %v4838 = vld [vmem:[%s208 + $0x88] sm:$0xff]
      %v4839 = vld [vmem:[%s208 + $0x90] sm:$0xff]
      %v4840 = vld [vmem:[%s208 + $0xa8] sm:$0xff]
      %v4841 = vld [vmem:[%s208 + $0xb0] sm:$0xff]
      %v4842 = vld [vmem:[%s208 + $0xc8] sm:$0xff]
      %v4843 = vld [vmem:[%s208 + $0xd0] sm:$0xff]
      %v4844 = vld [vmem:[%s208 + $0xe8] sm:$0xff]
      %v4845 = vld [vmem:[%s208 + $0xf0] sm:$0xff]
      %v4846 = vld [vmem:[%s208 + $0x108] sm:$0xff]
      %v4847 = vld [vmem:[%s208 + $0x110] sm:$0xff]
      %v4848 = vld [vmem:[%s208 + $0x128] sm:$0xff]
      %v4849 = vld [vmem:[%s208 + $0x130] sm:$0xff]
      %v4850 = vld [vmem:[%s208 + $0x148] sm:$0xff]
      %v4851 = vld [vmem:[%s208 + $0x150] sm:$0xff]
      %v4852 = vld [vmem:[%s208 + $0x168] sm:$0xff]
      %v4853 = vld [vmem:[%s208 + $0x170] sm:$0xff]
      %v4854 = vld [vmem:[%s208 + $0x188] sm:$0xff]
      %v4855 = vld [vmem:[%s208 + $0x190] sm:$0xff]
      %v4856 = vld [vmem:[%s208 + $0x1a8] sm:$0xff]
      %v4857 = vld [vmem:[%s208 + $0x1b0] sm:$0xff]
      %v4858 = vld [vmem:[%s208 + $0x1c8] sm:$0xff]
      %v4859 = vld [vmem:[%s208 + $0x1d0] sm:$0xff]
      %v4860 = vld [vmem:[%s208 + $0x1e8] sm:$0xff]
      %v4861 = vld [vmem:[%s208 + $0x1f0] sm:$0xff]
      %v4862 = vpack.c.bf16 %v4831, %v4830
      %v4863 = vpack.c.bf16 %v4833, %v4832
      %v4864 = vpack.c.bf16 %v4835, %v4834
      %v4865 = vpack.c.bf16 %v4837, %v4836
      %v4866 = vpack.c.bf16 %v4839, %v4838
      %v4867 = vpack.c.bf16 %v4841, %v4840
      %v4868 = vpack.c.bf16 %v4843, %v4842
      %v4869 = vpack.c.bf16 %v4845, %v4844
      %v4870 = vpack.c.bf16 %v4847, %v4846
      %v4871 = vpack.c.bf16 %v4849, %v4848
      %v4872 = vpack.c.bf16 %v4851, %v4850
      %v4873 = vpack.c.bf16 %v4853, %v4852
      %v4874 = vpack.c.bf16 %v4855, %v4854
      %v4875 = vpack.c.bf16 %v4857, %v4856
      %v4876 = vpack.c.bf16 %v4859, %v4858
      %v4877 = vpack.c.bf16 %v4861, %v4860
      %4878 = vst [vmem:[#allocation3 + $0x20] sm:$0xff] %v4862
      %4879 = vst [vmem:[#allocation3 + $0x68] sm:$0xff] %v4863
      %4880 = vst [vmem:[#allocation3 + $0xb0] sm:$0xff] %v4864
      %4881 = vst [vmem:[#allocation3 + $0xf8] sm:$0xff] %v4865
      %4882 = vst [vmem:[#allocation3 + $0x140] sm:$0xff] %v4866
      %4883 = vst [vmem:[#allocation3 + $0x188] sm:$0xff] %v4867
      %4884 = vst [vmem:[#allocation3 + $0x1d0] sm:$0xff] %v4868
      %4885 = vst [vmem:[#allocation3 + $0x218] sm:$0xff] %v4869
      %4886 = vst [vmem:[#allocation3 + $0x260] sm:$0xff] %v4870
      %4887 = vst [vmem:[#allocation3 + $0x2a8] sm:$0xff] %v4871
      %4888 = vst [vmem:[#allocation3 + $0x2f0] sm:$0xff] %v4872
      %4889 = vst [vmem:[#allocation3 + $0x338] sm:$0xff] %v4873
      %4890 = vst [vmem:[#allocation3 + $0x380] sm:$0xff] %v4874
      %4891 = vst [vmem:[#allocation3 + $0x3c8] sm:$0xff] %v4875
      %4892 = vst [vmem:[#allocation3 + $0x410] sm:$0xff] %v4876
      %4893 = vst [vmem:[#allocation3 + $0x458] sm:$0xff] %v4877
      %v4894 = vld [vmem:[%s208 + $0x9] sm:$0xff]
      %v4895 = vld [vmem:[%s208 + $0x11] sm:$0xff]
      %v4896 = vld [vmem:[%s208 + $0x29] sm:$0xff]
      %v4897 = vld [vmem:[%s208 + $0x31] sm:$0xff]
      %v4898 = vld [vmem:[%s208 + $0x49] sm:$0xff]
      %v4899 = vld [vmem:[%s208 + $0x51] sm:$0xff]
      %v4900 = vld [vmem:[%s208 + $0x69] sm:$0xff]
      %v4901 = vld [vmem:[%s208 + $0x71] sm:$0xff]
      %v4902 = vld [vmem:[%s208 + $0x89] sm:$0xff]
      %v4903 = vld [vmem:[%s208 + $0x91] sm:$0xff]
      %v4904 = vld [vmem:[%s208 + $0xa9] sm:$0xff]
      %v4905 = vld [vmem:[%s208 + $0xb1] sm:$0xff]
      %v4906 = vld [vmem:[%s208 + $0xc9] sm:$0xff]
      %v4907 = vld [vmem:[%s208 + $0xd1] sm:$0xff]
      %v4908 = vld [vmem:[%s208 + $0xe9] sm:$0xff]
      %v4909 = vld [vmem:[%s208 + $0xf1] sm:$0xff]
      %v4910 = vld [vmem:[%s208 + $0x109] sm:$0xff]
      %v4911 = vld [vmem:[%s208 + $0x111] sm:$0xff]
      %v4912 = vld [vmem:[%s208 + $0x129] sm:$0xff]
      %v4913 = vld [vmem:[%s208 + $0x131] sm:$0xff]
      %v4914 = vld [vmem:[%s208 + $0x149] sm:$0xff]
      %v4915 = vld [vmem:[%s208 + $0x151] sm:$0xff]
      %v4916 = vld [vmem:[%s208 + $0x169] sm:$0xff]
      %v4917 = vld [vmem:[%s208 + $0x171] sm:$0xff]
      %v4918 = vld [vmem:[%s208 + $0x189] sm:$0xff]
      %v4919 = vld [vmem:[%s208 + $0x191] sm:$0xff]
      %v4920 = vld [vmem:[%s208 + $0x1a9] sm:$0xff]
      %v4921 = vld [vmem:[%s208 + $0x1b1] sm:$0xff]
      %v4922 = vld [vmem:[%s208 + $0x1c9] sm:$0xff]
      %v4923 = vld [vmem:[%s208 + $0x1d1] sm:$0xff]
      %v4924 = vld [vmem:[%s208 + $0x1e9] sm:$0xff]
      %v4925 = vld [vmem:[%s208 + $0x1f1] sm:$0xff]
      %v4926 = vpack.c.bf16 %v4895, %v4894
      %v4927 = vpack.c.bf16 %v4897, %v4896
      %v4928 = vpack.c.bf16 %v4899, %v4898
      %v4929 = vpack.c.bf16 %v4901, %v4900
      %v4930 = vpack.c.bf16 %v4903, %v4902
      %v4931 = vpack.c.bf16 %v4905, %v4904
      %v4932 = vpack.c.bf16 %v4907, %v4906
      %v4933 = vpack.c.bf16 %v4909, %v4908
      %v4934 = vpack.c.bf16 %v4911, %v4910
      %v4935 = vpack.c.bf16 %v4913, %v4912
      %v4936 = vpack.c.bf16 %v4915, %v4914
      %v4937 = vpack.c.bf16 %v4917, %v4916
      %v4938 = vpack.c.bf16 %v4919, %v4918
      %v4939 = vpack.c.bf16 %v4921, %v4920
      %v4940 = vpack.c.bf16 %v4923, %v4922
      %v4941 = vpack.c.bf16 %v4925, %v4924
      %4942 = vst [vmem:[#allocation3 + $0x28] sm:$0xff] %v4926
      %4943 = vst [vmem:[#allocation3 + $0x70] sm:$0xff] %v4927
      %4944 = vst [vmem:[#allocation3 + $0xb8] sm:$0xff] %v4928
      %4945 = vst [vmem:[#allocation3 + $0x100] sm:$0xff] %v4929
      %4946 = vst [vmem:[#allocation3 + $0x148] sm:$0xff] %v4930
      %4947 = vst [vmem:[#allocation3 + $0x190] sm:$0xff] %v4931
      %4948 = vst [vmem:[#allocation3 + $0x1d8] sm:$0xff] %v4932
      %4949 = vst [vmem:[#allocation3 + $0x220] sm:$0xff] %v4933
      %4950 = vst [vmem:[#allocation3 + $0x268] sm:$0xff] %v4934
      %4951 = vst [vmem:[#allocation3 + $0x2b0] sm:$0xff] %v4935
      %4952 = vst [vmem:[#allocation3 + $0x2f8] sm:$0xff] %v4936
      %4953 = vst [vmem:[#allocation3 + $0x340] sm:$0xff] %v4937
      %4954 = vst [vmem:[#allocation3 + $0x388] sm:$0xff] %v4938
      %4955 = vst [vmem:[#allocation3 + $0x3d0] sm:$0xff] %v4939
      %4956 = vst [vmem:[#allocation3 + $0x418] sm:$0xff] %v4940
      %4957 = vst [vmem:[#allocation3 + $0x460] sm:$0xff] %v4941
      %v4958 = vld [vmem:[%s2792 + $0x7] sm:$0xff]
      %v4959 = vld [vmem:[%s2792 + $0xf] sm:$0xff]
      %v4960 = vld [vmem:[%s2792 + $0x27] sm:$0xff]
      %v4961 = vld [vmem:[%s2792 + $0x2f] sm:$0xff]
      %v4962 = vld [vmem:[%s2792 + $0x47] sm:$0xff]
      %v4963 = vld [vmem:[%s2792 + $0x4f] sm:$0xff]
      %v4964 = vld [vmem:[%s2792 + $0x67] sm:$0xff]
      %v4965 = vld [vmem:[%s2792 + $0x6f] sm:$0xff]
      %v4966 = vld [vmem:[%s2792 + $0x87] sm:$0xff]
      %v4967 = vld [vmem:[%s2792 + $0x8f] sm:$0xff]
      %v4968 = vld [vmem:[%s2792 + $0xa7] sm:$0xff]
      %v4969 = vld [vmem:[%s2792 + $0xaf] sm:$0xff]
      %v4970 = vld [vmem:[%s2792 + $0xc7] sm:$0xff]
      %v4971 = vld [vmem:[%s2792 + $0xcf] sm:$0xff]
      %v4972 = vld [vmem:[%s2792 + $0xe7] sm:$0xff]
      %v4973 = vld [vmem:[%s2792 + $0xef] sm:$0xff]
      %v4974 = vld [vmem:[%s2792 + $0x107] sm:$0xff]
      %v4975 = vld [vmem:[%s2792 + $0x10f] sm:$0xff]
      %v4976 = vld [vmem:[%s2792 + $0x127] sm:$0xff]
      %v4977 = vld [vmem:[%s2792 + $0x12f] sm:$0xff]
      %v4978 = vld [vmem:[%s2792 + $0x147] sm:$0xff]
      %v4979 = vld [vmem:[%s2792 + $0x14f] sm:$0xff]
      %v4980 = vld [vmem:[%s2792 + $0x167] sm:$0xff]
      %v4981 = vld [vmem:[%s2792 + $0x16f] sm:$0xff]
      %v4982 = vld [vmem:[%s2792 + $0x187] sm:$0xff]
      %v4983 = vld [vmem:[%s2792 + $0x18f] sm:$0xff]
      %v4984 = vld [vmem:[%s2792 + $0x1a7] sm:$0xff]
      %v4985 = vld [vmem:[%s2792 + $0x1af] sm:$0xff]
      %v4986 = vld [vmem:[%s2792 + $0x1c7] sm:$0xff]
      %v4987 = vld [vmem:[%s2792 + $0x1cf] sm:$0xff]
      %v4988 = vld [vmem:[%s2792 + $0x1e7] sm:$0xff]
      %v4989 = vld [vmem:[%s2792 + $0x1ef] sm:$0xff]
      %v4990 = vpack.c.bf16 %v4959, %v4958
      %v4991 = vpack.c.bf16 %v4961, %v4960
      %v4992 = vpack.c.bf16 %v4963, %v4962
      %v4993 = vpack.c.bf16 %v4965, %v4964
      %v4994 = vpack.c.bf16 %v4967, %v4966
      %v4995 = vpack.c.bf16 %v4969, %v4968
      %v4996 = vpack.c.bf16 %v4971, %v4970
      %v4997 = vpack.c.bf16 %v4973, %v4972
      %v4998 = vpack.c.bf16 %v4975, %v4974
      %v4999 = vpack.c.bf16 %v4977, %v4976
      %v5000 = vpack.c.bf16 %v4979, %v4978
      %v5001 = vpack.c.bf16 %v4981, %v4980
      %v5002 = vpack.c.bf16 %v4983, %v4982
      %v5003 = vpack.c.bf16 %v4985, %v4984
      %v5004 = vpack.c.bf16 %v4987, %v4986
      %v5005 = vpack.c.bf16 %v4989, %v4988
      %5006 = vst [vmem:[#allocation3 + $0x30] sm:$0xff] %v4990
      %5007 = vst [vmem:[#allocation3 + $0x78] sm:$0xff] %v4991
      %5008 = vst [vmem:[#allocation3 + $0xc0] sm:$0xff] %v4992
      %5009 = vst [vmem:[#allocation3 + $0x108] sm:$0xff] %v4993
      %5010 = vst [vmem:[#allocation3 + $0x150] sm:$0xff] %v4994
      %5011 = vst [vmem:[#allocation3 + $0x198] sm:$0xff] %v4995
      %5012 = vst [vmem:[#allocation3 + $0x1e0] sm:$0xff] %v4996
      %5013 = vst [vmem:[#allocation3 + $0x228] sm:$0xff] %v4997
      %5014 = vst [vmem:[#allocation3 + $0x270] sm:$0xff] %v4998
      %5015 = vst [vmem:[#allocation3 + $0x2b8] sm:$0xff] %v4999
      %5016 = vst [vmem:[#allocation3 + $0x300] sm:$0xff] %v5000
      %5017 = vst [vmem:[#allocation3 + $0x348] sm:$0xff] %v5001
      %5018 = vst [vmem:[#allocation3 + $0x390] sm:$0xff] %v5002
      %5019 = vst [vmem:[#allocation3 + $0x3d8] sm:$0xff] %v5003
      %5020 = vst [vmem:[#allocation3 + $0x420] sm:$0xff] %v5004
      %5021 = vst [vmem:[#allocation3 + $0x468] sm:$0xff] %v5005
      %v5022 = vld [vmem:[%s2792 + $0x8] sm:$0xff]
      %v5023 = vld [vmem:[%s2792 + $0x10] sm:$0xff]
      %v5024 = vld [vmem:[%s2792 + $0x28] sm:$0xff]
      %v5025 = vld [vmem:[%s2792 + $0x30] sm:$0xff]
      %v5026 = vld [vmem:[%s2792 + $0x48] sm:$0xff]
      %v5027 = vld [vmem:[%s2792 + $0x50] sm:$0xff]
      %v5028 = vld [vmem:[%s2792 + $0x68] sm:$0xff]
      %v5029 = vld [vmem:[%s2792 + $0x70] sm:$0xff]
      %v5030 = vld [vmem:[%s2792 + $0x88] sm:$0xff]
      %v5031 = vld [vmem:[%s2792 + $0x90] sm:$0xff]
      %v5032 = vld [vmem:[%s2792 + $0xa8] sm:$0xff]
      %v5033 = vld [vmem:[%s2792 + $0xb0] sm:$0xff]
      %v5034 = vld [vmem:[%s2792 + $0xc8] sm:$0xff]
      %v5035 = vld [vmem:[%s2792 + $0xd0] sm:$0xff]
      %v5036 = vld [vmem:[%s2792 + $0xe8] sm:$0xff]
      %v5037 = vld [vmem:[%s2792 + $0xf0] sm:$0xff]
      %v5038 = vld [vmem:[%s2792 + $0x108] sm:$0xff]
      %v5039 = vld [vmem:[%s2792 + $0x110] sm:$0xff]
      %v5040 = vld [vmem:[%s2792 + $0x128] sm:$0xff]
      %v5041 = vld [vmem:[%s2792 + $0x130] sm:$0xff]
      %v5042 = vld [vmem:[%s2792 + $0x148] sm:$0xff]
      %v5043 = vld [vmem:[%s2792 + $0x150] sm:$0xff]
      %v5044 = vld [vmem:[%s2792 + $0x168] sm:$0xff]
      %v5045 = vld [vmem:[%s2792 + $0x170] sm:$0xff]
      %v5046 = vld [vmem:[%s2792 + $0x188] sm:$0xff]
      %v5047 = vld [vmem:[%s2792 + $0x190] sm:$0xff]
      %v5048 = vld [vmem:[%s2792 + $0x1a8] sm:$0xff]
      %v5049 = vld [vmem:[%s2792 + $0x1b0] sm:$0xff]
      %v5050 = vld [vmem:[%s2792 + $0x1c8] sm:$0xff]
      %v5051 = vld [vmem:[%s2792 + $0x1d0] sm:$0xff]
      %v5052 = vld [vmem:[%s2792 + $0x1e8] sm:$0xff]
      %v5053 = vld [vmem:[%s2792 + $0x1f0] sm:$0xff]
      %v5054 = vpack.c.bf16 %v5023, %v5022
      %v5055 = vpack.c.bf16 %v5025, %v5024
      %v5056 = vpack.c.bf16 %v5027, %v5026
      %v5057 = vpack.c.bf16 %v5029, %v5028
      %v5058 = vpack.c.bf16 %v5031, %v5030
      %v5059 = vpack.c.bf16 %v5033, %v5032
      %v5060 = vpack.c.bf16 %v5035, %v5034
      %v5061 = vpack.c.bf16 %v5037, %v5036
      %v5062 = vpack.c.bf16 %v5039, %v5038
      %v5063 = vpack.c.bf16 %v5041, %v5040
      %v5064 = vpack.c.bf16 %v5043, %v5042
      %v5065 = vpack.c.bf16 %v5045, %v5044
      %v5066 = vpack.c.bf16 %v5047, %v5046
      %v5067 = vpack.c.bf16 %v5049, %v5048
      %v5068 = vpack.c.bf16 %v5051, %v5050
      %v5069 = vpack.c.bf16 %v5053, %v5052
      %5070 = vst [vmem:[#allocation3 + $0x38] sm:$0xff] %v5054
      %5071 = vst [vmem:[#allocation3 + $0x80] sm:$0xff] %v5055
      %5072 = vst [vmem:[#allocation3 + $0xc8] sm:$0xff] %v5056
      %5073 = vst [vmem:[#allocation3 + $0x110] sm:$0xff] %v5057
      %5074 = vst [vmem:[#allocation3 + $0x158] sm:$0xff] %v5058
      %5075 = vst [vmem:[#allocation3 + $0x1a0] sm:$0xff] %v5059
      %5076 = vst [vmem:[#allocation3 + $0x1e8] sm:$0xff] %v5060
      %5077 = vst [vmem:[#allocation3 + $0x230] sm:$0xff] %v5061
      %5078 = vst [vmem:[#allocation3 + $0x278] sm:$0xff] %v5062
      %5079 = vst [vmem:[#allocation3 + $0x2c0] sm:$0xff] %v5063
      %5080 = vst [vmem:[#allocation3 + $0x308] sm:$0xff] %v5064
      %5081 = vst [vmem:[#allocation3 + $0x350] sm:$0xff] %v5065
      %5082 = vst [vmem:[#allocation3 + $0x398] sm:$0xff] %v5066
      %5083 = vst [vmem:[#allocation3 + $0x3e0] sm:$0xff] %v5067
      %5084 = vst [vmem:[#allocation3 + $0x428] sm:$0xff] %v5068
      %5085 = vst [vmem:[#allocation3 + $0x470] sm:$0xff] %v5069
      %v5086 = vld [vmem:[%s2792 + $0x9] sm:$0xff]
      %v5087 = vld [vmem:[%s2792 + $0x11] sm:$0xff]
      %v5088 = vld [vmem:[%s2792 + $0x29] sm:$0xff]
      %v5089 = vld [vmem:[%s2792 + $0x31] sm:$0xff]
      %v5090 = vld [vmem:[%s2792 + $0x49] sm:$0xff]
      %v5091 = vld [vmem:[%s2792 + $0x51] sm:$0xff]
      %v5092 = vld [vmem:[%s2792 + $0x69] sm:$0xff]
      %v5093 = vld [vmem:[%s2792 + $0x71] sm:$0xff]
      %v5094 = vld [vmem:[%s2792 + $0x89] sm:$0xff]
      %v5095 = vld [vmem:[%s2792 + $0x91] sm:$0xff]
      %v5096 = vld [vmem:[%s2792 + $0xa9] sm:$0xff]
      %v5097 = vld [vmem:[%s2792 + $0xb1] sm:$0xff]
      %v5098 = vld [vmem:[%s2792 + $0xc9] sm:$0xff]
      %v5099 = vld [vmem:[%s2792 + $0xd1] sm:$0xff]
      %v5100 = vld [vmem:[%s2792 + $0xe9] sm:$0xff]
      %v5101 = vld [vmem:[%s2792 + $0xf1] sm:$0xff]
      %v5102 = vld [vmem:[%s2792 + $0x109] sm:$0xff]
      %v5103 = vld [vmem:[%s2792 + $0x111] sm:$0xff]
      %v5104 = vld [vmem:[%s2792 + $0x129] sm:$0xff]
      %v5105 = vld [vmem:[%s2792 + $0x131] sm:$0xff]
      %v5106 = vld [vmem:[%s2792 + $0x149] sm:$0xff]
      %v5107 = vld [vmem:[%s2792 + $0x151] sm:$0xff]
      %v5108 = vld [vmem:[%s2792 + $0x169] sm:$0xff]
      %v5109 = vld [vmem:[%s2792 + $0x171] sm:$0xff]
      %v5110 = vld [vmem:[%s2792 + $0x189] sm:$0xff]
      %v5111 = vld [vmem:[%s2792 + $0x191] sm:$0xff]
      %v5112 = vld [vmem:[%s2792 + $0x1a9] sm:$0xff]
      %v5113 = vld [vmem:[%s2792 + $0x1b1] sm:$0xff]
      %v5114 = vld [vmem:[%s2792 + $0x1c9] sm:$0xff]
      %v5115 = vld [vmem:[%s2792 + $0x1d1] sm:$0xff]
      %v5116 = vld [vmem:[%s2792 + $0x1e9] sm:$0xff]
      %v5117 = vld [vmem:[%s2792 + $0x1f1] sm:$0xff]
      %v5118 = vpack.c.bf16 %v5087, %v5086
      %v5119 = vpack.c.bf16 %v5089, %v5088
      %v5120 = vpack.c.bf16 %v5091, %v5090
      %v5121 = vpack.c.bf16 %v5093, %v5092
      %v5122 = vpack.c.bf16 %v5095, %v5094
      %v5123 = vpack.c.bf16 %v5097, %v5096
      %v5124 = vpack.c.bf16 %v5099, %v5098
      %v5125 = vpack.c.bf16 %v5101, %v5100
      %v5126 = vpack.c.bf16 %v5103, %v5102
      %v5127 = vpack.c.bf16 %v5105, %v5104
      %v5128 = vpack.c.bf16 %v5107, %v5106
      %v5129 = vpack.c.bf16 %v5109, %v5108
      %v5130 = vpack.c.bf16 %v5111, %v5110
      %v5131 = vpack.c.bf16 %v5113, %v5112
      %v5132 = vpack.c.bf16 %v5115, %v5114
      %v5133 = vpack.c.bf16 %v5117, %v5116
      %5134 = vst [vmem:[#allocation3 + $0x40] sm:$0xff] %v5118
      %5135 = vst [vmem:[#allocation3 + $0x88] sm:$0xff] %v5119
      %5136 = vst [vmem:[#allocation3 + $0xd0] sm:$0xff] %v5120
      %5137 = vst [vmem:[#allocation3 + $0x118] sm:$0xff] %v5121
      %5138 = vst [vmem:[#allocation3 + $0x160] sm:$0xff] %v5122
      %5139 = vst [vmem:[#allocation3 + $0x1a8] sm:$0xff] %v5123
      %5140 = vst [vmem:[#allocation3 + $0x1f0] sm:$0xff] %v5124
      %5141 = vst [vmem:[#allocation3 + $0x238] sm:$0xff] %v5125
      %5142 = vst [vmem:[#allocation3 + $0x280] sm:$0xff] %v5126
      %5143 = vst [vmem:[#allocation3 + $0x2c8] sm:$0xff] %v5127
      %5144 = vst [vmem:[#allocation3 + $0x310] sm:$0xff] %v5128
      %5145 = vst [vmem:[#allocation3 + $0x358] sm:$0xff] %v5129
      %5146 = vst [vmem:[#allocation3 + $0x3a0] sm:$0xff] %v5130
      %5147 = vst [vmem:[#allocation3 + $0x3e8] sm:$0xff] %v5131
      %5148 = vst [vmem:[#allocation3 + $0x430] sm:$0xff] %v5132
      %5149 = vst [vmem:[#allocation3 + $0x478] sm:$0xff] %v5133
      %v5150 = vld [vmem:[%s3] sm:$0xf]
      %v5151 = vld [vmem:[%s3 + $0x4] sm:$0xf]
      %v5152 = vld [vmem:[%s3 + $0x8] sm:$0xf]
      %v5153 = vld [vmem:[%s3 + $0xc] sm:$0xf]
      %v5154 = vld [vmem:[%s3 + $0x10] sm:$0xf]
      %v5155 = vld [vmem:[%s3 + $0x14] sm:$0xf]
      %v5156 = vld [vmem:[%s3 + $0x18] sm:$0xf]
      %v5157 = vld [vmem:[%s3 + $0x1c] sm:$0xf]
      %v5158 = vld [vmem:[%s3 + $0x20] sm:$0xf]
      %v5159 = vld [vmem:[%s3 + $0x24] sm:$0xf]
      %v5160 = vld [vmem:[%s3 + $0x28] sm:$0xf]
      %v5161 = vld [vmem:[%s3 + $0x2c] sm:$0xf]
      %v5162 = vld [vmem:[%s3 + $0x30] sm:$0xf]
      %v5163 = vld [vmem:[%s3 + $0x34] sm:$0xf]
      %v5164 = vld [vmem:[%s3 + $0x38] sm:$0xf]
      %v5165 = vld [vmem:[%s3 + $0x3c] sm:$0xf]
      %v5166 = vld [vmem:[%s3 + $0x40] sm:$0xf]
      %v5167 = vld [vmem:[%s3 + $0x44] sm:$0xf]
      %v5168 = vld [vmem:[%s3 + $0x48] sm:$0xf]
      %v5169 = vld [vmem:[%s3 + $0x4c] sm:$0xf]
      %v5170 = vld [vmem:[%s3 + $0x50] sm:$0xf]
      %v5171 = vld [vmem:[%s3 + $0x54] sm:$0xf]
      %v5172 = vld [vmem:[%s3 + $0x58] sm:$0xf]
      %v5173 = vld [vmem:[%s3 + $0x5c] sm:$0xf]
      %v5174 = vld [vmem:[%s3 + $0x60] sm:$0xf]
      %v5175 = vld [vmem:[%s3 + $0x64] sm:$0xf]
      %v5176 = vld [vmem:[%s3 + $0x68] sm:$0xf]
      %v5177 = vld [vmem:[%s3 + $0x6c] sm:$0xf]
      %v5178 = vld [vmem:[%s3 + $0x70] sm:$0xf]
      %v5179 = vld [vmem:[%s3 + $0x74] sm:$0xf]
      %v5180 = vld [vmem:[%s3 + $0x78] sm:$0xf]
      %v5181 = vld [vmem:[%s3 + $0x7c] sm:$0xf]
      %v5182 = vld [vmem:[%s3 + $0x80] sm:$0xf]
      %v5183 = vld [vmem:[%s3 + $0x84] sm:$0xf]
      %v5184 = vld [vmem:[%s3 + $0x88] sm:$0xf]
      %v5185 = vld [vmem:[%s3 + $0x8c] sm:$0xf]
      %v5186 = vld [vmem:[%s3 + $0x90] sm:$0xf]
      %v5187 = vld [vmem:[%s3 + $0x94] sm:$0xf]
      %v5188 = vld [vmem:[%s3 + $0x98] sm:$0xf]
      %v5189 = vld [vmem:[%s3 + $0x9c] sm:$0xf]
      %v5190 = vld [vmem:[%s3 + $0xa0] sm:$0xf]
      %v5191 = vld [vmem:[%s3 + $0xa4] sm:$0xf]
      %v5192 = vld [vmem:[%s3 + $0xa8] sm:$0xf]
      %v5193 = vld [vmem:[%s3 + $0xac] sm:$0xf]
      %v5194 = vld [vmem:[%s3 + $0xb0] sm:$0xf]
      %v5195 = vld [vmem:[%s3 + $0xb4] sm:$0xf]
      %v5196 = vld [vmem:[%s3 + $0xb8] sm:$0xf]
      %v5197 = vld [vmem:[%s3 + $0xbc] sm:$0xf]
      %v5198 = vld [vmem:[%s3 + $0xc0] sm:$0xf]
      %v5199 = vld [vmem:[%s3 + $0xc4] sm:$0xf]
      %v5200 = vld [vmem:[%s3 + $0xc8] sm:$0xf]
      %v5201 = vld [vmem:[%s3 + $0xcc] sm:$0xf]
      %v5202 = vld [vmem:[%s3 + $0xd0] sm:$0xf]
      %v5203 = vld [vmem:[%s3 + $0xd4] sm:$0xf]
      %v5204 = vld [vmem:[%s3 + $0xd8] sm:$0xf]
      %v5205 = vld [vmem:[%s3 + $0xdc] sm:$0xf]
      %v5206 = vld [vmem:[%s3 + $0xe0] sm:$0xf]
      %v5207 = vld [vmem:[%s3 + $0xe4] sm:$0xf]
      %v5208 = vld [vmem:[%s3 + $0xe8] sm:$0xf]
      %v5209 = vld [vmem:[%s3 + $0xec] sm:$0xf]
      %v5210 = vld [vmem:[%s3 + $0xf0] sm:$0xf]
      %v5211 = vld [vmem:[%s3 + $0xf4] sm:$0xf]
      %v5212 = vld [vmem:[%s3 + $0xf8] sm:$0xf]
      %v5213 = vld [vmem:[%s3 + $0xfc] sm:$0xf]
      %v5214 = vld [vmem:[%s3 + $0x100] sm:$0xf]
      %v5215 = vld [vmem:[%s3 + $0x104] sm:$0xf]
      %v5216 = vld [vmem:[%s3 + $0x108] sm:$0xf]
      %v5217 = vld [vmem:[%s3 + $0x10c] sm:$0xf]
      %v5218 = vld [vmem:[%s3 + $0x110] sm:$0xf]
      %v5219 = vld [vmem:[%s3 + $0x114] sm:$0xf]
      %v5220 = vld [vmem:[%s3 + $0x118] sm:$0xf]
      %v5221 = vld [vmem:[%s3 + $0x11c] sm:$0xf]
      %v5222 = vld [vmem:[%s3 + $0x120] sm:$0xf]
      %v5223 = vld [vmem:[%s3 + $0x124] sm:$0xf]
      %v5224 = vld [vmem:[%s3 + $0x128] sm:$0xf]
      %v5225 = vld [vmem:[%s3 + $0x12c] sm:$0xf]
      %v5226 = vld [vmem:[%s3 + $0x130] sm:$0xf]
      %v5227 = vld [vmem:[%s3 + $0x134] sm:$0xf]
      %v5228 = vld [vmem:[%s3 + $0x138] sm:$0xf]
      %v5229 = vld [vmem:[%s3 + $0x13c] sm:$0xf]
      %v5230 = vld [vmem:[%s3 + $0x140] sm:$0xf]
      %v5231 = vld [vmem:[%s3 + $0x144] sm:$0xf]
      %v5232 = vld [vmem:[%s3 + $0x148] sm:$0xf]
      %v5233 = vld [vmem:[%s3 + $0x14c] sm:$0xf]
      %v5234 = vld [vmem:[%s3 + $0x150] sm:$0xf]
      %v5235 = vld [vmem:[%s3 + $0x154] sm:$0xf]
      %v5236 = vld [vmem:[%s3 + $0x158] sm:$0xf]
      %v5237 = vld [vmem:[%s3 + $0x15c] sm:$0xf]
      %v5238 = vld [vmem:[%s3 + $0x160] sm:$0xf]
      %v5239 = vld [vmem:[%s3 + $0x164] sm:$0xf]
      %v5240 = vld [vmem:[%s3 + $0x168] sm:$0xf]
      %v5241 = vld [vmem:[%s3 + $0x16c] sm:$0xf]
      %v5242 = vld [vmem:[%s3 + $0x170] sm:$0xf]
      %v5243 = vld [vmem:[%s3 + $0x174] sm:$0xf]
      %v5244 = vld [vmem:[%s3 + $0x178] sm:$0xf]
      %v5245 = vld [vmem:[%s3 + $0x17c] sm:$0xf]
      %v5246 = vld [vmem:[%s3 + $0x180] sm:$0xf]
      %v5247 = vld [vmem:[%s3 + $0x184] sm:$0xf]
      %v5248 = vld [vmem:[%s3 + $0x188] sm:$0xf]
      %v5249 = vld [vmem:[%s3 + $0x18c] sm:$0xf]
      %v5250 = vld [vmem:[%s3 + $0x190] sm:$0xf]
      %v5251 = vld [vmem:[%s3 + $0x194] sm:$0xf]
      %v5252 = vld [vmem:[%s3 + $0x198] sm:$0xf]
      %v5253 = vld [vmem:[%s3 + $0x19c] sm:$0xf]
      %v5254 = vld [vmem:[%s3 + $0x1a0] sm:$0xf]
      %v5255 = vld [vmem:[%s3 + $0x1a4] sm:$0xf]
      %v5256 = vld [vmem:[%s3 + $0x1a8] sm:$0xf]
      %v5257 = vld [vmem:[%s3 + $0x1ac] sm:$0xf]
      %v5258 = vld [vmem:[%s3 + $0x1b0] sm:$0xf]
      %v5259 = vld [vmem:[%s3 + $0x1b4] sm:$0xf]
      %v5260 = vld [vmem:[%s3 + $0x1b8] sm:$0xf]
      %v5261 = vld [vmem:[%s3 + $0x1bc] sm:$0xf]
      %v5262 = vld [vmem:[%s3 + $0x1c0] sm:$0xf]
      %v5263 = vld [vmem:[%s3 + $0x1c4] sm:$0xf]
      %v5264 = vld [vmem:[%s3 + $0x1c8] sm:$0xf]
      %v5265 = vld [vmem:[%s3 + $0x1cc] sm:$0xf]
      %v5266 = vld [vmem:[%s3 + $0x1d0] sm:$0xf]
      %v5267 = vld [vmem:[%s3 + $0x1d4] sm:$0xf]
      %v5268 = vld [vmem:[%s3 + $0x1d8] sm:$0xf]
      %v5269 = vld [vmem:[%s3 + $0x1dc] sm:$0xf]
      %v5270 = vld [vmem:[%s3 + $0x1e0] sm:$0xf]
      %v5271 = vld [vmem:[%s3 + $0x1e4] sm:$0xf]
      %v5272 = vld [vmem:[%s3 + $0x1e8] sm:$0xf]
      %v5273 = vld [vmem:[%s3 + $0x1ec] sm:$0xf]
      %v5274 = vld [vmem:[%s3 + $0x1f0] sm:$0xf]
      %v5275 = vld [vmem:[%s3 + $0x1f4] sm:$0xf]
      %v5276 = vld [vmem:[%s3 + $0x1f8] sm:$0xf]
      %v5277 = vld [vmem:[%s3 + $0x1fc] sm:$0xf]
      %v5278 = vld [vmem:[%s3 + $0x200] sm:$0xf]
      %v5279 = vld [vmem:[%s3 + $0x204] sm:$0xf]
      %v5280 = vld [vmem:[%s3 + $0x208] sm:$0xf]
      %v5281 = vld [vmem:[%s3 + $0x20c] sm:$0xf]
      %v5282 = vld [vmem:[%s3 + $0x210] sm:$0xf]
      %v5283 = vld [vmem:[%s3 + $0x214] sm:$0xf]
      %v5284 = vld [vmem:[%s3 + $0x218] sm:$0xf]
      %v5285 = vld [vmem:[%s3 + $0x21c] sm:$0xf]
      %v5286 = vld [vmem:[%s3 + $0x220] sm:$0xf]
      %v5287 = vld [vmem:[%s3 + $0x224] sm:$0xf]
      %v5288 = vld [vmem:[%s3 + $0x228] sm:$0xf]
      %v5289 = vld [vmem:[%s3 + $0x22c] sm:$0xf]
      %v5290 = vld [vmem:[%s3 + $0x230] sm:$0xf]
      %v5291 = vld [vmem:[%s3 + $0x234] sm:$0xf]
      %v5292 = vld [vmem:[%s3 + $0x238] sm:$0xf]
      %v5293 = vld [vmem:[%s3 + $0x23c] sm:$0xf]
      %v5294 = vld [vmem:[#allocation3] sm:$0xff]
      %v5295 = vld [vmem:[#allocation3 + $0x8] sm:$0xff]
      %v5296 = vld [vmem:[#allocation3 + $0x10] sm:$0xff]
      %v5297 = vld [vmem:[#allocation3 + $0x18] sm:$0xff]
      %v5298 = vld [vmem:[#allocation3 + $0x20] sm:$0xff]
      %v5299 = vld [vmem:[#allocation3 + $0x28] sm:$0xff]
      %v5300 = vld [vmem:[#allocation3 + $0x30] sm:$0xff]
      %v5301 = vld [vmem:[#allocation3 + $0x38] sm:$0xff]
      %v5302 = vld [vmem:[#allocation3 + $0x40] sm:$0xff]
      %v5303 = vld [vmem:[#allocation3 + $0x48] sm:$0xff]
      %v5304 = vld [vmem:[#allocation3 + $0x50] sm:$0xff]
      %v5305 = vld [vmem:[#allocation3 + $0x58] sm:$0xff]
      %v5306 = vld [vmem:[#allocation3 + $0x60] sm:$0xff]
      %v5307 = vld [vmem:[#allocation3 + $0x68] sm:$0xff]
      %v5308 = vld [vmem:[#allocation3 + $0x70] sm:$0xff]
      %v5309 = vld [vmem:[#allocation3 + $0x78] sm:$0xff]
      %v5310 = vld [vmem:[#allocation3 + $0x80] sm:$0xff]
      %v5311 = vld [vmem:[#allocation3 + $0x88] sm:$0xff]
      %v5312 = vld [vmem:[#allocation3 + $0x90] sm:$0xff]
      %v5313 = vld [vmem:[#allocation3 + $0x98] sm:$0xff]
      %v5314 = vld [vmem:[#allocation3 + $0xa0] sm:$0xff]
      %v5315 = vld [vmem:[#allocation3 + $0xa8] sm:$0xff]
      %v5316 = vld [vmem:[#allocation3 + $0xb0] sm:$0xff]
      %v5317 = vld [vmem:[#allocation3 + $0xb8] sm:$0xff]
      %v5318 = vld [vmem:[#allocation3 + $0xc0] sm:$0xff]
      %v5319 = vld [vmem:[#allocation3 + $0xc8] sm:$0xff]
      %v5320 = vld [vmem:[#allocation3 + $0xd0] sm:$0xff]
      %v5321 = vld [vmem:[#allocation3 + $0xd8] sm:$0xff]
      %v5322 = vld [vmem:[#allocation3 + $0xe0] sm:$0xff]
      %v5323 = vld [vmem:[#allocation3 + $0xe8] sm:$0xff]
      %v5324 = vld [vmem:[#allocation3 + $0xf0] sm:$0xff]
      %v5325 = vld [vmem:[#allocation3 + $0xf8] sm:$0xff]
      %v5326 = vld [vmem:[#allocation3 + $0x100] sm:$0xff]
      %v5327 = vld [vmem:[#allocation3 + $0x108] sm:$0xff]
      %v5328 = vld [vmem:[#allocation3 + $0x110] sm:$0xff]
      %v5329 = vld [vmem:[#allocation3 + $0x118] sm:$0xff]
      %v5330 = vld [vmem:[#allocation3 + $0x120] sm:$0xff]
      %v5331 = vld [vmem:[#allocation3 + $0x128] sm:$0xff]
      %v5332 = vld [vmem:[#allocation3 + $0x130] sm:$0xff]
      %v5333 = vld [vmem:[#allocation3 + $0x138] sm:$0xff]
      %v5334 = vld [vmem:[#allocation3 + $0x140] sm:$0xff]
      %v5335 = vld [vmem:[#allocation3 + $0x148] sm:$0xff]
      %v5336 = vld [vmem:[#allocation3 + $0x150] sm:$0xff]
      %v5337 = vld [vmem:[#allocation3 + $0x158] sm:$0xff]
      %v5338 = vld [vmem:[#allocation3 + $0x160] sm:$0xff]
      %v5339 = vld [vmem:[#allocation3 + $0x168] sm:$0xff]
      %v5340 = vld [vmem:[#allocation3 + $0x170] sm:$0xff]
      %v5341 = vld [vmem:[#allocation3 + $0x178] sm:$0xff]
      %v5342 = vld [vmem:[#allocation3 + $0x180] sm:$0xff]
      %v5343 = vld [vmem:[#allocation3 + $0x188] sm:$0xff]
      %v5344 = vld [vmem:[#allocation3 + $0x190] sm:$0xff]
      %v5345 = vld [vmem:[#allocation3 + $0x198] sm:$0xff]
      %v5346 = vld [vmem:[#allocation3 + $0x1a0] sm:$0xff]
      %v5347 = vld [vmem:[#allocation3 + $0x1a8] sm:$0xff]
      %v5348 = vld [vmem:[#allocation3 + $0x1b0] sm:$0xff]
      %v5349 = vld [vmem:[#allocation3 + $0x1b8] sm:$0xff]
      %v5350 = vld [vmem:[#allocation3 + $0x1c0] sm:$0xff]
      %v5351 = vld [vmem:[#allocation3 + $0x1c8] sm:$0xff]
      %v5352 = vld [vmem:[#allocation3 + $0x1d0] sm:$0xff]
      %v5353 = vld [vmem:[#allocation3 + $0x1d8] sm:$0xff]
      %v5354 = vld [vmem:[#allocation3 + $0x1e0] sm:$0xff]
      %v5355 = vld [vmem:[#allocation3 + $0x1e8] sm:$0xff]
      %v5356 = vld [vmem:[#allocation3 + $0x1f0] sm:$0xff]
      %v5357 = vld [vmem:[#allocation3 + $0x1f8] sm:$0xff]
      %v5358 = vld [vmem:[#allocation3 + $0x200] sm:$0xff]
      %v5359 = vld [vmem:[#allocation3 + $0x208] sm:$0xff]
      %v5360 = vld [vmem:[#allocation3 + $0x210] sm:$0xff]
      %v5361 = vld [vmem:[#allocation3 + $0x218] sm:$0xff]
      %v5362 = vld [vmem:[#allocation3 + $0x220] sm:$0xff]
      %v5363 = vld [vmem:[#allocation3 + $0x228] sm:$0xff]
      %v5364 = vld [vmem:[#allocation3 + $0x230] sm:$0xff]
      %v5365 = vld [vmem:[#allocation3 + $0x238] sm:$0xff]
      %v5366 = vld [vmem:[#allocation3 + $0x240] sm:$0xff]
      %v5367 = vld [vmem:[#allocation3 + $0x248] sm:$0xff]
      %v5368 = vld [vmem:[#allocation3 + $0x250] sm:$0xff]
      %v5369 = vld [vmem:[#allocation3 + $0x258] sm:$0xff]
      %v5370 = vld [vmem:[#allocation3 + $0x260] sm:$0xff]
      %v5371 = vld [vmem:[#allocation3 + $0x268] sm:$0xff]
      %v5372 = vld [vmem:[#allocation3 + $0x270] sm:$0xff]
      %v5373 = vld [vmem:[#allocation3 + $0x278] sm:$0xff]
      %v5374 = vld [vmem:[#allocation3 + $0x280] sm:$0xff]
      %v5375 = vld [vmem:[#allocation3 + $0x288] sm:$0xff]
      %v5376 = vld [vmem:[#allocation3 + $0x290] sm:$0xff]
      %v5377 = vld [vmem:[#allocation3 + $0x298] sm:$0xff]
      %v5378 = vld [vmem:[#allocation3 + $0x2a0] sm:$0xff]
      %v5379 = vld [vmem:[#allocation3 + $0x2a8] sm:$0xff]
      %v5380 = vld [vmem:[#allocation3 + $0x2b0] sm:$0xff]
      %v5381 = vld [vmem:[#allocation3 + $0x2b8] sm:$0xff]
      %v5382 = vld [vmem:[#allocation3 + $0x2c0] sm:$0xff]
      %v5383 = vld [vmem:[#allocation3 + $0x2c8] sm:$0xff]
      %v5384 = vld [vmem:[#allocation3 + $0x2d0] sm:$0xff]
      %v5385 = vld [vmem:[#allocation3 + $0x2d8] sm:$0xff]
      %v5386 = vld [vmem:[#allocation3 + $0x2e0] sm:$0xff]
      %v5387 = vld [vmem:[#allocation3 + $0x2e8] sm:$0xff]
      %v5388 = vld [vmem:[#allocation3 + $0x2f0] sm:$0xff]
      %v5389 = vld [vmem:[#allocation3 + $0x2f8] sm:$0xff]
      %v5390 = vld [vmem:[#allocation3 + $0x300] sm:$0xff]
      %v5391 = vld [vmem:[#allocation3 + $0x308] sm:$0xff]
      %v5392 = vld [vmem:[#allocation3 + $0x310] sm:$0xff]
      %v5393 = vld [vmem:[#allocation3 + $0x318] sm:$0xff]
      %v5394 = vld [vmem:[#allocation3 + $0x320] sm:$0xff]
      %v5395 = vld [vmem:[#allocation3 + $0x328] sm:$0xff]
      %v5396 = vld [vmem:[#allocation3 + $0x330] sm:$0xff]
      %v5397 = vld [vmem:[#allocation3 + $0x338] sm:$0xff]
      %v5398 = vld [vmem:[#allocation3 + $0x340] sm:$0xff]
      %v5399 = vld [vmem:[#allocation3 + $0x348] sm:$0xff]
      %v5400 = vld [vmem:[#allocation3 + $0x350] sm:$0xff]
      %v5401 = vld [vmem:[#allocation3 + $0x358] sm:$0xff]
      %v5402 = vld [vmem:[#allocation3 + $0x360] sm:$0xff]
      %v5403 = vld [vmem:[#allocation3 + $0x368] sm:$0xff]
      %v5404 = vld [vmem:[#allocation3 + $0x370] sm:$0xff]
      %v5405 = vld [vmem:[#allocation3 + $0x378] sm:$0xff]
      %v5406 = vld [vmem:[#allocation3 + $0x380] sm:$0xff]
      %v5407 = vld [vmem:[#allocation3 + $0x388] sm:$0xff]
      %v5408 = vld [vmem:[#allocation3 + $0x390] sm:$0xff]
      %v5409 = vld [vmem:[#allocation3 + $0x398] sm:$0xff]
      %v5410 = vld [vmem:[#allocation3 + $0x3a0] sm:$0xff]
      %v5411 = vld [vmem:[#allocation3 + $0x3a8] sm:$0xff]
      %v5412 = vld [vmem:[#allocation3 + $0x3b0] sm:$0xff]
      %v5413 = vld [vmem:[#allocation3 + $0x3b8] sm:$0xff]
      %v5414 = vld [vmem:[#allocation3 + $0x3c0] sm:$0xff]
      %v5415 = vld [vmem:[#allocation3 + $0x3c8] sm:$0xff]
      %v5416 = vld [vmem:[#allocation3 + $0x3d0] sm:$0xff]
      %v5417 = vld [vmem:[#allocation3 + $0x3d8] sm:$0xff]
      %v5418 = vld [vmem:[#allocation3 + $0x3e0] sm:$0xff]
      %v5419 = vld [vmem:[#allocation3 + $0x3e8] sm:$0xff]
      %v5420 = vld [vmem:[#allocation3 + $0x3f0] sm:$0xff]
      %v5421 = vld [vmem:[#allocation3 + $0x3f8] sm:$0xff]
      %v5422 = vld [vmem:[#allocation3 + $0x400] sm:$0xff]
      %v5423 = vld [vmem:[#allocation3 + $0x408] sm:$0xff]
      %v5424 = vld [vmem:[#allocation3 + $0x410] sm:$0xff]
      %v5425 = vld [vmem:[#allocation3 + $0x418] sm:$0xff]
      %v5426 = vld [vmem:[#allocation3 + $0x420] sm:$0xff]
      %v5427 = vld [vmem:[#allocation3 + $0x428] sm:$0xff]
      %v5428 = vld [vmem:[#allocation3 + $0x430] sm:$0xff]
      %v5429 = vld [vmem:[#allocation3 + $0x438] sm:$0xff]
      %v5430 = vld [vmem:[#allocation3 + $0x440] sm:$0xff]
      %v5431 = vld [vmem:[#allocation3 + $0x448] sm:$0xff]
      %v5432 = vld [vmem:[#allocation3 + $0x450] sm:$0xff]
      %v5433 = vld [vmem:[#allocation3 + $0x458] sm:$0xff]
      %v5434 = vld [vmem:[#allocation3 + $0x460] sm:$0xff]
      %v5435 = vld [vmem:[#allocation3 + $0x468] sm:$0xff]
      %v5436 = vld [vmem:[#allocation3 + $0x470] sm:$0xff]
      %v5437 = vld [vmem:[#allocation3 + $0x478] sm:$0xff]
      %v5438 = vld [vmem:[%s433 + $0x8] sm:$0xff]
      %v5439 = vld [vmem:[%s433 + $0x10] sm:$0xff]
      %v5440 = vld [vmem:[%s433 + $0x28] sm:$0xff]
      %v5441 = vld [vmem:[%s433 + $0x30] sm:$0xff]
      %v5442 = vld [vmem:[%s433 + $0x48] sm:$0xff]
      %v5443 = vld [vmem:[%s433 + $0x50] sm:$0xff]
      %v5444 = vld [vmem:[%s433 + $0x68] sm:$0xff]
      %v5445 = vld [vmem:[%s433 + $0x70] sm:$0xff]
      %v5446 = vld [vmem:[%s433 + $0x88] sm:$0xff]
      %v5447 = vld [vmem:[%s433 + $0x90] sm:$0xff]
      %v5448 = vld [vmem:[%s433 + $0xa8] sm:$0xff]
      %v5449 = vld [vmem:[%s433 + $0xb0] sm:$0xff]
      %v5450 = vld [vmem:[%s433 + $0xc8] sm:$0xff]
      %v5451 = vld [vmem:[%s433 + $0xd0] sm:$0xff]
      %v5452 = vld [vmem:[%s433 + $0xe8] sm:$0xff]
      %v5453 = vld [vmem:[%s433 + $0xf0] sm:$0xff]
      %v5454 = vld [vmem:[%s433 + $0x108] sm:$0xff]
      %v5455 = vld [vmem:[%s433 + $0x110] sm:$0xff]
      %v5456 = vld [vmem:[%s433 + $0x128] sm:$0xff]
      %v5457 = vld [vmem:[%s433 + $0x130] sm:$0xff]
      %v5458 = vld [vmem:[%s433 + $0x148] sm:$0xff]
      %v5459 = vld [vmem:[%s433 + $0x150] sm:$0xff]
      %v5460 = vld [vmem:[%s433 + $0x168] sm:$0xff]
      %v5461 = vld [vmem:[%s433 + $0x170] sm:$0xff]
      %v5462 = vld [vmem:[%s433 + $0x188] sm:$0xff]
      %v5463 = vld [vmem:[%s433 + $0x190] sm:$0xff]
      %v5464 = vld [vmem:[%s433 + $0x1a8] sm:$0xff]
      %v5465 = vld [vmem:[%s433 + $0x1b0] sm:$0xff]
      %v5466 = vld [vmem:[%s433 + $0x1c8] sm:$0xff]
      %v5467 = vld [vmem:[%s433 + $0x1d0] sm:$0xff]
      %v5468 = vld [vmem:[%s433 + $0x1e8] sm:$0xff]
      %v5469 = vld [vmem:[%s433 + $0x1f0] sm:$0xff]
      %v5614 = vunpack.c.l.b16 %v5150
      %v5615 = vunpack.c.l.b16 %v5151
      %v5616 = vunpack.c.l.b16 %v5152
      %v5617 = vunpack.c.l.b16 %v5153
      %v5618 = vunpack.c.l.b16 %v5154
      %v5619 = vunpack.c.l.b16 %v5155
      %v5620 = vunpack.c.l.b16 %v5156
      %v5621 = vunpack.c.l.b16 %v5157
      %v5622 = vunpack.c.l.b16 %v5158
      %v5623 = vunpack.c.l.b16 %v5159
      %v5624 = vunpack.c.l.b16 %v5160
      %v5625 = vunpack.c.l.b16 %v5161
      %v5626 = vunpack.c.l.b16 %v5162
      %v5627 = vunpack.c.l.b16 %v5163
      %v5628 = vunpack.c.l.b16 %v5164
      %v5629 = vunpack.c.l.b16 %v5165
      %v5630 = vunpack.c.l.b16 %v5166
      %v5631 = vunpack.c.l.b16 %v5167
      %v5632 = vunpack.c.l.b16 %v5168
      %v5633 = vunpack.c.l.b16 %v5169
      %v5634 = vunpack.c.l.b16 %v5170
      %v5635 = vunpack.c.l.b16 %v5171
      %v5636 = vunpack.c.l.b16 %v5172
      %v5637 = vunpack.c.l.b16 %v5173
      %v5638 = vunpack.c.l.b16 %v5174
      %v5639 = vunpack.c.l.b16 %v5175
      %v5640 = vunpack.c.l.b16 %v5176
      %v5641 = vunpack.c.l.b16 %v5177
      %v5642 = vunpack.c.l.b16 %v5178
      %v5643 = vunpack.c.l.b16 %v5179
      %v5644 = vunpack.c.l.b16 %v5180
      %v5645 = vunpack.c.l.b16 %v5181
      %v5646 = vunpack.c.l.b16 %v5182
      %v5647 = vunpack.c.l.b16 %v5183
      %v5648 = vunpack.c.l.b16 %v5184
      %v5649 = vunpack.c.l.b16 %v5185
      %v5650 = vunpack.c.l.b16 %v5186
      %v5651 = vunpack.c.l.b16 %v5187
      %v5652 = vunpack.c.l.b16 %v5188
      %v5653 = vunpack.c.l.b16 %v5189
      %v5654 = vunpack.c.l.b16 %v5190
      %v5655 = vunpack.c.l.b16 %v5191
      %v5656 = vunpack.c.l.b16 %v5192
      %v5657 = vunpack.c.l.b16 %v5193
      %v5658 = vunpack.c.l.b16 %v5194
      %v5659 = vunpack.c.l.b16 %v5195
      %v5660 = vunpack.c.l.b16 %v5196
      %v5661 = vunpack.c.l.b16 %v5197
      %v5662 = vunpack.c.l.b16 %v5198
      %v5663 = vunpack.c.l.b16 %v5199
      %v5664 = vunpack.c.l.b16 %v5200
      %v5665 = vunpack.c.l.b16 %v5201
      %v5666 = vunpack.c.l.b16 %v5202
      %v5667 = vunpack.c.l.b16 %v5203
      %v5668 = vunpack.c.l.b16 %v5204
      %v5669 = vunpack.c.l.b16 %v5205
      %v5670 = vunpack.c.l.b16 %v5206
      %v5671 = vunpack.c.l.b16 %v5207
      %v5672 = vunpack.c.l.b16 %v5208
      %v5673 = vunpack.c.l.b16 %v5209
      %v5674 = vunpack.c.l.b16 %v5210
      %v5675 = vunpack.c.l.b16 %v5211
      %v5676 = vunpack.c.l.b16 %v5212
      %v5677 = vunpack.c.l.b16 %v5213
      %v5678 = vunpack.c.l.b16 %v5214
      %v5679 = vunpack.c.l.b16 %v5215
      %v5680 = vunpack.c.l.b16 %v5216
      %v5681 = vunpack.c.l.b16 %v5217
      %v5682 = vunpack.c.l.b16 %v5218
      %v5683 = vunpack.c.l.b16 %v5219
      %v5684 = vunpack.c.l.b16 %v5220
      %v5685 = vunpack.c.l.b16 %v5221
      %v5686 = vunpack.c.l.b16 %v5222
      %v5687 = vunpack.c.l.b16 %v5223
      %v5688 = vunpack.c.l.b16 %v5224
      %v5689 = vunpack.c.l.b16 %v5225
      %v5690 = vunpack.c.l.b16 %v5226
      %v5691 = vunpack.c.l.b16 %v5227
      %v5692 = vunpack.c.l.b16 %v5228
      %v5693 = vunpack.c.l.b16 %v5229
      %v5694 = vunpack.c.l.b16 %v5230
      %v5695 = vunpack.c.l.b16 %v5231
      %v5696 = vunpack.c.l.b16 %v5232
      %v5697 = vunpack.c.l.b16 %v5233
      %v5698 = vunpack.c.l.b16 %v5234
      %v5699 = vunpack.c.l.b16 %v5235
      %v5700 = vunpack.c.l.b16 %v5236
      %v5701 = vunpack.c.l.b16 %v5237
      %v5702 = vunpack.c.l.b16 %v5238
      %v5703 = vunpack.c.l.b16 %v5239
      %v5704 = vunpack.c.l.b16 %v5240
      %v5705 = vunpack.c.l.b16 %v5241
      %v5706 = vunpack.c.l.b16 %v5242
      %v5707 = vunpack.c.l.b16 %v5243
      %v5708 = vunpack.c.l.b16 %v5244
      %v5709 = vunpack.c.l.b16 %v5245
      %v5710 = vunpack.c.l.b16 %v5246
      %v5711 = vunpack.c.l.b16 %v5247
      %v5712 = vunpack.c.l.b16 %v5248
      %v5713 = vunpack.c.l.b16 %v5249
      %v5714 = vunpack.c.l.b16 %v5250
      %v5715 = vunpack.c.l.b16 %v5251
      %v5716 = vunpack.c.l.b16 %v5252
      %v5717 = vunpack.c.l.b16 %v5253
      %v5718 = vunpack.c.l.b16 %v5254
      %v5719 = vunpack.c.l.b16 %v5255
      %v5720 = vunpack.c.l.b16 %v5256
      %v5721 = vunpack.c.l.b16 %v5257
      %v5722 = vunpack.c.l.b16 %v5258
      %v5723 = vunpack.c.l.b16 %v5259
      %v5724 = vunpack.c.l.b16 %v5260
      %v5725 = vunpack.c.l.b16 %v5261
      %v5726 = vunpack.c.l.b16 %v5262
      %v5727 = vunpack.c.l.b16 %v5263
      %v5728 = vunpack.c.l.b16 %v5264
      %v5729 = vunpack.c.l.b16 %v5265
      %v5730 = vunpack.c.l.b16 %v5266
      %v5731 = vunpack.c.l.b16 %v5267
      %v5732 = vunpack.c.l.b16 %v5268
      %v5733 = vunpack.c.l.b16 %v5269
      %v5734 = vunpack.c.l.b16 %v5270
      %v5735 = vunpack.c.l.b16 %v5271
      %v5736 = vunpack.c.l.b16 %v5272
      %v5737 = vunpack.c.l.b16 %v5273
      %v5738 = vunpack.c.l.b16 %v5274
      %v5739 = vunpack.c.l.b16 %v5275
      %v5740 = vunpack.c.l.b16 %v5276
      %v5741 = vunpack.c.l.b16 %v5277
      %v5742 = vunpack.c.l.b16 %v5278
      %v5743 = vunpack.c.l.b16 %v5279
      %v5744 = vunpack.c.l.b16 %v5280
      %v5745 = vunpack.c.l.b16 %v5281
      %v5746 = vunpack.c.l.b16 %v5282
      %v5747 = vunpack.c.l.b16 %v5283
      %v5748 = vunpack.c.l.b16 %v5284
      %v5749 = vunpack.c.l.b16 %v5285
      %v5750 = vunpack.c.l.b16 %v5286
      %v5751 = vunpack.c.l.b16 %v5287
      %v5752 = vunpack.c.l.b16 %v5288
      %v5753 = vunpack.c.l.b16 %v5289
      %v5754 = vunpack.c.l.b16 %v5290
      %v5755 = vunpack.c.l.b16 %v5291
      %v5756 = vunpack.c.l.b16 %v5292
      %v5757 = vunpack.c.l.b16 %v5293
      %v5758 = vpack.c.b16 %v5615, %v5614
      %v5759 = vpack.c.b16 %v5617, %v5616
      %v5760 = vpack.c.b16 %v5619, %v5618
      %v5761 = vpack.c.b16 %v5621, %v5620
      %v5762 = vpack.c.b16 %v5623, %v5622
      %v5763 = vpack.c.b16 %v5625, %v5624
      %v5764 = vpack.c.b16 %v5627, %v5626
      %v5765 = vpack.c.b16 %v5629, %v5628
      %v5766 = vpack.c.b16 %v5631, %v5630
      %v5767 = vpack.c.b16 %v5633, %v5632
      %v5768 = vpack.c.b16 %v5635, %v5634
      %v5769 = vpack.c.b16 %v5637, %v5636
      %v5770 = vpack.c.b16 %v5639, %v5638
      %v5771 = vpack.c.b16 %v5641, %v5640
      %v5772 = vpack.c.b16 %v5643, %v5642
      %v5773 = vpack.c.b16 %v5645, %v5644
      %v5774 = vpack.c.b16 %v5647, %v5646
      %v5775 = vpack.c.b16 %v5649, %v5648
      %v5776 = vpack.c.b16 %v5651, %v5650
      %v5777 = vpack.c.b16 %v5653, %v5652
      %v5778 = vpack.c.b16 %v5655, %v5654
      %v5779 = vpack.c.b16 %v5657, %v5656
      %v5780 = vpack.c.b16 %v5659, %v5658
      %v5781 = vpack.c.b16 %v5661, %v5660
      %v5782 = vpack.c.b16 %v5663, %v5662
      %v5783 = vpack.c.b16 %v5665, %v5664
      %v5784 = vpack.c.b16 %v5667, %v5666
      %v5785 = vpack.c.b16 %v5669, %v5668
      %v5786 = vpack.c.b16 %v5671, %v5670
      %v5787 = vpack.c.b16 %v5673, %v5672
      %v5788 = vpack.c.b16 %v5675, %v5674
      %v5789 = vpack.c.b16 %v5677, %v5676
      %v5790 = vpack.c.b16 %v5679, %v5678
      %v5791 = vpack.c.b16 %v5681, %v5680
      %v5792 = vpack.c.b16 %v5683, %v5682
      %v5793 = vpack.c.b16 %v5685, %v5684
      %v5794 = vpack.c.b16 %v5687, %v5686
      %v5795 = vpack.c.b16 %v5689, %v5688
      %v5796 = vpack.c.b16 %v5691, %v5690
      %v5797 = vpack.c.b16 %v5693, %v5692
      %v5798 = vpack.c.b16 %v5695, %v5694
      %v5799 = vpack.c.b16 %v5697, %v5696
      %v5800 = vpack.c.b16 %v5699, %v5698
      %v5801 = vpack.c.b16 %v5701, %v5700
      %v5802 = vpack.c.b16 %v5703, %v5702
      %v5803 = vpack.c.b16 %v5705, %v5704
      %v5804 = vpack.c.b16 %v5707, %v5706
      %v5805 = vpack.c.b16 %v5709, %v5708
      %v5806 = vpack.c.b16 %v5711, %v5710
      %v5807 = vpack.c.b16 %v5713, %v5712
      %v5808 = vpack.c.b16 %v5715, %v5714
      %v5809 = vpack.c.b16 %v5717, %v5716
      %v5810 = vpack.c.b16 %v5719, %v5718
      %v5811 = vpack.c.b16 %v5721, %v5720
      %v5812 = vpack.c.b16 %v5723, %v5722
      %v5813 = vpack.c.b16 %v5725, %v5724
      %v5814 = vpack.c.b16 %v5727, %v5726
      %v5815 = vpack.c.b16 %v5729, %v5728
      %v5816 = vpack.c.b16 %v5731, %v5730
      %v5817 = vpack.c.b16 %v5733, %v5732
      %v5818 = vpack.c.b16 %v5735, %v5734
      %v5819 = vpack.c.b16 %v5737, %v5736
      %v5820 = vpack.c.b16 %v5739, %v5738
      %v5821 = vpack.c.b16 %v5741, %v5740
      %v5822 = vpack.c.b16 %v5743, %v5742
      %v5823 = vpack.c.b16 %v5745, %v5744
      %v5824 = vpack.c.b16 %v5747, %v5746
      %v5825 = vpack.c.b16 %v5749, %v5748
      %v5826 = vpack.c.b16 %v5751, %v5750
      %v5827 = vpack.c.b16 %v5753, %v5752
      %v5828 = vpack.c.b16 %v5755, %v5754
      %v5829 = vpack.c.b16 %v5757, %v5756
      %5902 = vmatprep.subr.bf16.mxu0 0
      %5903 = vmatpush1.bf16.msra.mxu0 %v5758
      %5904 = vmatprep.subr.bf16.mxu0 0
      %5905 = vmatpush1.bf16.msra.mxu0 %v5759
      %5906 = vmatprep.subr.bf16.mxu0 0
      %5907 = vmatpush1.bf16.msra.mxu0 %v5760
      %5908 = vmatprep.subr.bf16.mxu0 0
      %5909 = vmatpush1.bf16.msra.mxu0 %v5761
      %5910 = vmatprep.subr.bf16.mxu0 0
      %5911 = vmatpush1.bf16.msra.mxu0 %v5762
      %5912 = vmatprep.subr.bf16.mxu0 0
      %5913 = vmatpush1.bf16.msra.mxu0 %v5763
      %5914 = vmatprep.subr.bf16.mxu0 0
      %5915 = vmatpush1.bf16.msra.mxu0 %v5764
      %5916 = vmatprep.subr.bf16.mxu0 0
      %5917 = vmatpush1.bf16.msra.mxu0 %v5765
      %5918 = vmatprep.subr.bf16.mxu0 0
      %5919 = vmatpush1.bf16.msra.mxu0 %v5766
      %5920 = vmatprep.subr.bf16.mxu0 0
      %5921 = vmatpush1.bf16.msra.mxu0 %v5767
      %5922 = vmatprep.subr.bf16.mxu0 0
      %5923 = vmatpush1.bf16.msra.mxu0 %v5768
      %5924 = vmatprep.subr.bf16.mxu0 0
      %5925 = vmatpush1.bf16.msra.mxu0 %v5769
      %5926 = vmatprep.subr.bf16.mxu0 0
      %5927 = vmatpush1.bf16.msra.mxu0 %v5770
      %5928 = vmatprep.subr.bf16.mxu0 0
      %5929 = vmatpush1.bf16.msra.mxu0 %v5771
      %5930 = vmatprep.subr.bf16.mxu0 0
      %5931 = vmatpush1.bf16.msra.mxu0 %v5772
      %5932 = vmatprep.subr.bf16.mxu0 0
      %5933 = vmatpush1.bf16.msra.mxu0 %v5773
      %5934 = vmatprep.mubr.bf16.mxu0 %v5295
      %5935 = vmatmul.mubr.bf16.gmra.mrb[0].mxu0 %v5294
      %v5936 = vpop.f32.mrb[0].mxu0
      %v5937 = vadd.f32 %v5438, %v5936
      %v5938 = vpop.f32.mrb[0].mxu0
      %v5939 = vpop.f32.mrb[0].mxu0
      %v5940 = vadd.f32 %v5439, %v5939
      %v5941 = vpop.f32.mrb[0].mxu0
      %5942 = vmatprep.mubr.bf16.mxu0 %v5304
      %5943 = vmatmul.mubr.bf16.gmra.mrb[0].mxu0 %v5303
      %v5944 = vpop.f32.mrb[0].mxu0
      %v5945 = vadd.f32 %v5440, %v5944
      %v5946 = vpop.f32.mrb[0].mxu0
      %v5947 = vpop.f32.mrb[0].mxu0
      %v5948 = vadd.f32 %v5441, %v5947
      %v5949 = vpop.f32.mrb[0].mxu0
      %5950 = vmatprep.mubr.bf16.mxu0 %v5313
      %5951 = vmatmul.mubr.bf16.gmra.mrb[0].mxu0 %v5312
      %v5952 = vpop.f32.mrb[0].mxu0
      %v5953 = vadd.f32 %v5442, %v5952
      %v5954 = vpop.f32.mrb[0].mxu0
      %v5955 = vpop.f32.mrb[0].mxu0
      %v5956 = vadd.f32 %v5443, %v5955
      %v5957 = vpop.f32.mrb[0].mxu0
      %5958 = vmatprep.mubr.bf16.mxu0 %v5322
      %5959 = vmatmul.mubr.bf16.gmra.mrb[0].mxu0 %v5321
      %v5960 = vpop.f32.mrb[0].mxu0
      %v5961 = vadd.f32 %v5444, %v5960
      %v5962 = vpop.f32.mrb[0].mxu0
      %v5963 = vpop.f32.mrb[0].mxu0
      %v5964 = vadd.f32 %v5445, %v5963
      %v5965 = vpop.f32.mrb[0].mxu0
      %5966 = vmatprep.mubr.bf16.mxu0 %v5331
      %5967 = vmatmul.mubr.bf16.gmra.mrb[0].mxu0 %v5330
      %v5968 = vpop.f32.mrb[0].mxu0
      %v5969 = vadd.f32 %v5446, %v5968
      %v5970 = vpop.f32.mrb[0].mxu0
      %v5971 = vpop.f32.mrb[0].mxu0
      %v5972 = vadd.f32 %v5447, %v5971
      %v5973 = vpop.f32.mrb[0].mxu0
      %5974 = vmatprep.mubr.bf16.mxu0 %v5340
      %5975 = vmatmul.mubr.bf16.gmra.mrb[0].mxu0 %v5339
      %v5976 = vpop.f32.mrb[0].mxu0
      %v5977 = vadd.f32 %v5448, %v5976
      %v5978 = vpop.f32.mrb[0].mxu0
      %v5979 = vpop.f32.mrb[0].mxu0
      %v5980 = vadd.f32 %v5449, %v5979
      %v5981 = vpop.f32.mrb[0].mxu0
      %5982 = vmatprep.mubr.bf16.mxu0 %v5349
      %5983 = vmatmul.mubr.bf16.gmra.mrb[0].mxu0 %v5348
      %v5984 = vpop.f32.mrb[0].mxu0
      %v5985 = vadd.f32 %v5450, %v5984
      %v5986 = vpop.f32.mrb[0].mxu0
      %v5987 = vpop.f32.mrb[0].mxu0
      %v5988 = vadd.f32 %v5451, %v5987
      %v5989 = vpop.f32.mrb[0].mxu0
      %5990 = vmatprep.mubr.bf16.mxu0 %v5358
      %5991 = vmatmul.mubr.bf16.gmra.mrb[0].mxu0 %v5357
      %v5992 = vpop.f32.mrb[0].mxu0
      %v5993 = vadd.f32 %v5452, %v5992
      %v5994 = vpop.f32.mrb[0].mxu0
      %v5995 = vpop.f32.mrb[0].mxu0
      %v5996 = vadd.f32 %v5453, %v5995
      %v5997 = vpop.f32.mrb[0].mxu0
      %5998 = vmatprep.mubr.bf16.mxu0 %v5367
      %5999 = vmatmul.mubr.bf16.gmra.mrb[0].mxu0 %v5366
      %v6000 = vpop.f32.mrb[0].mxu0
      %v6001 = vadd.f32 %v5454, %v6000
      %v6002 = vpop.f32.mrb[0].mxu0
      %v6003 = vpop.f32.mrb[0].mxu0
      %v6004 = vadd.f32 %v5455, %v6003
      %v6005 = vpop.f32.mrb[0].mxu0
      %6006 = vmatprep.mubr.bf16.mxu0 %v5376
      %6007 = vmatmul.mubr.bf16.gmra.mrb[0].mxu0 %v5375
      %v6008 = vpop.f32.mrb[0].mxu0
      %v6009 = vadd.f32 %v5456, %v6008
      %v6010 = vpop.f32.mrb[0].mxu0
      %v6011 = vpop.f32.mrb[0].mxu0
      %v6012 = vadd.f32 %v5457, %v6011
      %v6013 = vpop.f32.mrb[0].mxu0
      %6014 = vmatprep.mubr.bf16.mxu0 %v5385
      %6015 = vmatmul.mubr.bf16.gmra.mrb[0].mxu0 %v5384
      %v6016 = vpop.f32.mrb[0].mxu0
      %v6017 = vadd.f32 %v5458, %v6016
      %v6018 = vpop.f32.mrb[0].mxu0
      %v6019 = vpop.f32.mrb[0].mxu0
      %v6020 = vadd.f32 %v5459, %v6019
      %v6021 = vpop.f32.mrb[0].mxu0
      %6022 = vmatprep.mubr.bf16.mxu0 %v5394
      %6023 = vmatmul.mubr.bf16.gmra.mrb[0].mxu0 %v5393
      %v6024 = vpop.f32.mrb[0].mxu0
      %v6025 = vadd.f32 %v5460, %v6024
      %v6026 = vpop.f32.mrb[0].mxu0
      %v6027 = vpop.f32.mrb[0].mxu0
      %v6028 = vadd.f32 %v5461, %v6027
      %v6029 = vpop.f32.mrb[0].mxu0
      %6030 = vmatprep.mubr.bf16.mxu0 %v5403
      %6031 = vmatmul.mubr.bf16.gmra.mrb[0].mxu0 %v5402
      %v6032 = vpop.f32.mrb[0].mxu0
      %v6033 = vadd.f32 %v5462, %v6032
      %v6034 = vpop.f32.mrb[0].mxu0
      %v6035 = vpop.f32.mrb[0].mxu0
      %v6036 = vadd.f32 %v5463, %v6035
      %v6037 = vpop.f32.mrb[0].mxu0
      %6038 = vmatprep.mubr.bf16.mxu0 %v5412
      %6039 = vmatmul.mubr.bf16.gmra.mrb[0].mxu0 %v5411
      %v6040 = vpop.f32.mrb[0].mxu0
      %v6041 = vadd.f32 %v5464, %v6040
      %v6042 = vpop.f32.mrb[0].mxu0
      %v6043 = vpop.f32.mrb[0].mxu0
      %v6044 = vadd.f32 %v5465, %v6043
      %v6045 = vpop.f32.mrb[0].mxu0
      %6046 = vmatprep.mubr.bf16.mxu0 %v5421
      %6047 = vmatmul.mubr.bf16.gmra.mrb[0].mxu0 %v5420
      %v6048 = vpop.f32.mrb[0].mxu0
      %v6049 = vadd.f32 %v5466, %v6048
      %v6050 = vpop.f32.mrb[0].mxu0
      %v6051 = vpop.f32.mrb[0].mxu0
      %v6052 = vadd.f32 %v5467, %v6051
      %v6053 = vpop.f32.mrb[0].mxu0
      %6054 = vmatprep.mubr.bf16.mxu0 %v5430
      %6055 = vmatmul.mubr.bf16.gmra.mrb[0].mxu0 %v5429
      %v6056 = vpop.f32.mrb[0].mxu0
      %v6057 = vadd.f32 %v5468, %v6056
      %v6058 = vpop.f32.mrb[0].mxu0
      %v6059 = vpop.f32.mrb[0].mxu0
      %v6060 = vadd.f32 %v5469, %v6059
      %v6061 = vpop.f32.mrb[0].mxu0
      %6062 = vdwg.mxu0
      %6063 = vmatprep.subr.bf16.mxu0 0
      %6064 = vmatpush1.bf16.msra.mxu0 %v5774
      %6065 = vmatprep.subr.bf16.mxu0 0
      %6066 = vmatpush1.bf16.msra.mxu0 %v5775
      %6067 = vmatprep.subr.bf16.mxu0 0
      %6068 = vmatpush1.bf16.msra.mxu0 %v5776
      %6069 = vmatprep.subr.bf16.mxu0 0
      %6070 = vmatpush1.bf16.msra.mxu0 %v5777
      %6071 = vmatprep.subr.bf16.mxu0 0
      %6072 = vmatpush1.bf16.msra.mxu0 %v5778
      %6073 = vmatprep.subr.bf16.mxu0 0
      %6074 = vmatpush1.bf16.msra.mxu0 %v5779
      %6075 = vmatprep.subr.bf16.mxu0 0
      %6076 = vmatpush1.bf16.msra.mxu0 %v5780
      %6077 = vmatprep.subr.bf16.mxu0 0
      %6078 = vmatpush1.bf16.msra.mxu0 %v5781
      %6079 = vmatprep.subr.bf16.mxu0 0
      %6080 = vmatpush1.bf16.msra.mxu0 %v5782
      %6081 = vmatprep.subr.bf16.mxu0 0
      %6082 = vmatpush1.bf16.msra.mxu0 %v5783
      %6083 = vmatprep.subr.bf16.mxu0 0
      %6084 = vmatpush1.bf16.msra.mxu0 %v5784
      %6085 = vmatprep.subr.bf16.mxu0 0
      %6086 = vmatpush1.bf16.msra.mxu0 %v5785
      %6087 = vmatprep.subr.bf16.mxu0 0
      %6088 = vmatpush1.bf16.msra.mxu0 %v5786
      %6089 = vmatprep.subr.bf16.mxu0 0
      %6090 = vmatpush1.bf16.msra.mxu0 %v5787
      %6091 = vmatprep.subr.bf16.mxu0 0
      %6092 = vmatpush1.bf16.msra.mxu0 %v5788
      %6093 = vmatprep.subr.bf16.mxu0 0
      %6094 = vmatpush1.bf16.msra.mxu0 %v5789
      %6095 = vmatprep.mubr.bf16.mxu0 %v5297
      %6096 = vmatmul.mubr.bf16.gmra.mrb[0].mxu0 %v5296
      %v6097 = vpop.f32.mrb[0].mxu0
      %v6098 = vadd.f32 %v5937, %v6097
      %v6099 = vpop.f32.mrb[0].mxu0
      %v6100 = vpop.f32.mrb[0].mxu0
      %v6101 = vadd.f32 %v5940, %v6100
      %v6102 = vpop.f32.mrb[0].mxu0
      %6103 = vmatprep.mubr.bf16.mxu0 %v5306
      %6104 = vmatmul.mubr.bf16.gmra.mrb[0].mxu0 %v5305
      %v6105 = vpop.f32.mrb[0].mxu0
      %v6106 = vadd.f32 %v5945, %v6105
      %v6107 = vpop.f32.mrb[0].mxu0
      %v6108 = vpop.f32.mrb[0].mxu0
      %v6109 = vadd.f32 %v5948, %v6108
      %v6110 = vpop.f32.mrb[0].mxu0
      %6111 = vmatprep.mubr.bf16.mxu0 %v5315
      %6112 = vmatmul.mubr.bf16.gmra.mrb[0].mxu0 %v5314
      %v6113 = vpop.f32.mrb[0].mxu0
      %v6114 = vadd.f32 %v5953, %v6113
      %v6115 = vpop.f32.mrb[0].mxu0
      %v6116 = vpop.f32.mrb[0].mxu0
      %v6117 = vadd.f32 %v5956, %v6116
      %v6118 = vpop.f32.mrb[0].mxu0
      %6119 = vmatprep.mubr.bf16.mxu0 %v5324
      %6120 = vmatmul.mubr.bf16.gmra.mrb[0].mxu0 %v5323
      %v6121 = vpop.f32.mrb[0].mxu0
      %v6122 = vadd.f32 %v5961, %v6121
      %v6123 = vpop.f32.mrb[0].mxu0
      %v6124 = vpop.f32.mrb[0].mxu0
      %v6125 = vadd.f32 %v5964, %v6124
      %v6126 = vpop.f32.mrb[0].mxu0
      %6127 = vmatprep.mubr.bf16.mxu0 %v5333
      %6128 = vmatmul.mubr.bf16.gmra.mrb[0].mxu0 %v5332
      %v6129 = vpop.f32.mrb[0].mxu0
      %v6130 = vadd.f32 %v5969, %v6129
      %v6131 = vpop.f32.mrb[0].mxu0
      %v6132 = vpop.f32.mrb[0].mxu0
      %v6133 = vadd.f32 %v5972, %v6132
      %v6134 = vpop.f32.mrb[0].mxu0
      %6135 = vmatprep.mubr.bf16.mxu0 %v5342
      %6136 = vmatmul.mubr.bf16.gmra.mrb[0].mxu0 %v5341
      %v6137 = vpop.f32.mrb[0].mxu0
      %v6138 = vadd.f32 %v5977, %v6137
      %v6139 = vpop.f32.mrb[0].mxu0
      %v6140 = vpop.f32.mrb[0].mxu0
      %v6141 = vadd.f32 %v5980, %v6140
      %v6142 = vpop.f32.mrb[0].mxu0
      %6143 = vmatprep.mubr.bf16.mxu0 %v5351
      %6144 = vmatmul.mubr.bf16.gmra.mrb[0].mxu0 %v5350
      %v6145 = vpop.f32.mrb[0].mxu0
      %v6146 = vadd.f32 %v5985, %v6145
      %v6147 = vpop.f32.mrb[0].mxu0
      %v6148 = vpop.f32.mrb[0].mxu0
      %v6149 = vadd.f32 %v5988, %v6148
      %v6150 = vpop.f32.mrb[0].mxu0
      %6151 = vmatprep.mubr.bf16.mxu0 %v5360
      %6152 = vmatmul.mubr.bf16.gmra.mrb[0].mxu0 %v5359
      %v6153 = vpop.f32.mrb[0].mxu0
      %v6154 = vadd.f32 %v5993, %v6153
      %v6155 = vpop.f32.mrb[0].mxu0
      %v6156 = vpop.f32.mrb[0].mxu0
      %v6157 = vadd.f32 %v5996, %v6156
      %v6158 = vpop.f32.mrb[0].mxu0
      %6159 = vmatprep.mubr.bf16.mxu0 %v5369
      %6160 = vmatmul.mubr.bf16.gmra.mrb[0].mxu0 %v5368
      %v6161 = vpop.f32.mrb[0].mxu0
      %v6162 = vadd.f32 %v6001, %v6161
      %v6163 = vpop.f32.mrb[0].mxu0
      %v6164 = vpop.f32.mrb[0].mxu0
      %v6165 = vadd.f32 %v6004, %v6164
      %v6166 = vpop.f32.mrb[0].mxu0
      %6167 = vmatprep.mubr.bf16.mxu0 %v5378
      %6168 = vmatmul.mubr.bf16.gmra.mrb[0].mxu0 %v5377
      %v6169 = vpop.f32.mrb[0].mxu0
      %v6170 = vadd.f32 %v6009, %v6169
      %v6171 = vpop.f32.mrb[0].mxu0
      %v6172 = vpop.f32.mrb[0].mxu0
      %v6173 = vadd.f32 %v6012, %v6172
      %v6174 = vpop.f32.mrb[0].mxu0
      %6175 = vmatprep.mubr.bf16.mxu0 %v5387
      %6176 = vmatmul.mubr.bf16.gmra.mrb[0].mxu0 %v5386
      %v6177 = vpop.f32.mrb[0].mxu0
      %v6178 = vadd.f32 %v6017, %v6177
      %v6179 = vpop.f32.mrb[0].mxu0
      %v6180 = vpop.f32.mrb[0].mxu0
      %v6181 = vadd.f32 %v6020, %v6180
      %v6182 = vpop.f32.mrb[0].mxu0
      %6183 = vmatprep.mubr.bf16.mxu0 %v5396
      %6184 = vmatmul.mubr.bf16.gmra.mrb[0].mxu0 %v5395
      %v6185 = vpop.f32.mrb[0].mxu0
      %v6186 = vadd.f32 %v6025, %v6185
      %v6187 = vpop.f32.mrb[0].mxu0
      %v6188 = vpop.f32.mrb[0].mxu0
      %v6189 = vadd.f32 %v6028, %v6188
      %v6190 = vpop.f32.mrb[0].mxu0
      %6191 = vmatprep.mubr.bf16.mxu0 %v5405
      %6192 = vmatmul.mubr.bf16.gmra.mrb[0].mxu0 %v5404
      %v6193 = vpop.f32.mrb[0].mxu0
      %v6194 = vadd.f32 %v6033, %v6193
      %v6195 = vpop.f32.mrb[0].mxu0
      %v6196 = vpop.f32.mrb[0].mxu0
      %v6197 = vadd.f32 %v6036, %v6196
      %v6198 = vpop.f32.mrb[0].mxu0
      %6199 = vmatprep.mubr.bf16.mxu0 %v5414
      %6200 = vmatmul.mubr.bf16.gmra.mrb[0].mxu0 %v5413
      %v6201 = vpop.f32.mrb[0].mxu0
      %v6202 = vadd.f32 %v6041, %v6201
      %v6203 = vpop.f32.mrb[0].mxu0
      %v6204 = vpop.f32.mrb[0].mxu0
      %v6205 = vadd.f32 %v6044, %v6204
      %v6206 = vpop.f32.mrb[0].mxu0
      %6207 = vmatprep.mubr.bf16.mxu0 %v5423
      %6208 = vmatmul.mubr.bf16.gmra.mrb[0].mxu0 %v5422
      %v6209 = vpop.f32.mrb[0].mxu0
      %v6210 = vadd.f32 %v6049, %v6209
      %v6211 = vpop.f32.mrb[0].mxu0
      %v6212 = vpop.f32.mrb[0].mxu0
      %v6213 = vadd.f32 %v6052, %v6212
      %v6214 = vpop.f32.mrb[0].mxu0
      %6215 = vmatprep.mubr.bf16.mxu0 %v5432
      %6216 = vmatmul.mubr.bf16.gmra.mrb[0].mxu0 %v5431
      %v6217 = vpop.f32.mrb[0].mxu0
      %v6218 = vadd.f32 %v6057, %v6217
      %v6219 = vpop.f32.mrb[0].mxu0
      %v6220 = vpop.f32.mrb[0].mxu0
      %v6221 = vadd.f32 %v6060, %v6220
      %v6222 = vpop.f32.mrb[0].mxu0
      %6223 = vdwg.mxu0
      %6224 = vmatprep.subr.bf16.mxu0 0
      %6225 = vmatpush1.bf16.msra.mxu0 %v5790
      %6226 = vmatprep.subr.bf16.mxu0 0
      %6227 = vmatpush1.bf16.msra.mxu0 %v5791
      %6228 = vmatprep.subr.bf16.mxu0 0
      %6229 = vmatpush1.bf16.msra.mxu0 %v5792
      %6230 = vmatprep.subr.bf16.mxu0 0
      %6231 = vmatpush1.bf16.msra.mxu0 %v5793
      %6232 = vmatprep.subr.bf16.mxu0 0
      %6233 = vmatpush1.bf16.msra.mxu0 %v5794
      %6234 = vmatprep.subr.bf16.mxu0 0
      %6235 = vmatpush1.bf16.msra.mxu0 %v5795
      %6236 = vmatprep.subr.bf16.mxu0 0
      %6237 = vmatpush1.bf16.msra.mxu0 %v5796
      %6238 = vmatprep.subr.bf16.mxu0 0
      %6239 = vmatpush1.bf16.msra.mxu0 %v5797
      %6240 = vmatprep.subr.bf16.mxu0 0
      %6241 = vmatpush1.bf16.msra.mxu0 %v5798
      %6242 = vmatprep.subr.bf16.mxu0 0
      %6243 = vmatpush1.bf16.msra.mxu0 %v5799
      %6244 = vmatprep.subr.bf16.mxu0 0
      %6245 = vmatpush1.bf16.msra.mxu0 %v5800
      %6246 = vmatprep.subr.bf16.mxu0 0
      %6247 = vmatpush1.bf16.msra.mxu0 %v5801
      %6248 = vmatprep.subr.bf16.mxu0 0
      %6249 = vmatpush1.bf16.msra.mxu0 %v5802
      %6250 = vmatprep.subr.bf16.mxu0 0
      %6251 = vmatpush1.bf16.msra.mxu0 %v5803
      %6252 = vmatprep.subr.bf16.mxu0 0
      %6253 = vmatpush1.bf16.msra.mxu0 %v5804
      %6254 = vmatprep.subr.bf16.mxu0 0
      %6255 = vmatpush1.bf16.msra.mxu0 %v5805
      %6256 = vmatprep.mubr.bf16.mxu0 %v5299
      %6257 = vmatmul.mubr.bf16.gmra.mrb[0].mxu0 %v5298
      %v6258 = vpop.f32.mrb[0].mxu0
      %v6259 = vadd.f32 %v6098, %v6258
      %v6260 = vpop.f32.mrb[0].mxu0
      %v6261 = vpop.f32.mrb[0].mxu0
      %v6262 = vadd.f32 %v6101, %v6261
      %v6263 = vpop.f32.mrb[0].mxu0
      %6264 = vmatprep.mubr.bf16.mxu0 %v5308
      %6265 = vmatmul.mubr.bf16.gmra.mrb[0].mxu0 %v5307
      %v6266 = vpop.f32.mrb[0].mxu0
      %v6267 = vadd.f32 %v6106, %v6266
      %v6268 = vpop.f32.mrb[0].mxu0
      %v6269 = vpop.f32.mrb[0].mxu0
      %v6270 = vadd.f32 %v6109, %v6269
      %v6271 = vpop.f32.mrb[0].mxu0
      %6272 = vmatprep.mubr.bf16.mxu0 %v5317
      %6273 = vmatmul.mubr.bf16.gmra.mrb[0].mxu0 %v5316
      %v6274 = vpop.f32.mrb[0].mxu0
      %v6275 = vadd.f32 %v6114, %v6274
      %v6276 = vpop.f32.mrb[0].mxu0
      %v6277 = vpop.f32.mrb[0].mxu0
      %v6278 = vadd.f32 %v6117, %v6277
      %v6279 = vpop.f32.mrb[0].mxu0
      %6280 = vmatprep.mubr.bf16.mxu0 %v5326
      %6281 = vmatmul.mubr.bf16.gmra.mrb[0].mxu0 %v5325
      %v6282 = vpop.f32.mrb[0].mxu0
      %v6283 = vadd.f32 %v6122, %v6282
      %v6284 = vpop.f32.mrb[0].mxu0
      %v6285 = vpop.f32.mrb[0].mxu0
      %v6286 = vadd.f32 %v6125, %v6285
      %v6287 = vpop.f32.mrb[0].mxu0
      %6288 = vmatprep.mubr.bf16.mxu0 %v5335
      %6289 = vmatmul.mubr.bf16.gmra.mrb[0].mxu0 %v5334
      %v6290 = vpop.f32.mrb[0].mxu0
      %v6291 = vadd.f32 %v6130, %v6290
      %v6292 = vpop.f32.mrb[0].mxu0
      %v6293 = vpop.f32.mrb[0].mxu0
      %v6294 = vadd.f32 %v6133, %v6293
      %v6295 = vpop.f32.mrb[0].mxu0
      %6296 = vmatprep.mubr.bf16.mxu0 %v5344
      %6297 = vmatmul.mubr.bf16.gmra.mrb[0].mxu0 %v5343
      %v6298 = vpop.f32.mrb[0].mxu0
      %v6299 = vadd.f32 %v6138, %v6298
      %v6300 = vpop.f32.mrb[0].mxu0
      %v6301 = vpop.f32.mrb[0].mxu0
      %v6302 = vadd.f32 %v6141, %v6301
      %v6303 = vpop.f32.mrb[0].mxu0
      %6304 = vmatprep.mubr.bf16.mxu0 %v5353
      %6305 = vmatmul.mubr.bf16.gmra.mrb[0].mxu0 %v5352
      %v6306 = vpop.f32.mrb[0].mxu0
      %v6307 = vadd.f32 %v6146, %v6306
      %v6308 = vpop.f32.mrb[0].mxu0
      %v6309 = vpop.f32.mrb[0].mxu0
      %v6310 = vadd.f32 %v6149, %v6309
      %v6311 = vpop.f32.mrb[0].mxu0
      %6312 = vmatprep.mubr.bf16.mxu0 %v5362
      %6313 = vmatmul.mubr.bf16.gmra.mrb[0].mxu0 %v5361
      %v6314 = vpop.f32.mrb[0].mxu0
      %v6315 = vadd.f32 %v6154, %v6314
      %v6316 = vpop.f32.mrb[0].mxu0
      %v6317 = vpop.f32.mrb[0].mxu0
      %v6318 = vadd.f32 %v6157, %v6317
      %v6319 = vpop.f32.mrb[0].mxu0
      %6320 = vmatprep.mubr.bf16.mxu0 %v5371
      %6321 = vmatmul.mubr.bf16.gmra.mrb[0].mxu0 %v5370
      %v6322 = vpop.f32.mrb[0].mxu0
      %v6323 = vadd.f32 %v6162, %v6322
      %v6324 = vpop.f32.mrb[0].mxu0
      %v6325 = vpop.f32.mrb[0].mxu0
      %v6326 = vadd.f32 %v6165, %v6325
      %v6327 = vpop.f32.mrb[0].mxu0
      %6328 = vmatprep.mubr.bf16.mxu0 %v5380
      %6329 = vmatmul.mubr.bf16.gmra.mrb[0].mxu0 %v5379
      %v6330 = vpop.f32.mrb[0].mxu0
      %v6331 = vadd.f32 %v6170, %v6330
      %v6332 = vpop.f32.mrb[0].mxu0
      %v6333 = vpop.f32.mrb[0].mxu0
      %v6334 = vadd.f32 %v6173, %v6333
      %v6335 = vpop.f32.mrb[0].mxu0
      %6336 = vmatprep.mubr.bf16.mxu0 %v5389
      %6337 = vmatmul.mubr.bf16.gmra.mrb[0].mxu0 %v5388
      %v6338 = vpop.f32.mrb[0].mxu0
      %v6339 = vadd.f32 %v6178, %v6338
      %v6340 = vpop.f32.mrb[0].mxu0
      %v6341 = vpop.f32.mrb[0].mxu0
      %v6342 = vadd.f32 %v6181, %v6341
      %v6343 = vpop.f32.mrb[0].mxu0
      %6344 = vmatprep.mubr.bf16.mxu0 %v5398
      %6345 = vmatmul.mubr.bf16.gmra.mrb[0].mxu0 %v5397
      %v6346 = vpop.f32.mrb[0].mxu0
      %v6347 = vadd.f32 %v6186, %v6346
      %v6348 = vpop.f32.mrb[0].mxu0
      %v6349 = vpop.f32.mrb[0].mxu0
      %v6350 = vadd.f32 %v6189, %v6349
      %v6351 = vpop.f32.mrb[0].mxu0
      %6352 = vmatprep.mubr.bf16.mxu0 %v5407
      %6353 = vmatmul.mubr.bf16.gmra.mrb[0].mxu0 %v5406
      %v6354 = vpop.f32.mrb[0].mxu0
      %v6355 = vadd.f32 %v6194, %v6354
      %v6356 = vpop.f32.mrb[0].mxu0
      %v6357 = vpop.f32.mrb[0].mxu0
      %v6358 = vadd.f32 %v6197, %v6357
      %v6359 = vpop.f32.mrb[0].mxu0
      %6360 = vmatprep.mubr.bf16.mxu0 %v5416
      %6361 = vmatmul.mubr.bf16.gmra.mrb[0].mxu0 %v5415
      %v6362 = vpop.f32.mrb[0].mxu0
      %v6363 = vadd.f32 %v6202, %v6362
      %v6364 = vpop.f32.mrb[0].mxu0
      %v6365 = vpop.f32.mrb[0].mxu0
      %v6366 = vadd.f32 %v6205, %v6365
      %v6367 = vpop.f32.mrb[0].mxu0
      %6368 = vmatprep.mubr.bf16.mxu0 %v5425
      %6369 = vmatmul.mubr.bf16.gmra.mrb[0].mxu0 %v5424
      %v6370 = vpop.f32.mrb[0].mxu0
      %v6371 = vadd.f32 %v6210, %v6370
      %v6372 = vpop.f32.mrb[0].mxu0
      %v6373 = vpop.f32.mrb[0].mxu0
      %v6374 = vadd.f32 %v6213, %v6373
      %v6375 = vpop.f32.mrb[0].mxu0
      %6376 = vmatprep.mubr.bf16.mxu0 %v5434
      %6377 = vmatmul.mubr.bf16.gmra.mrb[0].mxu0 %v5433
      %v6378 = vpop.f32.mrb[0].mxu0
      %v6379 = vadd.f32 %v6218, %v6378
      %v6380 = vpop.f32.mrb[0].mxu0
      %v6381 = vpop.f32.mrb[0].mxu0
      %v6382 = vadd.f32 %v6221, %v6381
      %v6383 = vpop.f32.mrb[0].mxu0
      %6384 = vdwg.mxu0
      %6385 = vmatprep.subr.bf16.mxu0 0
      %6386 = vmatpush1.bf16.msra.mxu0 %v5806
      %6387 = vmatprep.subr.bf16.mxu0 0
      %6388 = vmatpush1.bf16.msra.mxu0 %v5807
      %6389 = vmatprep.subr.bf16.mxu0 0
      %6390 = vmatpush1.bf16.msra.mxu0 %v5808
      %6391 = vmatprep.subr.bf16.mxu0 0
      %6392 = vmatpush1.bf16.msra.mxu0 %v5809
      %6393 = vmatprep.subr.bf16.mxu0 0
      %6394 = vmatpush1.bf16.msra.mxu0 %v5810
      %6395 = vmatprep.subr.bf16.mxu0 0
      %6396 = vmatpush1.bf16.msra.mxu0 %v5811
      %6397 = vmatprep.subr.bf16.mxu0 0
      %6398 = vmatpush1.bf16.msra.mxu0 %v5812
      %6399 = vmatprep.subr.bf16.mxu0 0
      %6400 = vmatpush1.bf16.msra.mxu0 %v5813
      %6401 = vmatprep.subr.bf16.mxu0 0
      %6402 = vmatpush1.bf16.msra.mxu0 %v5814
      %6403 = vmatprep.subr.bf16.mxu0 0
      %6404 = vmatpush1.bf16.msra.mxu0 %v5815
      %6405 = vmatprep.subr.bf16.mxu0 0
      %6406 = vmatpush1.bf16.msra.mxu0 %v5816
      %6407 = vmatprep.subr.bf16.mxu0 0
      %6408 = vmatpush1.bf16.msra.mxu0 %v5817
      %6409 = vmatprep.subr.bf16.mxu0 0
      %6410 = vmatpush1.bf16.msra.mxu0 %v5818
      %6411 = vmatprep.subr.bf16.mxu0 0
      %6412 = vmatpush1.bf16.msra.mxu0 %v5819
      %6413 = vmatprep.subr.bf16.mxu0 0
      %6414 = vmatpush1.bf16.msra.mxu0 %v5820
      %6415 = vmatprep.subr.bf16.mxu0 0
      %6416 = vmatpush1.bf16.msra.mxu0 %v5821
      %6417 = vmatprep.mubr.bf16.mxu0 %v5301
      %6418 = vmatmul.mubr.bf16.gmra.mrb[0].mxu0 %v5300
      %v6419 = vpop.f32.mrb[0].mxu0
      %v6420 = vadd.f32 %v6259, %v6419
      %v6421 = vpop.f32.mrb[0].mxu0
      %v6422 = vpop.f32.mrb[0].mxu0
      %v6423 = vadd.f32 %v6262, %v6422
      %v6424 = vpop.f32.mrb[0].mxu0
      %6425 = vmatprep.mubr.bf16.mxu0 %v5310
      %6426 = vmatmul.mubr.bf16.gmra.mrb[0].mxu0 %v5309
      %v6427 = vpop.f32.mrb[0].mxu0
      %v6428 = vadd.f32 %v6267, %v6427
      %v6429 = vpop.f32.mrb[0].mxu0
      %v6430 = vpop.f32.mrb[0].mxu0
      %v6431 = vadd.f32 %v6270, %v6430
      %v6432 = vpop.f32.mrb[0].mxu0
      %6433 = vmatprep.mubr.bf16.mxu0 %v5319
      %6434 = vmatmul.mubr.bf16.gmra.mrb[0].mxu0 %v5318
      %v6435 = vpop.f32.mrb[0].mxu0
      %v6436 = vadd.f32 %v6275, %v6435
      %v6437 = vpop.f32.mrb[0].mxu0
      %v6438 = vpop.f32.mrb[0].mxu0
      %v6439 = vadd.f32 %v6278, %v6438
      %v6440 = vpop.f32.mrb[0].mxu0
      %6441 = vmatprep.mubr.bf16.mxu0 %v5328
      %6442 = vmatmul.mubr.bf16.gmra.mrb[0].mxu0 %v5327
      %v6443 = vpop.f32.mrb[0].mxu0
      %v6444 = vadd.f32 %v6283, %v6443
      %v6445 = vpop.f32.mrb[0].mxu0
      %v6446 = vpop.f32.mrb[0].mxu0
      %v6447 = vadd.f32 %v6286, %v6446
      %v6448 = vpop.f32.mrb[0].mxu0
      %6449 = vmatprep.mubr.bf16.mxu0 %v5337
      %6450 = vmatmul.mubr.bf16.gmra.mrb[0].mxu0 %v5336
      %v6451 = vpop.f32.mrb[0].mxu0
      %v6452 = vadd.f32 %v6291, %v6451
      %v6453 = vpop.f32.mrb[0].mxu0
      %v6454 = vpop.f32.mrb[0].mxu0
      %v6455 = vadd.f32 %v6294, %v6454
      %v6456 = vpop.f32.mrb[0].mxu0
      %6457 = vmatprep.mubr.bf16.mxu0 %v5346
      %6458 = vmatmul.mubr.bf16.gmra.mrb[0].mxu0 %v5345
      %v6459 = vpop.f32.mrb[0].mxu0
      %v6460 = vadd.f32 %v6299, %v6459
      %v6461 = vpop.f32.mrb[0].mxu0
      %v6462 = vpop.f32.mrb[0].mxu0
      %v6463 = vadd.f32 %v6302, %v6462
      %v6464 = vpop.f32.mrb[0].mxu0
      %6465 = vmatprep.mubr.bf16.mxu0 %v5355
      %6466 = vmatmul.mubr.bf16.gmra.mrb[0].mxu0 %v5354
      %v6467 = vpop.f32.mrb[0].mxu0
      %v6468 = vadd.f32 %v6307, %v6467
      %v6469 = vpop.f32.mrb[0].mxu0
      %v6470 = vpop.f32.mrb[0].mxu0
      %v6471 = vadd.f32 %v6310, %v6470
      %v6472 = vpop.f32.mrb[0].mxu0
      %6473 = vmatprep.mubr.bf16.mxu0 %v5364
      %6474 = vmatmul.mubr.bf16.gmra.mrb[0].mxu0 %v5363
      %v6475 = vpop.f32.mrb[0].mxu0
      %v6476 = vadd.f32 %v6315, %v6475
      %v6477 = vpop.f32.mrb[0].mxu0
      %v6478 = vpop.f32.mrb[0].mxu0
      %v6479 = vadd.f32 %v6318, %v6478
      %v6480 = vpop.f32.mrb[0].mxu0
      %6481 = vmatprep.mubr.bf16.mxu0 %v5373
      %6482 = vmatmul.mubr.bf16.gmra.mrb[0].mxu0 %v5372
      %v6483 = vpop.f32.mrb[0].mxu0
      %v6484 = vadd.f32 %v6323, %v6483
      %v6485 = vpop.f32.mrb[0].mxu0
      %v6486 = vpop.f32.mrb[0].mxu0
      %v6487 = vadd.f32 %v6326, %v6486
      %v6488 = vpop.f32.mrb[0].mxu0
      %6489 = vmatprep.mubr.bf16.mxu0 %v5382
      %6490 = vmatmul.mubr.bf16.gmra.mrb[0].mxu0 %v5381
      %v6491 = vpop.f32.mrb[0].mxu0
      %v6492 = vadd.f32 %v6331, %v6491
      %v6493 = vpop.f32.mrb[0].mxu0
      %v6494 = vpop.f32.mrb[0].mxu0
      %v6495 = vadd.f32 %v6334, %v6494
      %v6496 = vpop.f32.mrb[0].mxu0
      %6497 = vmatprep.mubr.bf16.mxu0 %v5391
      %6498 = vmatmul.mubr.bf16.gmra.mrb[0].mxu0 %v5390
      %v6499 = vpop.f32.mrb[0].mxu0
      %v6500 = vadd.f32 %v6339, %v6499
      %v6501 = vpop.f32.mrb[0].mxu0
      %v6502 = vpop.f32.mrb[0].mxu0
      %v6503 = vadd.f32 %v6342, %v6502
      %v6504 = vpop.f32.mrb[0].mxu0
      %6505 = vmatprep.mubr.bf16.mxu0 %v5400
      %6506 = vmatmul.mubr.bf16.gmra.mrb[0].mxu0 %v5399
      %v6507 = vpop.f32.mrb[0].mxu0
      %v6508 = vadd.f32 %v6347, %v6507
      %v6509 = vpop.f32.mrb[0].mxu0
      %v6510 = vpop.f32.mrb[0].mxu0
      %v6511 = vadd.f32 %v6350, %v6510
      %v6512 = vpop.f32.mrb[0].mxu0
      %6513 = vmatprep.mubr.bf16.mxu0 %v5409
      %6514 = vmatmul.mubr.bf16.gmra.mrb[0].mxu0 %v5408
      %v6515 = vpop.f32.mrb[0].mxu0
      %v6516 = vadd.f32 %v6355, %v6515
      %v6517 = vpop.f32.mrb[0].mxu0
      %v6518 = vpop.f32.mrb[0].mxu0
      %v6519 = vadd.f32 %v6358, %v6518
      %v6520 = vpop.f32.mrb[0].mxu0
      %6521 = vmatprep.mubr.bf16.mxu0 %v5418
      %6522 = vmatmul.mubr.bf16.gmra.mrb[0].mxu0 %v5417
      %v6523 = vpop.f32.mrb[0].mxu0
      %v6524 = vadd.f32 %v6363, %v6523
      %v6525 = vpop.f32.mrb[0].mxu0
      %v6526 = vpop.f32.mrb[0].mxu0
      %v6527 = vadd.f32 %v6366, %v6526
      %v6528 = vpop.f32.mrb[0].mxu0
      %6529 = vmatprep.mubr.bf16.mxu0 %v5427
      %6530 = vmatmul.mubr.bf16.gmra.mrb[0].mxu0 %v5426
      %v6531 = vpop.f32.mrb[0].mxu0
      %v6532 = vadd.f32 %v6371, %v6531
      %v6533 = vpop.f32.mrb[0].mxu0
      %v6534 = vpop.f32.mrb[0].mxu0
      %v6535 = vadd.f32 %v6374, %v6534
      %v6536 = vpop.f32.mrb[0].mxu0
      %6537 = vmatprep.mubr.bf16.mxu0 %v5436
      %6538 = vmatmul.mubr.bf16.gmra.mrb[0].mxu0 %v5435
      %v6539 = vpop.f32.mrb[0].mxu0
      %v6540 = vadd.f32 %v6379, %v6539
      %v6541 = vpop.f32.mrb[0].mxu0
      %v6542 = vpop.f32.mrb[0].mxu0
      %v6543 = vadd.f32 %v6382, %v6542
      %v6544 = vpop.f32.mrb[0].mxu0
      %6545 = vdwg.mxu0
      %6546 = vmatprep.subr.bf16.mxu0 0
      %6547 = vmatpush1.bf16.msra.mxu0 %v5822
      %6548 = vmatprep.subr.bf16.mxu0 0
      %6549 = vmatpush1.bf16.msra.mxu0 %v5823
      %6550 = vmatprep.subr.bf16.mxu0 0
      %6551 = vmatpush1.bf16.msra.mxu0 %v5824
      %6552 = vmatprep.subr.bf16.mxu0 0
      %6553 = vmatpush1.bf16.msra.mxu0 %v5825
      %6554 = vmatprep.subr.bf16.mxu0 0
      %6555 = vmatpush1.bf16.msra.mxu0 %v5826
      %6556 = vmatprep.subr.bf16.mxu0 0
      %6557 = vmatpush1.bf16.msra.mxu0 %v5827
      %6558 = vmatprep.subr.bf16.mxu0 0
      %6559 = vmatpush1.bf16.msra.mxu0 %v5828
      %6560 = vmatprep.subr.bf16.mxu0 0
      %6561 = vmatpush1.bf16.msra.mxu0 %v5829
      %6562 = vmatprep.subr.bf16.mxu0 0
      %6563 = vmatpush1.bf16.msra.mxu0 0
      %6564 = vmatprep.subr.bf16.mxu0 0
      %6565 = vmatpush1.bf16.msra.mxu0 0
      %6566 = vmatprep.subr.bf16.mxu0 0
      %6567 = vmatpush1.bf16.msra.mxu0 0
      %6568 = vmatprep.subr.bf16.mxu0 0
      %6569 = vmatpush1.bf16.msra.mxu0 0
      %6570 = vmatprep.subr.bf16.mxu0 0
      %6571 = vmatpush1.bf16.msra.mxu0 0
      %6572 = vmatprep.subr.bf16.mxu0 0
      %6573 = vmatpush1.bf16.msra.mxu0 0
      %6574 = vmatprep.subr.bf16.mxu0 0
      %6575 = vmatpush1.bf16.msra.mxu0 0
      %6576 = vmatprep.subr.bf16.mxu0 0
      %6577 = vmatpush1.bf16.msra.mxu0 0
      %6578 = vmatprep.mubr.bf16.mxu0 0
      %6579 = vmatmul.mubr.bf16.gmra.mrb[0].mxu0 %v5302
      %v6580 = vpop.f32.mrb[0].mxu0
      %v6581 = vadd.f32 %v6420, %v6580
      %v6582 = vpop.f32.mrb[0].mxu0
      %v6583 = vpop.f32.mrb[0].mxu0
      %v6584 = vadd.f32 %v6423, %v6583
      %v6585 = vpop.f32.mrb[0].mxu0
      %6586 = vmatprep.mubr.bf16.mxu0 0
      %6587 = vmatmul.mubr.bf16.gmra.mrb[0].mxu0 %v5311
      %v6588 = vpop.f32.mrb[0].mxu0
      %v6589 = vadd.f32 %v6428, %v6588
      %v6590 = vpop.f32.mrb[0].mxu0
      %v6591 = vpop.f32.mrb[0].mxu0
      %v6592 = vadd.f32 %v6431, %v6591
      %v6593 = vpop.f32.mrb[0].mxu0
      %6594 = vmatprep.mubr.bf16.mxu0 0
      %6595 = vmatmul.mubr.bf16.gmra.mrb[0].mxu0 %v5320
      %v6596 = vpop.f32.mrb[0].mxu0
      %v6597 = vadd.f32 %v6436, %v6596
      %v6598 = vpop.f32.mrb[0].mxu0
      %v6599 = vpop.f32.mrb[0].mxu0
      %v6600 = vadd.f32 %v6439, %v6599
      %v6601 = vpop.f32.mrb[0].mxu0
      %6602 = vmatprep.mubr.bf16.mxu0 0
      %6603 = vmatmul.mubr.bf16.gmra.mrb[0].mxu0 %v5329
      %v6604 = vpop.f32.mrb[0].mxu0
      %v6605 = vadd.f32 %v6444, %v6604
      %v6606 = vpop.f32.mrb[0].mxu0
      %v6607 = vpop.f32.mrb[0].mxu0
      %v6608 = vadd.f32 %v6447, %v6607
      %v6609 = vpop.f32.mrb[0].mxu0
      %6610 = vmatprep.mubr.bf16.mxu0 0
      %6611 = vmatmul.mubr.bf16.gmra.mrb[0].mxu0 %v5338
      %v6612 = vpop.f32.mrb[0].mxu0
      %v6613 = vadd.f32 %v6452, %v6612
      %v6614 = vpop.f32.mrb[0].mxu0
      %v6615 = vpop.f32.mrb[0].mxu0
      %v6616 = vadd.f32 %v6455, %v6615
      %v6617 = vpop.f32.mrb[0].mxu0
      %6618 = vmatprep.mubr.bf16.mxu0 0
      %6619 = vmatmul.mubr.bf16.gmra.mrb[0].mxu0 %v5347
      %v6620 = vpop.f32.mrb[0].mxu0
      %v6621 = vadd.f32 %v6460, %v6620
      %v6622 = vpop.f32.mrb[0].mxu0
      %v6623 = vpop.f32.mrb[0].mxu0
      %v6624 = vadd.f32 %v6463, %v6623
      %v6625 = vpop.f32.mrb[0].mxu0
      %6626 = vmatprep.mubr.bf16.mxu0 0
      %6627 = vmatmul.mubr.bf16.gmra.mrb[0].mxu0 %v5356
      %v6628 = vpop.f32.mrb[0].mxu0
      %v6629 = vadd.f32 %v6468, %v6628
      %v6630 = vpop.f32.mrb[0].mxu0
      %v6631 = vpop.f32.mrb[0].mxu0
      %v6632 = vadd.f32 %v6471, %v6631
      %v6633 = vpop.f32.mrb[0].mxu0
      %6634 = vmatprep.mubr.bf16.mxu0 0
      %6635 = vmatmul.mubr.bf16.gmra.mrb[0].mxu0 %v5365
      %v6636 = vpop.f32.mrb[0].mxu0
      %v6637 = vadd.f32 %v6476, %v6636
      %v6638 = vpop.f32.mrb[0].mxu0
      %v6639 = vpop.f32.mrb[0].mxu0
      %v6640 = vadd.f32 %v6479, %v6639
      %v6641 = vpop.f32.mrb[0].mxu0
      %6642 = vmatprep.mubr.bf16.mxu0 0
      %6643 = vmatmul.mubr.bf16.gmra.mrb[0].mxu0 %v5374
      %v6644 = vpop.f32.mrb[0].mxu0
      %v6645 = vadd.f32 %v6484, %v6644
      %v6646 = vpop.f32.mrb[0].mxu0
      %v6647 = vpop.f32.mrb[0].mxu0
      %v6648 = vadd.f32 %v6487, %v6647
      %v6649 = vpop.f32.mrb[0].mxu0
      %6650 = vmatprep.mubr.bf16.mxu0 0
      %6651 = vmatmul.mubr.bf16.gmra.mrb[0].mxu0 %v5383
      %v6652 = vpop.f32.mrb[0].mxu0
      %v6653 = vadd.f32 %v6492, %v6652
      %v6654 = vpop.f32.mrb[0].mxu0
      %v6655 = vpop.f32.mrb[0].mxu0
      %v6656 = vadd.f32 %v6495, %v6655
      %v6657 = vpop.f32.mrb[0].mxu0
      %6658 = vmatprep.mubr.bf16.mxu0 0
      %6659 = vmatmul.mubr.bf16.gmra.mrb[0].mxu0 %v5392
      %v6660 = vpop.f32.mrb[0].mxu0
      %v6661 = vadd.f32 %v6500, %v6660
      %v6662 = vpop.f32.mrb[0].mxu0
      %v6663 = vpop.f32.mrb[0].mxu0
      %v6664 = vadd.f32 %v6503, %v6663
      %v6665 = vpop.f32.mrb[0].mxu0
      %6666 = vmatprep.mubr.bf16.mxu0 0
      %6667 = vmatmul.mubr.bf16.gmra.mrb[0].mxu0 %v5401
      %v6668 = vpop.f32.mrb[0].mxu0
      %v6669 = vadd.f32 %v6508, %v6668
      %v6670 = vpop.f32.mrb[0].mxu0
      %v6671 = vpop.f32.mrb[0].mxu0
      %v6672 = vadd.f32 %v6511, %v6671
      %v6673 = vpop.f32.mrb[0].mxu0
      %6674 = vmatprep.mubr.bf16.mxu0 0
      %6675 = vmatmul.mubr.bf16.gmra.mrb[0].mxu0 %v5410
      %v6676 = vpop.f32.mrb[0].mxu0
      %v6677 = vadd.f32 %v6516, %v6676
      %v6678 = vpop.f32.mrb[0].mxu0
      %v6679 = vpop.f32.mrb[0].mxu0
      %v6680 = vadd.f32 %v6519, %v6679
      %v6681 = vpop.f32.mrb[0].mxu0
      %6682 = vmatprep.mubr.bf16.mxu0 0
      %6683 = vmatmul.mubr.bf16.gmra.mrb[0].mxu0 %v5419
      %v6684 = vpop.f32.mrb[0].mxu0
      %v6685 = vadd.f32 %v6524, %v6684
      %v6686 = vpop.f32.mrb[0].mxu0
      %v6687 = vpop.f32.mrb[0].mxu0
      %v6688 = vadd.f32 %v6527, %v6687
      %v6689 = vpop.f32.mrb[0].mxu0
      %6690 = vmatprep.mubr.bf16.mxu0 0
      %6691 = vmatmul.mubr.bf16.gmra.mrb[0].mxu0 %v5428
      %v6692 = vpop.f32.mrb[0].mxu0
      %v6693 = vadd.f32 %v6532, %v6692
      %v6694 = vpop.f32.mrb[0].mxu0
      %v6695 = vpop.f32.mrb[0].mxu0
      %v6696 = vadd.f32 %v6535, %v6695
      %v6697 = vpop.f32.mrb[0].mxu0
      %6698 = vmatprep.mubr.bf16.mxu0 0
      %6699 = vmatmul.mubr.bf16.gmra.mrb[0].mxu0 %v5437
      %v6700 = vpop.f32.mrb[0].mxu0
      %v6701 = vadd.f32 %v6540, %v6700
      %v6702 = vpop.f32.mrb[0].mxu0
      %v6703 = vpop.f32.mrb[0].mxu0
      %v6704 = vadd.f32 %v6543, %v6703
      %v6705 = vpop.f32.mrb[0].mxu0
      %6706 = vdwg.mxu0
      %6707 = vst [vmem:[%s197] sm:$0xff] %v6581
      %6708 = vst [vmem:[%s197 + $0x8] sm:$0xff] %v6584
      %6709 = vst [vmem:[%s197 + $0x10] sm:$0xff] %v6589
      %6710 = vst [vmem:[%s197 + $0x18] sm:$0xff] %v6592
      %6711 = vst [vmem:[%s197 + $0x20] sm:$0xff] %v6597
      %6712 = vst [vmem:[%s197 + $0x28] sm:$0xff] %v6600
      %6713 = vst [vmem:[%s197 + $0x30] sm:$0xff] %v6605
      %6714 = vst [vmem:[%s197 + $0x38] sm:$0xff] %v6608
      %6715 = vst [vmem:[%s197 + $0x40] sm:$0xff] %v6613
      %6716 = vst [vmem:[%s197 + $0x48] sm:$0xff] %v6616
      %6717 = vst [vmem:[%s197 + $0x50] sm:$0xff] %v6621
      %6718 = vst [vmem:[%s197 + $0x58] sm:$0xff] %v6624
      %6719 = vst [vmem:[%s197 + $0x60] sm:$0xff] %v6629
      %6720 = vst [vmem:[%s197 + $0x68] sm:$0xff] %v6632
      %6721 = vst [vmem:[%s197 + $0x70] sm:$0xff] %v6637
      %6722 = vst [vmem:[%s197 + $0x78] sm:$0xff] %v6640
      %6723 = vst [vmem:[%s197 + $0x80] sm:$0xff] %v6645
      %6724 = vst [vmem:[%s197 + $0x88] sm:$0xff] %v6648
      %6725 = vst [vmem:[%s197 + $0x90] sm:$0xff] %v6653
      %6726 = vst [vmem:[%s197 + $0x98] sm:$0xff] %v6656
      %6727 = vst [vmem:[%s197 + $0xa0] sm:$0xff] %v6661
      %6728 = vst [vmem:[%s197 + $0xa8] sm:$0xff] %v6664
      %6729 = vst [vmem:[%s197 + $0xb0] sm:$0xff] %v6669
      %6730 = vst [vmem:[%s197 + $0xb8] sm:$0xff] %v6672
      %6731 = vst [vmem:[%s197 + $0xc0] sm:$0xff] %v6677
      %6732 = vst [vmem:[%s197 + $0xc8] sm:$0xff] %v6680
      %6733 = vst [vmem:[%s197 + $0xd0] sm:$0xff] %v6685
      %6734 = vst [vmem:[%s197 + $0xd8] sm:$0xff] %v6688
      %6735 = vst [vmem:[%s197 + $0xe0] sm:$0xff] %v6693
      %6736 = vst [vmem:[%s197 + $0xe8] sm:$0xff] %v6696
      %6737 = vst [vmem:[%s197 + $0xf0] sm:$0xff] %v6701
      %6738 = vst [vmem:[%s197 + $0xf8] sm:$0xff] %v6704
      %p6739 = scmp.lt.s32.totalorder %s15, 1
      %s6740 = scalar_select %p6739, %s15, 1
      %s6741 = smul.addr %s6740, 32
      %s6742 = smul.addr %s6741, 8
      %s6743 = scalar_lea.vmem %s4, %s6742
      // Predicated region
      $region37: #{light_learning_net.1} parent=35 // pred_check
        %p6744 = pneg %p122
      $region38: #{light_learning_net.1} parent=35 // pred_check_branch
        %6746 = sbr.rel (%p6744) target = $region40
      $region39: #{light_learning_net.1} parent=35 // pred_region
        _
      $region40: #{light_learning_net.1} parent=35 // pred_fallthru
        _
    $region36: #{light_learning_net.1} parent=5 // pred_fallthru
      _
    %p6747 = scmp.le.s32.totalorder 2, %s10
    // Predicated region
    $region41: #{light_learning_net.1} parent=5 // pred_check
      %p6748 = pneg %p6747
    $region42: #{light_learning_net.1} parent=5 // pred_check_branch
      %6750 = sbr.rel (%p6748) target = $region44
    $region43: #{light_learning_net.1} parent=5 // pred_region
      %s6751 = ssub.s32 %s10, 2
      // Predicated region
      $region45: #{light_learning_net.1} parent=43 // pred_check
        %p6752 = pneg %p128
      $region46: #{light_learning_net.1} parent=43 // pred_check_branch
        %6754 = sbr.rel (%p6752) target = $region48
      $region47: #{light_learning_net.1} parent=43 // pred_region
        %p6755 = scmp.lt.s32.totalorder %s16, 1
        %s6756 = scalar_select %p6755, %s16, 1
        %s6757 = smul.addr %s6756, 32
        %s6758 = smul.addr %s6757, 8
        %s6759 = scalar_lea.vmem %s4, %s6758
      $region48: #{light_learning_net.1} parent=43 // pred_fallthru
        _
    $region44: #{light_learning_net.1} parent=5 // pred_fallthru
      _
  $region6: #{light_learning_net.1} parent=0 // loop_footer
    %s14 = sadd.s32 1, %s10
  $region7: #{light_learning_net.1} parent=0 // loop_footer_branch
    %9 = sbr.rel target = $region3
  $region8: #{light_learning_net.1} parent=0 // loop_exit
    _

</llo_original>
